<compile_context>
chip_gen: v5e
topology: v5e:2x2
jax: 0.10.0
libtpu: 0.0.40
codegen_flags: <defaults>
</compile_context>

<pallas_src>
import math

import jax
import jax.numpy as jnp
from jax import lax
from jax.experimental import pallas as pl
from jax.experimental.pallas import tpu as pltpu


def _make_kernel(B, L, C, n_filters, cpad, n_fc, out_dim):
    BL = B * L
    f0, f1, f2, f3 = n_filters

    # row offsets of each conv's (3*Cin, Cout) block inside its weight slab
    # (all offsets are multiples of 8 -> sublane-aligned slices)
    small_off = {}
    o = 0
    for name, cin in (("c12", f0), ("c21", f0), ("c22", f1), ("c31", f1), ("c32", f2)):
        small_off[name] = o
        o += 3 * cin
    big_off = {"c41": 0, "c42": 3 * f2}
    dd1a, dd1b, dd2, ddo = 0, f3, f3 + cpad, f3 + cpad + n_fc

    def kernel(x3_ref, xc_ref, w1_ref, wsm_ref, wbg_ref, wd_ref, vec_ref, o_ref):
        # per-row timestep index, computed once and reused by every conv
        row = lax.broadcasted_iota(jnp.int32, (BL, 1), 0)
        t = row % L
        is_first = t == 0            # first timestep of each sample
        is_last = t == L - 1         # last timestep of each sample

        def vec(i, c):               # (1, c) f32 bias / bn row
            return vec_ref[i:i + 1, 0:c]

        def conv_roll(x, w_ref, off, cin, cout, brow):
            # Conv1d(padding='same', K=3) on the flat (BL, cin) activation:
            # three shifted bf16 matmuls accumulated in f32; shifts via pltpu.roll
            # (XLU) with masks zeroing the per-sample wrap rows.
            w0 = w_ref[off:off + cin, 0:cout]
            w1 = w_ref[off + cin:off + 2 * cin, 0:cout]
            w2 = w_ref[off + 2 * cin:off + 3 * cin, 0:cout]
            acc = jnp.dot(x.astype(jnp.bfloat16), w1,
                          preferred_element_type=jnp.float32)
            left = jnp.where(is_first, 0.0, pltpu.roll(x, 1, 0))       # x[l-1]
            acc = acc + jnp.dot(left.astype(jnp.bfloat16), w0,
                                preferred_element_type=jnp.float32)
            right = jnp.where(is_last, 0.0, pltpu.roll(x, BL - 1, 0))  # x[l+1]
            acc = acc + jnp.dot(right.astype(jnp.bfloat16), w2,
                                preferred_element_type=jnp.float32)
            return jnp.maximum(acc + vec(brow, cout), 0.0)

        # ---- ConvBlock 1 (first conv has its taps pre-stacked on the host) ----
        h = jnp.dot(x3_ref[...], w1_ref[...], preferred_element_type=jnp.float32)
        h = jnp.maximum(h + vec(0, f0), 0.0)                            # (BL, 24)
        h = conv_roll(h, wsm_ref, small_off["c12"], f0, f0, 1)

        # ---- BatchNorm1d: batch stats over (batch, time), eps=0 per module ----
        mu = jnp.mean(h, axis=0, keepdims=True)
        msq = jnp.mean(h * h, axis=0, keepdims=True)
        var = jnp.maximum(msq - mu * mu, 0.0)
        h = (h - mu) * lax.rsqrt(var) * vec(2, f0) + vec(3, f0)

        # ---- ConvBlocks 2-4 ----------------------------------------------------
        h = conv_roll(h, wsm_ref, small_off["c21"], f0, f1, 4)          # (BL, 48)
        h = conv_roll(h, wsm_ref, small_off["c22"], f1, f1, 5)
        h = conv_roll(h, wsm_ref, small_off["c31"], f1, f2, 6)          # (BL, 96)
        h = conv_roll(h, wsm_ref, small_off["c32"], f2, f2, 7)
        h = conv_roll(h, wbg_ref, big_off["c41"], f2, f3, 8)            # (BL, 192)
        h = conv_roll(h, wbg_ref, big_off["c42"], f3, f3, 9)

        # ---- per-sample temporal mean, pooling operator built in-kernel --------
        # f32 matmul (tiny) keeps the mean at reference precision.
        rb = lax.broadcasted_iota(jnp.int32, (B, BL), 0)
        cb = lax.broadcasted_iota(jnp.int32, (B, BL), 1)
        seg = rb * L
        pool = jnp.where((cb >= seg) & (cb < seg + L), 1.0 / L, 0.0)    # (B, BL) f32
        m = jnp.dot(pool, h, preferred_element_type=jnp.float32)        # (B, 192)

        # ---- dense head: dense1(cat([mean, const])) -> dense2 -> out -----------
        # the concat is realised as two matmuls (avoids a lane-offset relayout of xc)
        y = (jnp.dot(m.astype(jnp.bfloat16), wd_ref[dd1a:dd1a + f3, :],
                     preferred_element_type=jnp.float32)
             + jnp.dot(xc_ref[...], wd_ref[dd1b:dd1b + cpad, :],
                       preferred_element_type=jnp.float32)
             + vec(10, n_fc))
        y = jnp.maximum(y, 0.0)
        y = jnp.dot(y.astype(jnp.bfloat16), wd_ref[dd2:dd2 + n_fc, :],
                    preferred_element_type=jnp.float32) + vec(11, n_fc)
        y = jnp.maximum(y, 0.0)
        logits = jnp.dot(y.astype(jnp.bfloat16), wd_ref[ddo:ddo + n_fc, 0:out_dim],
                         preferred_element_type=jnp.float32) + vec(12, out_dim)
        o_ref[...] = jax.nn.sigmoid(logits)

    return kernel


def init_params(key, channels, const_params, n_filters, n_fc, out_dim, k=3):
    keys = iter(jax.random.split(key, 64))

    def xavier(shape, fan_in, fan_out):
        bound = math.sqrt(6.0 / (fan_in + fan_out))
        return jax.random.uniform(next(keys), shape, jnp.float32, -bound, bound)

    def bias(n, fan_in):
        bound = 1.0 / math.sqrt(fan_in)
        return jax.random.uniform(next(keys), (n,), jnp.float32, -bound, bound)

    def conv_wb(cin, cout):
        # torch (cout, cin, k) -> stored here as (k, cin, cout)
        return xavier((k, cin, cout), cin * k, cout * k), bias(cout, cin * k)

    f0, f1, f2, f3 = n_filters
    w11, b11 = conv_wb(channels, f0)
    w12, b12 = conv_wb(f0, f0)
    g = jnp.ones((f0,), jnp.float32)        # bn weight
    be = jnp.zeros((f0,), jnp.float32)      # bn bias
    w21, b21 = conv_wb(f0, f1)
    w22, b22 = conv_wb(f1, f1)
    w31, b31 = conv_wb(f1, f2)
    w32, b32 = conv_wb(f2, f2)
    w41, b41 = conv_wb(f2, f3)
    w42, b42 = conv_wb(f3, f3)
    d_in = f3 + const_params
    wd1, bd1 = xavier((d_in, n_fc), d_in, n_fc), bias(n_fc, d_in)
    wd2, bd2 = xavier((n_fc, n_fc), n_fc, n_fc), bias(n_fc, n_fc)
    wdo, bdo = xavier((n_fc, out_dim), n_fc, out_dim), bias(out_dim, n_fc)
    return (w11, b11, w12, b12, g, be,
            w21, b21, w22, b22,
            w31, b31, w32, b32,
            w41, b41, w42, b42,
            wd1, bd1, wd2, bd2, wdo, bdo)


def _pack_params(params, C, cpad, n_filters, n_fc, out_dim):
    (w11, b11, w12, b12, g, be,
     w21, b21, w22, b22,
     w31, b31, w32, b32,
     w41, b41, w42, b42,
     wd1, bd1, wd2, bd2, wdo, bdo) = params
    f0, f1, f2, f3 = n_filters
    bf = jnp.bfloat16

    w1 = w11.reshape(3 * C, f0).astype(bf)                   # taps stacked for conv1-1

    def blk(w, width):
        kk, cin, cout = w.shape
        return jnp.pad(w.reshape(kk * cin, cout), ((0, 0), (0, width - cout)))

    wsmall = jnp.concatenate(
        [blk(w12, f2), blk(w21, f2), blk(w22, f2), blk(w31, f2), blk(w32, f2)],
        axis=0).astype(bf)                                    # (720, 96)
    wbig = jnp.concatenate([blk(w41, f3), blk(w42, f3)], axis=0).astype(bf)  # (864, 192)

    nconst = wd1.shape[0] - f3
    wdense = jnp.concatenate(
        [wd1[:f3],
         jnp.pad(wd1[f3:], ((0, cpad - nconst), (0, 0))),
         wd2,
         jnp.pad(wdo, ((0, 0), (0, n_fc - out_dim)))], axis=0).astype(bf)    # (336, 64)

    vw = max(f3, n_fc)

    def row(v):
        return jnp.pad(v.astype(jnp.float32), (0, vw - v.shape[0]))

    zero = jnp.zeros((vw,), jnp.float32)
    vecs = jnp.stack([row(b11), row(b12), row(g), row(be),
                      row(b21), row(b22), row(b31), row(b32),
                      row(b41), row(b42), row(bd1), row(bd2), row(bdo),
                      zero, zero, zero])                      # (16, 192) f32
    return w1, wsmall, wbig, wdense, vecs


def cnn_forward(x_trsl, x_const, params, n_filters=(24, 48, 96, 192), n_fc=64):
    B, C, L = x_trsl.shape
    nconst = x_const.shape[1]
    cpad = ((nconst + 7) // 8) * 8
    out_dim = params[-1].shape[0]

    # host-side glue: NCL -> channels-last flat, first conv's 3 taps pre-stacked.
    x = jnp.transpose(x_trsl, (0, 2, 1)).astype(jnp.float32)          # (B, L, C)
    left = jnp.pad(x, ((0, 0), (1, 0), (0, 0)))[:, :L, :]             # x[l-1]
    right = jnp.pad(x, ((0, 0), (0, 1), (0, 0)))[:, 1:, :]            # x[l+1]
    x3 = jnp.concatenate([left, x, right], axis=-1).reshape(B * L, 3 * C)
    x3 = x3.astype(jnp.bfloat16)
    xc = jnp.pad(x_const.astype(jnp.float32), ((0, 0), (0, cpad - nconst)))
    xc = xc.astype(jnp.bfloat16)

    w1, wsmall, wbig, wdense, vecs = _pack_params(params, C, cpad, n_filters,
                                                  n_fc, out_dim)
    inputs = [x3, xc, w1, wsmall, wbig, wdense, vecs]
    vmem = pl.BlockSpec(memory_space=pltpu.MemorySpace.VMEM)
    return pl.pallas_call(
        _make_kernel(B, L, C, n_filters, cpad, n_fc, out_dim),
        out_shape=jax.ShapeDtypeStruct((B, out_dim), jnp.float32),
        in_specs=[vmem] * len(inputs),
        out_specs=vmem,
    )(*inputs)


def cnn_forward_ref(x_trsl, x_const, params):
    """Plain-JAX reference of the torch forward, with the same bf16 matmul
    operands / f32 accumulation precision choice as the kernel."""
    (w11, b11, w12, b12, g, be,
     w21, b21, w22, b22,
     w31, b31, w32, b32,
     w41, b41, w42, b42,
     wd1, bd1, wd2, bd2, wdo, bdo) = params
    B, C, L = x_trsl.shape
    bf = jnp.bfloat16
    x = jnp.transpose(x_trsl, (0, 2, 1)).astype(jnp.float32)          # (B, L, C)

    def conv(x, w, b):
        xp = jnp.pad(x, ((0, 0), (1, 1), (0, 0)))
        y = sum(jnp.einsum("blc,cd->bld", xp[:, k:k + L, :].astype(bf),
                           w[k].astype(bf), preferred_element_type=jnp.float32)
                for k in range(w.shape[0]))
        return y + b[None, None, :]

    def block(x, wa, ba, wb, bb):
        x = jax.nn.relu(conv(x, wa, ba))
        return jax.nn.relu(conv(x, wb, bb))

    h = block(x, w11, b11, w12, b12)
    mu = jnp.mean(h, axis=(0, 1), keepdims=True)
    var = jnp.mean((h - mu) ** 2, axis=(0, 1), keepdims=True)
    h = (h - mu) / jnp.sqrt(var) * g[None, None, :] + be[None, None, :]   # eps=0
    h = block(h, w21, b21, w22, b22)
    h = block(h, w31, b31, w32, b32)
    h = block(h, w41, b41, w42, b42)
    m = jnp.mean(h, axis=1)                                           # (B, 192)
    f3 = w42.shape[2]
    y = jax.nn.relu(
        jnp.dot(m.astype(bf), wd1[:f3].astype(bf), preferred_element_type=jnp.float32)
        + jnp.dot(x_const.astype(jnp.float32).astype(bf), wd1[f3:].astype(bf),
                  preferred_element_type=jnp.float32)
        + bd1)
    y = jax.nn.relu(jnp.dot(y.astype(bf), wd2.astype(bf),
                            preferred_element_type=jnp.float32) + bd2)
    return jax.nn.sigmoid(jnp.dot(y.astype(bf), wdo.astype(bf),
                                  preferred_element_type=jnp.float32) + bdo)


if __name__ == "__main__":
    B, C, L, CONST = 4, 2, 60, 11
    N_FILTERS = (24, 48, 96, 192)
    N_FC, OUT = 64, 1

    key = jax.random.PRNGKey(0)
    k1, k2, k3 = jax.random.split(key, 3)
    x_trsl = jax.random.normal(k1, (B, C, L), jnp.float32)
    x_const = jax.random.normal(k2, (B, CONST), jnp.float32)
    params = init_params(k3, C, CONST, N_FILTERS, N_FC, OUT)

    out = cnn_forward(x_trsl, x_const, params, N_FILTERS, N_FC)
    out = jax.block_until_ready(out)
    assert out.shape == (B, OUT)

    ref = cnn_forward_ref(x_trsl, x_const, params)
    if not bool(jnp.allclose(out, ref, atol=5e-3, rtol=5e-3)):
        raise AssertionError(f"mismatch: pallas={out} ref={ref}")

    print("KERNEL_OK")
</pallas_src>

<mosaic_0001>
module attributes {stable_mosaic.version = 11 : i64} {
  func.func @kernel(%arg0: memref<240x6xbf16, #tpu.memory_space<vmem>>, %arg1: memref<4x16xbf16, #tpu.memory_space<vmem>>, %arg2: memref<6x24xbf16, #tpu.memory_space<vmem>>, %arg3: memref<720x96xbf16, #tpu.memory_space<vmem>>, %arg4: memref<864x192xbf16, #tpu.memory_space<vmem>>, %arg5: memref<336x64xbf16, #tpu.memory_space<vmem>>, %arg6: memref<16x192xf32, #tpu.memory_space<vmem>>, %arg7: memref<4x1xf32, #tpu.memory_space<vmem>>) attributes {dimension_semantics = [], scalar_prefetch = 0 : i64, scratch_operands = 0 : i64, tpu.core_type = #tpu.core_type<tc>} {
    %0 = tpu.iota {dimensions = array<i32: 0>} : vector<240x1xi32>
    %c60_i32 = arith.constant 60 : i32
    %c0_i32 = arith.constant 0 : i32
    %1 = arith.cmpi eq, %c60_i32, %c0_i32 : i32
    %c1_i32 = arith.constant 1 : i32
    %2 = arith.select %1, %c1_i32, %c60_i32 : i32
    %3 = vector.broadcast %2 : i32 to vector<240x1xi32>
    %4 = arith.remsi %0, %3 : vector<240x1xi32>
    %c0_i32_0 = arith.constant 0 : i32
    %5 = vector.broadcast %c0_i32_0 : i32 to vector<240x1xi32>
    %6 = arith.cmpi ne, %4, %5 : vector<240x1xi32>
    %c0_i32_1 = arith.constant 0 : i32
    %7 = vector.broadcast %c0_i32_1 : i32 to vector<240x1xi32>
    %8 = arith.cmpi slt, %4, %7 : vector<240x1xi32>
    %c0_i32_2 = arith.constant 0 : i32
    %9 = arith.cmpi slt, %2, %c0_i32_2 : i32
    %10 = vector.broadcast %9 : i1 to vector<240x1xi1>
    %11 = vector.broadcast %10 : vector<240x1xi1> to vector<240x1xi1>
    %12 = arith.xori %8, %11 : vector<240x1xi1>
    %13 = arith.andi %12, %6 : vector<240x1xi1>
    %14 = vector.broadcast %2 : i32 to vector<240x1xi32>
    %15 = arith.addi %4, %14 : vector<240x1xi32>
    %16 = arith.select %13, %15, %4 : vector<240x1xi1>, vector<240x1xi32>
    %c0_i32_3 = arith.constant 0 : i32
    %17 = vector.broadcast %c0_i32_3 : i32 to vector<240x1xi32>
    %18 = arith.cmpi eq, %16, %17 : vector<240x1xi32>
    %c59_i32 = arith.constant 59 : i32
    %19 = vector.broadcast %c59_i32 : i32 to vector<240x1xi32>
    %20 = arith.cmpi eq, %16, %19 : vector<240x1xi32>
    %c0 = arith.constant 0 : index
    %c0_4 = arith.constant 0 : index
    %21 = vector.load %arg0[%c0, %c0_4] : memref<240x6xbf16, #tpu.memory_space<vmem>>, vector<240x6xbf16>
    %c0_5 = arith.constant 0 : index
    %c0_6 = arith.constant 0 : index
    %22 = vector.load %arg2[%c0_5, %c0_6] : memref<6x24xbf16, #tpu.memory_space<vmem>>, vector<6x24xbf16>
    %cst = arith.constant dense<0.000000e+00> : vector<240x24xf32>
    %23 = tpu.matmul %21, %22, %cst {dimension_numbers = #tpu.dot_dimension_numbers<[1], [0], [0], [1], [0, 0, 1, 1], [], []>} : vector<240x6xbf16>, vector<6x24xbf16>, vector<240x24xf32> -> vector<240x24xf32>
    %c0_7 = arith.constant 0 : index
    %c0_8 = arith.constant 0 : index
    %24 = vector.load %arg6[%c0_7, %c0_8] : memref<16x192xf32, #tpu.memory_space<vmem>>, vector<1x24xf32>
    %25 = vector.broadcast %24 : vector<1x24xf32> to vector<240x24xf32>
    %26 = arith.addf %23, %25 : vector<240x24xf32>
    %cst_9 = arith.constant 0.000000e+00 : f32
    %27 = vector.broadcast %cst_9 : f32 to vector<240x24xf32>
    %28 = arith.maximumf %26, %27 : vector<240x24xf32>
    %c0_10 = arith.constant 0 : index
    %c0_11 = arith.constant 0 : index
    %29 = vector.load %arg3[%c0_10, %c0_11] : memref<720x96xbf16, #tpu.memory_space<vmem>>, vector<24x24xbf16>
    %c24 = arith.constant 24 : index
    %c0_12 = arith.constant 0 : index
    %30 = vector.load %arg3[%c24, %c0_12] : memref<720x96xbf16, #tpu.memory_space<vmem>>, vector<24x24xbf16>
    %c48 = arith.constant 48 : index
    %c0_13 = arith.constant 0 : index
    %31 = vector.load %arg3[%c48, %c0_13] : memref<720x96xbf16, #tpu.memory_space<vmem>>, vector<24x24xbf16>
    %32 = arith.truncf %28 : vector<240x24xf32> to vector<240x24xbf16>
    %cst_14 = arith.constant dense<0.000000e+00> : vector<240x24xf32>
    %33 = tpu.matmul %32, %30, %cst_14 {dimension_numbers = #tpu.dot_dimension_numbers<[1], [0], [0], [1], [0, 0, 1, 1], [], []>} : vector<240x24xbf16>, vector<24x24xbf16>, vector<240x24xf32> -> vector<240x24xf32>
    %c1_i32_15 = arith.constant 1 : i32
    %34 = tpu.dynamic_rotate %28 by %c1_i32_15 dim 0 : vector<240x24xf32>, i32 -> vector<240x24xf32>
    %cst_16 = arith.constant 0.000000e+00 : f32
    %35 = vector.shape_cast %18 : vector<240x1xi1> to vector<240x1xi1>
    %36 = vector.broadcast %35 : vector<240x1xi1> to vector<240x24xi1>
    %37 = vector.broadcast %cst_16 : f32 to vector<240x24xf32>
    %38 = arith.select %36, %37, %34 : vector<240x24xi1>, vector<240x24xf32>
    %39 = arith.truncf %38 : vector<240x24xf32> to vector<240x24xbf16>
    %cst_17 = arith.constant dense<0.000000e+00> : vector<240x24xf32>
    %40 = tpu.matmul %39, %29, %cst_17 {dimension_numbers = #tpu.dot_dimension_numbers<[1], [0], [0], [1], [0, 0, 1, 1], [], []>} : vector<240x24xbf16>, vector<24x24xbf16>, vector<240x24xf32> -> vector<240x24xf32>
    %41 = arith.addf %33, %40 : vector<240x24xf32>
    %c239_i32 = arith.constant 239 : i32
    %42 = tpu.dynamic_rotate %28 by %c239_i32 dim 0 : vector<240x24xf32>, i32 -> vector<240x24xf32>
    %cst_18 = arith.constant 0.000000e+00 : f32
    %43 = vector.shape_cast %20 : vector<240x1xi1> to vector<240x1xi1>
    %44 = vector.broadcast %43 : vector<240x1xi1> to vector<240x24xi1>
    %45 = vector.broadcast %cst_18 : f32 to vector<240x24xf32>
    %46 = arith.select %44, %45, %42 : vector<240x24xi1>, vector<240x24xf32>
    %47 = arith.truncf %46 : vector<240x24xf32> to vector<240x24xbf16>
    %cst_19 = arith.constant dense<0.000000e+00> : vector<240x24xf32>
    %48 = tpu.matmul %47, %31, %cst_19 {dimension_numbers = #tpu.dot_dimension_numbers<[1], [0], [0], [1], [0, 0, 1, 1], [], []>} : vector<240x24xbf16>, vector<24x24xbf16>, vector<240x24xf32> -> vector<240x24xf32>
    %49 = arith.addf %41, %48 : vector<240x24xf32>
    %c1 = arith.constant 1 : index
    %c0_20 = arith.constant 0 : index
    %50 = vector.load %arg6[%c1, %c0_20] : memref<16x192xf32, #tpu.memory_space<vmem>>, vector<1x24xf32>
    %51 = vector.broadcast %50 : vector<1x24xf32> to vector<240x24xf32>
    %52 = arith.addf %49, %51 : vector<240x24xf32>
    %cst_21 = arith.constant 0.000000e+00 : f32
    %53 = vector.broadcast %cst_21 : f32 to vector<240x24xf32>
    %54 = arith.maximumf %52, %53 : vector<240x24xf32>
    %cst_22 = arith.constant dense<0.000000e+00> : vector<24xf32>
    %55 = vector.multi_reduction <add>, %54, %cst_22 [0] : vector<240x24xf32> to vector<24xf32>
    %56 = vector.shape_cast %55 : vector<24xf32> to vector<1x24xf32>
    %cst_23 = arith.constant 2.400000e+02 : f32
    %57 = vector.broadcast %cst_23 : f32 to vector<1x24xf32>
    %58 = arith.divf %56, %57 : vector<1x24xf32>
    %59 = arith.mulf %54, %54 : vector<240x24xf32>
    %cst_24 = arith.constant dense<0.000000e+00> : vector<24xf32>
    %60 = vector.multi_reduction <add>, %59, %cst_24 [0] : vector<240x24xf32> to vector<24xf32>
    %61 = vector.shape_cast %60 : vector<24xf32> to vector<1x24xf32>
    %cst_25 = arith.constant 2.400000e+02 : f32
    %62 = vector.broadcast %cst_25 : f32 to vector<1x24xf32>
    %63 = arith.divf %61, %62 : vector<1x24xf32>
    %64 = arith.mulf %58, %58 : vector<1x24xf32>
    %65 = arith.subf %63, %64 : vector<1x24xf32>
    %cst_26 = arith.constant 0.000000e+00 : f32
    %66 = vector.broadcast %cst_26 : f32 to vector<1x24xf32>
    %67 = arith.maximumf %65, %66 : vector<1x24xf32>
    %68 = vector.broadcast %58 : vector<1x24xf32> to vector<240x24xf32>
    %69 = arith.subf %54, %68 : vector<240x24xf32>
    %70 = math.rsqrt %67 : vector<1x24xf32>
    %71 = vector.broadcast %70 : vector<1x24xf32> to vector<240x24xf32>
    %72 = arith.mulf %69, %71 : vector<240x24xf32>
    %c2 = arith.constant 2 : index
    %c0_27 = arith.constant 0 : index
    %73 = vector.load %arg6[%c2, %c0_27] : memref<16x192xf32, #tpu.memory_space<vmem>>, vector<1x24xf32>
    %74 = vector.broadcast %73 : vector<1x24xf32> to vector<240x24xf32>
    %75 = arith.mulf %72, %74 : vector<240x24xf32>
    %c3 = arith.constant 3 : index
    %c0_28 = arith.constant 0 : index
    %76 = vector.load %arg6[%c3, %c0_28] : memref<16x192xf32, #tpu.memory_space<vmem>>, vector<1x24xf32>
    %77 = vector.broadcast %76 : vector<1x24xf32> to vector<240x24xf32>
    %78 = arith.addf %75, %77 : vector<240x24xf32>
    %c72 = arith.constant 72 : index
    %c0_29 = arith.constant 0 : index
    %79 = vector.load %arg3[%c72, %c0_29] : memref<720x96xbf16, #tpu.memory_space<vmem>>, vector<24x48xbf16>
    %c96 = arith.constant 96 : index
    %c0_30 = arith.constant 0 : index
    %80 = vector.load %arg3[%c96, %c0_30] : memref<720x96xbf16, #tpu.memory_space<vmem>>, vector<24x48xbf16>
    %c120 = arith.constant 120 : index
    %c0_31 = arith.constant 0 : index
    %81 = vector.load %arg3[%c120, %c0_31] : memref<720x96xbf16, #tpu.memory_space<vmem>>, vector<24x48xbf16>
    %82 = arith.truncf %78 : vector<240x24xf32> to vector<240x24xbf16>
    %cst_32 = arith.constant dense<0.000000e+00> : vector<240x48xf32>
    %83 = tpu.matmul %82, %80, %cst_32 {dimension_numbers = #tpu.dot_dimension_numbers<[1], [0], [0], [1], [0, 0, 1, 1], [], []>} : vector<240x24xbf16>, vector<24x48xbf16>, vector<240x48xf32> -> vector<240x48xf32>
    %c1_i32_33 = arith.constant 1 : i32
    %84 = tpu.dynamic_rotate %78 by %c1_i32_33 dim 0 : vector<240x24xf32>, i32 -> vector<240x24xf32>
    %cst_34 = arith.constant 0.000000e+00 : f32
    %85 = vector.shape_cast %18 : vector<240x1xi1> to vector<240x1xi1>
    %86 = vector.broadcast %85 : vector<240x1xi1> to vector<240x24xi1>
    %87 = vector.broadcast %cst_34 : f32 to vector<240x24xf32>
    %88 = arith.select %86, %87, %84 : vector<240x24xi1>, vector<240x24xf32>
    %89 = arith.truncf %88 : vector<240x24xf32> to vector<240x24xbf16>
    %cst_35 = arith.constant dense<0.000000e+00> : vector<240x48xf32>
    %90 = tpu.matmul %89, %79, %cst_35 {dimension_numbers = #tpu.dot_dimension_numbers<[1], [0], [0], [1], [0, 0, 1, 1], [], []>} : vector<240x24xbf16>, vector<24x48xbf16>, vector<240x48xf32> -> vector<240x48xf32>
    %91 = arith.addf %83, %90 : vector<240x48xf32>
    %c239_i32_36 = arith.constant 239 : i32
    %92 = tpu.dynamic_rotate %78 by %c239_i32_36 dim 0 : vector<240x24xf32>, i32 -> vector<240x24xf32>
    %cst_37 = arith.constant 0.000000e+00 : f32
    %93 = vector.shape_cast %20 : vector<240x1xi1> to vector<240x1xi1>
    %94 = vector.broadcast %93 : vector<240x1xi1> to vector<240x24xi1>
    %95 = vector.broadcast %cst_37 : f32 to vector<240x24xf32>
    %96 = arith.select %94, %95, %92 : vector<240x24xi1>, vector<240x24xf32>
    %97 = arith.truncf %96 : vector<240x24xf32> to vector<240x24xbf16>
    %cst_38 = arith.constant dense<0.000000e+00> : vector<240x48xf32>
    %98 = tpu.matmul %97, %81, %cst_38 {dimension_numbers = #tpu.dot_dimension_numbers<[1], [0], [0], [1], [0, 0, 1, 1], [], []>} : vector<240x24xbf16>, vector<24x48xbf16>, vector<240x48xf32> -> vector<240x48xf32>
    %99 = arith.addf %91, %98 : vector<240x48xf32>
    %c4 = arith.constant 4 : index
    %c0_39 = arith.constant 0 : index
    %100 = vector.load %arg6[%c4, %c0_39] : memref<16x192xf32, #tpu.memory_space<vmem>>, vector<1x48xf32>
    %101 = vector.broadcast %100 : vector<1x48xf32> to vector<240x48xf32>
    %102 = arith.addf %99, %101 : vector<240x48xf32>
    %cst_40 = arith.constant 0.000000e+00 : f32
    %103 = vector.broadcast %cst_40 : f32 to vector<240x48xf32>
    %104 = arith.maximumf %102, %103 : vector<240x48xf32>
    %c144 = arith.constant 144 : index
    %c0_41 = arith.constant 0 : index
    %105 = vector.load %arg3[%c144, %c0_41] : memref<720x96xbf16, #tpu.memory_space<vmem>>, vector<48x48xbf16>
    %c192 = arith.constant 192 : index
    %c0_42 = arith.constant 0 : index
    %106 = vector.load %arg3[%c192, %c0_42] : memref<720x96xbf16, #tpu.memory_space<vmem>>, vector<48x48xbf16>
    %c240 = arith.constant 240 : index
    %c0_43 = arith.constant 0 : index
    %107 = vector.load %arg3[%c240, %c0_43] : memref<720x96xbf16, #tpu.memory_space<vmem>>, vector<48x48xbf16>
    %108 = arith.truncf %104 : vector<240x48xf32> to vector<240x48xbf16>
    %cst_44 = arith.constant dense<0.000000e+00> : vector<240x48xf32>
    %109 = tpu.matmul %108, %106, %cst_44 {dimension_numbers = #tpu.dot_dimension_numbers<[1], [0], [0], [1], [0, 0, 1, 1], [], []>} : vector<240x48xbf16>, vector<48x48xbf16>, vector<240x48xf32> -> vector<240x48xf32>
    %c1_i32_45 = arith.constant 1 : i32
    %110 = tpu.dynamic_rotate %104 by %c1_i32_45 dim 0 : vector<240x48xf32>, i32 -> vector<240x48xf32>
    %cst_46 = arith.constant 0.000000e+00 : f32
    %111 = vector.shape_cast %18 : vector<240x1xi1> to vector<240x1xi1>
    %112 = vector.broadcast %111 : vector<240x1xi1> to vector<240x48xi1>
    %113 = vector.broadcast %cst_46 : f32 to vector<240x48xf32>
    %114 = arith.select %112, %113, %110 : vector<240x48xi1>, vector<240x48xf32>
    %115 = arith.truncf %114 : vector<240x48xf32> to vector<240x48xbf16>
    %cst_47 = arith.constant dense<0.000000e+00> : vector<240x48xf32>
    %116 = tpu.matmul %115, %105, %cst_47 {dimension_numbers = #tpu.dot_dimension_numbers<[1], [0], [0], [1], [0, 0, 1, 1], [], []>} : vector<240x48xbf16>, vector<48x48xbf16>, vector<240x48xf32> -> vector<240x48xf32>
    %117 = arith.addf %109, %116 : vector<240x48xf32>
    %c239_i32_48 = arith.constant 239 : i32
    %118 = tpu.dynamic_rotate %104 by %c239_i32_48 dim 0 : vector<240x48xf32>, i32 -> vector<240x48xf32>
    %cst_49 = arith.constant 0.000000e+00 : f32
    %119 = vector.shape_cast %20 : vector<240x1xi1> to vector<240x1xi1>
    %120 = vector.broadcast %119 : vector<240x1xi1> to vector<240x48xi1>
    %121 = vector.broadcast %cst_49 : f32 to vector<240x48xf32>
    %122 = arith.select %120, %121, %118 : vector<240x48xi1>, vector<240x48xf32>
    %123 = arith.truncf %122 : vector<240x48xf32> to vector<240x48xbf16>
    %cst_50 = arith.constant dense<0.000000e+00> : vector<240x48xf32>
    %124 = tpu.matmul %123, %107, %cst_50 {dimension_numbers = #tpu.dot_dimension_numbers<[1], [0], [0], [1], [0, 0, 1, 1], [], []>} : vector<240x48xbf16>, vector<48x48xbf16>, vector<240x48xf32> -> vector<240x48xf32>
    %125 = arith.addf %117, %124 : vector<240x48xf32>
    %c5 = arith.constant 5 : index
    %c0_51 = arith.constant 0 : index
    %126 = vector.load %arg6[%c5, %c0_51] : memref<16x192xf32, #tpu.memory_space<vmem>>, vector<1x48xf32>
    %127 = vector.broadcast %126 : vector<1x48xf32> to vector<240x48xf32>
    %128 = arith.addf %125, %127 : vector<240x48xf32>
    %cst_52 = arith.constant 0.000000e+00 : f32
    %129 = vector.broadcast %cst_52 : f32 to vector<240x48xf32>
    %130 = arith.maximumf %128, %129 : vector<240x48xf32>
    %c288 = arith.constant 288 : index
    %c0_53 = arith.constant 0 : index
    %131 = vector.load %arg3[%c288, %c0_53] : memref<720x96xbf16, #tpu.memory_space<vmem>>, vector<48x96xbf16>
    %c336 = arith.constant 336 : index
    %c0_54 = arith.constant 0 : index
    %132 = vector.load %arg3[%c336, %c0_54] : memref<720x96xbf16, #tpu.memory_space<vmem>>, vector<48x96xbf16>
    %c384 = arith.constant 384 : index
    %c0_55 = arith.constant 0 : index
    %133 = vector.load %arg3[%c384, %c0_55] : memref<720x96xbf16, #tpu.memory_space<vmem>>, vector<48x96xbf16>
    %134 = arith.truncf %130 : vector<240x48xf32> to vector<240x48xbf16>
    %cst_56 = arith.constant dense<0.000000e+00> : vector<240x96xf32>
    %135 = tpu.matmul %134, %132, %cst_56 {dimension_numbers = #tpu.dot_dimension_numbers<[1], [0], [0], [1], [0, 0, 1, 1], [], []>} : vector<240x48xbf16>, vector<48x96xbf16>, vector<240x96xf32> -> vector<240x96xf32>
    %c1_i32_57 = arith.constant 1 : i32
    %136 = tpu.dynamic_rotate %130 by %c1_i32_57 dim 0 : vector<240x48xf32>, i32 -> vector<240x48xf32>
    %cst_58 = arith.constant 0.000000e+00 : f32
    %137 = vector.shape_cast %18 : vector<240x1xi1> to vector<240x1xi1>
    %138 = vector.broadcast %137 : vector<240x1xi1> to vector<240x48xi1>
    %139 = vector.broadcast %cst_58 : f32 to vector<240x48xf32>
    %140 = arith.select %138, %139, %136 : vector<240x48xi1>, vector<240x48xf32>
    %141 = arith.truncf %140 : vector<240x48xf32> to vector<240x48xbf16>
    %cst_59 = arith.constant dense<0.000000e+00> : vector<240x96xf32>
    %142 = tpu.matmul %141, %131, %cst_59 {dimension_numbers = #tpu.dot_dimension_numbers<[1], [0], [0], [1], [0, 0, 1, 1], [], []>} : vector<240x48xbf16>, vector<48x96xbf16>, vector<240x96xf32> -> vector<240x96xf32>
    %143 = arith.addf %135, %142 : vector<240x96xf32>
    %c239_i32_60 = arith.constant 239 : i32
    %144 = tpu.dynamic_rotate %130 by %c239_i32_60 dim 0 : vector<240x48xf32>, i32 -> vector<240x48xf32>
    %cst_61 = arith.constant 0.000000e+00 : f32
    %145 = vector.shape_cast %20 : vector<240x1xi1> to vector<240x1xi1>
    %146 = vector.broadcast %145 : vector<240x1xi1> to vector<240x48xi1>
    %147 = vector.broadcast %cst_61 : f32 to vector<240x48xf32>
    %148 = arith.select %146, %147, %144 : vector<240x48xi1>, vector<240x48xf32>
    %149 = arith.truncf %148 : vector<240x48xf32> to vector<240x48xbf16>
    %cst_62 = arith.constant dense<0.000000e+00> : vector<240x96xf32>
    %150 = tpu.matmul %149, %133, %cst_62 {dimension_numbers = #tpu.dot_dimension_numbers<[1], [0], [0], [1], [0, 0, 1, 1], [], []>} : vector<240x48xbf16>, vector<48x96xbf16>, vector<240x96xf32> -> vector<240x96xf32>
    %151 = arith.addf %143, %150 : vector<240x96xf32>
    %c6 = arith.constant 6 : index
    %c0_63 = arith.constant 0 : index
    %152 = vector.load %arg6[%c6, %c0_63] : memref<16x192xf32, #tpu.memory_space<vmem>>, vector<1x96xf32>
    %153 = vector.broadcast %152 : vector<1x96xf32> to vector<240x96xf32>
    %154 = arith.addf %151, %153 : vector<240x96xf32>
    %cst_64 = arith.constant 0.000000e+00 : f32
    %155 = vector.broadcast %cst_64 : f32 to vector<240x96xf32>
    %156 = arith.maximumf %154, %155 : vector<240x96xf32>
    %c432 = arith.constant 432 : index
    %c0_65 = arith.constant 0 : index
    %157 = vector.load %arg3[%c432, %c0_65] : memref<720x96xbf16, #tpu.memory_space<vmem>>, vector<96x96xbf16>
    %c528 = arith.constant 528 : index
    %c0_66 = arith.constant 0 : index
    %158 = vector.load %arg3[%c528, %c0_66] : memref<720x96xbf16, #tpu.memory_space<vmem>>, vector<96x96xbf16>
    %c624 = arith.constant 624 : index
    %c0_67 = arith.constant 0 : index
    %159 = vector.load %arg3[%c624, %c0_67] : memref<720x96xbf16, #tpu.memory_space<vmem>>, vector<96x96xbf16>
    %160 = arith.truncf %156 : vector<240x96xf32> to vector<240x96xbf16>
    %cst_68 = arith.constant dense<0.000000e+00> : vector<240x96xf32>
    %161 = tpu.matmul %160, %158, %cst_68 {dimension_numbers = #tpu.dot_dimension_numbers<[1], [0], [0], [1], [0, 0, 1, 1], [], []>} : vector<240x96xbf16>, vector<96x96xbf16>, vector<240x96xf32> -> vector<240x96xf32>
    %c1_i32_69 = arith.constant 1 : i32
    %162 = tpu.dynamic_rotate %156 by %c1_i32_69 dim 0 : vector<240x96xf32>, i32 -> vector<240x96xf32>
    %cst_70 = arith.constant 0.000000e+00 : f32
    %163 = vector.shape_cast %18 : vector<240x1xi1> to vector<240x1xi1>
    %164 = vector.broadcast %163 : vector<240x1xi1> to vector<240x96xi1>
    %165 = vector.broadcast %cst_70 : f32 to vector<240x96xf32>
    %166 = arith.select %164, %165, %162 : vector<240x96xi1>, vector<240x96xf32>
    %167 = arith.truncf %166 : vector<240x96xf32> to vector<240x96xbf16>
    %cst_71 = arith.constant dense<0.000000e+00> : vector<240x96xf32>
    %168 = tpu.matmul %167, %157, %cst_71 {dimension_numbers = #tpu.dot_dimension_numbers<[1], [0], [0], [1], [0, 0, 1, 1], [], []>} : vector<240x96xbf16>, vector<96x96xbf16>, vector<240x96xf32> -> vector<240x96xf32>
    %169 = arith.addf %161, %168 : vector<240x96xf32>
    %c239_i32_72 = arith.constant 239 : i32
    %170 = tpu.dynamic_rotate %156 by %c239_i32_72 dim 0 : vector<240x96xf32>, i32 -> vector<240x96xf32>
    %cst_73 = arith.constant 0.000000e+00 : f32
    %171 = vector.shape_cast %20 : vector<240x1xi1> to vector<240x1xi1>
    %172 = vector.broadcast %171 : vector<240x1xi1> to vector<240x96xi1>
    %173 = vector.broadcast %cst_73 : f32 to vector<240x96xf32>
    %174 = arith.select %172, %173, %170 : vector<240x96xi1>, vector<240x96xf32>
    %175 = arith.truncf %174 : vector<240x96xf32> to vector<240x96xbf16>
    %cst_74 = arith.constant dense<0.000000e+00> : vector<240x96xf32>
    %176 = tpu.matmul %175, %159, %cst_74 {dimension_numbers = #tpu.dot_dimension_numbers<[1], [0], [0], [1], [0, 0, 1, 1], [], []>} : vector<240x96xbf16>, vector<96x96xbf16>, vector<240x96xf32> -> vector<240x96xf32>
    %177 = arith.addf %169, %176 : vector<240x96xf32>
    %c7 = arith.constant 7 : index
    %c0_75 = arith.constant 0 : index
    %178 = vector.load %arg6[%c7, %c0_75] : memref<16x192xf32, #tpu.memory_space<vmem>>, vector<1x96xf32>
    %179 = vector.broadcast %178 : vector<1x96xf32> to vector<240x96xf32>
    %180 = arith.addf %177, %179 : vector<240x96xf32>
    %cst_76 = arith.constant 0.000000e+00 : f32
    %181 = vector.broadcast %cst_76 : f32 to vector<240x96xf32>
    %182 = arith.maximumf %180, %181 : vector<240x96xf32>
    %c0_77 = arith.constant 0 : index
    %c0_78 = arith.constant 0 : index
    %183 = vector.load %arg4[%c0_77, %c0_78] : memref<864x192xbf16, #tpu.memory_space<vmem>>, vector<96x192xbf16>
    %c96_79 = arith.constant 96 : index
    %c0_80 = arith.constant 0 : index
    %184 = vector.load %arg4[%c96_79, %c0_80] : memref<864x192xbf16, #tpu.memory_space<vmem>>, vector<96x192xbf16>
    %c192_81 = arith.constant 192 : index
    %c0_82 = arith.constant 0 : index
    %185 = vector.load %arg4[%c192_81, %c0_82] : memref<864x192xbf16, #tpu.memory_space<vmem>>, vector<96x192xbf16>
    %186 = arith.truncf %182 : vector<240x96xf32> to vector<240x96xbf16>
    %cst_83 = arith.constant dense<0.000000e+00> : vector<240x192xf32>
    %187 = tpu.matmul %186, %184, %cst_83 {dimension_numbers = #tpu.dot_dimension_numbers<[1], [0], [0], [1], [0, 0, 1, 1], [], []>} : vector<240x96xbf16>, vector<96x192xbf16>, vector<240x192xf32> -> vector<240x192xf32>
    %c1_i32_84 = arith.constant 1 : i32
    %188 = tpu.dynamic_rotate %182 by %c1_i32_84 dim 0 : vector<240x96xf32>, i32 -> vector<240x96xf32>
    %cst_85 = arith.constant 0.000000e+00 : f32
    %189 = vector.shape_cast %18 : vector<240x1xi1> to vector<240x1xi1>
    %190 = vector.broadcast %189 : vector<240x1xi1> to vector<240x96xi1>
    %191 = vector.broadcast %cst_85 : f32 to vector<240x96xf32>
    %192 = arith.select %190, %191, %188 : vector<240x96xi1>, vector<240x96xf32>
    %193 = arith.truncf %192 : vector<240x96xf32> to vector<240x96xbf16>
    %cst_86 = arith.constant dense<0.000000e+00> : vector<240x192xf32>
    %194 = tpu.matmul %193, %183, %cst_86 {dimension_numbers = #tpu.dot_dimension_numbers<[1], [0], [0], [1], [0, 0, 1, 1], [], []>} : vector<240x96xbf16>, vector<96x192xbf16>, vector<240x192xf32> -> vector<240x192xf32>
    %195 = arith.addf %187, %194 : vector<240x192xf32>
    %c239_i32_87 = arith.constant 239 : i32
    %196 = tpu.dynamic_rotate %182 by %c239_i32_87 dim 0 : vector<240x96xf32>, i32 -> vector<240x96xf32>
    %cst_88 = arith.constant 0.000000e+00 : f32
    %197 = vector.shape_cast %20 : vector<240x1xi1> to vector<240x1xi1>
    %198 = vector.broadcast %197 : vector<240x1xi1> to vector<240x96xi1>
    %199 = vector.broadcast %cst_88 : f32 to vector<240x96xf32>
    %200 = arith.select %198, %199, %196 : vector<240x96xi1>, vector<240x96xf32>
    %201 = arith.truncf %200 : vector<240x96xf32> to vector<240x96xbf16>
    %cst_89 = arith.constant dense<0.000000e+00> : vector<240x192xf32>
    %202 = tpu.matmul %201, %185, %cst_89 {dimension_numbers = #tpu.dot_dimension_numbers<[1], [0], [0], [1], [0, 0, 1, 1], [], []>} : vector<240x96xbf16>, vector<96x192xbf16>, vector<240x192xf32> -> vector<240x192xf32>
    %203 = arith.addf %195, %202 : vector<240x192xf32>
    %c8 = arith.constant 8 : index
    %c0_90 = arith.constant 0 : index
    %204 = vector.load %arg6[%c8, %c0_90] : memref<16x192xf32, #tpu.memory_space<vmem>>, vector<1x192xf32>
    %205 = vector.broadcast %204 : vector<1x192xf32> to vector<240x192xf32>
    %206 = arith.addf %203, %205 : vector<240x192xf32>
    %cst_91 = arith.constant 0.000000e+00 : f32
    %207 = vector.broadcast %cst_91 : f32 to vector<240x192xf32>
    %208 = arith.maximumf %206, %207 : vector<240x192xf32>
    %c288_92 = arith.constant 288 : index
    %c0_93 = arith.constant 0 : index
    %209 = vector.load %arg4[%c288_92, %c0_93] : memref<864x192xbf16, #tpu.memory_space<vmem>>, vector<192x192xbf16>
    %c480 = arith.constant 480 : index
    %c0_94 = arith.constant 0 : index
    %210 = vector.load %arg4[%c480, %c0_94] : memref<864x192xbf16, #tpu.memory_space<vmem>>, vector<192x192xbf16>
    %c672 = arith.constant 672 : index
    %c0_95 = arith.constant 0 : index
    %211 = vector.load %arg4[%c672, %c0_95] : memref<864x192xbf16, #tpu.memory_space<vmem>>, vector<192x192xbf16>
    %212 = arith.truncf %208 : vector<240x192xf32> to vector<240x192xbf16>
    %cst_96 = arith.constant dense<0.000000e+00> : vector<240x192xf32>
    %213 = tpu.matmul %212, %210, %cst_96 {dimension_numbers = #tpu.dot_dimension_numbers<[1], [0], [0], [1], [0, 0, 1, 1], [], []>} : vector<240x192xbf16>, vector<192x192xbf16>, vector<240x192xf32> -> vector<240x192xf32>
    %c1_i32_97 = arith.constant 1 : i32
    %214 = tpu.dynamic_rotate %208 by %c1_i32_97 dim 0 : vector<240x192xf32>, i32 -> vector<240x192xf32>
    %cst_98 = arith.constant 0.000000e+00 : f32
    %215 = vector.shape_cast %18 : vector<240x1xi1> to vector<240x1xi1>
    %216 = vector.broadcast %215 : vector<240x1xi1> to vector<240x192xi1>
    %217 = vector.broadcast %cst_98 : f32 to vector<240x192xf32>
    %218 = arith.select %216, %217, %214 : vector<240x192xi1>, vector<240x192xf32>
    %219 = arith.truncf %218 : vector<240x192xf32> to vector<240x192xbf16>
    %cst_99 = arith.constant dense<0.000000e+00> : vector<240x192xf32>
    %220 = tpu.matmul %219, %209, %cst_99 {dimension_numbers = #tpu.dot_dimension_numbers<[1], [0], [0], [1], [0, 0, 1, 1], [], []>} : vector<240x192xbf16>, vector<192x192xbf16>, vector<240x192xf32> -> vector<240x192xf32>
    %221 = arith.addf %213, %220 : vector<240x192xf32>
    %c239_i32_100 = arith.constant 239 : i32
    %222 = tpu.dynamic_rotate %208 by %c239_i32_100 dim 0 : vector<240x192xf32>, i32 -> vector<240x192xf32>
    %cst_101 = arith.constant 0.000000e+00 : f32
    %223 = vector.shape_cast %20 : vector<240x1xi1> to vector<240x1xi1>
    %224 = vector.broadcast %223 : vector<240x1xi1> to vector<240x192xi1>
    %225 = vector.broadcast %cst_101 : f32 to vector<240x192xf32>
    %226 = arith.select %224, %225, %222 : vector<240x192xi1>, vector<240x192xf32>
    %227 = arith.truncf %226 : vector<240x192xf32> to vector<240x192xbf16>
    %cst_102 = arith.constant dense<0.000000e+00> : vector<240x192xf32>
    %228 = tpu.matmul %227, %211, %cst_102 {dimension_numbers = #tpu.dot_dimension_numbers<[1], [0], [0], [1], [0, 0, 1, 1], [], []>} : vector<240x192xbf16>, vector<192x192xbf16>, vector<240x192xf32> -> vector<240x192xf32>
    %229 = arith.addf %221, %228 : vector<240x192xf32>
    %c9 = arith.constant 9 : index
    %c0_103 = arith.constant 0 : index
    %230 = vector.load %arg6[%c9, %c0_103] : memref<16x192xf32, #tpu.memory_space<vmem>>, vector<1x192xf32>
    %231 = vector.broadcast %230 : vector<1x192xf32> to vector<240x192xf32>
    %232 = arith.addf %229, %231 : vector<240x192xf32>
    %cst_104 = arith.constant 0.000000e+00 : f32
    %233 = vector.broadcast %cst_104 : f32 to vector<240x192xf32>
    %234 = arith.maximumf %232, %233 : vector<240x192xf32>
    %235 = tpu.iota {dimensions = array<i32: 0>} : vector<4x240xi32>
    %236 = tpu.iota {dimensions = array<i32: 1>} : vector<4x240xi32>
    %c60_i32_105 = arith.constant 60 : i32
    %237 = vector.broadcast %c60_i32_105 : i32 to vector<4x240xi32>
    %238 = arith.muli %235, %237 : vector<4x240xi32>
    %239 = arith.cmpi sge, %236, %238 : vector<4x240xi32>
    %c60_i32_106 = arith.constant 60 : i32
    %240 = vector.broadcast %c60_i32_106 : i32 to vector<4x240xi32>
    %241 = arith.addi %238, %240 : vector<4x240xi32>
    %242 = arith.cmpi slt, %236, %241 : vector<4x240xi32>
    %243 = arith.andi %239, %242 : vector<4x240xi1>
    %cst_107 = arith.constant 0.0166666675 : f32
    %cst_108 = arith.constant 0.000000e+00 : f32
    %244 = vector.broadcast %cst_107 : f32 to vector<4x240xf32>
    %245 = vector.broadcast %cst_108 : f32 to vector<4x240xf32>
    %246 = arith.select %243, %244, %245 : vector<4x240xi1>, vector<4x240xf32>
    %cst_109 = arith.constant dense<0.000000e+00> : vector<4x192xf32>
    %247 = tpu.matmul %246, %234, %cst_109 {dimension_numbers = #tpu.dot_dimension_numbers<[1], [0], [0], [1], [0, 0, 1, 1], [], []>} : vector<4x240xf32>, vector<240x192xf32>, vector<4x192xf32> -> vector<4x192xf32>
    %248 = arith.truncf %247 : vector<4x192xf32> to vector<4x192xbf16>
    %c0_110 = arith.constant 0 : index
    %c0_111 = arith.constant 0 : index
    %249 = vector.load %arg5[%c0_110, %c0_111] : memref<336x64xbf16, #tpu.memory_space<vmem>>, vector<192x64xbf16>
    %cst_112 = arith.constant dense<0.000000e+00> : vector<4x64xf32>
    %250 = tpu.matmul %248, %249, %cst_112 {dimension_numbers = #tpu.dot_dimension_numbers<[1], [0], [0], [1], [0, 0, 1, 1], [], []>} : vector<4x192xbf16>, vector<192x64xbf16>, vector<4x64xf32> -> vector<4x64xf32>
    %c0_113 = arith.constant 0 : index
    %c0_114 = arith.constant 0 : index
    %251 = vector.load %arg1[%c0_113, %c0_114] : memref<4x16xbf16, #tpu.memory_space<vmem>>, vector<4x16xbf16>
    %c192_115 = arith.constant 192 : index
    %c0_116 = arith.constant 0 : index
    %252 = vector.load %arg5[%c192_115, %c0_116] : memref<336x64xbf16, #tpu.memory_space<vmem>>, vector<16x64xbf16>
    %cst_117 = arith.constant dense<0.000000e+00> : vector<4x64xf32>
    %253 = tpu.matmul %251, %252, %cst_117 {dimension_numbers = #tpu.dot_dimension_numbers<[1], [0], [0], [1], [0, 0, 1, 1], [], []>} : vector<4x16xbf16>, vector<16x64xbf16>, vector<4x64xf32> -> vector<4x64xf32>
    %254 = arith.addf %250, %253 : vector<4x64xf32>
    %c10 = arith.constant 10 : index
    %c0_118 = arith.constant 0 : index
    %255 = vector.load %arg6[%c10, %c0_118] : memref<16x192xf32, #tpu.memory_space<vmem>>, vector<1x64xf32>
    %256 = vector.broadcast %255 : vector<1x64xf32> to vector<4x64xf32>
    %257 = arith.addf %254, %256 : vector<4x64xf32>
    %cst_119 = arith.constant 0.000000e+00 : f32
    %258 = vector.broadcast %cst_119 : f32 to vector<4x64xf32>
    %259 = arith.maximumf %257, %258 : vector<4x64xf32>
    %260 = arith.truncf %259 : vector<4x64xf32> to vector<4x64xbf16>
    %c208 = arith.constant 208 : index
    %c0_120 = arith.constant 0 : index
    %261 = vector.load %arg5[%c208, %c0_120] : memref<336x64xbf16, #tpu.memory_space<vmem>>, vector<64x64xbf16>
    %cst_121 = arith.constant dense<0.000000e+00> : vector<4x64xf32>
    %262 = tpu.matmul %260, %261, %cst_121 {dimension_numbers = #tpu.dot_dimension_numbers<[1], [0], [0], [1], [0, 0, 1, 1], [], []>} : vector<4x64xbf16>, vector<64x64xbf16>, vector<4x64xf32> -> vector<4x64xf32>
    %c11 = arith.constant 11 : index
    %c0_122 = arith.constant 0 : index
    %263 = vector.load %arg6[%c11, %c0_122] : memref<16x192xf32, #tpu.memory_space<vmem>>, vector<1x64xf32>
    %264 = vector.broadcast %263 : vector<1x64xf32> to vector<4x64xf32>
    %265 = arith.addf %262, %264 : vector<4x64xf32>
    %cst_123 = arith.constant 0.000000e+00 : f32
    %266 = vector.broadcast %cst_123 : f32 to vector<4x64xf32>
    %267 = arith.maximumf %265, %266 : vector<4x64xf32>
    %268 = arith.truncf %267 : vector<4x64xf32> to vector<4x64xbf16>
    %c272 = arith.constant 272 : index
    %c0_124 = arith.constant 0 : index
    %269 = vector.load %arg5[%c272, %c0_124] : memref<336x64xbf16, #tpu.memory_space<vmem>>, vector<64x1xbf16>
    %cst_125 = arith.constant dense<0.000000e+00> : vector<4x1xf32>
    %270 = tpu.matmul %268, %269, %cst_125 {dimension_numbers = #tpu.dot_dimension_numbers<[1], [0], [0], [1], [0, 0, 1, 1], [], []>} : vector<4x64xbf16>, vector<64x1xbf16>, vector<4x1xf32> -> vector<4x1xf32>
    %c12 = arith.constant 12 : index
    %c0_126 = arith.constant 0 : index
    %271 = vector.load %arg6[%c12, %c0_126] : memref<16x192xf32, #tpu.memory_space<vmem>>, vector<1x1xf32>
    %272 = vector.broadcast %271 : vector<1x1xf32> to vector<4x1xf32>
    %273 = arith.addf %270, %272 : vector<4x1xf32>
    %274 = arith.negf %273 : vector<4x1xf32>
    %275 = math.exp %274 : vector<4x1xf32>
    %cst_127 = arith.constant 1.000000e+00 : f32
    %276 = vector.broadcast %cst_127 : f32 to vector<4x1xf32>
    %277 = arith.addf %276, %275 : vector<4x1xf32>
    %278 = arith.divf %276, %277 : vector<4x1xf32>
    %c0_128 = arith.constant 0 : index
    %c0_129 = arith.constant 0 : index
    %279 = vector.load %arg7[%c0_128, %c0_129] : memref<4x1xf32, #tpu.memory_space<vmem>>, vector<4x1xf32>
    tpu.vector_store %arg7[%c0_128, %c0_129], %278 {strides = array<i32>} : memref<4x1xf32, #tpu.memory_space<vmem>>, vector<4x1xf32>,
    return
  }
}

</mosaic_0001>

<llo_original>
// kernel: tpu_custom_call.1
$region0: #{tpu_custom_call.1}
  #allocation0 [shape = 'u32[]', space=smem, size = 0x4, offset = 0x4, fixed_abs, tag = 'smem constant byte address 0x4 - core index']
  #allocation1 [shape = 'u32[72,128]{1,0:T(1,128)}', space=vmem, size = 0x9000, scoped, tag = 'internal scratch']
  %s0 = inlined_call_operand.vmem [shape: bf16[240,6], index: 0, kind: input, shape index: {}]
  %s1 = inlined_call_operand.vmem [shape: bf16[4,16], index: 1, kind: input, shape index: {}]
  %s2 = inlined_call_operand.vmem [shape: bf16[6,24], index: 2, kind: input, shape index: {}]
  %s3 = inlined_call_operand.vmem [shape: bf16[720,96], index: 3, kind: input, shape index: {}]
  %s4 = inlined_call_operand.vmem [shape: bf16[864,192], index: 4, kind: input, shape index: {}]
  %s5 = inlined_call_operand.vmem [shape: bf16[336,64], index: 5, kind: input, shape index: {}]
  %s6 = inlined_call_operand.vmem [shape: f32[16,192], index: 6, kind: input, shape index: {}]
  %s7 = inlined_call_operand.vmem [shape: f32[4,1], index: 7, kind: output, shape index: {}]
  %s8 = sld [smem:[#allocation0]]
  $region38: #{tpu_custom_call.1} parent=0
    _
  %s10 = ssub.s32 1, %s8
  %s11 = scalar_select 0, %s10, %s8
  // Predicated region
  $region2: #{tpu_custom_call.1} parent=0 // pred_check
    _
  $region3: #{tpu_custom_call.1} parent=0 // pred_check_branch
    %13 = sbr.rel (0) target = $region5
  $region4: #{tpu_custom_call.1} parent=0 // pred_region
    _
  $region5: #{tpu_custom_call.1} parent=0 // pred_fallthru
    _
  // Predicated region
  $region6: #{tpu_custom_call.1} parent=0 // pred_check
    _
  $region7: #{tpu_custom_call.1} parent=0 // pred_check_branch
    %15 = sbr.rel (0) target = $region9
  $region8: #{tpu_custom_call.1} parent=0 // pred_region
    _
  $region9: #{tpu_custom_call.1} parent=0 // pred_fallthru
    _
  // Predicated region
  $region10: #{tpu_custom_call.1} parent=0 // pred_check
    _
  $region11: #{tpu_custom_call.1} parent=0 // pred_check_branch
    %17 = sbr.rel (0) target = $region13
  $region12: #{tpu_custom_call.1} parent=0 // pred_region
    _
  $region13: #{tpu_custom_call.1} parent=0 // pred_fallthru
    _
  // Predicated region
  $region14: #{tpu_custom_call.1} parent=0 // pred_check
    _
  $region15: #{tpu_custom_call.1} parent=0 // pred_check_branch
    %19 = sbr.rel (0) target = $region17
  $region16: #{tpu_custom_call.1} parent=0 // pred_region
    _
  $region17: #{tpu_custom_call.1} parent=0 // pred_fallthru
    _
  // Predicated region
  $region18: #{tpu_custom_call.1} parent=0 // pred_check
    _
  $region19: #{tpu_custom_call.1} parent=0 // pred_check_branch
    %21 = sbr.rel (0) target = $region21
  $region20: #{tpu_custom_call.1} parent=0 // pred_region
    _
  $region21: #{tpu_custom_call.1} parent=0 // pred_fallthru
    _
  // Predicated region
  $region22: #{tpu_custom_call.1} parent=0 // pred_check
    _
  $region23: #{tpu_custom_call.1} parent=0 // pred_check_branch
    %23 = sbr.rel (0) target = $region25
  $region24: #{tpu_custom_call.1} parent=0 // pred_region
    _
  $region25: #{tpu_custom_call.1} parent=0 // pred_fallthru
    _
  // Predicated region
  $region26: #{tpu_custom_call.1} parent=0 // pred_check
    _
  $region27: #{tpu_custom_call.1} parent=0 // pred_check_branch
    %25 = sbr.rel (0) target = $region29
  $region28: #{tpu_custom_call.1} parent=0 // pred_region
    _
  $region29: #{tpu_custom_call.1} parent=0 // pred_fallthru
    _
  %v27 = vlaneseq
  %v28 = vshrl.u32 %v27, 7
  %v29 = vadd.s32 %v28, 8
  %v30 = vadd.s32 %v28, 16
  %v31 = vadd.s32 %v28, 24
  %v32 = vadd.s32 %v28, 32
  %v33 = vadd.s32 %v28, 40
  %v34 = vadd.s32 %v28, 48
  %v35 = vadd.s32 %v28, 56
  %v36 = vadd.s32 %v28, 64
  %v37 = vadd.s32 %v28, 72
  %v38 = vadd.s32 %v28, 80
  %v39 = vadd.s32 %v28, 88
  %v40 = vadd.s32 %v28, 96
  %v41 = vadd.s32 %v28, 104
  %v42 = vadd.s32 %v28, 112
  %v43 = vadd.s32 %v28, 120
  %v44 = vadd.s32 %v28, 128
  %v45 = vadd.s32 %v28, 136
  %v46 = vadd.s32 %v28, 144
  %v47 = vadd.s32 %v28, 152
  %v48 = vadd.s32 %v28, 160
  %v49 = vadd.s32 %v28, 168
  %v50 = vadd.s32 %v28, 176
  %v51 = vadd.s32 %v28, 184
  %v52 = vadd.s32 %v28, 192
  %v53 = vadd.s32 %v28, 200
  %v54 = vadd.s32 %v28, 208
  %v55 = vadd.s32 %v28, 216
  %v56 = vadd.s32 %v28, 224
  %v57 = vadd.s32 %v28, 232
  %vm58 = vcmp.lt.s32.totalorder %v28, 0
  %v59 = vsub.s32 0, %v28
  %v60 = vsel %vm58, %v59, %v28
  %v61 = vand.u32 %v60, 65535
  %v62 = vshrl.u32 %v60, 16
  %v64 = vmul.u32 %v61, 34953
  %v65 = vmul.u32 %v61, 34952
  %v66 = vmul.u32 %v62, 34953
  %v67 = vmul.u32 %v62, 34952
  %v68 = vshll.u32 %v65, 16
  %v69 = vshrl.u32 %v65, 16
  %v70 = vshll.u32 %v66, 16
  %v71 = vshrl.u32 %v66, 16
  %vm72 = vc.u32 %v64, %v68
  %v73 = vsel %vm72, 1, 0
  %v74 = vadd.s32 %v64, %v68
  %v75 = vadd.s32 %v67, %v73
  %vm76 = vc.u32 %v74, %v70
  %v77 = vsel %vm76, 1, 0
  %v78 = vadd.s32 %v74, %v70
  %v79 = vadd.s32 %v75, %v77
  %v80 = vadd.s32 %v79, %v69
  %v81 = vadd.s32 %v80, %v71
  %v82 = vshrl.u32 %v81, 5
  %v83 = vmul.u32 %v82, 60
  %v84 = vsub.s32 %v60, %v83
  %v85 = vsub.s32 0, %v84
  %v86 = vsel %vm58, %v85, %v84
  %vm87 = vcmp.lt.s32.totalorder %v29, 0
  %v88 = vsub.s32 0, %v29
  %v89 = vsel %vm87, %v88, %v29
  %v90 = vand.u32 %v89, 65535
  %v91 = vshrl.u32 %v89, 16
  %v93 = vmul.u32 %v90, 34953
  %v94 = vmul.u32 %v90, 34952
  %v95 = vmul.u32 %v91, 34953
  %v96 = vmul.u32 %v91, 34952
  %v97 = vshll.u32 %v94, 16
  %v98 = vshrl.u32 %v94, 16
  %v99 = vshll.u32 %v95, 16
  %v100 = vshrl.u32 %v95, 16
  %vm101 = vc.u32 %v93, %v97
  %v102 = vsel %vm101, 1, 0
  %v103 = vadd.s32 %v93, %v97
  %v104 = vadd.s32 %v96, %v102
  %vm105 = vc.u32 %v103, %v99
  %v106 = vsel %vm105, 1, 0
  %v107 = vadd.s32 %v103, %v99
  %v108 = vadd.s32 %v104, %v106
  %v109 = vadd.s32 %v108, %v98
  %v110 = vadd.s32 %v109, %v100
  %v111 = vshrl.u32 %v110, 5
  %v112 = vmul.u32 %v111, 60
  %v113 = vsub.s32 %v89, %v112
  %v114 = vsub.s32 0, %v113
  %v115 = vsel %vm87, %v114, %v113
  %vm116 = vcmp.lt.s32.totalorder %v30, 0
  %v117 = vsub.s32 0, %v30
  %v118 = vsel %vm116, %v117, %v30
  %v119 = vand.u32 %v118, 65535
  %v120 = vshrl.u32 %v118, 16
  %v122 = vmul.u32 %v119, 34953
  %v123 = vmul.u32 %v119, 34952
  %v124 = vmul.u32 %v120, 34953
  %v125 = vmul.u32 %v120, 34952
  %v126 = vshll.u32 %v123, 16
  %v127 = vshrl.u32 %v123, 16
  %v128 = vshll.u32 %v124, 16
  %v129 = vshrl.u32 %v124, 16
  %vm130 = vc.u32 %v122, %v126
  %v131 = vsel %vm130, 1, 0
  %v132 = vadd.s32 %v122, %v126
  %v133 = vadd.s32 %v125, %v131
  %vm134 = vc.u32 %v132, %v128
  %v135 = vsel %vm134, 1, 0
  %v136 = vadd.s32 %v132, %v128
  %v137 = vadd.s32 %v133, %v135
  %v138 = vadd.s32 %v137, %v127
  %v139 = vadd.s32 %v138, %v129
  %v140 = vshrl.u32 %v139, 5
  %v141 = vmul.u32 %v140, 60
  %v142 = vsub.s32 %v118, %v141
  %v143 = vsub.s32 0, %v142
  %v144 = vsel %vm116, %v143, %v142
  %vm145 = vcmp.lt.s32.totalorder %v31, 0
  %v146 = vsub.s32 0, %v31
  %v147 = vsel %vm145, %v146, %v31
  %v148 = vand.u32 %v147, 65535
  %v149 = vshrl.u32 %v147, 16
  %v151 = vmul.u32 %v148, 34953
  %v152 = vmul.u32 %v148, 34952
  %v153 = vmul.u32 %v149, 34953
  %v154 = vmul.u32 %v149, 34952
  %v155 = vshll.u32 %v152, 16
  %v156 = vshrl.u32 %v152, 16
  %v157 = vshll.u32 %v153, 16
  %v158 = vshrl.u32 %v153, 16
  %vm159 = vc.u32 %v151, %v155
  %v160 = vsel %vm159, 1, 0
  %v161 = vadd.s32 %v151, %v155
  %v162 = vadd.s32 %v154, %v160
  %vm163 = vc.u32 %v161, %v157
  %v164 = vsel %vm163, 1, 0
  %v165 = vadd.s32 %v161, %v157
  %v166 = vadd.s32 %v162, %v164
  %v167 = vadd.s32 %v166, %v156
  %v168 = vadd.s32 %v167, %v158
  %v169 = vshrl.u32 %v168, 5
  %v170 = vmul.u32 %v169, 60
  %v171 = vsub.s32 %v147, %v170
  %v172 = vsub.s32 0, %v171
  %v173 = vsel %vm145, %v172, %v171
  %vm174 = vcmp.lt.s32.totalorder %v32, 0
  %v175 = vsub.s32 0, %v32
  %v176 = vsel %vm174, %v175, %v32
  %v177 = vand.u32 %v176, 65535
  %v178 = vshrl.u32 %v176, 16
  %v180 = vmul.u32 %v177, 34953
  %v181 = vmul.u32 %v177, 34952
  %v182 = vmul.u32 %v178, 34953
  %v183 = vmul.u32 %v178, 34952
  %v184 = vshll.u32 %v181, 16
  %v185 = vshrl.u32 %v181, 16
  %v186 = vshll.u32 %v182, 16
  %v187 = vshrl.u32 %v182, 16
  %vm188 = vc.u32 %v180, %v184
  %v189 = vsel %vm188, 1, 0
  %v190 = vadd.s32 %v180, %v184
  %v191 = vadd.s32 %v183, %v189
  %vm192 = vc.u32 %v190, %v186
  %v193 = vsel %vm192, 1, 0
  %v194 = vadd.s32 %v190, %v186
  %v195 = vadd.s32 %v191, %v193
  %v196 = vadd.s32 %v195, %v185
  %v197 = vadd.s32 %v196, %v187
  %v198 = vshrl.u32 %v197, 5
  %v199 = vmul.u32 %v198, 60
  %v200 = vsub.s32 %v176, %v199
  %v201 = vsub.s32 0, %v200
  %v202 = vsel %vm174, %v201, %v200
  %vm203 = vcmp.lt.s32.totalorder %v33, 0
  %v204 = vsub.s32 0, %v33
  %v205 = vsel %vm203, %v204, %v33
  %v206 = vand.u32 %v205, 65535
  %v207 = vshrl.u32 %v205, 16
  %v209 = vmul.u32 %v206, 34953
  %v210 = vmul.u32 %v206, 34952
  %v211 = vmul.u32 %v207, 34953
  %v212 = vmul.u32 %v207, 34952
  %v213 = vshll.u32 %v210, 16
  %v214 = vshrl.u32 %v210, 16
  %v215 = vshll.u32 %v211, 16
  %v216 = vshrl.u32 %v211, 16
  %vm217 = vc.u32 %v209, %v213
  %v218 = vsel %vm217, 1, 0
  %v219 = vadd.s32 %v209, %v213
  %v220 = vadd.s32 %v212, %v218
  %vm221 = vc.u32 %v219, %v215
  %v222 = vsel %vm221, 1, 0
  %v223 = vadd.s32 %v219, %v215
  %v224 = vadd.s32 %v220, %v222
  %v225 = vadd.s32 %v224, %v214
  %v226 = vadd.s32 %v225, %v216
  %v227 = vshrl.u32 %v226, 5
  %v228 = vmul.u32 %v227, 60
  %v229 = vsub.s32 %v205, %v228
  %v230 = vsub.s32 0, %v229
  %v231 = vsel %vm203, %v230, %v229
  %vm232 = vcmp.lt.s32.totalorder %v34, 0
  %v233 = vsub.s32 0, %v34
  %v234 = vsel %vm232, %v233, %v34
  %v235 = vand.u32 %v234, 65535
  %v236 = vshrl.u32 %v234, 16
  %v238 = vmul.u32 %v235, 34953
  %v239 = vmul.u32 %v235, 34952
  %v240 = vmul.u32 %v236, 34953
  %v241 = vmul.u32 %v236, 34952
  %v242 = vshll.u32 %v239, 16
  %v243 = vshrl.u32 %v239, 16
  %v244 = vshll.u32 %v240, 16
  %v245 = vshrl.u32 %v240, 16
  %vm246 = vc.u32 %v238, %v242
  %v247 = vsel %vm246, 1, 0
  %v248 = vadd.s32 %v238, %v242
  %v249 = vadd.s32 %v241, %v247
  %vm250 = vc.u32 %v248, %v244
  %v251 = vsel %vm250, 1, 0
  %v252 = vadd.s32 %v248, %v244
  %v253 = vadd.s32 %v249, %v251
  %v254 = vadd.s32 %v253, %v243
  %v255 = vadd.s32 %v254, %v245
  %v256 = vshrl.u32 %v255, 5
  %v257 = vmul.u32 %v256, 60
  %v258 = vsub.s32 %v234, %v257
  %v259 = vsub.s32 0, %v258
  %v260 = vsel %vm232, %v259, %v258
  %vm261 = vcmp.lt.s32.totalorder %v35, 0
  %v262 = vsub.s32 0, %v35
  %v263 = vsel %vm261, %v262, %v35
  %v264 = vand.u32 %v263, 65535
  %v265 = vshrl.u32 %v263, 16
  %v267 = vmul.u32 %v264, 34953
  %v268 = vmul.u32 %v264, 34952
  %v269 = vmul.u32 %v265, 34953
  %v270 = vmul.u32 %v265, 34952
  %v271 = vshll.u32 %v268, 16
  %v272 = vshrl.u32 %v268, 16
  %v273 = vshll.u32 %v269, 16
  %v274 = vshrl.u32 %v269, 16
  %vm275 = vc.u32 %v267, %v271
  %v276 = vsel %vm275, 1, 0
  %v277 = vadd.s32 %v267, %v271
  %v278 = vadd.s32 %v270, %v276
  %vm279 = vc.u32 %v277, %v273
  %v280 = vsel %vm279, 1, 0
  %v281 = vadd.s32 %v277, %v273
  %v282 = vadd.s32 %v278, %v280
  %v283 = vadd.s32 %v282, %v272
  %v284 = vadd.s32 %v283, %v274
  %v285 = vshrl.u32 %v284, 5
  %v286 = vmul.u32 %v285, 60
  %v287 = vsub.s32 %v263, %v286
  %v288 = vsub.s32 0, %v287
  %v289 = vsel %vm261, %v288, %v287
  %vm290 = vcmp.lt.s32.totalorder %v36, 0
  %v291 = vsub.s32 0, %v36
  %v292 = vsel %vm290, %v291, %v36
  %v293 = vand.u32 %v292, 65535
  %v294 = vshrl.u32 %v292, 16
  %v296 = vmul.u32 %v293, 34953
  %v297 = vmul.u32 %v293, 34952
  %v298 = vmul.u32 %v294, 34953
  %v299 = vmul.u32 %v294, 34952
  %v300 = vshll.u32 %v297, 16
  %v301 = vshrl.u32 %v297, 16
  %v302 = vshll.u32 %v298, 16
  %v303 = vshrl.u32 %v298, 16
  %vm304 = vc.u32 %v296, %v300
  %v305 = vsel %vm304, 1, 0
  %v306 = vadd.s32 %v296, %v300
  %v307 = vadd.s32 %v299, %v305
  %vm308 = vc.u32 %v306, %v302
  %v309 = vsel %vm308, 1, 0
  %v310 = vadd.s32 %v306, %v302
  %v311 = vadd.s32 %v307, %v309
  %v312 = vadd.s32 %v311, %v301
  %v313 = vadd.s32 %v312, %v303
  %v314 = vshrl.u32 %v313, 5
  %v315 = vmul.u32 %v314, 60
  %v316 = vsub.s32 %v292, %v315
  %v317 = vsub.s32 0, %v316
  %v318 = vsel %vm290, %v317, %v316
  %vm319 = vcmp.lt.s32.totalorder %v37, 0
  %v320 = vsub.s32 0, %v37
  %v321 = vsel %vm319, %v320, %v37
  %v322 = vand.u32 %v321, 65535
  %v323 = vshrl.u32 %v321, 16
  %v325 = vmul.u32 %v322, 34953
  %v326 = vmul.u32 %v322, 34952
  %v327 = vmul.u32 %v323, 34953
  %v328 = vmul.u32 %v323, 34952
  %v329 = vshll.u32 %v326, 16
  %v330 = vshrl.u32 %v326, 16
  %v331 = vshll.u32 %v327, 16
  %v332 = vshrl.u32 %v327, 16
  %vm333 = vc.u32 %v325, %v329
  %v334 = vsel %vm333, 1, 0
  %v335 = vadd.s32 %v325, %v329
  %v336 = vadd.s32 %v328, %v334
  %vm337 = vc.u32 %v335, %v331
  %v338 = vsel %vm337, 1, 0
  %v339 = vadd.s32 %v335, %v331
  %v340 = vadd.s32 %v336, %v338
  %v341 = vadd.s32 %v340, %v330
  %v342 = vadd.s32 %v341, %v332
  %v343 = vshrl.u32 %v342, 5
  %v344 = vmul.u32 %v343, 60
  %v345 = vsub.s32 %v321, %v344
  %v346 = vsub.s32 0, %v345
  %v347 = vsel %vm319, %v346, %v345
  %vm348 = vcmp.lt.s32.totalorder %v38, 0
  %v349 = vsub.s32 0, %v38
  %v350 = vsel %vm348, %v349, %v38
  %v351 = vand.u32 %v350, 65535
  %v352 = vshrl.u32 %v350, 16
  %v354 = vmul.u32 %v351, 34953
  %v355 = vmul.u32 %v351, 34952
  %v356 = vmul.u32 %v352, 34953
  %v357 = vmul.u32 %v352, 34952
  %v358 = vshll.u32 %v355, 16
  %v359 = vshrl.u32 %v355, 16
  %v360 = vshll.u32 %v356, 16
  %v361 = vshrl.u32 %v356, 16
  %vm362 = vc.u32 %v354, %v358
  %v363 = vsel %vm362, 1, 0
  %v364 = vadd.s32 %v354, %v358
  %v365 = vadd.s32 %v357, %v363
  %vm366 = vc.u32 %v364, %v360
  %v367 = vsel %vm366, 1, 0
  %v368 = vadd.s32 %v364, %v360
  %v369 = vadd.s32 %v365, %v367
  %v370 = vadd.s32 %v369, %v359
  %v371 = vadd.s32 %v370, %v361
  %v372 = vshrl.u32 %v371, 5
  %v373 = vmul.u32 %v372, 60
  %v374 = vsub.s32 %v350, %v373
  %v375 = vsub.s32 0, %v374
  %v376 = vsel %vm348, %v375, %v374
  %vm377 = vcmp.lt.s32.totalorder %v39, 0
  %v378 = vsub.s32 0, %v39
  %v379 = vsel %vm377, %v378, %v39
  %v380 = vand.u32 %v379, 65535
  %v381 = vshrl.u32 %v379, 16
  %v383 = vmul.u32 %v380, 34953
  %v384 = vmul.u32 %v380, 34952
  %v385 = vmul.u32 %v381, 34953
  %v386 = vmul.u32 %v381, 34952
  %v387 = vshll.u32 %v384, 16
  %v388 = vshrl.u32 %v384, 16
  %v389 = vshll.u32 %v385, 16
  %v390 = vshrl.u32 %v385, 16
  %vm391 = vc.u32 %v383, %v387
  %v392 = vsel %vm391, 1, 0
  %v393 = vadd.s32 %v383, %v387
  %v394 = vadd.s32 %v386, %v392
  %vm395 = vc.u32 %v393, %v389
  %v396 = vsel %vm395, 1, 0
  %v397 = vadd.s32 %v393, %v389
  %v398 = vadd.s32 %v394, %v396
  %v399 = vadd.s32 %v398, %v388
  %v400 = vadd.s32 %v399, %v390
  %v401 = vshrl.u32 %v400, 5
  %v402 = vmul.u32 %v401, 60
  %v403 = vsub.s32 %v379, %v402
  %v404 = vsub.s32 0, %v403
  %v405 = vsel %vm377, %v404, %v403
  %vm406 = vcmp.lt.s32.totalorder %v40, 0
  %v407 = vsub.s32 0, %v40
  %v408 = vsel %vm406, %v407, %v40
  %v409 = vand.u32 %v408, 65535
  %v410 = vshrl.u32 %v408, 16
  %v412 = vmul.u32 %v409, 34953
  %v413 = vmul.u32 %v409, 34952
  %v414 = vmul.u32 %v410, 34953
  %v415 = vmul.u32 %v410, 34952
  %v416 = vshll.u32 %v413, 16
  %v417 = vshrl.u32 %v413, 16
  %v418 = vshll.u32 %v414, 16
  %v419 = vshrl.u32 %v414, 16
  %vm420 = vc.u32 %v412, %v416
  %v421 = vsel %vm420, 1, 0
  %v422 = vadd.s32 %v412, %v416
  %v423 = vadd.s32 %v415, %v421
  %vm424 = vc.u32 %v422, %v418
  %v425 = vsel %vm424, 1, 0
  %v426 = vadd.s32 %v422, %v418
  %v427 = vadd.s32 %v423, %v425
  %v428 = vadd.s32 %v427, %v417
  %v429 = vadd.s32 %v428, %v419
  %v430 = vshrl.u32 %v429, 5
  %v431 = vmul.u32 %v430, 60
  %v432 = vsub.s32 %v408, %v431
  %v433 = vsub.s32 0, %v432
  %v434 = vsel %vm406, %v433, %v432
  %vm435 = vcmp.lt.s32.totalorder %v41, 0
  %v436 = vsub.s32 0, %v41
  %v437 = vsel %vm435, %v436, %v41
  %v438 = vand.u32 %v437, 65535
  %v439 = vshrl.u32 %v437, 16
  %v441 = vmul.u32 %v438, 34953
  %v442 = vmul.u32 %v438, 34952
  %v443 = vmul.u32 %v439, 34953
  %v444 = vmul.u32 %v439, 34952
  %v445 = vshll.u32 %v442, 16
  %v446 = vshrl.u32 %v442, 16
  %v447 = vshll.u32 %v443, 16
  %v448 = vshrl.u32 %v443, 16
  %vm449 = vc.u32 %v441, %v445
  %v450 = vsel %vm449, 1, 0
  %v451 = vadd.s32 %v441, %v445
  %v452 = vadd.s32 %v444, %v450
  %vm453 = vc.u32 %v451, %v447
  %v454 = vsel %vm453, 1, 0
  %v455 = vadd.s32 %v451, %v447
  %v456 = vadd.s32 %v452, %v454
  %v457 = vadd.s32 %v456, %v446
  %v458 = vadd.s32 %v457, %v448
  %v459 = vshrl.u32 %v458, 5
  %v460 = vmul.u32 %v459, 60
  %v461 = vsub.s32 %v437, %v460
  %v462 = vsub.s32 0, %v461
  %v463 = vsel %vm435, %v462, %v461
  %vm464 = vcmp.lt.s32.totalorder %v42, 0
  %v465 = vsub.s32 0, %v42
  %v466 = vsel %vm464, %v465, %v42
  %v467 = vand.u32 %v466, 65535
  %v468 = vshrl.u32 %v466, 16
  %v470 = vmul.u32 %v467, 34953
  %v471 = vmul.u32 %v467, 34952
  %v472 = vmul.u32 %v468, 34953
  %v473 = vmul.u32 %v468, 34952
  %v474 = vshll.u32 %v471, 16
  %v475 = vshrl.u32 %v471, 16
  %v476 = vshll.u32 %v472, 16
  %v477 = vshrl.u32 %v472, 16
  %vm478 = vc.u32 %v470, %v474
  %v479 = vsel %vm478, 1, 0
  %v480 = vadd.s32 %v470, %v474
  %v481 = vadd.s32 %v473, %v479
  %vm482 = vc.u32 %v480, %v476
  %v483 = vsel %vm482, 1, 0
  %v484 = vadd.s32 %v480, %v476
  %v485 = vadd.s32 %v481, %v483
  %v486 = vadd.s32 %v485, %v475
  %v487 = vadd.s32 %v486, %v477
  %v488 = vshrl.u32 %v487, 5
  %v489 = vmul.u32 %v488, 60
  %v490 = vsub.s32 %v466, %v489
  %v491 = vsub.s32 0, %v490
  %v492 = vsel %vm464, %v491, %v490
  %vm493 = vcmp.lt.s32.totalorder %v43, 0
  %v494 = vsub.s32 0, %v43
  %v495 = vsel %vm493, %v494, %v43
  %v496 = vand.u32 %v495, 65535
  %v497 = vshrl.u32 %v495, 16
  %v499 = vmul.u32 %v496, 34953
  %v500 = vmul.u32 %v496, 34952
  %v501 = vmul.u32 %v497, 34953
  %v502 = vmul.u32 %v497, 34952
  %v503 = vshll.u32 %v500, 16
  %v504 = vshrl.u32 %v500, 16
  %v505 = vshll.u32 %v501, 16
  %v506 = vshrl.u32 %v501, 16
  %vm507 = vc.u32 %v499, %v503
  %v508 = vsel %vm507, 1, 0
  %v509 = vadd.s32 %v499, %v503
  %v510 = vadd.s32 %v502, %v508
  %vm511 = vc.u32 %v509, %v505
  %v512 = vsel %vm511, 1, 0
  %v513 = vadd.s32 %v509, %v505
  %v514 = vadd.s32 %v510, %v512
  %v515 = vadd.s32 %v514, %v504
  %v516 = vadd.s32 %v515, %v506
  %v517 = vshrl.u32 %v516, 5
  %v518 = vmul.u32 %v517, 60
  %v519 = vsub.s32 %v495, %v518
  %v520 = vsub.s32 0, %v519
  %v521 = vsel %vm493, %v520, %v519
  %vm522 = vcmp.lt.s32.totalorder %v44, 0
  %v523 = vsub.s32 0, %v44
  %v524 = vsel %vm522, %v523, %v44
  %v525 = vand.u32 %v524, 65535
  %v526 = vshrl.u32 %v524, 16
  %v528 = vmul.u32 %v525, 34953
  %v529 = vmul.u32 %v525, 34952
  %v530 = vmul.u32 %v526, 34953
  %v531 = vmul.u32 %v526, 34952
  %v532 = vshll.u32 %v529, 16
  %v533 = vshrl.u32 %v529, 16
  %v534 = vshll.u32 %v530, 16
  %v535 = vshrl.u32 %v530, 16
  %vm536 = vc.u32 %v528, %v532
  %v537 = vsel %vm536, 1, 0
  %v538 = vadd.s32 %v528, %v532
  %v539 = vadd.s32 %v531, %v537
  %vm540 = vc.u32 %v538, %v534
  %v541 = vsel %vm540, 1, 0
  %v542 = vadd.s32 %v538, %v534
  %v543 = vadd.s32 %v539, %v541
  %v544 = vadd.s32 %v543, %v533
  %v545 = vadd.s32 %v544, %v535
  %v546 = vshrl.u32 %v545, 5
  %v547 = vmul.u32 %v546, 60
  %v548 = vsub.s32 %v524, %v547
  %v549 = vsub.s32 0, %v548
  %v550 = vsel %vm522, %v549, %v548
  %vm551 = vcmp.lt.s32.totalorder %v45, 0
  %v552 = vsub.s32 0, %v45
  %v553 = vsel %vm551, %v552, %v45
  %v554 = vand.u32 %v553, 65535
  %v555 = vshrl.u32 %v553, 16
  %v557 = vmul.u32 %v554, 34953
  %v558 = vmul.u32 %v554, 34952
  %v559 = vmul.u32 %v555, 34953
  %v560 = vmul.u32 %v555, 34952
  %v561 = vshll.u32 %v558, 16
  %v562 = vshrl.u32 %v558, 16
  %v563 = vshll.u32 %v559, 16
  %v564 = vshrl.u32 %v559, 16
  %vm565 = vc.u32 %v557, %v561
  %v566 = vsel %vm565, 1, 0
  %v567 = vadd.s32 %v557, %v561
  %v568 = vadd.s32 %v560, %v566
  %vm569 = vc.u32 %v567, %v563
  %v570 = vsel %vm569, 1, 0
  %v571 = vadd.s32 %v567, %v563
  %v572 = vadd.s32 %v568, %v570
  %v573 = vadd.s32 %v572, %v562
  %v574 = vadd.s32 %v573, %v564
  %v575 = vshrl.u32 %v574, 5
  %v576 = vmul.u32 %v575, 60
  %v577 = vsub.s32 %v553, %v576
  %v578 = vsub.s32 0, %v577
  %v579 = vsel %vm551, %v578, %v577
  %vm580 = vcmp.lt.s32.totalorder %v46, 0
  %v581 = vsub.s32 0, %v46
  %v582 = vsel %vm580, %v581, %v46
  %v583 = vand.u32 %v582, 65535
  %v584 = vshrl.u32 %v582, 16
  %v586 = vmul.u32 %v583, 34953
  %v587 = vmul.u32 %v583, 34952
  %v588 = vmul.u32 %v584, 34953
  %v589 = vmul.u32 %v584, 34952
  %v590 = vshll.u32 %v587, 16
  %v591 = vshrl.u32 %v587, 16
  %v592 = vshll.u32 %v588, 16
  %v593 = vshrl.u32 %v588, 16
  %vm594 = vc.u32 %v586, %v590
  %v595 = vsel %vm594, 1, 0
  %v596 = vadd.s32 %v586, %v590
  %v597 = vadd.s32 %v589, %v595
  %vm598 = vc.u32 %v596, %v592
  %v599 = vsel %vm598, 1, 0
  %v600 = vadd.s32 %v596, %v592
  %v601 = vadd.s32 %v597, %v599
  %v602 = vadd.s32 %v601, %v591
  %v603 = vadd.s32 %v602, %v593
  %v604 = vshrl.u32 %v603, 5
  %v605 = vmul.u32 %v604, 60
  %v606 = vsub.s32 %v582, %v605
  %v607 = vsub.s32 0, %v606
  %v608 = vsel %vm580, %v607, %v606
  %vm609 = vcmp.lt.s32.totalorder %v47, 0
  %v610 = vsub.s32 0, %v47
  %v611 = vsel %vm609, %v610, %v47
  %v612 = vand.u32 %v611, 65535
  %v613 = vshrl.u32 %v611, 16
  %v615 = vmul.u32 %v612, 34953
  %v616 = vmul.u32 %v612, 34952
  %v617 = vmul.u32 %v613, 34953
  %v618 = vmul.u32 %v613, 34952
  %v619 = vshll.u32 %v616, 16
  %v620 = vshrl.u32 %v616, 16
  %v621 = vshll.u32 %v617, 16
  %v622 = vshrl.u32 %v617, 16
  %vm623 = vc.u32 %v615, %v619
  %v624 = vsel %vm623, 1, 0
  %v625 = vadd.s32 %v615, %v619
  %v626 = vadd.s32 %v618, %v624
  %vm627 = vc.u32 %v625, %v621
  %v628 = vsel %vm627, 1, 0
  %v629 = vadd.s32 %v625, %v621
  %v630 = vadd.s32 %v626, %v628
  %v631 = vadd.s32 %v630, %v620
  %v632 = vadd.s32 %v631, %v622
  %v633 = vshrl.u32 %v632, 5
  %v634 = vmul.u32 %v633, 60
  %v635 = vsub.s32 %v611, %v634
  %v636 = vsub.s32 0, %v635
  %v637 = vsel %vm609, %v636, %v635
  %vm638 = vcmp.lt.s32.totalorder %v48, 0
  %v639 = vsub.s32 0, %v48
  %v640 = vsel %vm638, %v639, %v48
  %v641 = vand.u32 %v640, 65535
  %v642 = vshrl.u32 %v640, 16
  %v644 = vmul.u32 %v641, 34953
  %v645 = vmul.u32 %v641, 34952
  %v646 = vmul.u32 %v642, 34953
  %v647 = vmul.u32 %v642, 34952
  %v648 = vshll.u32 %v645, 16
  %v649 = vshrl.u32 %v645, 16
  %v650 = vshll.u32 %v646, 16
  %v651 = vshrl.u32 %v646, 16
  %vm652 = vc.u32 %v644, %v648
  %v653 = vsel %vm652, 1, 0
  %v654 = vadd.s32 %v644, %v648
  %v655 = vadd.s32 %v647, %v653
  %vm656 = vc.u32 %v654, %v650
  %v657 = vsel %vm656, 1, 0
  %v658 = vadd.s32 %v654, %v650
  %v659 = vadd.s32 %v655, %v657
  %v660 = vadd.s32 %v659, %v649
  %v661 = vadd.s32 %v660, %v651
  %v662 = vshrl.u32 %v661, 5
  %v663 = vmul.u32 %v662, 60
  %v664 = vsub.s32 %v640, %v663
  %v665 = vsub.s32 0, %v664
  %v666 = vsel %vm638, %v665, %v664
  %vm667 = vcmp.lt.s32.totalorder %v49, 0
  %v668 = vsub.s32 0, %v49
  %v669 = vsel %vm667, %v668, %v49
  %v670 = vand.u32 %v669, 65535
  %v671 = vshrl.u32 %v669, 16
  %v673 = vmul.u32 %v670, 34953
  %v674 = vmul.u32 %v670, 34952
  %v675 = vmul.u32 %v671, 34953
  %v676 = vmul.u32 %v671, 34952
  %v677 = vshll.u32 %v674, 16
  %v678 = vshrl.u32 %v674, 16
  %v679 = vshll.u32 %v675, 16
  %v680 = vshrl.u32 %v675, 16
  %vm681 = vc.u32 %v673, %v677
  %v682 = vsel %vm681, 1, 0
  %v683 = vadd.s32 %v673, %v677
  %v684 = vadd.s32 %v676, %v682
  %vm685 = vc.u32 %v683, %v679
  %v686 = vsel %vm685, 1, 0
  %v687 = vadd.s32 %v683, %v679
  %v688 = vadd.s32 %v684, %v686
  %v689 = vadd.s32 %v688, %v678
  %v690 = vadd.s32 %v689, %v680
  %v691 = vshrl.u32 %v690, 5
  %v692 = vmul.u32 %v691, 60
  %v693 = vsub.s32 %v669, %v692
  %v694 = vsub.s32 0, %v693
  %v695 = vsel %vm667, %v694, %v693
  %vm696 = vcmp.lt.s32.totalorder %v50, 0
  %v697 = vsub.s32 0, %v50
  %v698 = vsel %vm696, %v697, %v50
  %v699 = vand.u32 %v698, 65535
  %v700 = vshrl.u32 %v698, 16
  %v702 = vmul.u32 %v699, 34953
  %v703 = vmul.u32 %v699, 34952
  %v704 = vmul.u32 %v700, 34953
  %v705 = vmul.u32 %v700, 34952
  %v706 = vshll.u32 %v703, 16
  %v707 = vshrl.u32 %v703, 16
  %v708 = vshll.u32 %v704, 16
  %v709 = vshrl.u32 %v704, 16
  %vm710 = vc.u32 %v702, %v706
  %v711 = vsel %vm710, 1, 0
  %v712 = vadd.s32 %v702, %v706
  %v713 = vadd.s32 %v705, %v711
  %vm714 = vc.u32 %v712, %v708
  %v715 = vsel %vm714, 1, 0
  %v716 = vadd.s32 %v712, %v708
  %v717 = vadd.s32 %v713, %v715
  %v718 = vadd.s32 %v717, %v707
  %v719 = vadd.s32 %v718, %v709
  %v720 = vshrl.u32 %v719, 5
  %v721 = vmul.u32 %v720, 60
  %v722 = vsub.s32 %v698, %v721
  %v723 = vsub.s32 0, %v722
  %v724 = vsel %vm696, %v723, %v722
  %vm725 = vcmp.lt.s32.totalorder %v51, 0
  %v726 = vsub.s32 0, %v51
  %v727 = vsel %vm725, %v726, %v51
  %v728 = vand.u32 %v727, 65535
  %v729 = vshrl.u32 %v727, 16
  %v731 = vmul.u32 %v728, 34953
  %v732 = vmul.u32 %v728, 34952
  %v733 = vmul.u32 %v729, 34953
  %v734 = vmul.u32 %v729, 34952
  %v735 = vshll.u32 %v732, 16
  %v736 = vshrl.u32 %v732, 16
  %v737 = vshll.u32 %v733, 16
  %v738 = vshrl.u32 %v733, 16
  %vm739 = vc.u32 %v731, %v735
  %v740 = vsel %vm739, 1, 0
  %v741 = vadd.s32 %v731, %v735
  %v742 = vadd.s32 %v734, %v740
  %vm743 = vc.u32 %v741, %v737
  %v744 = vsel %vm743, 1, 0
  %v745 = vadd.s32 %v741, %v737
  %v746 = vadd.s32 %v742, %v744
  %v747 = vadd.s32 %v746, %v736
  %v748 = vadd.s32 %v747, %v738
  %v749 = vshrl.u32 %v748, 5
  %v750 = vmul.u32 %v749, 60
  %v751 = vsub.s32 %v727, %v750
  %v752 = vsub.s32 0, %v751
  %v753 = vsel %vm725, %v752, %v751
  %vm754 = vcmp.lt.s32.totalorder %v52, 0
  %v755 = vsub.s32 0, %v52
  %v756 = vsel %vm754, %v755, %v52
  %v757 = vand.u32 %v756, 65535
  %v758 = vshrl.u32 %v756, 16
  %v760 = vmul.u32 %v757, 34953
  %v761 = vmul.u32 %v757, 34952
  %v762 = vmul.u32 %v758, 34953
  %v763 = vmul.u32 %v758, 34952
  %v764 = vshll.u32 %v761, 16
  %v765 = vshrl.u32 %v761, 16
  %v766 = vshll.u32 %v762, 16
  %v767 = vshrl.u32 %v762, 16
  %vm768 = vc.u32 %v760, %v764
  %v769 = vsel %vm768, 1, 0
  %v770 = vadd.s32 %v760, %v764
  %v771 = vadd.s32 %v763, %v769
  %vm772 = vc.u32 %v770, %v766
  %v773 = vsel %vm772, 1, 0
  %v774 = vadd.s32 %v770, %v766
  %v775 = vadd.s32 %v771, %v773
  %v776 = vadd.s32 %v775, %v765
  %v777 = vadd.s32 %v776, %v767
  %v778 = vshrl.u32 %v777, 5
  %v779 = vmul.u32 %v778, 60
  %v780 = vsub.s32 %v756, %v779
  %v781 = vsub.s32 0, %v780
  %v782 = vsel %vm754, %v781, %v780
  %vm783 = vcmp.lt.s32.totalorder %v53, 0
  %v784 = vsub.s32 0, %v53
  %v785 = vsel %vm783, %v784, %v53
  %v786 = vand.u32 %v785, 65535
  %v787 = vshrl.u32 %v785, 16
  %v789 = vmul.u32 %v786, 34953
  %v790 = vmul.u32 %v786, 34952
  %v791 = vmul.u32 %v787, 34953
  %v792 = vmul.u32 %v787, 34952
  %v793 = vshll.u32 %v790, 16
  %v794 = vshrl.u32 %v790, 16
  %v795 = vshll.u32 %v791, 16
  %v796 = vshrl.u32 %v791, 16
  %vm797 = vc.u32 %v789, %v793
  %v798 = vsel %vm797, 1, 0
  %v799 = vadd.s32 %v789, %v793
  %v800 = vadd.s32 %v792, %v798
  %vm801 = vc.u32 %v799, %v795
  %v802 = vsel %vm801, 1, 0
  %v803 = vadd.s32 %v799, %v795
  %v804 = vadd.s32 %v800, %v802
  %v805 = vadd.s32 %v804, %v794
  %v806 = vadd.s32 %v805, %v796
  %v807 = vshrl.u32 %v806, 5
  %v808 = vmul.u32 %v807, 60
  %v809 = vsub.s32 %v785, %v808
  %v810 = vsub.s32 0, %v809
  %v811 = vsel %vm783, %v810, %v809
  %vm812 = vcmp.lt.s32.totalorder %v54, 0
  %v813 = vsub.s32 0, %v54
  %v814 = vsel %vm812, %v813, %v54
  %v815 = vand.u32 %v814, 65535
  %v816 = vshrl.u32 %v814, 16
  %v818 = vmul.u32 %v815, 34953
  %v819 = vmul.u32 %v815, 34952
  %v820 = vmul.u32 %v816, 34953
  %v821 = vmul.u32 %v816, 34952
  %v822 = vshll.u32 %v819, 16
  %v823 = vshrl.u32 %v819, 16
  %v824 = vshll.u32 %v820, 16
  %v825 = vshrl.u32 %v820, 16
  %vm826 = vc.u32 %v818, %v822
  %v827 = vsel %vm826, 1, 0
  %v828 = vadd.s32 %v818, %v822
  %v829 = vadd.s32 %v821, %v827
  %vm830 = vc.u32 %v828, %v824
  %v831 = vsel %vm830, 1, 0
  %v832 = vadd.s32 %v828, %v824
  %v833 = vadd.s32 %v829, %v831
  %v834 = vadd.s32 %v833, %v823
  %v835 = vadd.s32 %v834, %v825
  %v836 = vshrl.u32 %v835, 5
  %v837 = vmul.u32 %v836, 60
  %v838 = vsub.s32 %v814, %v837
  %v839 = vsub.s32 0, %v838
  %v840 = vsel %vm812, %v839, %v838
  %vm841 = vcmp.lt.s32.totalorder %v55, 0
  %v842 = vsub.s32 0, %v55
  %v843 = vsel %vm841, %v842, %v55
  %v844 = vand.u32 %v843, 65535
  %v845 = vshrl.u32 %v843, 16
  %v847 = vmul.u32 %v844, 34953
  %v848 = vmul.u32 %v844, 34952
  %v849 = vmul.u32 %v845, 34953
  %v850 = vmul.u32 %v845, 34952
  %v851 = vshll.u32 %v848, 16
  %v852 = vshrl.u32 %v848, 16
  %v853 = vshll.u32 %v849, 16
  %v854 = vshrl.u32 %v849, 16
  %vm855 = vc.u32 %v847, %v851
  %v856 = vsel %vm855, 1, 0
  %v857 = vadd.s32 %v847, %v851
  %v858 = vadd.s32 %v850, %v856
  %vm859 = vc.u32 %v857, %v853
  %v860 = vsel %vm859, 1, 0
  %v861 = vadd.s32 %v857, %v853
  %v862 = vadd.s32 %v858, %v860
  %v863 = vadd.s32 %v862, %v852
  %v864 = vadd.s32 %v863, %v854
  %v865 = vshrl.u32 %v864, 5
  %v866 = vmul.u32 %v865, 60
  %v867 = vsub.s32 %v843, %v866
  %v868 = vsub.s32 0, %v867
  %v869 = vsel %vm841, %v868, %v867
  %vm870 = vcmp.lt.s32.totalorder %v56, 0
  %v871 = vsub.s32 0, %v56
  %v872 = vsel %vm870, %v871, %v56
  %v873 = vand.u32 %v872, 65535
  %v874 = vshrl.u32 %v872, 16
  %v876 = vmul.u32 %v873, 34953
  %v877 = vmul.u32 %v873, 34952
  %v878 = vmul.u32 %v874, 34953
  %v879 = vmul.u32 %v874, 34952
  %v880 = vshll.u32 %v877, 16
  %v881 = vshrl.u32 %v877, 16
  %v882 = vshll.u32 %v878, 16
  %v883 = vshrl.u32 %v878, 16
  %vm884 = vc.u32 %v876, %v880
  %v885 = vsel %vm884, 1, 0
  %v886 = vadd.s32 %v876, %v880
  %v887 = vadd.s32 %v879, %v885
  %vm888 = vc.u32 %v886, %v882
  %v889 = vsel %vm888, 1, 0
  %v890 = vadd.s32 %v886, %v882
  %v891 = vadd.s32 %v887, %v889
  %v892 = vadd.s32 %v891, %v881
  %v893 = vadd.s32 %v892, %v883
  %v894 = vshrl.u32 %v893, 5
  %v895 = vmul.u32 %v894, 60
  %v896 = vsub.s32 %v872, %v895
  %v897 = vsub.s32 0, %v896
  %v898 = vsel %vm870, %v897, %v896
  %vm899 = vcmp.lt.s32.totalorder %v57, 0
  %v900 = vsub.s32 0, %v57
  %v901 = vsel %vm899, %v900, %v57
  %v902 = vand.u32 %v901, 65535
  %v903 = vshrl.u32 %v901, 16
  %v905 = vmul.u32 %v902, 34953
  %v906 = vmul.u32 %v902, 34952
  %v907 = vmul.u32 %v903, 34953
  %v908 = vmul.u32 %v903, 34952
  %v909 = vshll.u32 %v906, 16
  %v910 = vshrl.u32 %v906, 16
  %v911 = vshll.u32 %v907, 16
  %v912 = vshrl.u32 %v907, 16
  %vm913 = vc.u32 %v905, %v909
  %v914 = vsel %vm913, 1, 0
  %v915 = vadd.s32 %v905, %v909
  %v916 = vadd.s32 %v908, %v914
  %vm917 = vc.u32 %v915, %v911
  %v918 = vsel %vm917, 1, 0
  %v919 = vadd.s32 %v915, %v911
  %v920 = vadd.s32 %v916, %v918
  %v921 = vadd.s32 %v920, %v910
  %v922 = vadd.s32 %v921, %v912
  %v923 = vshrl.u32 %v922, 5
  %v924 = vmul.u32 %v923, 60
  %v925 = vsub.s32 %v901, %v924
  %v926 = vsub.s32 0, %v925
  %v927 = vsel %vm899, %v926, %v925
  %vm928 = vcmp.ne.s32.totalorder %v86, 0
  %vm929 = vcmp.ne.s32.totalorder %v115, 0
  %vm930 = vcmp.ne.s32.totalorder %v144, 0
  %vm931 = vcmp.ne.s32.totalorder %v173, 0
  %vm932 = vcmp.ne.s32.totalorder %v202, 0
  %vm933 = vcmp.ne.s32.totalorder %v231, 0
  %vm934 = vcmp.ne.s32.totalorder %v260, 0
  %vm935 = vcmp.ne.s32.totalorder %v289, 0
  %vm936 = vcmp.ne.s32.totalorder %v318, 0
  %vm937 = vcmp.ne.s32.totalorder %v347, 0
  %vm938 = vcmp.ne.s32.totalorder %v376, 0
  %vm939 = vcmp.ne.s32.totalorder %v405, 0
  %vm940 = vcmp.ne.s32.totalorder %v434, 0
  %vm941 = vcmp.ne.s32.totalorder %v463, 0
  %vm942 = vcmp.ne.s32.totalorder %v492, 0
  %vm943 = vcmp.ne.s32.totalorder %v521, 0
  %vm944 = vcmp.ne.s32.totalorder %v550, 0
  %vm945 = vcmp.ne.s32.totalorder %v579, 0
  %vm946 = vcmp.ne.s32.totalorder %v608, 0
  %vm947 = vcmp.ne.s32.totalorder %v637, 0
  %vm948 = vcmp.ne.s32.totalorder %v666, 0
  %vm949 = vcmp.ne.s32.totalorder %v695, 0
  %vm950 = vcmp.ne.s32.totalorder %v724, 0
  %vm951 = vcmp.ne.s32.totalorder %v753, 0
  %vm952 = vcmp.ne.s32.totalorder %v782, 0
  %vm953 = vcmp.ne.s32.totalorder %v811, 0
  %vm954 = vcmp.ne.s32.totalorder %v840, 0
  %vm955 = vcmp.ne.s32.totalorder %v869, 0
  %vm956 = vcmp.ne.s32.totalorder %v898, 0
  %vm957 = vcmp.ne.s32.totalorder %v927, 0
  %vm958 = vcmp.lt.s32.totalorder %v86, 0
  %vm959 = vcmp.lt.s32.totalorder %v115, 0
  %vm960 = vcmp.lt.s32.totalorder %v144, 0
  %vm961 = vcmp.lt.s32.totalorder %v173, 0
  %vm962 = vcmp.lt.s32.totalorder %v202, 0
  %vm963 = vcmp.lt.s32.totalorder %v231, 0
  %vm964 = vcmp.lt.s32.totalorder %v260, 0
  %vm965 = vcmp.lt.s32.totalorder %v289, 0
  %vm966 = vcmp.lt.s32.totalorder %v318, 0
  %vm967 = vcmp.lt.s32.totalorder %v347, 0
  %vm968 = vcmp.lt.s32.totalorder %v376, 0
  %vm969 = vcmp.lt.s32.totalorder %v405, 0
  %vm970 = vcmp.lt.s32.totalorder %v434, 0
  %vm971 = vcmp.lt.s32.totalorder %v463, 0
  %vm972 = vcmp.lt.s32.totalorder %v492, 0
  %vm973 = vcmp.lt.s32.totalorder %v521, 0
  %vm974 = vcmp.lt.s32.totalorder %v550, 0
  %vm975 = vcmp.lt.s32.totalorder %v579, 0
  %vm976 = vcmp.lt.s32.totalorder %v608, 0
  %vm977 = vcmp.lt.s32.totalorder %v637, 0
  %vm978 = vcmp.lt.s32.totalorder %v666, 0
  %vm979 = vcmp.lt.s32.totalorder %v695, 0
  %vm980 = vcmp.lt.s32.totalorder %v724, 0
  %vm981 = vcmp.lt.s32.totalorder %v753, 0
  %vm982 = vcmp.lt.s32.totalorder %v782, 0
  %vm983 = vcmp.lt.s32.totalorder %v811, 0
  %vm984 = vcmp.lt.s32.totalorder %v840, 0
  %vm985 = vcmp.lt.s32.totalorder %v869, 0
  %vm986 = vcmp.lt.s32.totalorder %v898, 0
  %vm987 = vcmp.lt.s32.totalorder %v927, 0
  %vm988 = vmand %vm958, %vm928
  %vm989 = vmand %vm959, %vm929
  %vm990 = vmand %vm960, %vm930
  %vm991 = vmand %vm961, %vm931
  %vm992 = vmand %vm962, %vm932
  %vm993 = vmand %vm963, %vm933
  %vm994 = vmand %vm964, %vm934
  %vm995 = vmand %vm965, %vm935
  %vm996 = vmand %vm966, %vm936
  %vm997 = vmand %vm967, %vm937
  %vm998 = vmand %vm968, %vm938
  %vm999 = vmand %vm969, %vm939
  %vm1000 = vmand %vm970, %vm940
  %vm1001 = vmand %vm971, %vm941
  %vm1002 = vmand %vm972, %vm942
  %vm1003 = vmand %vm973, %vm943
  %vm1004 = vmand %vm974, %vm944
  %vm1005 = vmand %vm975, %vm945
  %vm1006 = vmand %vm976, %vm946
  %vm1007 = vmand %vm977, %vm947
  %vm1008 = vmand %vm978, %vm948
  %vm1009 = vmand %vm979, %vm949
  %vm1010 = vmand %vm980, %vm950
  %vm1011 = vmand %vm981, %vm951
  %vm1012 = vmand %vm982, %vm952
  %vm1013 = vmand %vm983, %vm953
  %vm1014 = vmand %vm984, %vm954
  %vm1015 = vmand %vm985, %vm955
  %vm1016 = vmand %vm986, %vm956
  %vm1017 = vmand %vm987, %vm957
  %v1018 = vadd.s32 %v86, 60
  %v1019 = vadd.s32 %v115, 60
  %v1020 = vadd.s32 %v144, 60
  %v1021 = vadd.s32 %v173, 60
  %v1022 = vadd.s32 %v202, 60
  %v1023 = vadd.s32 %v231, 60
  %v1024 = vadd.s32 %v260, 60
  %v1025 = vadd.s32 %v289, 60
  %v1026 = vadd.s32 %v318, 60
  %v1027 = vadd.s32 %v347, 60
  %v1028 = vadd.s32 %v376, 60
  %v1029 = vadd.s32 %v405, 60
  %v1030 = vadd.s32 %v434, 60
  %v1031 = vadd.s32 %v463, 60
  %v1032 = vadd.s32 %v492, 60
  %v1033 = vadd.s32 %v521, 60
  %v1034 = vadd.s32 %v550, 60
  %v1035 = vadd.s32 %v579, 60
  %v1036 = vadd.s32 %v608, 60
  %v1037 = vadd.s32 %v637, 60
  %v1038 = vadd.s32 %v666, 60
  %v1039 = vadd.s32 %v695, 60
  %v1040 = vadd.s32 %v724, 60
  %v1041 = vadd.s32 %v753, 60
  %v1042 = vadd.s32 %v782, 60
  %v1043 = vadd.s32 %v811, 60
  %v1044 = vadd.s32 %v840, 60
  %v1045 = vadd.s32 %v869, 60
  %v1046 = vadd.s32 %v898, 60
  %v1047 = vadd.s32 %v927, 60
  %v1048 = vsel %vm988, %v1018, %v86
  %v1049 = vsel %vm989, %v1019, %v115
  %v1050 = vsel %vm990, %v1020, %v144
  %v1051 = vsel %vm991, %v1021, %v173
  %v1052 = vsel %vm992, %v1022, %v202
  %v1053 = vsel %vm993, %v1023, %v231
  %v1054 = vsel %vm994, %v1024, %v260
  %v1055 = vsel %vm995, %v1025, %v289
  %v1056 = vsel %vm996, %v1026, %v318
  %v1057 = vsel %vm997, %v1027, %v347
  %v1058 = vsel %vm998, %v1028, %v376
  %v1059 = vsel %vm999, %v1029, %v405
  %v1060 = vsel %vm1000, %v1030, %v434
  %v1061 = vsel %vm1001, %v1031, %v463
  %v1062 = vsel %vm1002, %v1032, %v492
  %v1063 = vsel %vm1003, %v1033, %v521
  %v1064 = vsel %vm1004, %v1034, %v550
  %v1065 = vsel %vm1005, %v1035, %v579
  %v1066 = vsel %vm1006, %v1036, %v608
  %v1067 = vsel %vm1007, %v1037, %v637
  %v1068 = vsel %vm1008, %v1038, %v666
  %v1069 = vsel %vm1009, %v1039, %v695
  %v1070 = vsel %vm1010, %v1040, %v724
  %v1071 = vsel %vm1011, %v1041, %v753
  %v1072 = vsel %vm1012, %v1042, %v782
  %v1073 = vsel %vm1013, %v1043, %v811
  %v1074 = vsel %vm1014, %v1044, %v840
  %v1075 = vsel %vm1015, %v1045, %v869
  %v1076 = vsel %vm1016, %v1046, %v898
  %v1077 = vsel %vm1017, %v1047, %v927
  %vm1078 = vcmp.eq.s32.totalorder %v1048, 0
  %vm1079 = vcmp.eq.s32.totalorder %v1049, 0
  %vm1080 = vcmp.eq.s32.totalorder %v1050, 0
  %vm1081 = vcmp.eq.s32.totalorder %v1051, 0
  %vm1082 = vcmp.eq.s32.totalorder %v1052, 0
  %vm1083 = vcmp.eq.s32.totalorder %v1053, 0
  %vm1084 = vcmp.eq.s32.totalorder %v1054, 0
  %vm1085 = vcmp.eq.s32.totalorder %v1055, 0
  %vm1086 = vcmp.eq.s32.totalorder %v1056, 0
  %vm1087 = vcmp.eq.s32.totalorder %v1057, 0
  %vm1088 = vcmp.eq.s32.totalorder %v1058, 0
  %vm1089 = vcmp.eq.s32.totalorder %v1059, 0
  %vm1090 = vcmp.eq.s32.totalorder %v1060, 0
  %vm1091 = vcmp.eq.s32.totalorder %v1061, 0
  %vm1092 = vcmp.eq.s32.totalorder %v1062, 0
  %vm1093 = vcmp.eq.s32.totalorder %v1063, 0
  %vm1094 = vcmp.eq.s32.totalorder %v1064, 0
  %vm1095 = vcmp.eq.s32.totalorder %v1065, 0
  %vm1096 = vcmp.eq.s32.totalorder %v1066, 0
  %vm1097 = vcmp.eq.s32.totalorder %v1067, 0
  %vm1098 = vcmp.eq.s32.totalorder %v1068, 0
  %vm1099 = vcmp.eq.s32.totalorder %v1069, 0
  %vm1100 = vcmp.eq.s32.totalorder %v1070, 0
  %vm1101 = vcmp.eq.s32.totalorder %v1071, 0
  %vm1102 = vcmp.eq.s32.totalorder %v1072, 0
  %vm1103 = vcmp.eq.s32.totalorder %v1073, 0
  %vm1104 = vcmp.eq.s32.totalorder %v1074, 0
  %vm1105 = vcmp.eq.s32.totalorder %v1075, 0
  %vm1106 = vcmp.eq.s32.totalorder %v1076, 0
  %vm1107 = vcmp.eq.s32.totalorder %v1077, 0
  %vm1108 = vcmp.eq.s32.totalorder %v1048, 59
  %vm1109 = vcmp.eq.s32.totalorder %v1049, 59
  %vm1110 = vcmp.eq.s32.totalorder %v1050, 59
  %vm1111 = vcmp.eq.s32.totalorder %v1051, 59
  %vm1112 = vcmp.eq.s32.totalorder %v1052, 59
  %vm1113 = vcmp.eq.s32.totalorder %v1053, 59
  %vm1114 = vcmp.eq.s32.totalorder %v1054, 59
  %vm1115 = vcmp.eq.s32.totalorder %v1055, 59
  %vm1116 = vcmp.eq.s32.totalorder %v1056, 59
  %vm1117 = vcmp.eq.s32.totalorder %v1057, 59
  %vm1118 = vcmp.eq.s32.totalorder %v1058, 59
  %vm1119 = vcmp.eq.s32.totalorder %v1059, 59
  %vm1120 = vcmp.eq.s32.totalorder %v1060, 59
  %vm1121 = vcmp.eq.s32.totalorder %v1061, 59
  %vm1122 = vcmp.eq.s32.totalorder %v1062, 59
  %vm1123 = vcmp.eq.s32.totalorder %v1063, 59
  %vm1124 = vcmp.eq.s32.totalorder %v1064, 59
  %vm1125 = vcmp.eq.s32.totalorder %v1065, 59
  %vm1126 = vcmp.eq.s32.totalorder %v1066, 59
  %vm1127 = vcmp.eq.s32.totalorder %v1067, 59
  %vm1128 = vcmp.eq.s32.totalorder %v1068, 59
  %vm1129 = vcmp.eq.s32.totalorder %v1069, 59
  %vm1130 = vcmp.eq.s32.totalorder %v1070, 59
  %vm1131 = vcmp.eq.s32.totalorder %v1071, 59
  %vm1132 = vcmp.eq.s32.totalorder %v1072, 59
  %vm1133 = vcmp.eq.s32.totalorder %v1073, 59
  %vm1134 = vcmp.eq.s32.totalorder %v1074, 59
  %vm1135 = vcmp.eq.s32.totalorder %v1075, 59
  %vm1136 = vcmp.eq.s32.totalorder %v1076, 59
  %vm1137 = vcmp.eq.s32.totalorder %v1077, 59
  %v1138 = vld [vmem:[%s0] sm:$0xf]
  %v1139 = vld [vmem:[%s0 + $0x4] sm:$0xf]
  %v1140 = vld [vmem:[%s0 + $0x8] sm:$0xf]
  %v1141 = vld [vmem:[%s0 + $0xc] sm:$0xf]
  %v1142 = vld [vmem:[%s0 + $0x10] sm:$0xf]
  %v1143 = vld [vmem:[%s0 + $0x14] sm:$0xf]
  %v1144 = vld [vmem:[%s0 + $0x18] sm:$0xf]
  %v1145 = vld [vmem:[%s0 + $0x1c] sm:$0xf]
  %v1146 = vld [vmem:[%s0 + $0x20] sm:$0xf]
  %v1147 = vld [vmem:[%s0 + $0x24] sm:$0xf]
  %v1148 = vld [vmem:[%s0 + $0x28] sm:$0xf]
  %v1149 = vld [vmem:[%s0 + $0x2c] sm:$0xf]
  %v1150 = vld [vmem:[%s0 + $0x30] sm:$0xf]
  %v1151 = vld [vmem:[%s0 + $0x34] sm:$0xf]
  %v1152 = vld [vmem:[%s0 + $0x38] sm:$0xf]
  %v1153 = vld [vmem:[%s0 + $0x3c] sm:$0xf]
  %v1154 = vld [vmem:[%s0 + $0x40] sm:$0xf]
  %v1155 = vld [vmem:[%s0 + $0x44] sm:$0xf]
  %v1156 = vld [vmem:[%s0 + $0x48] sm:$0xf]
  %v1157 = vld [vmem:[%s0 + $0x4c] sm:$0xf]
  %v1158 = vld [vmem:[%s0 + $0x50] sm:$0xf]
  %v1159 = vld [vmem:[%s0 + $0x54] sm:$0xf]
  %v1160 = vld [vmem:[%s0 + $0x58] sm:$0xf]
  %v1161 = vld [vmem:[%s0 + $0x5c] sm:$0xf]
  %v1162 = vld [vmem:[%s0 + $0x60] sm:$0xf]
  %v1163 = vld [vmem:[%s0 + $0x64] sm:$0xf]
  %v1164 = vld [vmem:[%s0 + $0x68] sm:$0xf]
  %v1165 = vld [vmem:[%s0 + $0x6c] sm:$0xf]
  %v1166 = vld [vmem:[%s0 + $0x70] sm:$0xf]
  %v1167 = vld [vmem:[%s0 + $0x74] sm:$0xf]
  %v1168 = vld [vmem:[%s2] sm:$0x7]
  %v1169 = vld [vmem:[%s6] ss:$0 sm:$0xff]
  %v1200 = vunpack.c.l.b16 %v1138
  %v1201 = vunpack.c.l.b16 %v1139
  %v1202 = vunpack.c.l.b16 %v1140
  %v1203 = vunpack.c.l.b16 %v1141
  %v1204 = vunpack.c.l.b16 %v1142
  %v1205 = vunpack.c.l.b16 %v1143
  %v1206 = vunpack.c.l.b16 %v1144
  %v1207 = vunpack.c.l.b16 %v1145
  %v1208 = vunpack.c.l.b16 %v1146
  %v1209 = vunpack.c.l.b16 %v1147
  %v1210 = vunpack.c.l.b16 %v1148
  %v1211 = vunpack.c.l.b16 %v1149
  %v1212 = vunpack.c.l.b16 %v1150
  %v1213 = vunpack.c.l.b16 %v1151
  %v1214 = vunpack.c.l.b16 %v1152
  %v1215 = vunpack.c.l.b16 %v1153
  %v1216 = vunpack.c.l.b16 %v1154
  %v1217 = vunpack.c.l.b16 %v1155
  %v1218 = vunpack.c.l.b16 %v1156
  %v1219 = vunpack.c.l.b16 %v1157
  %v1220 = vunpack.c.l.b16 %v1158
  %v1221 = vunpack.c.l.b16 %v1159
  %v1222 = vunpack.c.l.b16 %v1160
  %v1223 = vunpack.c.l.b16 %v1161
  %v1224 = vunpack.c.l.b16 %v1162
  %v1225 = vunpack.c.l.b16 %v1163
  %v1226 = vunpack.c.l.b16 %v1164
  %v1227 = vunpack.c.l.b16 %v1165
  %v1228 = vunpack.c.l.b16 %v1166
  %v1229 = vunpack.c.l.b16 %v1167
  %v1230 = vpack.c.b16 %v1201, %v1200
  %v1231 = vpack.c.b16 %v1203, %v1202
  %v1232 = vpack.c.b16 %v1205, %v1204
  %v1233 = vpack.c.b16 %v1207, %v1206
  %v1234 = vpack.c.b16 %v1209, %v1208
  %v1235 = vpack.c.b16 %v1211, %v1210
  %v1236 = vpack.c.b16 %v1213, %v1212
  %v1237 = vpack.c.b16 %v1215, %v1214
  %v1238 = vpack.c.b16 %v1217, %v1216
  %v1239 = vpack.c.b16 %v1219, %v1218
  %v1240 = vpack.c.b16 %v1221, %v1220
  %v1241 = vpack.c.b16 %v1223, %v1222
  %v1242 = vpack.c.b16 %v1225, %v1224
  %v1243 = vpack.c.b16 %v1227, %v1226
  %v1244 = vpack.c.b16 %v1229, %v1228
  %vm1245 = vcmask 48128
  %v1247 = vsel %vm1245, %v1230, 0
  %v1250 = vsel %vm1245, %v1231, 0
  %v1253 = vsel %vm1245, %v1232, 0
  %v1256 = vsel %vm1245, %v1233, 0
  %v1259 = vsel %vm1245, %v1234, 0
  %v1262 = vsel %vm1245, %v1235, 0
  %v1265 = vsel %vm1245, %v1236, 0
  %v1268 = vsel %vm1245, %v1237, 0
  %v1271 = vsel %vm1245, %v1238, 0
  %v1274 = vsel %vm1245, %v1239, 0
  %v1277 = vsel %vm1245, %v1240, 0
  %v1280 = vsel %vm1245, %v1241, 0
  %v1283 = vsel %vm1245, %v1242, 0
  %v1286 = vsel %vm1245, %v1243, 0
  %v1289 = vsel %vm1245, %v1244, 0
  %vm1291 = vcmask 1042432
  %v1293 = vsel %vm1291, %v1168, 0
  %1295 = vmatpush.bf16.msra.mxu0 0
  %1296 = vmatpush.bf16.msra.mxu0 0
  %1297 = vmatpush.bf16.msra.mxu0 0
  %1298 = vmatpush.bf16.msra.mxu0 0
  %1299 = vmatpush.bf16.msra.mxu0 0
  %1300 = vmatpush.bf16.msra.mxu0 0
  %1301 = vmatpush.bf16.msra.mxu0 0
  %1302 = vmatpush.bf16.msra.mxu0 %v1293
  %1303 = vmatmul.bf16.gmra.mxu0 %v1247
  %v1304 = vpop.f32.mrf.mxu0
  %v1305 = vadd.f32 %v1169, %v1304
  %v1306 = vpop.f32.mrf.mxu0
  %v1307 = vadd.f32 %v1169, %v1306
  %1308 = vmatmul.bf16.gmra.mxu0 %v1250
  %v1309 = vpop.f32.mrf.mxu0
  %v1310 = vadd.f32 %v1169, %v1309
  %v1311 = vpop.f32.mrf.mxu0
  %v1312 = vadd.f32 %v1169, %v1311
  %1313 = vmatmul.bf16.gmra.mxu0 %v1253
  %v1314 = vpop.f32.mrf.mxu0
  %v1315 = vadd.f32 %v1169, %v1314
  %v1316 = vpop.f32.mrf.mxu0
  %v1317 = vadd.f32 %v1169, %v1316
  %1318 = vmatmul.bf16.gmra.mxu0 %v1256
  %v1319 = vpop.f32.mrf.mxu0
  %v1320 = vadd.f32 %v1169, %v1319
  %v1321 = vpop.f32.mrf.mxu0
  %v1322 = vadd.f32 %v1169, %v1321
  %1323 = vmatmul.bf16.gmra.mxu0 %v1259
  %v1324 = vpop.f32.mrf.mxu0
  %v1325 = vadd.f32 %v1169, %v1324
  %v1326 = vpop.f32.mrf.mxu0
  %v1327 = vadd.f32 %v1169, %v1326
  %1328 = vmatmul.bf16.gmra.mxu0 %v1262
  %v1329 = vpop.f32.mrf.mxu0
  %v1330 = vadd.f32 %v1169, %v1329
  %v1331 = vpop.f32.mrf.mxu0
  %v1332 = vadd.f32 %v1169, %v1331
  %1333 = vmatmul.bf16.gmra.mxu0 %v1265
  %v1334 = vpop.f32.mrf.mxu0
  %v1335 = vadd.f32 %v1169, %v1334
  %v1336 = vpop.f32.mrf.mxu0
  %v1337 = vadd.f32 %v1169, %v1336
  %1338 = vmatmul.bf16.gmra.mxu0 %v1268
  %v1339 = vpop.f32.mrf.mxu0
  %v1340 = vadd.f32 %v1169, %v1339
  %v1341 = vpop.f32.mrf.mxu0
  %v1342 = vadd.f32 %v1169, %v1341
  %1343 = vmatmul.bf16.gmra.mxu0 %v1271
  %v1344 = vpop.f32.mrf.mxu0
  %v1345 = vadd.f32 %v1169, %v1344
  %v1346 = vpop.f32.mrf.mxu0
  %v1347 = vadd.f32 %v1169, %v1346
  %1348 = vmatmul.bf16.gmra.mxu0 %v1274
  %v1349 = vpop.f32.mrf.mxu0
  %v1350 = vadd.f32 %v1169, %v1349
  %v1351 = vpop.f32.mrf.mxu0
  %v1352 = vadd.f32 %v1169, %v1351
  %1353 = vmatmul.bf16.gmra.mxu0 %v1277
  %v1354 = vpop.f32.mrf.mxu0
  %v1355 = vadd.f32 %v1169, %v1354
  %v1356 = vpop.f32.mrf.mxu0
  %v1357 = vadd.f32 %v1169, %v1356
  %1358 = vmatmul.bf16.gmra.mxu0 %v1280
  %v1359 = vpop.f32.mrf.mxu0
  %v1360 = vadd.f32 %v1169, %v1359
  %v1361 = vpop.f32.mrf.mxu0
  %v1362 = vadd.f32 %v1169, %v1361
  %1363 = vmatmul.bf16.gmra.mxu0 %v1283
  %v1364 = vpop.f32.mrf.mxu0
  %v1365 = vadd.f32 %v1169, %v1364
  %v1366 = vpop.f32.mrf.mxu0
  %v1367 = vadd.f32 %v1169, %v1366
  %1368 = vmatmul.bf16.gmra.mxu0 %v1286
  %v1369 = vpop.f32.mrf.mxu0
  %v1370 = vadd.f32 %v1169, %v1369
  %v1371 = vpop.f32.mrf.mxu0
  %v1372 = vadd.f32 %v1169, %v1371
  %1373 = vmatmul.bf16.gmra.mxu0 %v1289
  %v1374 = vpop.f32.mrf.mxu0
  %v1375 = vadd.f32 %v1169, %v1374
  %v1376 = vpop.f32.mrf.mxu0
  %v1377 = vadd.f32 %v1169, %v1376
  %1378 = vdwg.mxu0
  %v1379 = vmax.f32 %v1305, 0.0
  %v1380 = vmax.f32 %v1307, 0.0
  %v1381 = vmax.f32 %v1310, 0.0
  %v1382 = vmax.f32 %v1312, 0.0
  %v1383 = vmax.f32 %v1315, 0.0
  %v1384 = vmax.f32 %v1317, 0.0
  %v1385 = vmax.f32 %v1320, 0.0
  %v1386 = vmax.f32 %v1322, 0.0
  %v1387 = vmax.f32 %v1325, 0.0
  %v1388 = vmax.f32 %v1327, 0.0
  %v1389 = vmax.f32 %v1330, 0.0
  %v1390 = vmax.f32 %v1332, 0.0
  %v1391 = vmax.f32 %v1335, 0.0
  %v1392 = vmax.f32 %v1337, 0.0
  %v1393 = vmax.f32 %v1340, 0.0
  %v1394 = vmax.f32 %v1342, 0.0
  %v1395 = vmax.f32 %v1345, 0.0
  %v1396 = vmax.f32 %v1347, 0.0
  %v1397 = vmax.f32 %v1350, 0.0
  %v1398 = vmax.f32 %v1352, 0.0
  %v1399 = vmax.f32 %v1355, 0.0
  %v1400 = vmax.f32 %v1357, 0.0
  %v1401 = vmax.f32 %v1360, 0.0
  %v1402 = vmax.f32 %v1362, 0.0
  %v1403 = vmax.f32 %v1365, 0.0
  %v1404 = vmax.f32 %v1367, 0.0
  %v1405 = vmax.f32 %v1370, 0.0
  %v1406 = vmax.f32 %v1372, 0.0
  %v1407 = vmax.f32 %v1375, 0.0
  %v1408 = vmax.f32 %v1377, 0.0
  %v1409 = vld [vmem:[%s3] sm:$0xf]
  %v1410 = vld [vmem:[%s3 + $0x4] sm:$0xf]
  %v1411 = vld [vmem:[%s3 + $0x8] sm:$0xf]
  %v1412 = vld [vmem:[%s3 + $0xc] sm:$0xf]
  %v1413 = vld [vmem:[%s3 + $0x10] sm:$0xf]
  %v1414 = vld [vmem:[%s3 + $0x14] sm:$0xf]
  %v1415 = vld [vmem:[%s3 + $0x18] sm:$0xf]
  %v1416 = vld [vmem:[%s3 + $0x1c] sm:$0xf]
  %v1417 = vld [vmem:[%s3 + $0x20] sm:$0xf]
  %v1418 = vpack.c.bf16 %v1380, %v1379
  %v1419 = vpack.c.bf16 %v1382, %v1381
  %v1420 = vpack.c.bf16 %v1384, %v1383
  %v1421 = vpack.c.bf16 %v1386, %v1385
  %v1422 = vpack.c.bf16 %v1388, %v1387
  %v1423 = vpack.c.bf16 %v1390, %v1389
  %v1424 = vpack.c.bf16 %v1392, %v1391
  %v1425 = vpack.c.bf16 %v1394, %v1393
  %v1426 = vpack.c.bf16 %v1396, %v1395
  %v1427 = vpack.c.bf16 %v1398, %v1397
  %v1428 = vpack.c.bf16 %v1400, %v1399
  %v1429 = vpack.c.bf16 %v1402, %v1401
  %v1430 = vpack.c.bf16 %v1404, %v1403
  %v1431 = vpack.c.bf16 %v1406, %v1405
  %v1432 = vpack.c.bf16 %v1408, %v1407
  %v1433 = vrot.slane %v1379, 7
  %v1434 = vrot.slane %v1380, 7
  %v1435 = vrot.slane %v1381, 7
  %v1436 = vrot.slane %v1382, 7
  %v1437 = vrot.slane %v1383, 7
  %v1438 = vrot.slane %v1384, 7
  %v1439 = vrot.slane %v1385, 7
  %v1440 = vrot.slane %v1386, 7
  %v1441 = vrot.slane %v1387, 7
  %v1442 = vrot.slane %v1388, 7
  %v1443 = vrot.slane %v1389, 7
  %v1444 = vrot.slane %v1390, 7
  %v1445 = vrot.slane %v1391, 7
  %v1446 = vrot.slane %v1392, 7
  %v1447 = vrot.slane %v1393, 7
  %v1448 = vrot.slane %v1394, 7
  %v1449 = vrot.slane %v1395, 7
  %v1450 = vrot.slane %v1396, 7
  %v1451 = vrot.slane %v1397, 7
  %v1452 = vrot.slane %v1398, 7
  %v1453 = vrot.slane %v1399, 7
  %v1454 = vrot.slane %v1400, 7
  %v1455 = vrot.slane %v1401, 7
  %v1456 = vrot.slane %v1402, 7
  %v1457 = vrot.slane %v1403, 7
  %v1458 = vrot.slane %v1404, 7
  %v1459 = vrot.slane %v1405, 7
  %v1460 = vrot.slane %v1406, 7
  %v1461 = vrot.slane %v1407, 7
  %v1462 = vrot.slane %v1408, 7
  %vm1463 = vcmp.lt.s32.totalorder %v28, 1
  %v1464 = vsel %vm1463, %v1461, %v1462
  %v1465 = vsel %vm1463, %v1460, %v1461
  %v1466 = vsel %vm1463, %v1459, %v1460
  %v1467 = vsel %vm1463, %v1458, %v1459
  %v1468 = vsel %vm1463, %v1457, %v1458
  %v1469 = vsel %vm1463, %v1456, %v1457
  %v1470 = vsel %vm1463, %v1455, %v1456
  %v1471 = vsel %vm1463, %v1454, %v1455
  %v1472 = vsel %vm1463, %v1453, %v1454
  %v1473 = vsel %vm1463, %v1452, %v1453
  %v1474 = vsel %vm1463, %v1451, %v1452
  %v1475 = vsel %vm1463, %v1450, %v1451
  %v1476 = vsel %vm1463, %v1449, %v1450
  %v1477 = vsel %vm1463, %v1448, %v1449
  %v1478 = vsel %vm1463, %v1447, %v1448
  %v1479 = vsel %vm1463, %v1446, %v1447
  %v1480 = vsel %vm1463, %v1445, %v1446
  %v1481 = vsel %vm1463, %v1444, %v1445
  %v1482 = vsel %vm1463, %v1443, %v1444
  %v1483 = vsel %vm1463, %v1442, %v1443
  %v1484 = vsel %vm1463, %v1441, %v1442
  %v1485 = vsel %vm1463, %v1440, %v1441
  %v1486 = vsel %vm1463, %v1439, %v1440
  %v1487 = vsel %vm1463, %v1438, %v1439
  %v1488 = vsel %vm1463, %v1437, %v1438
  %v1489 = vsel %vm1463, %v1436, %v1437
  %v1490 = vsel %vm1463, %v1435, %v1436
  %v1491 = vsel %vm1463, %v1434, %v1435
  %v1492 = vsel %vm1463, %v1433, %v1434
  %v1493 = vsel %vm1463, %v1462, %v1433
  %v1494 = vsel %vm1078, 1, 0
  %v1495 = vsel %vm1079, 1, 0
  %v1496 = vsel %vm1080, 1, 0
  %v1497 = vsel %vm1081, 1, 0
  %v1498 = vsel %vm1082, 1, 0
  %v1499 = vsel %vm1083, 1, 0
  %v1500 = vsel %vm1084, 1, 0
  %v1501 = vsel %vm1085, 1, 0
  %v1502 = vsel %vm1086, 1, 0
  %v1503 = vsel %vm1087, 1, 0
  %v1504 = vsel %vm1088, 1, 0
  %v1505 = vsel %vm1089, 1, 0
  %v1506 = vsel %vm1090, 1, 0
  %v1507 = vsel %vm1091, 1, 0
  %v1508 = vsel %vm1092, 1, 0
  %v1509 = vsel %vm1093, 1, 0
  %v1510 = vsel %vm1094, 1, 0
  %v1511 = vsel %vm1095, 1, 0
  %v1512 = vsel %vm1096, 1, 0
  %v1513 = vsel %vm1097, 1, 0
  %v1514 = vsel %vm1098, 1, 0
  %v1515 = vsel %vm1099, 1, 0
  %v1516 = vsel %vm1100, 1, 0
  %v1517 = vsel %vm1101, 1, 0
  %v1518 = vsel %vm1102, 1, 0
  %v1519 = vsel %vm1103, 1, 0
  %v1520 = vsel %vm1104, 1, 0
  %v1521 = vsel %vm1105, 1, 0
  %v1522 = vsel %vm1106, 1, 0
  %v1523 = vsel %vm1107, 1, 0
  %vm1524 = vcmp.eq.s32.totalorder %v1494, 1
  %vm1525 = vcmp.eq.s32.totalorder %v1495, 1
  %vm1526 = vcmp.eq.s32.totalorder %v1496, 1
  %vm1527 = vcmp.eq.s32.totalorder %v1497, 1
  %vm1528 = vcmp.eq.s32.totalorder %v1498, 1
  %vm1529 = vcmp.eq.s32.totalorder %v1499, 1
  %vm1530 = vcmp.eq.s32.totalorder %v1500, 1
  %vm1531 = vcmp.eq.s32.totalorder %v1501, 1
  %vm1532 = vcmp.eq.s32.totalorder %v1502, 1
  %vm1533 = vcmp.eq.s32.totalorder %v1503, 1
  %vm1534 = vcmp.eq.s32.totalorder %v1504, 1
  %vm1535 = vcmp.eq.s32.totalorder %v1505, 1
  %vm1536 = vcmp.eq.s32.totalorder %v1506, 1
  %vm1537 = vcmp.eq.s32.totalorder %v1507, 1
  %vm1538 = vcmp.eq.s32.totalorder %v1508, 1
  %vm1539 = vcmp.eq.s32.totalorder %v1509, 1
  %vm1540 = vcmp.eq.s32.totalorder %v1510, 1
  %vm1541 = vcmp.eq.s32.totalorder %v1511, 1
  %vm1542 = vcmp.eq.s32.totalorder %v1512, 1
  %vm1543 = vcmp.eq.s32.totalorder %v1513, 1
  %vm1544 = vcmp.eq.s32.totalorder %v1514, 1
  %vm1545 = vcmp.eq.s32.totalorder %v1515, 1
  %vm1546 = vcmp.eq.s32.totalorder %v1516, 1
  %vm1547 = vcmp.eq.s32.totalorder %v1517, 1
  %vm1548 = vcmp.eq.s32.totalorder %v1518, 1
  %vm1549 = vcmp.eq.s32.totalorder %v1519, 1
  %vm1550 = vcmp.eq.s32.totalorder %v1520, 1
  %vm1551 = vcmp.eq.s32.totalorder %v1521, 1
  %vm1552 = vcmp.eq.s32.totalorder %v1522, 1
  %vm1553 = vcmp.eq.s32.totalorder %v1523, 1
  %v1554 = vsel %vm1524, 0.0, %v1493
  %v1555 = vsel %vm1525, 0.0, %v1492
  %v1556 = vsel %vm1526, 0.0, %v1491
  %v1557 = vsel %vm1527, 0.0, %v1490
  %v1558 = vsel %vm1528, 0.0, %v1489
  %v1559 = vsel %vm1529, 0.0, %v1488
  %v1560 = vsel %vm1530, 0.0, %v1487
  %v1561 = vsel %vm1531, 0.0, %v1486
  %v1562 = vsel %vm1532, 0.0, %v1485
  %v1563 = vsel %vm1533, 0.0, %v1484
  %v1564 = vsel %vm1534, 0.0, %v1483
  %v1565 = vsel %vm1535, 0.0, %v1482
  %v1566 = vsel %vm1536, 0.0, %v1481
  %v1567 = vsel %vm1537, 0.0, %v1480
  %v1568 = vsel %vm1538, 0.0, %v1479
  %v1569 = vsel %vm1539, 0.0, %v1478
  %v1570 = vsel %vm1540, 0.0, %v1477
  %v1571 = vsel %vm1541, 0.0, %v1476
  %v1572 = vsel %vm1542, 0.0, %v1475
  %v1573 = vsel %vm1543, 0.0, %v1474
  %v1574 = vsel %vm1544, 0.0, %v1473
  %v1575 = vsel %vm1545, 0.0, %v1472
  %v1576 = vsel %vm1546, 0.0, %v1471
  %v1577 = vsel %vm1547, 0.0, %v1470
  %v1578 = vsel %vm1548, 0.0, %v1469
  %v1579 = vsel %vm1549, 0.0, %v1468
  %v1580 = vsel %vm1550, 0.0, %v1467
  %v1581 = vsel %vm1551, 0.0, %v1466
  %v1582 = vsel %vm1552, 0.0, %v1465
  %v1583 = vsel %vm1553, 0.0, %v1464
  %v1584 = vpack.c.bf16 %v1555, %v1554
  %v1585 = vpack.c.bf16 %v1557, %v1556
  %v1586 = vpack.c.bf16 %v1559, %v1558
  %v1587 = vpack.c.bf16 %v1561, %v1560
  %v1588 = vpack.c.bf16 %v1563, %v1562
  %v1589 = vpack.c.bf16 %v1565, %v1564
  %v1590 = vpack.c.bf16 %v1567, %v1566
  %v1591 = vpack.c.bf16 %v1569, %v1568
  %v1592 = vpack.c.bf16 %v1571, %v1570
  %v1593 = vpack.c.bf16 %v1573, %v1572
  %v1594 = vpack.c.bf16 %v1575, %v1574
  %v1595 = vpack.c.bf16 %v1577, %v1576
  %v1596 = vpack.c.bf16 %v1579, %v1578
  %v1597 = vpack.c.bf16 %v1581, %v1580
  %v1598 = vpack.c.bf16 %v1583, %v1582
  %v1602 = vunpack.c.l.b16 %v1409
  %v1603 = vunpack.c.l.b16 %v1410
  %v1604 = vunpack.c.l.b16 %v1411
  %v1605 = vpack.c.b16 %v1603, %v1602
  %v1606 = vpack.c.b16 %v1604, %v1604
  %vm1608 = vcmask 195584
  %v1610 = vsel %vm1608, %v1584, 0
  %v1613 = vsel %vm1608, %v1585, 0
  %v1616 = vsel %vm1608, %v1586, 0
  %v1619 = vsel %vm1608, %v1587, 0
  %v1622 = vsel %vm1608, %v1588, 0
  %v1625 = vsel %vm1608, %v1589, 0
  %v1628 = vsel %vm1608, %v1590, 0
  %v1631 = vsel %vm1608, %v1591, 0
  %v1634 = vsel %vm1608, %v1592, 0
  %v1637 = vsel %vm1608, %v1593, 0
  %v1640 = vsel %vm1608, %v1594, 0
  %v1643 = vsel %vm1608, %v1595, 0
  %v1646 = vsel %vm1608, %v1596, 0
  %v1649 = vsel %vm1608, %v1597, 0
  %v1652 = vsel %vm1608, %v1598, 0
  %vm1654 = vcmask 1043456
  %v1656 = vsel %vm1654, %v1606, 0
  %1658 = vmatpush.bf16.msra.mxu0 0
  %1659 = vmatpush.bf16.msra.mxu0 0
  %1660 = vmatpush.bf16.msra.mxu0 0
  %1661 = vmatpush.bf16.msra.mxu0 0
  %1662 = vmatpush.bf16.msra.mxu0 0
  %1663 = vmatpush.bf16.msra.mxu0 0
  %1664 = vmatpush.bf16.msra.mxu0 %v1656
  %1665 = vmatpush.bf16.msra.mxu0 %v1605
  %1666 = vmatmul.bf16.gmra.mxu0 %v1610
  %v1667 = vpop.f32.mrf.mxu0
  %v1668 = vadd.f32 0.0, %v1667
  %v1669 = vpop.f32.mrf.mxu0
  %v1670 = vadd.f32 0.0, %v1669
  %1671 = vmatmul.bf16.gmra.mxu0 %v1613
  %v1672 = vpop.f32.mrf.mxu0
  %v1673 = vadd.f32 0.0, %v1672
  %v1674 = vpop.f32.mrf.mxu0
  %v1675 = vadd.f32 0.0, %v1674
  %1676 = vmatmul.bf16.gmra.mxu0 %v1616
  %v1677 = vpop.f32.mrf.mxu0
  %v1678 = vadd.f32 0.0, %v1677
  %v1679 = vpop.f32.mrf.mxu0
  %v1680 = vadd.f32 0.0, %v1679
  %1681 = vmatmul.bf16.gmra.mxu0 %v1619
  %v1682 = vpop.f32.mrf.mxu0
  %v1683 = vadd.f32 0.0, %v1682
  %v1684 = vpop.f32.mrf.mxu0
  %v1685 = vadd.f32 0.0, %v1684
  %1686 = vmatmul.bf16.gmra.mxu0 %v1622
  %v1687 = vpop.f32.mrf.mxu0
  %v1688 = vadd.f32 0.0, %v1687
  %v1689 = vpop.f32.mrf.mxu0
  %v1690 = vadd.f32 0.0, %v1689
  %1691 = vmatmul.bf16.gmra.mxu0 %v1625
  %v1692 = vpop.f32.mrf.mxu0
  %v1693 = vadd.f32 0.0, %v1692
  %v1694 = vpop.f32.mrf.mxu0
  %v1695 = vadd.f32 0.0, %v1694
  %1696 = vmatmul.bf16.gmra.mxu0 %v1628
  %v1697 = vpop.f32.mrf.mxu0
  %v1698 = vadd.f32 0.0, %v1697
  %v1699 = vpop.f32.mrf.mxu0
  %v1700 = vadd.f32 0.0, %v1699
  %1701 = vmatmul.bf16.gmra.mxu0 %v1631
  %v1702 = vpop.f32.mrf.mxu0
  %v1703 = vadd.f32 0.0, %v1702
  %v1704 = vpop.f32.mrf.mxu0
  %v1705 = vadd.f32 0.0, %v1704
  %1706 = vmatmul.bf16.gmra.mxu0 %v1634
  %v1707 = vpop.f32.mrf.mxu0
  %v1708 = vadd.f32 0.0, %v1707
  %v1709 = vpop.f32.mrf.mxu0
  %v1710 = vadd.f32 0.0, %v1709
  %1711 = vmatmul.bf16.gmra.mxu0 %v1637
  %v1712 = vpop.f32.mrf.mxu0
  %v1713 = vadd.f32 0.0, %v1712
  %v1714 = vpop.f32.mrf.mxu0
  %v1715 = vadd.f32 0.0, %v1714
  %1716 = vmatmul.bf16.gmra.mxu0 %v1640
  %v1717 = vpop.f32.mrf.mxu0
  %v1718 = vadd.f32 0.0, %v1717
  %v1719 = vpop.f32.mrf.mxu0
  %v1720 = vadd.f32 0.0, %v1719
  %1721 = vmatmul.bf16.gmra.mxu0 %v1643
  %v1722 = vpop.f32.mrf.mxu0
  %v1723 = vadd.f32 0.0, %v1722
  %v1724 = vpop.f32.mrf.mxu0
  %v1725 = vadd.f32 0.0, %v1724
  %1726 = vmatmul.bf16.gmra.mxu0 %v1646
  %v1727 = vpop.f32.mrf.mxu0
  %v1728 = vadd.f32 0.0, %v1727
  %v1729 = vpop.f32.mrf.mxu0
  %v1730 = vadd.f32 0.0, %v1729
  %1731 = vmatmul.bf16.gmra.mxu0 %v1649
  %v1732 = vpop.f32.mrf.mxu0
  %v1733 = vadd.f32 0.0, %v1732
  %v1734 = vpop.f32.mrf.mxu0
  %v1735 = vadd.f32 0.0, %v1734
  %1736 = vmatmul.bf16.gmra.mxu0 %v1652
  %v1737 = vpop.f32.mrf.mxu0
  %v1738 = vadd.f32 0.0, %v1737
  %v1739 = vpop.f32.mrf.mxu0
  %v1740 = vadd.f32 0.0, %v1739
  %1741 = vdwg.mxu0
  %v1745 = vunpack.c.l.b16 %v1412
  %v1746 = vunpack.c.l.b16 %v1413
  %v1747 = vunpack.c.l.b16 %v1414
  %v1748 = vpack.c.b16 %v1746, %v1745
  %v1749 = vpack.c.b16 %v1747, %v1747
  %v1752 = vsel %vm1608, %v1418, 0
  %v1755 = vsel %vm1608, %v1419, 0
  %v1758 = vsel %vm1608, %v1420, 0
  %v1761 = vsel %vm1608, %v1421, 0
  %v1764 = vsel %vm1608, %v1422, 0
  %v1767 = vsel %vm1608, %v1423, 0
  %v1770 = vsel %vm1608, %v1424, 0
  %v1773 = vsel %vm1608, %v1425, 0
  %v1776 = vsel %vm1608, %v1426, 0
  %v1779 = vsel %vm1608, %v1427, 0
  %v1782 = vsel %vm1608, %v1428, 0
  %v1785 = vsel %vm1608, %v1429, 0
  %v1788 = vsel %vm1608, %v1430, 0
  %v1791 = vsel %vm1608, %v1431, 0
  %v1794 = vsel %vm1608, %v1432, 0
  %v1797 = vsel %vm1654, %v1749, 0
  %1799 = vmatpush.bf16.msra.mxu0 0
  %1800 = vmatpush.bf16.msra.mxu0 0
  %1801 = vmatpush.bf16.msra.mxu0 0
  %1802 = vmatpush.bf16.msra.mxu0 0
  %1803 = vmatpush.bf16.msra.mxu0 0
  %1804 = vmatpush.bf16.msra.mxu0 0
  %1805 = vmatpush.bf16.msra.mxu0 %v1797
  %1806 = vmatpush.bf16.msra.mxu0 %v1748
  %1807 = vmatmul.bf16.gmra.mxu0 %v1752
  %v1808 = vpop.f32.mrf.mxu0
  %v1809 = vadd.f32 %v1668, %v1808
  %v1810 = vpop.f32.mrf.mxu0
  %v1811 = vadd.f32 %v1670, %v1810
  %1812 = vmatmul.bf16.gmra.mxu0 %v1755
  %v1813 = vpop.f32.mrf.mxu0
  %v1814 = vadd.f32 %v1673, %v1813
  %v1815 = vpop.f32.mrf.mxu0
  %v1816 = vadd.f32 %v1675, %v1815
  %1817 = vmatmul.bf16.gmra.mxu0 %v1758
  %v1818 = vpop.f32.mrf.mxu0
  %v1819 = vadd.f32 %v1678, %v1818
  %v1820 = vpop.f32.mrf.mxu0
  %v1821 = vadd.f32 %v1680, %v1820
  %1822 = vmatmul.bf16.gmra.mxu0 %v1761
  %v1823 = vpop.f32.mrf.mxu0
  %v1824 = vadd.f32 %v1683, %v1823
  %v1825 = vpop.f32.mrf.mxu0
  %v1826 = vadd.f32 %v1685, %v1825
  %1827 = vmatmul.bf16.gmra.mxu0 %v1764
  %v1828 = vpop.f32.mrf.mxu0
  %v1829 = vadd.f32 %v1688, %v1828
  %v1830 = vpop.f32.mrf.mxu0
  %v1831 = vadd.f32 %v1690, %v1830
  %1832 = vmatmul.bf16.gmra.mxu0 %v1767
  %v1833 = vpop.f32.mrf.mxu0
  %v1834 = vadd.f32 %v1693, %v1833
  %v1835 = vpop.f32.mrf.mxu0
  %v1836 = vadd.f32 %v1695, %v1835
  %1837 = vmatmul.bf16.gmra.mxu0 %v1770
  %v1838 = vpop.f32.mrf.mxu0
  %v1839 = vadd.f32 %v1698, %v1838
  %v1840 = vpop.f32.mrf.mxu0
  %v1841 = vadd.f32 %v1700, %v1840
  %1842 = vmatmul.bf16.gmra.mxu0 %v1773
  %v1843 = vpop.f32.mrf.mxu0
  %v1844 = vadd.f32 %v1703, %v1843
  %v1845 = vpop.f32.mrf.mxu0
  %v1846 = vadd.f32 %v1705, %v1845
  %1847 = vmatmul.bf16.gmra.mxu0 %v1776
  %v1848 = vpop.f32.mrf.mxu0
  %v1849 = vadd.f32 %v1708, %v1848
  %v1850 = vpop.f32.mrf.mxu0
  %v1851 = vadd.f32 %v1710, %v1850
  %1852 = vmatmul.bf16.gmra.mxu0 %v1779
  %v1853 = vpop.f32.mrf.mxu0
  %v1854 = vadd.f32 %v1713, %v1853
  %v1855 = vpop.f32.mrf.mxu0
  %v1856 = vadd.f32 %v1715, %v1855
  %1857 = vmatmul.bf16.gmra.mxu0 %v1782
  %v1858 = vpop.f32.mrf.mxu0
  %v1859 = vadd.f32 %v1718, %v1858
  %v1860 = vpop.f32.mrf.mxu0
  %v1861 = vadd.f32 %v1720, %v1860
  %1862 = vmatmul.bf16.gmra.mxu0 %v1785
  %v1863 = vpop.f32.mrf.mxu0
  %v1864 = vadd.f32 %v1723, %v1863
  %v1865 = vpop.f32.mrf.mxu0
  %v1866 = vadd.f32 %v1725, %v1865
  %1867 = vmatmul.bf16.gmra.mxu0 %v1788
  %v1868 = vpop.f32.mrf.mxu0
  %v1869 = vadd.f32 %v1728, %v1868
  %v1870 = vpop.f32.mrf.mxu0
  %v1871 = vadd.f32 %v1730, %v1870
  %1872 = vmatmul.bf16.gmra.mxu0 %v1791
  %v1873 = vpop.f32.mrf.mxu0
  %v1874 = vadd.f32 %v1733, %v1873
  %v1875 = vpop.f32.mrf.mxu0
  %v1876 = vadd.f32 %v1735, %v1875
  %1877 = vmatmul.bf16.gmra.mxu0 %v1794
  %v1878 = vpop.f32.mrf.mxu0
  %v1879 = vadd.f32 %v1738, %v1878
  %v1880 = vpop.f32.mrf.mxu0
  %v1881 = vadd.f32 %v1740, %v1880
  %1882 = vdwg.mxu0
  %v1883 = vrot.slane %v1379, 1
  %v1884 = vrot.slane %v1380, 1
  %v1885 = vrot.slane %v1381, 1
  %v1886 = vrot.slane %v1382, 1
  %v1887 = vrot.slane %v1383, 1
  %v1888 = vrot.slane %v1384, 1
  %v1889 = vrot.slane %v1385, 1
  %v1890 = vrot.slane %v1386, 1
  %v1891 = vrot.slane %v1387, 1
  %v1892 = vrot.slane %v1388, 1
  %v1893 = vrot.slane %v1389, 1
  %v1894 = vrot.slane %v1390, 1
  %v1895 = vrot.slane %v1391, 1
  %v1896 = vrot.slane %v1392, 1
  %v1897 = vrot.slane %v1393, 1
  %v1898 = vrot.slane %v1394, 1
  %v1899 = vrot.slane %v1395, 1
  %v1900 = vrot.slane %v1396, 1
  %v1901 = vrot.slane %v1397, 1
  %v1902 = vrot.slane %v1398, 1
  %v1903 = vrot.slane %v1399, 1
  %v1904 = vrot.slane %v1400, 1
  %v1905 = vrot.slane %v1401, 1
  %v1906 = vrot.slane %v1402, 1
  %v1907 = vrot.slane %v1403, 1
  %v1908 = vrot.slane %v1404, 1
  %v1909 = vrot.slane %v1405, 1
  %v1910 = vrot.slane %v1406, 1
  %v1911 = vrot.slane %v1407, 1
  %v1912 = vrot.slane %v1408, 1
  %vm1913 = vcmp.lt.s32.totalorder %v28, 7
  %v1914 = vsel %vm1913, %v1911, %v1912
  %v1915 = vsel %vm1913, %v1910, %v1911
  %v1916 = vsel %vm1913, %v1909, %v1910
  %v1917 = vsel %vm1913, %v1908, %v1909
  %v1918 = vsel %vm1913, %v1907, %v1908
  %v1919 = vsel %vm1913, %v1906, %v1907
  %v1920 = vsel %vm1913, %v1905, %v1906
  %v1921 = vsel %vm1913, %v1904, %v1905
  %v1922 = vsel %vm1913, %v1903, %v1904
  %v1923 = vsel %vm1913, %v1902, %v1903
  %v1924 = vsel %vm1913, %v1901, %v1902
  %v1925 = vsel %vm1913, %v1900, %v1901
  %v1926 = vsel %vm1913, %v1899, %v1900
  %v1927 = vsel %vm1913, %v1898, %v1899
  %v1928 = vsel %vm1913, %v1897, %v1898
  %v1929 = vsel %vm1913, %v1896, %v1897
  %v1930 = vsel %vm1913, %v1895, %v1896
  %v1931 = vsel %vm1913, %v1894, %v1895
  %v1932 = vsel %vm1913, %v1893, %v1894
  %v1933 = vsel %vm1913, %v1892, %v1893
  %v1934 = vsel %vm1913, %v1891, %v1892
  %v1935 = vsel %vm1913, %v1890, %v1891
  %v1936 = vsel %vm1913, %v1889, %v1890
  %v1937 = vsel %vm1913, %v1888, %v1889
  %v1938 = vsel %vm1913, %v1887, %v1888
  %v1939 = vsel %vm1913, %v1886, %v1887
  %v1940 = vsel %vm1913, %v1885, %v1886
  %v1941 = vsel %vm1913, %v1884, %v1885
  %v1942 = vsel %vm1913, %v1883, %v1884
  %v1943 = vsel %vm1913, %v1912, %v1883
  %v1944 = vsel %vm1108, 1, 0
  %v1945 = vsel %vm1109, 1, 0
  %v1946 = vsel %vm1110, 1, 0
  %v1947 = vsel %vm1111, 1, 0
  %v1948 = vsel %vm1112, 1, 0
  %v1949 = vsel %vm1113, 1, 0
  %v1950 = vsel %vm1114, 1, 0
  %v1951 = vsel %vm1115, 1, 0
  %v1952 = vsel %vm1116, 1, 0
  %v1953 = vsel %vm1117, 1, 0
  %v1954 = vsel %vm1118, 1, 0
  %v1955 = vsel %vm1119, 1, 0
  %v1956 = vsel %vm1120, 1, 0
  %v1957 = vsel %vm1121, 1, 0
  %v1958 = vsel %vm1122, 1, 0
  %v1959 = vsel %vm1123, 1, 0
  %v1960 = vsel %vm1124, 1, 0
  %v1961 = vsel %vm1125, 1, 0
  %v1962 = vsel %vm1126, 1, 0
  %v1963 = vsel %vm1127, 1, 0
  %v1964 = vsel %vm1128, 1, 0
  %v1965 = vsel %vm1129, 1, 0
  %v1966 = vsel %vm1130, 1, 0
  %v1967 = vsel %vm1131, 1, 0
  %v1968 = vsel %vm1132, 1, 0
  %v1969 = vsel %vm1133, 1, 0
  %v1970 = vsel %vm1134, 1, 0
  %v1971 = vsel %vm1135, 1, 0
  %v1972 = vsel %vm1136, 1, 0
  %v1973 = vsel %vm1137, 1, 0
  %vm1974 = vcmp.eq.s32.totalorder %v1944, 1
  %vm1975 = vcmp.eq.s32.totalorder %v1945, 1
  %vm1976 = vcmp.eq.s32.totalorder %v1946, 1
  %vm1977 = vcmp.eq.s32.totalorder %v1947, 1
  %vm1978 = vcmp.eq.s32.totalorder %v1948, 1
  %vm1979 = vcmp.eq.s32.totalorder %v1949, 1
  %vm1980 = vcmp.eq.s32.totalorder %v1950, 1
  %vm1981 = vcmp.eq.s32.totalorder %v1951, 1
  %vm1982 = vcmp.eq.s32.totalorder %v1952, 1
  %vm1983 = vcmp.eq.s32.totalorder %v1953, 1
  %vm1984 = vcmp.eq.s32.totalorder %v1954, 1
  %vm1985 = vcmp.eq.s32.totalorder %v1955, 1
  %vm1986 = vcmp.eq.s32.totalorder %v1956, 1
  %vm1987 = vcmp.eq.s32.totalorder %v1957, 1
  %vm1988 = vcmp.eq.s32.totalorder %v1958, 1
  %vm1989 = vcmp.eq.s32.totalorder %v1959, 1
  %vm1990 = vcmp.eq.s32.totalorder %v1960, 1
  %vm1991 = vcmp.eq.s32.totalorder %v1961, 1
  %vm1992 = vcmp.eq.s32.totalorder %v1962, 1
  %vm1993 = vcmp.eq.s32.totalorder %v1963, 1
  %vm1994 = vcmp.eq.s32.totalorder %v1964, 1
  %vm1995 = vcmp.eq.s32.totalorder %v1965, 1
  %vm1996 = vcmp.eq.s32.totalorder %v1966, 1
  %vm1997 = vcmp.eq.s32.totalorder %v1967, 1
  %vm1998 = vcmp.eq.s32.totalorder %v1968, 1
  %vm1999 = vcmp.eq.s32.totalorder %v1969, 1
  %vm2000 = vcmp.eq.s32.totalorder %v1970, 1
  %vm2001 = vcmp.eq.s32.totalorder %v1971, 1
  %vm2002 = vcmp.eq.s32.totalorder %v1972, 1
  %vm2003 = vcmp.eq.s32.totalorder %v1973, 1
  %v2004 = vsel %vm1974, 0.0, %v1942
  %v2005 = vsel %vm1975, 0.0, %v1941
  %v2006 = vsel %vm1976, 0.0, %v1940
  %v2007 = vsel %vm1977, 0.0, %v1939
  %v2008 = vsel %vm1978, 0.0, %v1938
  %v2009 = vsel %vm1979, 0.0, %v1937
  %v2010 = vsel %vm1980, 0.0, %v1936
  %v2011 = vsel %vm1981, 0.0, %v1935
  %v2012 = vsel %vm1982, 0.0, %v1934
  %v2013 = vsel %vm1983, 0.0, %v1933
  %v2014 = vsel %vm1984, 0.0, %v1932
  %v2015 = vsel %vm1985, 0.0, %v1931
  %v2016 = vsel %vm1986, 0.0, %v1930
  %v2017 = vsel %vm1987, 0.0, %v1929
  %v2018 = vsel %vm1988, 0.0, %v1928
  %v2019 = vsel %vm1989, 0.0, %v1927
  %v2020 = vsel %vm1990, 0.0, %v1926
  %v2021 = vsel %vm1991, 0.0, %v1925
  %v2022 = vsel %vm1992, 0.0, %v1924
  %v2023 = vsel %vm1993, 0.0, %v1923
  %v2024 = vsel %vm1994, 0.0, %v1922
  %v2025 = vsel %vm1995, 0.0, %v1921
  %v2026 = vsel %vm1996, 0.0, %v1920
  %v2027 = vsel %vm1997, 0.0, %v1919
  %v2028 = vsel %vm1998, 0.0, %v1918
  %v2029 = vsel %vm1999, 0.0, %v1917
  %v2030 = vsel %vm2000, 0.0, %v1916
  %v2031 = vsel %vm2001, 0.0, %v1915
  %v2032 = vsel %vm2002, 0.0, %v1914
  %v2033 = vsel %vm2003, 0.0, %v1943
  %v2034 = vpack.c.bf16 %v2005, %v2004
  %v2035 = vpack.c.bf16 %v2007, %v2006
  %v2036 = vpack.c.bf16 %v2009, %v2008
  %v2037 = vpack.c.bf16 %v2011, %v2010
  %v2038 = vpack.c.bf16 %v2013, %v2012
  %v2039 = vpack.c.bf16 %v2015, %v2014
  %v2040 = vpack.c.bf16 %v2017, %v2016
  %v2041 = vpack.c.bf16 %v2019, %v2018
  %v2042 = vpack.c.bf16 %v2021, %v2020
  %v2043 = vpack.c.bf16 %v2023, %v2022
  %v2044 = vpack.c.bf16 %v2025, %v2024
  %v2045 = vpack.c.bf16 %v2027, %v2026
  %v2046 = vpack.c.bf16 %v2029, %v2028
  %v2047 = vpack.c.bf16 %v2031, %v2030
  %v2048 = vpack.c.bf16 %v2033, %v2032
  %v2052 = vunpack.c.l.b16 %v1415
  %v2053 = vunpack.c.l.b16 %v1416
  %v2054 = vunpack.c.l.b16 %v1417
  %v2055 = vpack.c.b16 %v2053, %v2052
  %v2056 = vpack.c.b16 %v2054, %v2054
  %v2059 = vsel %vm1608, %v2034, 0
  %v2062 = vsel %vm1608, %v2035, 0
  %v2065 = vsel %vm1608, %v2036, 0
  %v2068 = vsel %vm1608, %v2037, 0
  %v2071 = vsel %vm1608, %v2038, 0
  %v2074 = vsel %vm1608, %v2039, 0
  %v2077 = vsel %vm1608, %v2040, 0
  %v2080 = vsel %vm1608, %v2041, 0
  %v2083 = vsel %vm1608, %v2042, 0
  %v2086 = vsel %vm1608, %v2043, 0
  %v2089 = vsel %vm1608, %v2044, 0
  %v2092 = vsel %vm1608, %v2045, 0
  %v2095 = vsel %vm1608, %v2046, 0
  %v2098 = vsel %vm1608, %v2047, 0
  %v2101 = vsel %vm1608, %v2048, 0
  %v2104 = vsel %vm1654, %v2056, 0
  %2106 = vmatpush.bf16.msra.mxu0 0
  %2107 = vmatpush.bf16.msra.mxu0 0
  %2108 = vmatpush.bf16.msra.mxu0 0
  %2109 = vmatpush.bf16.msra.mxu0 0
  %2110 = vmatpush.bf16.msra.mxu0 0
  %2111 = vmatpush.bf16.msra.mxu0 0
  %2112 = vmatpush.bf16.msra.mxu0 %v2104
  %2113 = vmatpush.bf16.msra.mxu0 %v2055
  %2114 = vmatmul.bf16.gmra.mxu0 %v2059
  %v2115 = vpop.f32.mrf.mxu0
  %v2116 = vadd.f32 0.0, %v2115
  %v2117 = vpop.f32.mrf.mxu0
  %v2118 = vadd.f32 0.0, %v2117
  %2119 = vmatmul.bf16.gmra.mxu0 %v2062
  %v2120 = vpop.f32.mrf.mxu0
  %v2121 = vadd.f32 0.0, %v2120
  %v2122 = vpop.f32.mrf.mxu0
  %v2123 = vadd.f32 0.0, %v2122
  %2124 = vmatmul.bf16.gmra.mxu0 %v2065
  %v2125 = vpop.f32.mrf.mxu0
  %v2126 = vadd.f32 0.0, %v2125
  %v2127 = vpop.f32.mrf.mxu0
  %v2128 = vadd.f32 0.0, %v2127
  %2129 = vmatmul.bf16.gmra.mxu0 %v2068
  %v2130 = vpop.f32.mrf.mxu0
  %v2131 = vadd.f32 0.0, %v2130
  %v2132 = vpop.f32.mrf.mxu0
  %v2133 = vadd.f32 0.0, %v2132
  %2134 = vmatmul.bf16.gmra.mxu0 %v2071
  %v2135 = vpop.f32.mrf.mxu0
  %v2136 = vadd.f32 0.0, %v2135
  %v2137 = vpop.f32.mrf.mxu0
  %v2138 = vadd.f32 0.0, %v2137
  %2139 = vmatmul.bf16.gmra.mxu0 %v2074
  %v2140 = vpop.f32.mrf.mxu0
  %v2141 = vadd.f32 0.0, %v2140
  %v2142 = vpop.f32.mrf.mxu0
  %v2143 = vadd.f32 0.0, %v2142
  %2144 = vmatmul.bf16.gmra.mxu0 %v2077
  %v2145 = vpop.f32.mrf.mxu0
  %v2146 = vadd.f32 0.0, %v2145
  %v2147 = vpop.f32.mrf.mxu0
  %v2148 = vadd.f32 0.0, %v2147
  %2149 = vmatmul.bf16.gmra.mxu0 %v2080
  %v2150 = vpop.f32.mrf.mxu0
  %v2151 = vadd.f32 0.0, %v2150
  %v2152 = vpop.f32.mrf.mxu0
  %v2153 = vadd.f32 0.0, %v2152
  %2154 = vmatmul.bf16.gmra.mxu0 %v2083
  %v2155 = vpop.f32.mrf.mxu0
  %v2156 = vadd.f32 0.0, %v2155
  %v2157 = vpop.f32.mrf.mxu0
  %v2158 = vadd.f32 0.0, %v2157
  %2159 = vmatmul.bf16.gmra.mxu0 %v2086
  %v2160 = vpop.f32.mrf.mxu0
  %v2161 = vadd.f32 0.0, %v2160
  %v2162 = vpop.f32.mrf.mxu0
  %v2163 = vadd.f32 0.0, %v2162
  %2164 = vmatmul.bf16.gmra.mxu0 %v2089
  %v2165 = vpop.f32.mrf.mxu0
  %v2166 = vadd.f32 0.0, %v2165
  %v2167 = vpop.f32.mrf.mxu0
  %v2168 = vadd.f32 0.0, %v2167
  %2169 = vmatmul.bf16.gmra.mxu0 %v2092
  %v2170 = vpop.f32.mrf.mxu0
  %v2171 = vadd.f32 0.0, %v2170
  %v2172 = vpop.f32.mrf.mxu0
  %v2173 = vadd.f32 0.0, %v2172
  %2174 = vmatmul.bf16.gmra.mxu0 %v2095
  %v2175 = vpop.f32.mrf.mxu0
  %v2176 = vadd.f32 0.0, %v2175
  %v2177 = vpop.f32.mrf.mxu0
  %v2178 = vadd.f32 0.0, %v2177
  %2179 = vmatmul.bf16.gmra.mxu0 %v2098
  %v2180 = vpop.f32.mrf.mxu0
  %v2181 = vadd.f32 0.0, %v2180
  %v2182 = vpop.f32.mrf.mxu0
  %v2183 = vadd.f32 0.0, %v2182
  %2184 = vmatmul.bf16.gmra.mxu0 %v2101
  %v2185 = vpop.f32.mrf.mxu0
  %v2186 = vadd.f32 0.0, %v2185
  %v2187 = vpop.f32.mrf.mxu0
  %v2188 = vadd.f32 0.0, %v2187
  %2189 = vdwg.mxu0
  %v2190 = vadd.f32 %v1809, %v2116
  %v2191 = vadd.f32 %v1811, %v2118
  %v2192 = vadd.f32 %v1814, %v2121
  %v2193 = vadd.f32 %v1816, %v2123
  %v2194 = vadd.f32 %v1819, %v2126
  %v2195 = vadd.f32 %v1821, %v2128
  %v2196 = vadd.f32 %v1824, %v2131
  %v2197 = vadd.f32 %v1826, %v2133
  %v2198 = vadd.f32 %v1829, %v2136
  %v2199 = vadd.f32 %v1831, %v2138
  %v2200 = vadd.f32 %v1834, %v2141
  %v2201 = vadd.f32 %v1836, %v2143
  %v2202 = vadd.f32 %v1839, %v2146
  %v2203 = vadd.f32 %v1841, %v2148
  %v2204 = vadd.f32 %v1844, %v2151
  %v2205 = vadd.f32 %v1846, %v2153
  %v2206 = vadd.f32 %v1849, %v2156
  %v2207 = vadd.f32 %v1851, %v2158
  %v2208 = vadd.f32 %v1854, %v2161
  %v2209 = vadd.f32 %v1856, %v2163
  %v2210 = vadd.f32 %v1859, %v2166
  %v2211 = vadd.f32 %v1861, %v2168
  %v2212 = vadd.f32 %v1864, %v2171
  %v2213 = vadd.f32 %v1866, %v2173
  %v2214 = vadd.f32 %v1869, %v2176
  %v2215 = vadd.f32 %v1871, %v2178
  %v2216 = vadd.f32 %v1874, %v2181
  %v2217 = vadd.f32 %v1876, %v2183
  %v2218 = vadd.f32 %v1879, %v2186
  %v2219 = vadd.f32 %v1881, %v2188
  %v2220 = vld [vmem:[%s6 + $0x1] ss:$0 sm:$0xff]
  %v2221 = vadd.f32 %v2190, %v2220
  %v2222 = vadd.f32 %v2191, %v2220
  %v2223 = vadd.f32 %v2192, %v2220
  %v2224 = vadd.f32 %v2193, %v2220
  %v2225 = vadd.f32 %v2194, %v2220
  %v2226 = vadd.f32 %v2195, %v2220
  %v2227 = vadd.f32 %v2196, %v2220
  %v2228 = vadd.f32 %v2197, %v2220
  %v2229 = vadd.f32 %v2198, %v2220
  %v2230 = vadd.f32 %v2199, %v2220
  %v2231 = vadd.f32 %v2200, %v2220
  %v2232 = vadd.f32 %v2201, %v2220
  %v2233 = vadd.f32 %v2202, %v2220
  %v2234 = vadd.f32 %v2203, %v2220
  %v2235 = vadd.f32 %v2204, %v2220
  %v2236 = vadd.f32 %v2205, %v2220
  %v2237 = vadd.f32 %v2206, %v2220
  %v2238 = vadd.f32 %v2207, %v2220
  %v2239 = vadd.f32 %v2208, %v2220
  %v2240 = vadd.f32 %v2209, %v2220
  %v2241 = vadd.f32 %v2210, %v2220
  %v2242 = vadd.f32 %v2211, %v2220
  %v2243 = vadd.f32 %v2212, %v2220
  %v2244 = vadd.f32 %v2213, %v2220
  %v2245 = vadd.f32 %v2214, %v2220
  %v2246 = vadd.f32 %v2215, %v2220
  %v2247 = vadd.f32 %v2216, %v2220
  %v2248 = vadd.f32 %v2217, %v2220
  %v2249 = vadd.f32 %v2218, %v2220
  %v2250 = vadd.f32 %v2219, %v2220
  %v2251 = vmax.f32 %v2221, 0.0
  %v2252 = vmax.f32 %v2222, 0.0
  %v2253 = vmax.f32 %v2223, 0.0
  %v2254 = vmax.f32 %v2224, 0.0
  %v2255 = vmax.f32 %v2225, 0.0
  %v2256 = vmax.f32 %v2226, 0.0
  %v2257 = vmax.f32 %v2227, 0.0
  %v2258 = vmax.f32 %v2228, 0.0
  %v2259 = vmax.f32 %v2229, 0.0
  %v2260 = vmax.f32 %v2230, 0.0
  %v2261 = vmax.f32 %v2231, 0.0
  %v2262 = vmax.f32 %v2232, 0.0
  %v2263 = vmax.f32 %v2233, 0.0
  %v2264 = vmax.f32 %v2234, 0.0
  %v2265 = vmax.f32 %v2235, 0.0
  %v2266 = vmax.f32 %v2236, 0.0
  %v2267 = vmax.f32 %v2237, 0.0
  %v2268 = vmax.f32 %v2238, 0.0
  %v2269 = vmax.f32 %v2239, 0.0
  %v2270 = vmax.f32 %v2240, 0.0
  %v2271 = vmax.f32 %v2241, 0.0
  %v2272 = vmax.f32 %v2242, 0.0
  %v2273 = vmax.f32 %v2243, 0.0
  %v2274 = vmax.f32 %v2244, 0.0
  %v2275 = vmax.f32 %v2245, 0.0
  %v2276 = vmax.f32 %v2246, 0.0
  %v2277 = vmax.f32 %v2247, 0.0
  %v2278 = vmax.f32 %v2248, 0.0
  %v2279 = vmax.f32 %v2249, 0.0
  %v2280 = vmax.f32 %v2250, 0.0
  %v2281 = vsel %vm1608, %v2251, 0.0
  %v2282 = vsel %vm1608, %v2252, 0.0
  %v2283 = vadd.f32 %v2281, %v2282
  %v2284 = vsel %vm1608, %v2253, 0.0
  %v2285 = vadd.f32 %v2283, %v2284
  %v2286 = vsel %vm1608, %v2254, 0.0
  %v2287 = vadd.f32 %v2285, %v2286
  %v2288 = vsel %vm1608, %v2255, 0.0
  %v2289 = vadd.f32 %v2287, %v2288
  %v2290 = vsel %vm1608, %v2256, 0.0
  %v2291 = vadd.f32 %v2289, %v2290
  %v2292 = vsel %vm1608, %v2257, 0.0
  %v2293 = vadd.f32 %v2291, %v2292
  %v2294 = vsel %vm1608, %v2258, 0.0
  %v2295 = vadd.f32 %v2293, %v2294
  %v2296 = vsel %vm1608, %v2259, 0.0
  %v2297 = vadd.f32 %v2295, %v2296
  %v2298 = vsel %vm1608, %v2260, 0.0
  %v2299 = vadd.f32 %v2297, %v2298
  %v2300 = vsel %vm1608, %v2261, 0.0
  %v2301 = vadd.f32 %v2299, %v2300
  %v2302 = vsel %vm1608, %v2262, 0.0
  %v2303 = vadd.f32 %v2301, %v2302
  %v2304 = vsel %vm1608, %v2263, 0.0
  %v2305 = vadd.f32 %v2303, %v2304
  %v2306 = vsel %vm1608, %v2264, 0.0
  %v2307 = vadd.f32 %v2305, %v2306
  %v2308 = vsel %vm1608, %v2265, 0.0
  %v2309 = vadd.f32 %v2307, %v2308
  %v2310 = vsel %vm1608, %v2266, 0.0
  %v2311 = vadd.f32 %v2309, %v2310
  %v2312 = vsel %vm1608, %v2267, 0.0
  %v2313 = vadd.f32 %v2311, %v2312
  %v2314 = vsel %vm1608, %v2268, 0.0
  %v2315 = vadd.f32 %v2313, %v2314
  %v2316 = vsel %vm1608, %v2269, 0.0
  %v2317 = vadd.f32 %v2315, %v2316
  %v2318 = vsel %vm1608, %v2270, 0.0
  %v2319 = vadd.f32 %v2317, %v2318
  %v2320 = vsel %vm1608, %v2271, 0.0
  %v2321 = vadd.f32 %v2319, %v2320
  %v2322 = vsel %vm1608, %v2272, 0.0
  %v2323 = vadd.f32 %v2321, %v2322
  %v2324 = vsel %vm1608, %v2273, 0.0
  %v2325 = vadd.f32 %v2323, %v2324
  %v2326 = vsel %vm1608, %v2274, 0.0
  %v2327 = vadd.f32 %v2325, %v2326
  %v2328 = vsel %vm1608, %v2275, 0.0
  %v2329 = vadd.f32 %v2327, %v2328
  %v2330 = vsel %vm1608, %v2276, 0.0
  %v2331 = vadd.f32 %v2329, %v2330
  %v2332 = vsel %vm1608, %v2277, 0.0
  %v2333 = vadd.f32 %v2331, %v2332
  %v2334 = vsel %vm1608, %v2278, 0.0
  %v2335 = vadd.f32 %v2333, %v2334
  %v2336 = vsel %vm1608, %v2279, 0.0
  %v2337 = vadd.f32 %v2335, %v2336
  %v2338 = vsel %vm1608, %v2280, 0.0
  %v2339 = vadd.f32 %v2337, %v2338
  %v2340 = vrot.slane %v2339, 4
  %v2341 = vadd.f32 %v2339, %v2340
  %v2342 = vrot.slane %v2341, 2
  %v2343 = vadd.f32 %v2341, %v2342
  %v2344 = vrot.slane %v2343, 1
  %v2345 = vadd.f32 %v2343, %v2344
  %v2346 = vrcp.pop 240.0
  %v2347 = vmul.f32 240.0, %v2346
  %v2348 = vsub.f32 1.0, %v2347
  %v2349 = vmul.f32 %v2346, %v2348
  %v2350 = vadd.f32 %v2346, %v2349
  %vm2351 = vweird.f32 %v2346
  %v2352 = vsel %vm2351, %v2346, %v2350
  %v2353 = vmul.f32 %v2345, %v2352
  %v2354 = vmul.f32 %v2251, %v2251
  %v2355 = vmul.f32 %v2252, %v2252
  %v2356 = vmul.f32 %v2253, %v2253
  %v2357 = vmul.f32 %v2254, %v2254
  %v2358 = vmul.f32 %v2255, %v2255
  %v2359 = vmul.f32 %v2256, %v2256
  %v2360 = vmul.f32 %v2257, %v2257
  %v2361 = vmul.f32 %v2258, %v2258
  %v2362 = vmul.f32 %v2259, %v2259
  %v2363 = vmul.f32 %v2260, %v2260
  %v2364 = vmul.f32 %v2261, %v2261
  %v2365 = vmul.f32 %v2262, %v2262
  %v2366 = vmul.f32 %v2263, %v2263
  %v2367 = vmul.f32 %v2264, %v2264
  %v2368 = vmul.f32 %v2265, %v2265
  %v2369 = vmul.f32 %v2266, %v2266
  %v2370 = vmul.f32 %v2267, %v2267
  %v2371 = vmul.f32 %v2268, %v2268
  %v2372 = vmul.f32 %v2269, %v2269
  %v2373 = vmul.f32 %v2270, %v2270
  %v2374 = vmul.f32 %v2271, %v2271
  %v2375 = vmul.f32 %v2272, %v2272
  %v2376 = vmul.f32 %v2273, %v2273
  %v2377 = vmul.f32 %v2274, %v2274
  %v2378 = vmul.f32 %v2275, %v2275
  %v2379 = vmul.f32 %v2276, %v2276
  %v2380 = vmul.f32 %v2277, %v2277
  %v2381 = vmul.f32 %v2278, %v2278
  %v2382 = vmul.f32 %v2279, %v2279
  %v2383 = vmul.f32 %v2280, %v2280
  %v2384 = vsel %vm1608, %v2354, 0.0
  %v2385 = vsel %vm1608, %v2355, 0.0
  %v2386 = vadd.f32 %v2384, %v2385
  %v2387 = vsel %vm1608, %v2356, 0.0
  %v2388 = vadd.f32 %v2386, %v2387
  %v2389 = vsel %vm1608, %v2357, 0.0
  %v2390 = vadd.f32 %v2388, %v2389
  %v2391 = vsel %vm1608, %v2358, 0.0
  %v2392 = vadd.f32 %v2390, %v2391
  %v2393 = vsel %vm1608, %v2359, 0.0
  %v2394 = vadd.f32 %v2392, %v2393
  %v2395 = vsel %vm1608, %v2360, 0.0
  %v2396 = vadd.f32 %v2394, %v2395
  %v2397 = vsel %vm1608, %v2361, 0.0
  %v2398 = vadd.f32 %v2396, %v2397
  %v2399 = vsel %vm1608, %v2362, 0.0
  %v2400 = vadd.f32 %v2398, %v2399
  %v2401 = vsel %vm1608, %v2363, 0.0
  %v2402 = vadd.f32 %v2400, %v2401
  %v2403 = vsel %vm1608, %v2364, 0.0
  %v2404 = vadd.f32 %v2402, %v2403
  %v2405 = vsel %vm1608, %v2365, 0.0
  %v2406 = vadd.f32 %v2404, %v2405
  %v2407 = vsel %vm1608, %v2366, 0.0
  %v2408 = vadd.f32 %v2406, %v2407
  %v2409 = vsel %vm1608, %v2367, 0.0
  %v2410 = vadd.f32 %v2408, %v2409
  %v2411 = vsel %vm1608, %v2368, 0.0
  %v2412 = vadd.f32 %v2410, %v2411
  %v2413 = vsel %vm1608, %v2369, 0.0
  %v2414 = vadd.f32 %v2412, %v2413
  %v2415 = vsel %vm1608, %v2370, 0.0
  %v2416 = vadd.f32 %v2414, %v2415
  %v2417 = vsel %vm1608, %v2371, 0.0
  %v2418 = vadd.f32 %v2416, %v2417
  %v2419 = vsel %vm1608, %v2372, 0.0
  %v2420 = vadd.f32 %v2418, %v2419
  %v2421 = vsel %vm1608, %v2373, 0.0
  %v2422 = vadd.f32 %v2420, %v2421
  %v2423 = vsel %vm1608, %v2374, 0.0
  %v2424 = vadd.f32 %v2422, %v2423
  %v2425 = vsel %vm1608, %v2375, 0.0
  %v2426 = vadd.f32 %v2424, %v2425
  %v2427 = vsel %vm1608, %v2376, 0.0
  %v2428 = vadd.f32 %v2426, %v2427
  %v2429 = vsel %vm1608, %v2377, 0.0
  %v2430 = vadd.f32 %v2428, %v2429
  %v2431 = vsel %vm1608, %v2378, 0.0
  %v2432 = vadd.f32 %v2430, %v2431
  %v2433 = vsel %vm1608, %v2379, 0.0
  %v2434 = vadd.f32 %v2432, %v2433
  %v2435 = vsel %vm1608, %v2380, 0.0
  %v2436 = vadd.f32 %v2434, %v2435
  %v2437 = vsel %vm1608, %v2381, 0.0
  %v2438 = vadd.f32 %v2436, %v2437
  %v2439 = vsel %vm1608, %v2382, 0.0
  %v2440 = vadd.f32 %v2438, %v2439
  %v2441 = vsel %vm1608, %v2383, 0.0
  %v2442 = vadd.f32 %v2440, %v2441
  %v2443 = vrot.slane %v2442, 4
  %v2444 = vadd.f32 %v2442, %v2443
  %v2445 = vrot.slane %v2444, 2
  %v2446 = vadd.f32 %v2444, %v2445
  %v2447 = vrot.slane %v2446, 1
  %v2448 = vadd.f32 %v2446, %v2447
  %v2449 = vmul.f32 %v2448, %v2352
  %v2450 = vmul.f32 %v2353, %v2353
  %v2451 = vsub.f32 %v2449, %v2450
  %v2452 = vmax.f32 %v2451, 0.0
  %v2453 = vsub.f32 %v2251, %v2353
  %v2454 = vsub.f32 %v2252, %v2353
  %v2455 = vsub.f32 %v2253, %v2353
  %v2456 = vsub.f32 %v2254, %v2353
  %v2457 = vsub.f32 %v2255, %v2353
  %v2458 = vsub.f32 %v2256, %v2353
  %v2459 = vsub.f32 %v2257, %v2353
  %v2460 = vsub.f32 %v2258, %v2353
  %v2461 = vsub.f32 %v2259, %v2353
  %v2462 = vsub.f32 %v2260, %v2353
  %v2463 = vsub.f32 %v2261, %v2353
  %v2464 = vsub.f32 %v2262, %v2353
  %v2465 = vsub.f32 %v2263, %v2353
  %v2466 = vsub.f32 %v2264, %v2353
  %v2467 = vsub.f32 %v2265, %v2353
  %v2468 = vsub.f32 %v2266, %v2353
  %v2469 = vsub.f32 %v2267, %v2353
  %v2470 = vsub.f32 %v2268, %v2353
  %v2471 = vsub.f32 %v2269, %v2353
  %v2472 = vsub.f32 %v2270, %v2353
  %v2473 = vsub.f32 %v2271, %v2353
  %v2474 = vsub.f32 %v2272, %v2353
  %v2475 = vsub.f32 %v2273, %v2353
  %v2476 = vsub.f32 %v2274, %v2353
  %v2477 = vsub.f32 %v2275, %v2353
  %v2478 = vsub.f32 %v2276, %v2353
  %v2479 = vsub.f32 %v2277, %v2353
  %v2480 = vsub.f32 %v2278, %v2353
  %v2481 = vsub.f32 %v2279, %v2353
  %v2482 = vsub.f32 %v2280, %v2353
  %v2483 = vrsqrt.pop %v2452
  %v2484 = vmul.f32 %v2483, %v2452
  %v2485 = vmul.f32 %v2484, %v2483
  %v2486 = vmul.f32 0.5, %v2485
  %v2487 = vsub.f32 1.5, %v2486
  %v2488 = vmul.f32 %v2483, %v2487
  %vm2489 = vweird.f32 %v2452
  %vm2490 = vweird.f32 %v2483
  %vm2491 = vmor %vm2489, %vm2490
  %v2492 = vsel %vm2491, %v2483, %v2488
  %v2493 = vmul.f32 %v2453, %v2492
  %v2494 = vmul.f32 %v2454, %v2492
  %v2495 = vmul.f32 %v2455, %v2492
  %v2496 = vmul.f32 %v2456, %v2492
  %v2497 = vmul.f32 %v2457, %v2492
  %v2498 = vmul.f32 %v2458, %v2492
  %v2499 = vmul.f32 %v2459, %v2492
  %v2500 = vmul.f32 %v2460, %v2492
  %v2501 = vmul.f32 %v2461, %v2492
  %v2502 = vmul.f32 %v2462, %v2492
  %v2503 = vmul.f32 %v2463, %v2492
  %v2504 = vmul.f32 %v2464, %v2492
  %v2505 = vmul.f32 %v2465, %v2492
  %v2506 = vmul.f32 %v2466, %v2492
  %v2507 = vmul.f32 %v2467, %v2492
  %v2508 = vmul.f32 %v2468, %v2492
  %v2509 = vmul.f32 %v2469, %v2492
  %v2510 = vmul.f32 %v2470, %v2492
  %v2511 = vmul.f32 %v2471, %v2492
  %v2512 = vmul.f32 %v2472, %v2492
  %v2513 = vmul.f32 %v2473, %v2492
  %v2514 = vmul.f32 %v2474, %v2492
  %v2515 = vmul.f32 %v2475, %v2492
  %v2516 = vmul.f32 %v2476, %v2492
  %v2517 = vmul.f32 %v2477, %v2492
  %v2518 = vmul.f32 %v2478, %v2492
  %v2519 = vmul.f32 %v2479, %v2492
  %v2520 = vmul.f32 %v2480, %v2492
  %v2521 = vmul.f32 %v2481, %v2492
  %v2522 = vmul.f32 %v2482, %v2492
  %v2523 = vld [vmem:[%s6 + $0x2] ss:$0 sm:$0xff]
  %v2524 = vmul.f32 %v2493, %v2523
  %v2525 = vmul.f32 %v2494, %v2523
  %v2526 = vmul.f32 %v2495, %v2523
  %v2527 = vmul.f32 %v2496, %v2523
  %v2528 = vmul.f32 %v2497, %v2523
  %v2529 = vmul.f32 %v2498, %v2523
  %v2530 = vmul.f32 %v2499, %v2523
  %v2531 = vmul.f32 %v2500, %v2523
  %v2532 = vmul.f32 %v2501, %v2523
  %v2533 = vmul.f32 %v2502, %v2523
  %v2534 = vmul.f32 %v2503, %v2523
  %v2535 = vmul.f32 %v2504, %v2523
  %v2536 = vmul.f32 %v2505, %v2523
  %v2537 = vmul.f32 %v2506, %v2523
  %v2538 = vmul.f32 %v2507, %v2523
  %v2539 = vmul.f32 %v2508, %v2523
  %v2540 = vmul.f32 %v2509, %v2523
  %v2541 = vmul.f32 %v2510, %v2523
  %v2542 = vmul.f32 %v2511, %v2523
  %v2543 = vmul.f32 %v2512, %v2523
  %v2544 = vmul.f32 %v2513, %v2523
  %v2545 = vmul.f32 %v2514, %v2523
  %v2546 = vmul.f32 %v2515, %v2523
  %v2547 = vmul.f32 %v2516, %v2523
  %v2548 = vmul.f32 %v2517, %v2523
  %v2549 = vmul.f32 %v2518, %v2523
  %v2550 = vmul.f32 %v2519, %v2523
  %v2551 = vmul.f32 %v2520, %v2523
  %v2552 = vmul.f32 %v2521, %v2523
  %v2553 = vmul.f32 %v2522, %v2523
  %v2554 = vld [vmem:[%s6 + $0x3] ss:$0 sm:$0xff]
  %v2555 = vadd.f32 %v2524, %v2554
  %v2556 = vadd.f32 %v2525, %v2554
  %v2557 = vadd.f32 %v2526, %v2554
  %v2558 = vadd.f32 %v2527, %v2554
  %v2559 = vadd.f32 %v2528, %v2554
  %v2560 = vadd.f32 %v2529, %v2554
  %v2561 = vadd.f32 %v2530, %v2554
  %v2562 = vadd.f32 %v2531, %v2554
  %v2563 = vadd.f32 %v2532, %v2554
  %v2564 = vadd.f32 %v2533, %v2554
  %v2565 = vadd.f32 %v2534, %v2554
  %v2566 = vadd.f32 %v2535, %v2554
  %v2567 = vadd.f32 %v2536, %v2554
  %v2568 = vadd.f32 %v2537, %v2554
  %v2569 = vadd.f32 %v2538, %v2554
  %v2570 = vadd.f32 %v2539, %v2554
  %v2571 = vadd.f32 %v2540, %v2554
  %v2572 = vadd.f32 %v2541, %v2554
  %v2573 = vadd.f32 %v2542, %v2554
  %v2574 = vadd.f32 %v2543, %v2554
  %v2575 = vadd.f32 %v2544, %v2554
  %v2576 = vadd.f32 %v2545, %v2554
  %v2577 = vadd.f32 %v2546, %v2554
  %v2578 = vadd.f32 %v2547, %v2554
  %v2579 = vadd.f32 %v2548, %v2554
  %v2580 = vadd.f32 %v2549, %v2554
  %v2581 = vadd.f32 %v2550, %v2554
  %v2582 = vadd.f32 %v2551, %v2554
  %v2583 = vadd.f32 %v2552, %v2554
  %v2584 = vadd.f32 %v2553, %v2554
  %v2585 = vld [vmem:[%s3 + $0x24] sm:$0xf]
  %v2586 = vld [vmem:[%s3 + $0x28] sm:$0xf]
  %v2587 = vld [vmem:[%s3 + $0x2c] sm:$0xf]
  %v2588 = vld [vmem:[%s3 + $0x30] sm:$0xf]
  %v2589 = vld [vmem:[%s3 + $0x34] sm:$0xf]
  %v2590 = vld [vmem:[%s3 + $0x38] sm:$0xf]
  %v2591 = vld [vmem:[%s3 + $0x3c] sm:$0xf]
  %v2592 = vld [vmem:[%s3 + $0x40] sm:$0xf]
  %v2593 = vld [vmem:[%s3 + $0x44] sm:$0xf]
  %v2594 = vpack.c.bf16 %v2556, %v2555
  %v2595 = vpack.c.bf16 %v2558, %v2557
  %v2596 = vpack.c.bf16 %v2560, %v2559
  %v2597 = vpack.c.bf16 %v2562, %v2561
  %v2598 = vpack.c.bf16 %v2564, %v2563
  %v2599 = vpack.c.bf16 %v2566, %v2565
  %v2600 = vpack.c.bf16 %v2568, %v2567
  %v2601 = vpack.c.bf16 %v2570, %v2569
  %v2602 = vpack.c.bf16 %v2572, %v2571
  %v2603 = vpack.c.bf16 %v2574, %v2573
  %v2604 = vpack.c.bf16 %v2576, %v2575
  %v2605 = vpack.c.bf16 %v2578, %v2577
  %v2606 = vpack.c.bf16 %v2580, %v2579
  %v2607 = vpack.c.bf16 %v2582, %v2581
  %v2608 = vpack.c.bf16 %v2584, %v2583
  %v2609 = vrot.slane %v2555, 7
  %v2610 = vrot.slane %v2556, 7
  %v2611 = vrot.slane %v2557, 7
  %v2612 = vrot.slane %v2558, 7
  %v2613 = vrot.slane %v2559, 7
  %v2614 = vrot.slane %v2560, 7
  %v2615 = vrot.slane %v2561, 7
  %v2616 = vrot.slane %v2562, 7
  %v2617 = vrot.slane %v2563, 7
  %v2618 = vrot.slane %v2564, 7
  %v2619 = vrot.slane %v2565, 7
  %v2620 = vrot.slane %v2566, 7
  %v2621 = vrot.slane %v2567, 7
  %v2622 = vrot.slane %v2568, 7
  %v2623 = vrot.slane %v2569, 7
  %v2624 = vrot.slane %v2570, 7
  %v2625 = vrot.slane %v2571, 7
  %v2626 = vrot.slane %v2572, 7
  %v2627 = vrot.slane %v2573, 7
  %v2628 = vrot.slane %v2574, 7
  %v2629 = vrot.slane %v2575, 7
  %v2630 = vrot.slane %v2576, 7
  %v2631 = vrot.slane %v2577, 7
  %v2632 = vrot.slane %v2578, 7
  %v2633 = vrot.slane %v2579, 7
  %v2634 = vrot.slane %v2580, 7
  %v2635 = vrot.slane %v2581, 7
  %v2636 = vrot.slane %v2582, 7
  %v2637 = vrot.slane %v2583, 7
  %v2638 = vrot.slane %v2584, 7
  %v2639 = vsel %vm1463, %v2637, %v2638
  %v2640 = vsel %vm1463, %v2636, %v2637
  %v2641 = vsel %vm1463, %v2635, %v2636
  %v2642 = vsel %vm1463, %v2634, %v2635
  %v2643 = vsel %vm1463, %v2633, %v2634
  %v2644 = vsel %vm1463, %v2632, %v2633
  %v2645 = vsel %vm1463, %v2631, %v2632
  %v2646 = vsel %vm1463, %v2630, %v2631
  %v2647 = vsel %vm1463, %v2629, %v2630
  %v2648 = vsel %vm1463, %v2628, %v2629
  %v2649 = vsel %vm1463, %v2627, %v2628
  %v2650 = vsel %vm1463, %v2626, %v2627
  %v2651 = vsel %vm1463, %v2625, %v2626
  %v2652 = vsel %vm1463, %v2624, %v2625
  %v2653 = vsel %vm1463, %v2623, %v2624
  %v2654 = vsel %vm1463, %v2622, %v2623
  %v2655 = vsel %vm1463, %v2621, %v2622
  %v2656 = vsel %vm1463, %v2620, %v2621
  %v2657 = vsel %vm1463, %v2619, %v2620
  %v2658 = vsel %vm1463, %v2618, %v2619
  %v2659 = vsel %vm1463, %v2617, %v2618
  %v2660 = vsel %vm1463, %v2616, %v2617
  %v2661 = vsel %vm1463, %v2615, %v2616
  %v2662 = vsel %vm1463, %v2614, %v2615
  %v2663 = vsel %vm1463, %v2613, %v2614
  %v2664 = vsel %vm1463, %v2612, %v2613
  %v2665 = vsel %vm1463, %v2611, %v2612
  %v2666 = vsel %vm1463, %v2610, %v2611
  %v2667 = vsel %vm1463, %v2609, %v2610
  %v2668 = vsel %vm1463, %v2638, %v2609
  %v2669 = vsel %vm1524, 0.0, %v2668
  %v2670 = vsel %vm1525, 0.0, %v2667
  %v2671 = vsel %vm1526, 0.0, %v2666
  %v2672 = vsel %vm1527, 0.0, %v2665
  %v2673 = vsel %vm1528, 0.0, %v2664
  %v2674 = vsel %vm1529, 0.0, %v2663
  %v2675 = vsel %vm1530, 0.0, %v2662
  %v2676 = vsel %vm1531, 0.0, %v2661
  %v2677 = vsel %vm1532, 0.0, %v2660
  %v2678 = vsel %vm1533, 0.0, %v2659
  %v2679 = vsel %vm1534, 0.0, %v2658
  %v2680 = vsel %vm1535, 0.0, %v2657
  %v2681 = vsel %vm1536, 0.0, %v2656
  %v2682 = vsel %vm1537, 0.0, %v2655
  %v2683 = vsel %vm1538, 0.0, %v2654
  %v2684 = vsel %vm1539, 0.0, %v2653
  %v2685 = vsel %vm1540, 0.0, %v2652
  %v2686 = vsel %vm1541, 0.0, %v2651
  %v2687 = vsel %vm1542, 0.0, %v2650
  %v2688 = vsel %vm1543, 0.0, %v2649
  %v2689 = vsel %vm1544, 0.0, %v2648
  %v2690 = vsel %vm1545, 0.0, %v2647
  %v2691 = vsel %vm1546, 0.0, %v2646
  %v2692 = vsel %vm1547, 0.0, %v2645
  %v2693 = vsel %vm1548, 0.0, %v2644
  %v2694 = vsel %vm1549, 0.0, %v2643
  %v2695 = vsel %vm1550, 0.0, %v2642
  %v2696 = vsel %vm1551, 0.0, %v2641
  %v2697 = vsel %vm1552, 0.0, %v2640
  %v2698 = vsel %vm1553, 0.0, %v2639
  %v2699 = vpack.c.bf16 %v2670, %v2669
  %v2700 = vpack.c.bf16 %v2672, %v2671
  %v2701 = vpack.c.bf16 %v2674, %v2673
  %v2702 = vpack.c.bf16 %v2676, %v2675
  %v2703 = vpack.c.bf16 %v2678, %v2677
  %v2704 = vpack.c.bf16 %v2680, %v2679
  %v2705 = vpack.c.bf16 %v2682, %v2681
  %v2706 = vpack.c.bf16 %v2684, %v2683
  %v2707 = vpack.c.bf16 %v2686, %v2685
  %v2708 = vpack.c.bf16 %v2688, %v2687
  %v2709 = vpack.c.bf16 %v2690, %v2689
  %v2710 = vpack.c.bf16 %v2692, %v2691
  %v2711 = vpack.c.bf16 %v2694, %v2693
  %v2712 = vpack.c.bf16 %v2696, %v2695
  %v2713 = vpack.c.bf16 %v2698, %v2697
  %v2717 = vunpack.c.l.b16 %v2585
  %v2718 = vunpack.c.l.b16 %v2586
  %v2719 = vunpack.c.l.b16 %v2587
  %v2720 = vpack.c.b16 %v2718, %v2717
  %v2721 = vpack.c.b16 %v2719, %v2719
  %v2724 = vsel %vm1608, %v2699, 0
  %v2727 = vsel %vm1608, %v2700, 0
  %v2730 = vsel %vm1608, %v2701, 0
  %v2733 = vsel %vm1608, %v2702, 0
  %v2736 = vsel %vm1608, %v2703, 0
  %v2739 = vsel %vm1608, %v2704, 0
  %v2742 = vsel %vm1608, %v2705, 0
  %v2745 = vsel %vm1608, %v2706, 0
  %v2748 = vsel %vm1608, %v2707, 0
  %v2751 = vsel %vm1608, %v2708, 0
  %v2754 = vsel %vm1608, %v2709, 0
  %v2757 = vsel %vm1608, %v2710, 0
  %v2760 = vsel %vm1608, %v2711, 0
  %v2763 = vsel %vm1608, %v2712, 0
  %v2766 = vsel %vm1608, %v2713, 0
  %v2769 = vsel %vm1654, %v2721, 0
  %2771 = vmatpush.bf16.msra.mxu0 0
  %2772 = vmatpush.bf16.msra.mxu0 0
  %2773 = vmatpush.bf16.msra.mxu0 0
  %2774 = vmatpush.bf16.msra.mxu0 0
  %2775 = vmatpush.bf16.msra.mxu0 0
  %2776 = vmatpush.bf16.msra.mxu0 0
  %2777 = vmatpush.bf16.msra.mxu0 %v2769
  %2778 = vmatpush.bf16.msra.mxu0 %v2720
  %2779 = vmatmul.bf16.gmra.mxu0 %v2724
  %v2780 = vpop.f32.mrf.mxu0
  %v2781 = vadd.f32 0.0, %v2780
  %v2782 = vpop.f32.mrf.mxu0
  %v2783 = vadd.f32 0.0, %v2782
  %2784 = vmatmul.bf16.gmra.mxu0 %v2727
  %v2785 = vpop.f32.mrf.mxu0
  %v2786 = vadd.f32 0.0, %v2785
  %v2787 = vpop.f32.mrf.mxu0
  %v2788 = vadd.f32 0.0, %v2787
  %2789 = vmatmul.bf16.gmra.mxu0 %v2730
  %v2790 = vpop.f32.mrf.mxu0
  %v2791 = vadd.f32 0.0, %v2790
  %v2792 = vpop.f32.mrf.mxu0
  %v2793 = vadd.f32 0.0, %v2792
  %2794 = vmatmul.bf16.gmra.mxu0 %v2733
  %v2795 = vpop.f32.mrf.mxu0
  %v2796 = vadd.f32 0.0, %v2795
  %v2797 = vpop.f32.mrf.mxu0
  %v2798 = vadd.f32 0.0, %v2797
  %2799 = vmatmul.bf16.gmra.mxu0 %v2736
  %v2800 = vpop.f32.mrf.mxu0
  %v2801 = vadd.f32 0.0, %v2800
  %v2802 = vpop.f32.mrf.mxu0
  %v2803 = vadd.f32 0.0, %v2802
  %2804 = vmatmul.bf16.gmra.mxu0 %v2739
  %v2805 = vpop.f32.mrf.mxu0
  %v2806 = vadd.f32 0.0, %v2805
  %v2807 = vpop.f32.mrf.mxu0
  %v2808 = vadd.f32 0.0, %v2807
  %2809 = vmatmul.bf16.gmra.mxu0 %v2742
  %v2810 = vpop.f32.mrf.mxu0
  %v2811 = vadd.f32 0.0, %v2810
  %v2812 = vpop.f32.mrf.mxu0
  %v2813 = vadd.f32 0.0, %v2812
  %2814 = vmatmul.bf16.gmra.mxu0 %v2745
  %v2815 = vpop.f32.mrf.mxu0
  %v2816 = vadd.f32 0.0, %v2815
  %v2817 = vpop.f32.mrf.mxu0
  %v2818 = vadd.f32 0.0, %v2817
  %2819 = vmatmul.bf16.gmra.mxu0 %v2748
  %v2820 = vpop.f32.mrf.mxu0
  %v2821 = vadd.f32 0.0, %v2820
  %v2822 = vpop.f32.mrf.mxu0
  %v2823 = vadd.f32 0.0, %v2822
  %2824 = vmatmul.bf16.gmra.mxu0 %v2751
  %v2825 = vpop.f32.mrf.mxu0
  %v2826 = vadd.f32 0.0, %v2825
  %v2827 = vpop.f32.mrf.mxu0
  %v2828 = vadd.f32 0.0, %v2827
  %2829 = vmatmul.bf16.gmra.mxu0 %v2754
  %v2830 = vpop.f32.mrf.mxu0
  %v2831 = vadd.f32 0.0, %v2830
  %v2832 = vpop.f32.mrf.mxu0
  %v2833 = vadd.f32 0.0, %v2832
  %2834 = vmatmul.bf16.gmra.mxu0 %v2757
  %v2835 = vpop.f32.mrf.mxu0
  %v2836 = vadd.f32 0.0, %v2835
  %v2837 = vpop.f32.mrf.mxu0
  %v2838 = vadd.f32 0.0, %v2837
  %2839 = vmatmul.bf16.gmra.mxu0 %v2760
  %v2840 = vpop.f32.mrf.mxu0
  %v2841 = vadd.f32 0.0, %v2840
  %v2842 = vpop.f32.mrf.mxu0
  %v2843 = vadd.f32 0.0, %v2842
  %2844 = vmatmul.bf16.gmra.mxu0 %v2763
  %v2845 = vpop.f32.mrf.mxu0
  %v2846 = vadd.f32 0.0, %v2845
  %v2847 = vpop.f32.mrf.mxu0
  %v2848 = vadd.f32 0.0, %v2847
  %2849 = vmatmul.bf16.gmra.mxu0 %v2766
  %v2850 = vpop.f32.mrf.mxu0
  %v2851 = vadd.f32 0.0, %v2850
  %v2852 = vpop.f32.mrf.mxu0
  %v2853 = vadd.f32 0.0, %v2852
  %2854 = vdwg.mxu0
  %v2858 = vunpack.c.l.b16 %v2588
  %v2859 = vunpack.c.l.b16 %v2589
  %v2860 = vunpack.c.l.b16 %v2590
  %v2861 = vpack.c.b16 %v2859, %v2858
  %v2862 = vpack.c.b16 %v2860, %v2860
  %v2865 = vsel %vm1608, %v2594, 0
  %v2868 = vsel %vm1608, %v2595, 0
  %v2871 = vsel %vm1608, %v2596, 0
  %v2874 = vsel %vm1608, %v2597, 0
  %v2877 = vsel %vm1608, %v2598, 0
  %v2880 = vsel %vm1608, %v2599, 0
  %v2883 = vsel %vm1608, %v2600, 0
  %v2886 = vsel %vm1608, %v2601, 0
  %v2889 = vsel %vm1608, %v2602, 0
  %v2892 = vsel %vm1608, %v2603, 0
  %v2895 = vsel %vm1608, %v2604, 0
  %v2898 = vsel %vm1608, %v2605, 0
  %v2901 = vsel %vm1608, %v2606, 0
  %v2904 = vsel %vm1608, %v2607, 0
  %v2907 = vsel %vm1608, %v2608, 0
  %v2910 = vsel %vm1654, %v2862, 0
  %2912 = vmatpush.bf16.msra.mxu0 0
  %2913 = vmatpush.bf16.msra.mxu0 0
  %2914 = vmatpush.bf16.msra.mxu0 0
  %2915 = vmatpush.bf16.msra.mxu0 0
  %2916 = vmatpush.bf16.msra.mxu0 0
  %2917 = vmatpush.bf16.msra.mxu0 0
  %2918 = vmatpush.bf16.msra.mxu0 %v2910
  %2919 = vmatpush.bf16.msra.mxu0 %v2861
  %2920 = vmatmul.bf16.gmra.mxu0 %v2865
  %v2921 = vpop.f32.mrf.mxu0
  %v2922 = vadd.f32 %v2781, %v2921
  %v2923 = vpop.f32.mrf.mxu0
  %v2924 = vadd.f32 %v2783, %v2923
  %2925 = vmatmul.bf16.gmra.mxu0 %v2868
  %v2926 = vpop.f32.mrf.mxu0
  %v2927 = vadd.f32 %v2786, %v2926
  %v2928 = vpop.f32.mrf.mxu0
  %v2929 = vadd.f32 %v2788, %v2928
  %2930 = vmatmul.bf16.gmra.mxu0 %v2871
  %v2931 = vpop.f32.mrf.mxu0
  %v2932 = vadd.f32 %v2791, %v2931
  %v2933 = vpop.f32.mrf.mxu0
  %v2934 = vadd.f32 %v2793, %v2933
  %2935 = vmatmul.bf16.gmra.mxu0 %v2874
  %v2936 = vpop.f32.mrf.mxu0
  %v2937 = vadd.f32 %v2796, %v2936
  %v2938 = vpop.f32.mrf.mxu0
  %v2939 = vadd.f32 %v2798, %v2938
  %2940 = vmatmul.bf16.gmra.mxu0 %v2877
  %v2941 = vpop.f32.mrf.mxu0
  %v2942 = vadd.f32 %v2801, %v2941
  %v2943 = vpop.f32.mrf.mxu0
  %v2944 = vadd.f32 %v2803, %v2943
  %2945 = vmatmul.bf16.gmra.mxu0 %v2880
  %v2946 = vpop.f32.mrf.mxu0
  %v2947 = vadd.f32 %v2806, %v2946
  %v2948 = vpop.f32.mrf.mxu0
  %v2949 = vadd.f32 %v2808, %v2948
  %2950 = vmatmul.bf16.gmra.mxu0 %v2883
  %v2951 = vpop.f32.mrf.mxu0
  %v2952 = vadd.f32 %v2811, %v2951
  %v2953 = vpop.f32.mrf.mxu0
  %v2954 = vadd.f32 %v2813, %v2953
  %2955 = vmatmul.bf16.gmra.mxu0 %v2886
  %v2956 = vpop.f32.mrf.mxu0
  %v2957 = vadd.f32 %v2816, %v2956
  %v2958 = vpop.f32.mrf.mxu0
  %v2959 = vadd.f32 %v2818, %v2958
  %2960 = vmatmul.bf16.gmra.mxu0 %v2889
  %v2961 = vpop.f32.mrf.mxu0
  %v2962 = vadd.f32 %v2821, %v2961
  %v2963 = vpop.f32.mrf.mxu0
  %v2964 = vadd.f32 %v2823, %v2963
  %2965 = vmatmul.bf16.gmra.mxu0 %v2892
  %v2966 = vpop.f32.mrf.mxu0
  %v2967 = vadd.f32 %v2826, %v2966
  %v2968 = vpop.f32.mrf.mxu0
  %v2969 = vadd.f32 %v2828, %v2968
  %2970 = vmatmul.bf16.gmra.mxu0 %v2895
  %v2971 = vpop.f32.mrf.mxu0
  %v2972 = vadd.f32 %v2831, %v2971
  %v2973 = vpop.f32.mrf.mxu0
  %v2974 = vadd.f32 %v2833, %v2973
  %2975 = vmatmul.bf16.gmra.mxu0 %v2898
  %v2976 = vpop.f32.mrf.mxu0
  %v2977 = vadd.f32 %v2836, %v2976
  %v2978 = vpop.f32.mrf.mxu0
  %v2979 = vadd.f32 %v2838, %v2978
  %2980 = vmatmul.bf16.gmra.mxu0 %v2901
  %v2981 = vpop.f32.mrf.mxu0
  %v2982 = vadd.f32 %v2841, %v2981
  %v2983 = vpop.f32.mrf.mxu0
  %v2984 = vadd.f32 %v2843, %v2983
  %2985 = vmatmul.bf16.gmra.mxu0 %v2904
  %v2986 = vpop.f32.mrf.mxu0
  %v2987 = vadd.f32 %v2846, %v2986
  %v2988 = vpop.f32.mrf.mxu0
  %v2989 = vadd.f32 %v2848, %v2988
  %2990 = vmatmul.bf16.gmra.mxu0 %v2907
  %v2991 = vpop.f32.mrf.mxu0
  %v2992 = vadd.f32 %v2851, %v2991
  %v2993 = vpop.f32.mrf.mxu0
  %v2994 = vadd.f32 %v2853, %v2993
  %2995 = vdwg.mxu0
  %v2996 = vrot.slane %v2555, 1
  %v2997 = vrot.slane %v2556, 1
  %v2998 = vrot.slane %v2557, 1
  %v2999 = vrot.slane %v2558, 1
  %v3000 = vrot.slane %v2559, 1
  %v3001 = vrot.slane %v2560, 1
  %v3002 = vrot.slane %v2561, 1
  %v3003 = vrot.slane %v2562, 1
  %v3004 = vrot.slane %v2563, 1
  %v3005 = vrot.slane %v2564, 1
  %v3006 = vrot.slane %v2565, 1
  %v3007 = vrot.slane %v2566, 1
  %v3008 = vrot.slane %v2567, 1
  %v3009 = vrot.slane %v2568, 1
  %v3010 = vrot.slane %v2569, 1
  %v3011 = vrot.slane %v2570, 1
  %v3012 = vrot.slane %v2571, 1
  %v3013 = vrot.slane %v2572, 1
  %v3014 = vrot.slane %v2573, 1
  %v3015 = vrot.slane %v2574, 1
  %v3016 = vrot.slane %v2575, 1
  %v3017 = vrot.slane %v2576, 1
  %v3018 = vrot.slane %v2577, 1
  %v3019 = vrot.slane %v2578, 1
  %v3020 = vrot.slane %v2579, 1
  %v3021 = vrot.slane %v2580, 1
  %v3022 = vrot.slane %v2581, 1
  %v3023 = vrot.slane %v2582, 1
  %v3024 = vrot.slane %v2583, 1
  %v3025 = vrot.slane %v2584, 1
  %v3026 = vsel %vm1913, %v3024, %v3025
  %v3027 = vsel %vm1913, %v3023, %v3024
  %v3028 = vsel %vm1913, %v3022, %v3023
  %v3029 = vsel %vm1913, %v3021, %v3022
  %v3030 = vsel %vm1913, %v3020, %v3021
  %v3031 = vsel %vm1913, %v3019, %v3020
  %v3032 = vsel %vm1913, %v3018, %v3019
  %v3033 = vsel %vm1913, %v3017, %v3018
  %v3034 = vsel %vm1913, %v3016, %v3017
  %v3035 = vsel %vm1913, %v3015, %v3016
  %v3036 = vsel %vm1913, %v3014, %v3015
  %v3037 = vsel %vm1913, %v3013, %v3014
  %v3038 = vsel %vm1913, %v3012, %v3013
  %v3039 = vsel %vm1913, %v3011, %v3012
  %v3040 = vsel %vm1913, %v3010, %v3011
  %v3041 = vsel %vm1913, %v3009, %v3010
  %v3042 = vsel %vm1913, %v3008, %v3009
  %v3043 = vsel %vm1913, %v3007, %v3008
  %v3044 = vsel %vm1913, %v3006, %v3007
  %v3045 = vsel %vm1913, %v3005, %v3006
  %v3046 = vsel %vm1913, %v3004, %v3005
  %v3047 = vsel %vm1913, %v3003, %v3004
  %v3048 = vsel %vm1913, %v3002, %v3003
  %v3049 = vsel %vm1913, %v3001, %v3002
  %v3050 = vsel %vm1913, %v3000, %v3001
  %v3051 = vsel %vm1913, %v2999, %v3000
  %v3052 = vsel %vm1913, %v2998, %v2999
  %v3053 = vsel %vm1913, %v2997, %v2998
  %v3054 = vsel %vm1913, %v2996, %v2997
  %v3055 = vsel %vm1913, %v3025, %v2996
  %v3056 = vsel %vm1974, 0.0, %v3054
  %v3057 = vsel %vm1975, 0.0, %v3053
  %v3058 = vsel %vm1976, 0.0, %v3052
  %v3059 = vsel %vm1977, 0.0, %v3051
  %v3060 = vsel %vm1978, 0.0, %v3050
  %v3061 = vsel %vm1979, 0.0, %v3049
  %v3062 = vsel %vm1980, 0.0, %v3048
  %v3063 = vsel %vm1981, 0.0, %v3047
  %v3064 = vsel %vm1982, 0.0, %v3046
  %v3065 = vsel %vm1983, 0.0, %v3045
  %v3066 = vsel %vm1984, 0.0, %v3044
  %v3067 = vsel %vm1985, 0.0, %v3043
  %v3068 = vsel %vm1986, 0.0, %v3042
  %v3069 = vsel %vm1987, 0.0, %v3041
  %v3070 = vsel %vm1988, 0.0, %v3040
  %v3071 = vsel %vm1989, 0.0, %v3039
  %v3072 = vsel %vm1990, 0.0, %v3038
  %v3073 = vsel %vm1991, 0.0, %v3037
  %v3074 = vsel %vm1992, 0.0, %v3036
  %v3075 = vsel %vm1993, 0.0, %v3035
  %v3076 = vsel %vm1994, 0.0, %v3034
  %v3077 = vsel %vm1995, 0.0, %v3033
  %v3078 = vsel %vm1996, 0.0, %v3032
  %v3079 = vsel %vm1997, 0.0, %v3031
  %v3080 = vsel %vm1998, 0.0, %v3030
  %v3081 = vsel %vm1999, 0.0, %v3029
  %v3082 = vsel %vm2000, 0.0, %v3028
  %v3083 = vsel %vm2001, 0.0, %v3027
  %v3084 = vsel %vm2002, 0.0, %v3026
  %v3085 = vsel %vm2003, 0.0, %v3055
  %v3086 = vpack.c.bf16 %v3057, %v3056
  %v3087 = vpack.c.bf16 %v3059, %v3058
  %v3088 = vpack.c.bf16 %v3061, %v3060
  %v3089 = vpack.c.bf16 %v3063, %v3062
  %v3090 = vpack.c.bf16 %v3065, %v3064
  %v3091 = vpack.c.bf16 %v3067, %v3066
  %v3092 = vpack.c.bf16 %v3069, %v3068
  %v3093 = vpack.c.bf16 %v3071, %v3070
  %v3094 = vpack.c.bf16 %v3073, %v3072
  %v3095 = vpack.c.bf16 %v3075, %v3074
  %v3096 = vpack.c.bf16 %v3077, %v3076
  %v3097 = vpack.c.bf16 %v3079, %v3078
  %v3098 = vpack.c.bf16 %v3081, %v3080
  %v3099 = vpack.c.bf16 %v3083, %v3082
  %v3100 = vpack.c.bf16 %v3085, %v3084
  %v3104 = vunpack.c.l.b16 %v2591
  %v3105 = vunpack.c.l.b16 %v2592
  %v3106 = vunpack.c.l.b16 %v2593
  %v3107 = vpack.c.b16 %v3105, %v3104
  %v3108 = vpack.c.b16 %v3106, %v3106
  %v3111 = vsel %vm1608, %v3086, 0
  %v3114 = vsel %vm1608, %v3087, 0
  %v3117 = vsel %vm1608, %v3088, 0
  %v3120 = vsel %vm1608, %v3089, 0
  %v3123 = vsel %vm1608, %v3090, 0
  %v3126 = vsel %vm1608, %v3091, 0
  %v3129 = vsel %vm1608, %v3092, 0
  %v3132 = vsel %vm1608, %v3093, 0
  %v3135 = vsel %vm1608, %v3094, 0
  %v3138 = vsel %vm1608, %v3095, 0
  %v3141 = vsel %vm1608, %v3096, 0
  %v3144 = vsel %vm1608, %v3097, 0
  %v3147 = vsel %vm1608, %v3098, 0
  %v3150 = vsel %vm1608, %v3099, 0
  %v3153 = vsel %vm1608, %v3100, 0
  %v3156 = vsel %vm1654, %v3108, 0
  %3158 = vmatpush.bf16.msra.mxu0 0
  %3159 = vmatpush.bf16.msra.mxu0 0
  %3160 = vmatpush.bf16.msra.mxu0 0
  %3161 = vmatpush.bf16.msra.mxu0 0
  %3162 = vmatpush.bf16.msra.mxu0 0
  %3163 = vmatpush.bf16.msra.mxu0 0
  %3164 = vmatpush.bf16.msra.mxu0 %v3156
  %3165 = vmatpush.bf16.msra.mxu0 %v3107
  %3166 = vmatmul.bf16.gmra.mxu0 %v3111
  %v3167 = vpop.f32.mrf.mxu0
  %v3168 = vadd.f32 0.0, %v3167
  %v3169 = vpop.f32.mrf.mxu0
  %v3170 = vadd.f32 0.0, %v3169
  %3171 = vmatmul.bf16.gmra.mxu0 %v3114
  %v3172 = vpop.f32.mrf.mxu0
  %v3173 = vadd.f32 0.0, %v3172
  %v3174 = vpop.f32.mrf.mxu0
  %v3175 = vadd.f32 0.0, %v3174
  %3176 = vmatmul.bf16.gmra.mxu0 %v3117
  %v3177 = vpop.f32.mrf.mxu0
  %v3178 = vadd.f32 0.0, %v3177
  %v3179 = vpop.f32.mrf.mxu0
  %v3180 = vadd.f32 0.0, %v3179
  %3181 = vmatmul.bf16.gmra.mxu0 %v3120
  %v3182 = vpop.f32.mrf.mxu0
  %v3183 = vadd.f32 0.0, %v3182
  %v3184 = vpop.f32.mrf.mxu0
  %v3185 = vadd.f32 0.0, %v3184
  %3186 = vmatmul.bf16.gmra.mxu0 %v3123
  %v3187 = vpop.f32.mrf.mxu0
  %v3188 = vadd.f32 0.0, %v3187
  %v3189 = vpop.f32.mrf.mxu0
  %v3190 = vadd.f32 0.0, %v3189
  %3191 = vmatmul.bf16.gmra.mxu0 %v3126
  %v3192 = vpop.f32.mrf.mxu0
  %v3193 = vadd.f32 0.0, %v3192
  %v3194 = vpop.f32.mrf.mxu0
  %v3195 = vadd.f32 0.0, %v3194
  %3196 = vmatmul.bf16.gmra.mxu0 %v3129
  %v3197 = vpop.f32.mrf.mxu0
  %v3198 = vadd.f32 0.0, %v3197
  %v3199 = vpop.f32.mrf.mxu0
  %v3200 = vadd.f32 0.0, %v3199
  %3201 = vmatmul.bf16.gmra.mxu0 %v3132
  %v3202 = vpop.f32.mrf.mxu0
  %v3203 = vadd.f32 0.0, %v3202
  %v3204 = vpop.f32.mrf.mxu0
  %v3205 = vadd.f32 0.0, %v3204
  %3206 = vmatmul.bf16.gmra.mxu0 %v3135
  %v3207 = vpop.f32.mrf.mxu0
  %v3208 = vadd.f32 0.0, %v3207
  %v3209 = vpop.f32.mrf.mxu0
  %v3210 = vadd.f32 0.0, %v3209
  %3211 = vmatmul.bf16.gmra.mxu0 %v3138
  %v3212 = vpop.f32.mrf.mxu0
  %v3213 = vadd.f32 0.0, %v3212
  %v3214 = vpop.f32.mrf.mxu0
  %v3215 = vadd.f32 0.0, %v3214
  %3216 = vmatmul.bf16.gmra.mxu0 %v3141
  %v3217 = vpop.f32.mrf.mxu0
  %v3218 = vadd.f32 0.0, %v3217
  %v3219 = vpop.f32.mrf.mxu0
  %v3220 = vadd.f32 0.0, %v3219
  %3221 = vmatmul.bf16.gmra.mxu0 %v3144
  %v3222 = vpop.f32.mrf.mxu0
  %v3223 = vadd.f32 0.0, %v3222
  %v3224 = vpop.f32.mrf.mxu0
  %v3225 = vadd.f32 0.0, %v3224
  %3226 = vmatmul.bf16.gmra.mxu0 %v3147
  %v3227 = vpop.f32.mrf.mxu0
  %v3228 = vadd.f32 0.0, %v3227
  %v3229 = vpop.f32.mrf.mxu0
  %v3230 = vadd.f32 0.0, %v3229
  %3231 = vmatmul.bf16.gmra.mxu0 %v3150
  %v3232 = vpop.f32.mrf.mxu0
  %v3233 = vadd.f32 0.0, %v3232
  %v3234 = vpop.f32.mrf.mxu0
  %v3235 = vadd.f32 0.0, %v3234
  %3236 = vmatmul.bf16.gmra.mxu0 %v3153
  %v3237 = vpop.f32.mrf.mxu0
  %v3238 = vadd.f32 0.0, %v3237
  %v3239 = vpop.f32.mrf.mxu0
  %v3240 = vadd.f32 0.0, %v3239
  %3241 = vdwg.mxu0
  %v3242 = vadd.f32 %v2922, %v3168
  %v3243 = vadd.f32 %v2924, %v3170
  %v3244 = vadd.f32 %v2927, %v3173
  %v3245 = vadd.f32 %v2929, %v3175
  %v3246 = vadd.f32 %v2932, %v3178
  %v3247 = vadd.f32 %v2934, %v3180
  %v3248 = vadd.f32 %v2937, %v3183
  %v3249 = vadd.f32 %v2939, %v3185
  %v3250 = vadd.f32 %v2942, %v3188
  %v3251 = vadd.f32 %v2944, %v3190
  %v3252 = vadd.f32 %v2947, %v3193
  %v3253 = vadd.f32 %v2949, %v3195
  %v3254 = vadd.f32 %v2952, %v3198
  %v3255 = vadd.f32 %v2954, %v3200
  %v3256 = vadd.f32 %v2957, %v3203
  %v3257 = vadd.f32 %v2959, %v3205
  %v3258 = vadd.f32 %v2962, %v3208
  %v3259 = vadd.f32 %v2964, %v3210
  %v3260 = vadd.f32 %v2967, %v3213
  %v3261 = vadd.f32 %v2969, %v3215
  %v3262 = vadd.f32 %v2972, %v3218
  %v3263 = vadd.f32 %v2974, %v3220
  %v3264 = vadd.f32 %v2977, %v3223
  %v3265 = vadd.f32 %v2979, %v3225
  %v3266 = vadd.f32 %v2982, %v3228
  %v3267 = vadd.f32 %v2984, %v3230
  %v3268 = vadd.f32 %v2987, %v3233
  %v3269 = vadd.f32 %v2989, %v3235
  %v3270 = vadd.f32 %v2992, %v3238
  %v3271 = vadd.f32 %v2994, %v3240
  %v3272 = vld [vmem:[%s6 + $0x4] ss:$0 sm:$0xff]
  %v3273 = vadd.f32 %v3242, %v3272
  %v3274 = vadd.f32 %v3243, %v3272
  %v3275 = vadd.f32 %v3244, %v3272
  %v3276 = vadd.f32 %v3245, %v3272
  %v3277 = vadd.f32 %v3246, %v3272
  %v3278 = vadd.f32 %v3247, %v3272
  %v3279 = vadd.f32 %v3248, %v3272
  %v3280 = vadd.f32 %v3249, %v3272
  %v3281 = vadd.f32 %v3250, %v3272
  %v3282 = vadd.f32 %v3251, %v3272
  %v3283 = vadd.f32 %v3252, %v3272
  %v3284 = vadd.f32 %v3253, %v3272
  %v3285 = vadd.f32 %v3254, %v3272
  %v3286 = vadd.f32 %v3255, %v3272
  %v3287 = vadd.f32 %v3256, %v3272
  %v3288 = vadd.f32 %v3257, %v3272
  %v3289 = vadd.f32 %v3258, %v3272
  %v3290 = vadd.f32 %v3259, %v3272
  %v3291 = vadd.f32 %v3260, %v3272
  %v3292 = vadd.f32 %v3261, %v3272
  %v3293 = vadd.f32 %v3262, %v3272
  %v3294 = vadd.f32 %v3263, %v3272
  %v3295 = vadd.f32 %v3264, %v3272
  %v3296 = vadd.f32 %v3265, %v3272
  %v3297 = vadd.f32 %v3266, %v3272
  %v3298 = vadd.f32 %v3267, %v3272
  %v3299 = vadd.f32 %v3268, %v3272
  %v3300 = vadd.f32 %v3269, %v3272
  %v3301 = vadd.f32 %v3270, %v3272
  %v3302 = vadd.f32 %v3271, %v3272
  %v3303 = vmax.f32 %v3273, 0.0
  %v3304 = vmax.f32 %v3274, 0.0
  %v3305 = vmax.f32 %v3275, 0.0
  %v3306 = vmax.f32 %v3276, 0.0
  %v3307 = vmax.f32 %v3277, 0.0
  %v3308 = vmax.f32 %v3278, 0.0
  %v3309 = vmax.f32 %v3279, 0.0
  %v3310 = vmax.f32 %v3280, 0.0
  %v3311 = vmax.f32 %v3281, 0.0
  %v3312 = vmax.f32 %v3282, 0.0
  %v3313 = vmax.f32 %v3283, 0.0
  %v3314 = vmax.f32 %v3284, 0.0
  %v3315 = vmax.f32 %v3285, 0.0
  %v3316 = vmax.f32 %v3286, 0.0
  %v3317 = vmax.f32 %v3287, 0.0
  %v3318 = vmax.f32 %v3288, 0.0
  %v3319 = vmax.f32 %v3289, 0.0
  %v3320 = vmax.f32 %v3290, 0.0
  %v3321 = vmax.f32 %v3291, 0.0
  %v3322 = vmax.f32 %v3292, 0.0
  %v3323 = vmax.f32 %v3293, 0.0
  %v3324 = vmax.f32 %v3294, 0.0
  %v3325 = vmax.f32 %v3295, 0.0
  %v3326 = vmax.f32 %v3296, 0.0
  %v3327 = vmax.f32 %v3297, 0.0
  %v3328 = vmax.f32 %v3298, 0.0
  %v3329 = vmax.f32 %v3299, 0.0
  %v3330 = vmax.f32 %v3300, 0.0
  %v3331 = vmax.f32 %v3301, 0.0
  %v3332 = vmax.f32 %v3302, 0.0
  %v3333 = vld [vmem:[%s3 + $0x48] sm:$0xf]
  %v3334 = vld [vmem:[%s3 + $0x4c] sm:$0xf]
  %v3335 = vld [vmem:[%s3 + $0x50] sm:$0xf]
  %v3336 = vld [vmem:[%s3 + $0x54] sm:$0xf]
  %v3337 = vld [vmem:[%s3 + $0x58] sm:$0xf]
  %v3338 = vld [vmem:[%s3 + $0x5c] sm:$0xf]
  %v3339 = vld [vmem:[%s3 + $0x60] sm:$0xf]
  %v3340 = vld [vmem:[%s3 + $0x64] sm:$0xf]
  %v3341 = vld [vmem:[%s3 + $0x68] sm:$0xf]
  %v3342 = vld [vmem:[%s3 + $0x6c] sm:$0xf]
  %v3343 = vld [vmem:[%s3 + $0x70] sm:$0xf]
  %v3344 = vld [vmem:[%s3 + $0x74] sm:$0xf]
  %v3345 = vld [vmem:[%s3 + $0x78] sm:$0xf]
  %v3346 = vld [vmem:[%s3 + $0x7c] sm:$0xf]
  %v3347 = vld [vmem:[%s3 + $0x80] sm:$0xf]
  %v3348 = vld [vmem:[%s3 + $0x84] sm:$0xf]
  %v3349 = vld [vmem:[%s3 + $0x88] sm:$0xf]
  %v3350 = vld [vmem:[%s3 + $0x8c] sm:$0xf]
  %v3351 = vpack.c.bf16 %v3304, %v3303
  %v3352 = vpack.c.bf16 %v3306, %v3305
  %v3353 = vpack.c.bf16 %v3308, %v3307
  %v3354 = vpack.c.bf16 %v3310, %v3309
  %v3355 = vpack.c.bf16 %v3312, %v3311
  %v3356 = vpack.c.bf16 %v3314, %v3313
  %v3357 = vpack.c.bf16 %v3316, %v3315
  %v3358 = vpack.c.bf16 %v3318, %v3317
  %v3359 = vpack.c.bf16 %v3320, %v3319
  %v3360 = vpack.c.bf16 %v3322, %v3321
  %v3361 = vpack.c.bf16 %v3324, %v3323
  %v3362 = vpack.c.bf16 %v3326, %v3325
  %v3363 = vpack.c.bf16 %v3328, %v3327
  %v3364 = vpack.c.bf16 %v3330, %v3329
  %v3365 = vpack.c.bf16 %v3332, %v3331
  %v3366 = vrot.slane %v3303, 7
  %v3367 = vrot.slane %v3304, 7
  %v3368 = vrot.slane %v3305, 7
  %v3369 = vrot.slane %v3306, 7
  %v3370 = vrot.slane %v3307, 7
  %v3371 = vrot.slane %v3308, 7
  %v3372 = vrot.slane %v3309, 7
  %v3373 = vrot.slane %v3310, 7
  %v3374 = vrot.slane %v3311, 7
  %v3375 = vrot.slane %v3312, 7
  %v3376 = vrot.slane %v3313, 7
  %v3377 = vrot.slane %v3314, 7
  %v3378 = vrot.slane %v3315, 7
  %v3379 = vrot.slane %v3316, 7
  %v3380 = vrot.slane %v3317, 7
  %v3381 = vrot.slane %v3318, 7
  %v3382 = vrot.slane %v3319, 7
  %v3383 = vrot.slane %v3320, 7
  %v3384 = vrot.slane %v3321, 7
  %v3385 = vrot.slane %v3322, 7
  %v3386 = vrot.slane %v3323, 7
  %v3387 = vrot.slane %v3324, 7
  %v3388 = vrot.slane %v3325, 7
  %v3389 = vrot.slane %v3326, 7
  %v3390 = vrot.slane %v3327, 7
  %v3391 = vrot.slane %v3328, 7
  %v3392 = vrot.slane %v3329, 7
  %v3393 = vrot.slane %v3330, 7
  %v3394 = vrot.slane %v3331, 7
  %v3395 = vrot.slane %v3332, 7
  %v3396 = vsel %vm1463, %v3394, %v3395
  %v3397 = vsel %vm1463, %v3393, %v3394
  %v3398 = vsel %vm1463, %v3392, %v3393
  %v3399 = vsel %vm1463, %v3391, %v3392
  %v3400 = vsel %vm1463, %v3390, %v3391
  %v3401 = vsel %vm1463, %v3389, %v3390
  %v3402 = vsel %vm1463, %v3388, %v3389
  %v3403 = vsel %vm1463, %v3387, %v3388
  %v3404 = vsel %vm1463, %v3386, %v3387
  %v3405 = vsel %vm1463, %v3385, %v3386
  %v3406 = vsel %vm1463, %v3384, %v3385
  %v3407 = vsel %vm1463, %v3383, %v3384
  %v3408 = vsel %vm1463, %v3382, %v3383
  %v3409 = vsel %vm1463, %v3381, %v3382
  %v3410 = vsel %vm1463, %v3380, %v3381
  %v3411 = vsel %vm1463, %v3379, %v3380
  %v3412 = vsel %vm1463, %v3378, %v3379
  %v3413 = vsel %vm1463, %v3377, %v3378
  %v3414 = vsel %vm1463, %v3376, %v3377
  %v3415 = vsel %vm1463, %v3375, %v3376
  %v3416 = vsel %vm1463, %v3374, %v3375
  %v3417 = vsel %vm1463, %v3373, %v3374
  %v3418 = vsel %vm1463, %v3372, %v3373
  %v3419 = vsel %vm1463, %v3371, %v3372
  %v3420 = vsel %vm1463, %v3370, %v3371
  %v3421 = vsel %vm1463, %v3369, %v3370
  %v3422 = vsel %vm1463, %v3368, %v3369
  %v3423 = vsel %vm1463, %v3367, %v3368
  %v3424 = vsel %vm1463, %v3366, %v3367
  %v3425 = vsel %vm1463, %v3395, %v3366
  %v3426 = vsel %vm1524, 0.0, %v3425
  %v3427 = vsel %vm1525, 0.0, %v3424
  %v3428 = vsel %vm1526, 0.0, %v3423
  %v3429 = vsel %vm1527, 0.0, %v3422
  %v3430 = vsel %vm1528, 0.0, %v3421
  %v3431 = vsel %vm1529, 0.0, %v3420
  %v3432 = vsel %vm1530, 0.0, %v3419
  %v3433 = vsel %vm1531, 0.0, %v3418
  %v3434 = vsel %vm1532, 0.0, %v3417
  %v3435 = vsel %vm1533, 0.0, %v3416
  %v3436 = vsel %vm1534, 0.0, %v3415
  %v3437 = vsel %vm1535, 0.0, %v3414
  %v3438 = vsel %vm1536, 0.0, %v3413
  %v3439 = vsel %vm1537, 0.0, %v3412
  %v3440 = vsel %vm1538, 0.0, %v3411
  %v3441 = vsel %vm1539, 0.0, %v3410
  %v3442 = vsel %vm1540, 0.0, %v3409
  %v3443 = vsel %vm1541, 0.0, %v3408
  %v3444 = vsel %vm1542, 0.0, %v3407
  %v3445 = vsel %vm1543, 0.0, %v3406
  %v3446 = vsel %vm1544, 0.0, %v3405
  %v3447 = vsel %vm1545, 0.0, %v3404
  %v3448 = vsel %vm1546, 0.0, %v3403
  %v3449 = vsel %vm1547, 0.0, %v3402
  %v3450 = vsel %vm1548, 0.0, %v3401
  %v3451 = vsel %vm1549, 0.0, %v3400
  %v3452 = vsel %vm1550, 0.0, %v3399
  %v3453 = vsel %vm1551, 0.0, %v3398
  %v3454 = vsel %vm1552, 0.0, %v3397
  %v3455 = vsel %vm1553, 0.0, %v3396
  %v3456 = vpack.c.bf16 %v3427, %v3426
  %v3457 = vpack.c.bf16 %v3429, %v3428
  %v3458 = vpack.c.bf16 %v3431, %v3430
  %v3459 = vpack.c.bf16 %v3433, %v3432
  %v3460 = vpack.c.bf16 %v3435, %v3434
  %v3461 = vpack.c.bf16 %v3437, %v3436
  %v3462 = vpack.c.bf16 %v3439, %v3438
  %v3463 = vpack.c.bf16 %v3441, %v3440
  %v3464 = vpack.c.bf16 %v3443, %v3442
  %v3465 = vpack.c.bf16 %v3445, %v3444
  %v3466 = vpack.c.bf16 %v3447, %v3446
  %v3467 = vpack.c.bf16 %v3449, %v3448
  %v3468 = vpack.c.bf16 %v3451, %v3450
  %v3469 = vpack.c.bf16 %v3453, %v3452
  %v3470 = vpack.c.bf16 %v3455, %v3454
  %v3477 = vunpack.c.l.b16 %v3333
  %v3478 = vunpack.c.l.b16 %v3334
  %v3479 = vunpack.c.l.b16 %v3335
  %v3480 = vunpack.c.l.b16 %v3336
  %v3481 = vunpack.c.l.b16 %v3337
  %v3482 = vunpack.c.l.b16 %v3338
  %v3483 = vpack.c.b16 %v3478, %v3477
  %v3484 = vpack.c.b16 %v3480, %v3479
  %v3485 = vpack.c.b16 %v3482, %v3481
  %vm3489 = vcmask 392192
  %v3491 = vsel %vm3489, %v3456, 0
  %v3494 = vsel %vm3489, %v3457, 0
  %v3497 = vsel %vm3489, %v3458, 0
  %v3500 = vsel %vm3489, %v3459, 0
  %v3503 = vsel %vm3489, %v3460, 0
  %v3506 = vsel %vm3489, %v3461, 0
  %v3509 = vsel %vm3489, %v3462, 0
  %v3512 = vsel %vm3489, %v3463, 0
  %v3515 = vsel %vm3489, %v3464, 0
  %v3518 = vsel %vm3489, %v3465, 0
  %v3521 = vsel %vm3489, %v3466, 0
  %v3524 = vsel %vm3489, %v3467, 0
  %v3527 = vsel %vm3489, %v3468, 0
  %v3530 = vsel %vm3489, %v3469, 0
  %v3533 = vsel %vm3489, %v3470, 0
  %3535 = vmatpush.bf16.msra.mxu0 0
  %3536 = vmatpush.bf16.msra.mxu0 0
  %3537 = vmatpush.bf16.msra.mxu0 0
  %3538 = vmatpush.bf16.msra.mxu0 0
  %3539 = vmatpush.bf16.msra.mxu0 0
  %3540 = vmatpush.bf16.msra.mxu0 %v3485
  %3541 = vmatpush.bf16.msra.mxu0 %v3484
  %3542 = vmatpush.bf16.msra.mxu0 %v3483
  %3543 = vmatmul.bf16.gmra.mxu0 %v3491
  %v3544 = vpop.f32.mrf.mxu0
  %v3545 = vadd.f32 0.0, %v3544
  %v3546 = vpop.f32.mrf.mxu0
  %v3547 = vadd.f32 0.0, %v3546
  %3548 = vmatmul.bf16.gmra.mxu0 %v3494
  %v3549 = vpop.f32.mrf.mxu0
  %v3550 = vadd.f32 0.0, %v3549
  %v3551 = vpop.f32.mrf.mxu0
  %v3552 = vadd.f32 0.0, %v3551
  %3553 = vmatmul.bf16.gmra.mxu0 %v3497
  %v3554 = vpop.f32.mrf.mxu0
  %v3555 = vadd.f32 0.0, %v3554
  %v3556 = vpop.f32.mrf.mxu0
  %v3557 = vadd.f32 0.0, %v3556
  %3558 = vmatmul.bf16.gmra.mxu0 %v3500
  %v3559 = vpop.f32.mrf.mxu0
  %v3560 = vadd.f32 0.0, %v3559
  %v3561 = vpop.f32.mrf.mxu0
  %v3562 = vadd.f32 0.0, %v3561
  %3563 = vmatmul.bf16.gmra.mxu0 %v3503
  %v3564 = vpop.f32.mrf.mxu0
  %v3565 = vadd.f32 0.0, %v3564
  %v3566 = vpop.f32.mrf.mxu0
  %v3567 = vadd.f32 0.0, %v3566
  %3568 = vmatmul.bf16.gmra.mxu0 %v3506
  %v3569 = vpop.f32.mrf.mxu0
  %v3570 = vadd.f32 0.0, %v3569
  %v3571 = vpop.f32.mrf.mxu0
  %v3572 = vadd.f32 0.0, %v3571
  %3573 = vmatmul.bf16.gmra.mxu0 %v3509
  %v3574 = vpop.f32.mrf.mxu0
  %v3575 = vadd.f32 0.0, %v3574
  %v3576 = vpop.f32.mrf.mxu0
  %v3577 = vadd.f32 0.0, %v3576
  %3578 = vmatmul.bf16.gmra.mxu0 %v3512
  %v3579 = vpop.f32.mrf.mxu0
  %v3580 = vadd.f32 0.0, %v3579
  %v3581 = vpop.f32.mrf.mxu0
  %v3582 = vadd.f32 0.0, %v3581
  %3583 = vmatmul.bf16.gmra.mxu0 %v3515
  %v3584 = vpop.f32.mrf.mxu0
  %v3585 = vadd.f32 0.0, %v3584
  %v3586 = vpop.f32.mrf.mxu0
  %v3587 = vadd.f32 0.0, %v3586
  %3588 = vmatmul.bf16.gmra.mxu0 %v3518
  %v3589 = vpop.f32.mrf.mxu0
  %v3590 = vadd.f32 0.0, %v3589
  %v3591 = vpop.f32.mrf.mxu0
  %v3592 = vadd.f32 0.0, %v3591
  %3593 = vmatmul.bf16.gmra.mxu0 %v3521
  %v3594 = vpop.f32.mrf.mxu0
  %v3595 = vadd.f32 0.0, %v3594
  %v3596 = vpop.f32.mrf.mxu0
  %v3597 = vadd.f32 0.0, %v3596
  %3598 = vmatmul.bf16.gmra.mxu0 %v3524
  %v3599 = vpop.f32.mrf.mxu0
  %v3600 = vadd.f32 0.0, %v3599
  %v3601 = vpop.f32.mrf.mxu0
  %v3602 = vadd.f32 0.0, %v3601
  %3603 = vmatmul.bf16.gmra.mxu0 %v3527
  %v3604 = vpop.f32.mrf.mxu0
  %v3605 = vadd.f32 0.0, %v3604
  %v3606 = vpop.f32.mrf.mxu0
  %v3607 = vadd.f32 0.0, %v3606
  %3608 = vmatmul.bf16.gmra.mxu0 %v3530
  %v3609 = vpop.f32.mrf.mxu0
  %v3610 = vadd.f32 0.0, %v3609
  %v3611 = vpop.f32.mrf.mxu0
  %v3612 = vadd.f32 0.0, %v3611
  %3613 = vmatmul.bf16.gmra.mxu0 %v3533
  %v3614 = vpop.f32.mrf.mxu0
  %v3615 = vadd.f32 0.0, %v3614
  %v3616 = vpop.f32.mrf.mxu0
  %v3617 = vadd.f32 0.0, %v3616
  %3618 = vdwg.mxu0
  %v3625 = vunpack.c.l.b16 %v3339
  %v3626 = vunpack.c.l.b16 %v3340
  %v3627 = vunpack.c.l.b16 %v3341
  %v3628 = vunpack.c.l.b16 %v3342
  %v3629 = vunpack.c.l.b16 %v3343
  %v3630 = vunpack.c.l.b16 %v3344
  %v3631 = vpack.c.b16 %v3626, %v3625
  %v3632 = vpack.c.b16 %v3628, %v3627
  %v3633 = vpack.c.b16 %v3630, %v3629
  %v3638 = vsel %vm3489, %v3351, 0
  %v3641 = vsel %vm3489, %v3352, 0
  %v3644 = vsel %vm3489, %v3353, 0
  %v3647 = vsel %vm3489, %v3354, 0
  %v3650 = vsel %vm3489, %v3355, 0
  %v3653 = vsel %vm3489, %v3356, 0
  %v3656 = vsel %vm3489, %v3357, 0
  %v3659 = vsel %vm3489, %v3358, 0
  %v3662 = vsel %vm3489, %v3359, 0
  %v3665 = vsel %vm3489, %v3360, 0
  %v3668 = vsel %vm3489, %v3361, 0
  %v3671 = vsel %vm3489, %v3362, 0
  %v3674 = vsel %vm3489, %v3363, 0
  %v3677 = vsel %vm3489, %v3364, 0
  %v3680 = vsel %vm3489, %v3365, 0
  %3682 = vmatpush.bf16.msra.mxu0 0
  %3683 = vmatpush.bf16.msra.mxu0 0
  %3684 = vmatpush.bf16.msra.mxu0 0
  %3685 = vmatpush.bf16.msra.mxu0 0
  %3686 = vmatpush.bf16.msra.mxu0 0
  %3687 = vmatpush.bf16.msra.mxu0 %v3633
  %3688 = vmatpush.bf16.msra.mxu0 %v3632
  %3689 = vmatpush.bf16.msra.mxu0 %v3631
  %3690 = vmatmul.bf16.gmra.mxu0 %v3638
  %v3691 = vpop.f32.mrf.mxu0
  %v3692 = vadd.f32 %v3545, %v3691
  %v3693 = vpop.f32.mrf.mxu0
  %v3694 = vadd.f32 %v3547, %v3693
  %3695 = vmatmul.bf16.gmra.mxu0 %v3641
  %v3696 = vpop.f32.mrf.mxu0
  %v3697 = vadd.f32 %v3550, %v3696
  %v3698 = vpop.f32.mrf.mxu0
  %v3699 = vadd.f32 %v3552, %v3698
  %3700 = vmatmul.bf16.gmra.mxu0 %v3644
  %v3701 = vpop.f32.mrf.mxu0
  %v3702 = vadd.f32 %v3555, %v3701
  %v3703 = vpop.f32.mrf.mxu0
  %v3704 = vadd.f32 %v3557, %v3703
  %3705 = vmatmul.bf16.gmra.mxu0 %v3647
  %v3706 = vpop.f32.mrf.mxu0
  %v3707 = vadd.f32 %v3560, %v3706
  %v3708 = vpop.f32.mrf.mxu0
  %v3709 = vadd.f32 %v3562, %v3708
  %3710 = vmatmul.bf16.gmra.mxu0 %v3650
  %v3711 = vpop.f32.mrf.mxu0
  %v3712 = vadd.f32 %v3565, %v3711
  %v3713 = vpop.f32.mrf.mxu0
  %v3714 = vadd.f32 %v3567, %v3713
  %3715 = vmatmul.bf16.gmra.mxu0 %v3653
  %v3716 = vpop.f32.mrf.mxu0
  %v3717 = vadd.f32 %v3570, %v3716
  %v3718 = vpop.f32.mrf.mxu0
  %v3719 = vadd.f32 %v3572, %v3718
  %3720 = vmatmul.bf16.gmra.mxu0 %v3656
  %v3721 = vpop.f32.mrf.mxu0
  %v3722 = vadd.f32 %v3575, %v3721
  %v3723 = vpop.f32.mrf.mxu0
  %v3724 = vadd.f32 %v3577, %v3723
  %3725 = vmatmul.bf16.gmra.mxu0 %v3659
  %v3726 = vpop.f32.mrf.mxu0
  %v3727 = vadd.f32 %v3580, %v3726
  %v3728 = vpop.f32.mrf.mxu0
  %v3729 = vadd.f32 %v3582, %v3728
  %3730 = vmatmul.bf16.gmra.mxu0 %v3662
  %v3731 = vpop.f32.mrf.mxu0
  %v3732 = vadd.f32 %v3585, %v3731
  %v3733 = vpop.f32.mrf.mxu0
  %v3734 = vadd.f32 %v3587, %v3733
  %3735 = vmatmul.bf16.gmra.mxu0 %v3665
  %v3736 = vpop.f32.mrf.mxu0
  %v3737 = vadd.f32 %v3590, %v3736
  %v3738 = vpop.f32.mrf.mxu0
  %v3739 = vadd.f32 %v3592, %v3738
  %3740 = vmatmul.bf16.gmra.mxu0 %v3668
  %v3741 = vpop.f32.mrf.mxu0
  %v3742 = vadd.f32 %v3595, %v3741
  %v3743 = vpop.f32.mrf.mxu0
  %v3744 = vadd.f32 %v3597, %v3743
  %3745 = vmatmul.bf16.gmra.mxu0 %v3671
  %v3746 = vpop.f32.mrf.mxu0
  %v3747 = vadd.f32 %v3600, %v3746
  %v3748 = vpop.f32.mrf.mxu0
  %v3749 = vadd.f32 %v3602, %v3748
  %3750 = vmatmul.bf16.gmra.mxu0 %v3674
  %v3751 = vpop.f32.mrf.mxu0
  %v3752 = vadd.f32 %v3605, %v3751
  %v3753 = vpop.f32.mrf.mxu0
  %v3754 = vadd.f32 %v3607, %v3753
  %3755 = vmatmul.bf16.gmra.mxu0 %v3677
  %v3756 = vpop.f32.mrf.mxu0
  %v3757 = vadd.f32 %v3610, %v3756
  %v3758 = vpop.f32.mrf.mxu0
  %v3759 = vadd.f32 %v3612, %v3758
  %3760 = vmatmul.bf16.gmra.mxu0 %v3680
  %v3761 = vpop.f32.mrf.mxu0
  %v3762 = vadd.f32 %v3615, %v3761
  %v3763 = vpop.f32.mrf.mxu0
  %v3764 = vadd.f32 %v3617, %v3763
  %3765 = vdwg.mxu0
  %v3766 = vrot.slane %v3303, 1
  %v3767 = vrot.slane %v3304, 1
  %v3768 = vrot.slane %v3305, 1
  %v3769 = vrot.slane %v3306, 1
  %v3770 = vrot.slane %v3307, 1
  %v3771 = vrot.slane %v3308, 1
  %v3772 = vrot.slane %v3309, 1
  %v3773 = vrot.slane %v3310, 1
  %v3774 = vrot.slane %v3311, 1
  %v3775 = vrot.slane %v3312, 1
  %v3776 = vrot.slane %v3313, 1
  %v3777 = vrot.slane %v3314, 1
  %v3778 = vrot.slane %v3315, 1
  %v3779 = vrot.slane %v3316, 1
  %v3780 = vrot.slane %v3317, 1
  %v3781 = vrot.slane %v3318, 1
  %v3782 = vrot.slane %v3319, 1
  %v3783 = vrot.slane %v3320, 1
  %v3784 = vrot.slane %v3321, 1
  %v3785 = vrot.slane %v3322, 1
  %v3786 = vrot.slane %v3323, 1
  %v3787 = vrot.slane %v3324, 1
  %v3788 = vrot.slane %v3325, 1
  %v3789 = vrot.slane %v3326, 1
  %v3790 = vrot.slane %v3327, 1
  %v3791 = vrot.slane %v3328, 1
  %v3792 = vrot.slane %v3329, 1
  %v3793 = vrot.slane %v3330, 1
  %v3794 = vrot.slane %v3331, 1
  %v3795 = vrot.slane %v3332, 1
  %v3796 = vsel %vm1913, %v3794, %v3795
  %v3797 = vsel %vm1913, %v3793, %v3794
  %v3798 = vsel %vm1913, %v3792, %v3793
  %v3799 = vsel %vm1913, %v3791, %v3792
  %v3800 = vsel %vm1913, %v3790, %v3791
  %v3801 = vsel %vm1913, %v3789, %v3790
  %v3802 = vsel %vm1913, %v3788, %v3789
  %v3803 = vsel %vm1913, %v3787, %v3788
  %v3804 = vsel %vm1913, %v3786, %v3787
  %v3805 = vsel %vm1913, %v3785, %v3786
  %v3806 = vsel %vm1913, %v3784, %v3785
  %v3807 = vsel %vm1913, %v3783, %v3784
  %v3808 = vsel %vm1913, %v3782, %v3783
  %v3809 = vsel %vm1913, %v3781, %v3782
  %v3810 = vsel %vm1913, %v3780, %v3781
  %v3811 = vsel %vm1913, %v3779, %v3780
  %v3812 = vsel %vm1913, %v3778, %v3779
  %v3813 = vsel %vm1913, %v3777, %v3778
  %v3814 = vsel %vm1913, %v3776, %v3777
  %v3815 = vsel %vm1913, %v3775, %v3776
  %v3816 = vsel %vm1913, %v3774, %v3775
  %v3817 = vsel %vm1913, %v3773, %v3774
  %v3818 = vsel %vm1913, %v3772, %v3773
  %v3819 = vsel %vm1913, %v3771, %v3772
  %v3820 = vsel %vm1913, %v3770, %v3771
  %v3821 = vsel %vm1913, %v3769, %v3770
  %v3822 = vsel %vm1913, %v3768, %v3769
  %v3823 = vsel %vm1913, %v3767, %v3768
  %v3824 = vsel %vm1913, %v3766, %v3767
  %v3825 = vsel %vm1913, %v3795, %v3766
  %v3826 = vsel %vm1974, 0.0, %v3824
  %v3827 = vsel %vm1975, 0.0, %v3823
  %v3828 = vsel %vm1976, 0.0, %v3822
  %v3829 = vsel %vm1977, 0.0, %v3821
  %v3830 = vsel %vm1978, 0.0, %v3820
  %v3831 = vsel %vm1979, 0.0, %v3819
  %v3832 = vsel %vm1980, 0.0, %v3818
  %v3833 = vsel %vm1981, 0.0, %v3817
  %v3834 = vsel %vm1982, 0.0, %v3816
  %v3835 = vsel %vm1983, 0.0, %v3815
  %v3836 = vsel %vm1984, 0.0, %v3814
  %v3837 = vsel %vm1985, 0.0, %v3813
  %v3838 = vsel %vm1986, 0.0, %v3812
  %v3839 = vsel %vm1987, 0.0, %v3811
  %v3840 = vsel %vm1988, 0.0, %v3810
  %v3841 = vsel %vm1989, 0.0, %v3809
  %v3842 = vsel %vm1990, 0.0, %v3808
  %v3843 = vsel %vm1991, 0.0, %v3807
  %v3844 = vsel %vm1992, 0.0, %v3806
  %v3845 = vsel %vm1993, 0.0, %v3805
  %v3846 = vsel %vm1994, 0.0, %v3804
  %v3847 = vsel %vm1995, 0.0, %v3803
  %v3848 = vsel %vm1996, 0.0, %v3802
  %v3849 = vsel %vm1997, 0.0, %v3801
  %v3850 = vsel %vm1998, 0.0, %v3800
  %v3851 = vsel %vm1999, 0.0, %v3799
  %v3852 = vsel %vm2000, 0.0, %v3798
  %v3853 = vsel %vm2001, 0.0, %v3797
  %v3854 = vsel %vm2002, 0.0, %v3796
  %v3855 = vsel %vm2003, 0.0, %v3825
  %v3856 = vpack.c.bf16 %v3827, %v3826
  %v3857 = vpack.c.bf16 %v3829, %v3828
  %v3858 = vpack.c.bf16 %v3831, %v3830
  %v3859 = vpack.c.bf16 %v3833, %v3832
  %v3860 = vpack.c.bf16 %v3835, %v3834
  %v3861 = vpack.c.bf16 %v3837, %v3836
  %v3862 = vpack.c.bf16 %v3839, %v3838
  %v3863 = vpack.c.bf16 %v3841, %v3840
  %v3864 = vpack.c.bf16 %v3843, %v3842
  %v3865 = vpack.c.bf16 %v3845, %v3844
  %v3866 = vpack.c.bf16 %v3847, %v3846
  %v3867 = vpack.c.bf16 %v3849, %v3848
  %v3868 = vpack.c.bf16 %v3851, %v3850
  %v3869 = vpack.c.bf16 %v3853, %v3852
  %v3870 = vpack.c.bf16 %v3855, %v3854
  %v3877 = vunpack.c.l.b16 %v3345
  %v3878 = vunpack.c.l.b16 %v3346
  %v3879 = vunpack.c.l.b16 %v3347
  %v3880 = vunpack.c.l.b16 %v3348
  %v3881 = vunpack.c.l.b16 %v3349
  %v3882 = vunpack.c.l.b16 %v3350
  %v3883 = vpack.c.b16 %v3878, %v3877
  %v3884 = vpack.c.b16 %v3880, %v3879
  %v3885 = vpack.c.b16 %v3882, %v3881
  %v3890 = vsel %vm3489, %v3856, 0
  %v3893 = vsel %vm3489, %v3857, 0
  %v3896 = vsel %vm3489, %v3858, 0
  %v3899 = vsel %vm3489, %v3859, 0
  %v3902 = vsel %vm3489, %v3860, 0
  %v3905 = vsel %vm3489, %v3861, 0
  %v3908 = vsel %vm3489, %v3862, 0
  %v3911 = vsel %vm3489, %v3863, 0
  %v3914 = vsel %vm3489, %v3864, 0
  %v3917 = vsel %vm3489, %v3865, 0
  %v3920 = vsel %vm3489, %v3866, 0
  %v3923 = vsel %vm3489, %v3867, 0
  %v3926 = vsel %vm3489, %v3868, 0
  %v3929 = vsel %vm3489, %v3869, 0
  %v3932 = vsel %vm3489, %v3870, 0
  %3934 = vmatpush.bf16.msra.mxu0 0
  %3935 = vmatpush.bf16.msra.mxu0 0
  %3936 = vmatpush.bf16.msra.mxu0 0
  %3937 = vmatpush.bf16.msra.mxu0 0
  %3938 = vmatpush.bf16.msra.mxu0 0
  %3939 = vmatpush.bf16.msra.mxu0 %v3885
  %3940 = vmatpush.bf16.msra.mxu0 %v3884
  %3941 = vmatpush.bf16.msra.mxu0 %v3883
  %3942 = vmatmul.bf16.gmra.mxu0 %v3890
  %v3943 = vpop.f32.mrf.mxu0
  %v3944 = vadd.f32 0.0, %v3943
  %v3945 = vpop.f32.mrf.mxu0
  %v3946 = vadd.f32 0.0, %v3945
  %3947 = vmatmul.bf16.gmra.mxu0 %v3893
  %v3948 = vpop.f32.mrf.mxu0
  %v3949 = vadd.f32 0.0, %v3948
  %v3950 = vpop.f32.mrf.mxu0
  %v3951 = vadd.f32 0.0, %v3950
  %3952 = vmatmul.bf16.gmra.mxu0 %v3896
  %v3953 = vpop.f32.mrf.mxu0
  %v3954 = vadd.f32 0.0, %v3953
  %v3955 = vpop.f32.mrf.mxu0
  %v3956 = vadd.f32 0.0, %v3955
  %3957 = vmatmul.bf16.gmra.mxu0 %v3899
  %v3958 = vpop.f32.mrf.mxu0
  %v3959 = vadd.f32 0.0, %v3958
  %v3960 = vpop.f32.mrf.mxu0
  %v3961 = vadd.f32 0.0, %v3960
  %3962 = vmatmul.bf16.gmra.mxu0 %v3902
  %v3963 = vpop.f32.mrf.mxu0
  %v3964 = vadd.f32 0.0, %v3963
  %v3965 = vpop.f32.mrf.mxu0
  %v3966 = vadd.f32 0.0, %v3965
  %3967 = vmatmul.bf16.gmra.mxu0 %v3905
  %v3968 = vpop.f32.mrf.mxu0
  %v3969 = vadd.f32 0.0, %v3968
  %v3970 = vpop.f32.mrf.mxu0
  %v3971 = vadd.f32 0.0, %v3970
  %3972 = vmatmul.bf16.gmra.mxu0 %v3908
  %v3973 = vpop.f32.mrf.mxu0
  %v3974 = vadd.f32 0.0, %v3973
  %v3975 = vpop.f32.mrf.mxu0
  %v3976 = vadd.f32 0.0, %v3975
  %3977 = vmatmul.bf16.gmra.mxu0 %v3911
  %v3978 = vpop.f32.mrf.mxu0
  %v3979 = vadd.f32 0.0, %v3978
  %v3980 = vpop.f32.mrf.mxu0
  %v3981 = vadd.f32 0.0, %v3980
  %3982 = vmatmul.bf16.gmra.mxu0 %v3914
  %v3983 = vpop.f32.mrf.mxu0
  %v3984 = vadd.f32 0.0, %v3983
  %v3985 = vpop.f32.mrf.mxu0
  %v3986 = vadd.f32 0.0, %v3985
  %3987 = vmatmul.bf16.gmra.mxu0 %v3917
  %v3988 = vpop.f32.mrf.mxu0
  %v3989 = vadd.f32 0.0, %v3988
  %v3990 = vpop.f32.mrf.mxu0
  %v3991 = vadd.f32 0.0, %v3990
  %3992 = vmatmul.bf16.gmra.mxu0 %v3920
  %v3993 = vpop.f32.mrf.mxu0
  %v3994 = vadd.f32 0.0, %v3993
  %v3995 = vpop.f32.mrf.mxu0
  %v3996 = vadd.f32 0.0, %v3995
  %3997 = vmatmul.bf16.gmra.mxu0 %v3923
  %v3998 = vpop.f32.mrf.mxu0
  %v3999 = vadd.f32 0.0, %v3998
  %v4000 = vpop.f32.mrf.mxu0
  %v4001 = vadd.f32 0.0, %v4000
  %4002 = vmatmul.bf16.gmra.mxu0 %v3926
  %v4003 = vpop.f32.mrf.mxu0
  %v4004 = vadd.f32 0.0, %v4003
  %v4005 = vpop.f32.mrf.mxu0
  %v4006 = vadd.f32 0.0, %v4005
  %4007 = vmatmul.bf16.gmra.mxu0 %v3929
  %v4008 = vpop.f32.mrf.mxu0
  %v4009 = vadd.f32 0.0, %v4008
  %v4010 = vpop.f32.mrf.mxu0
  %v4011 = vadd.f32 0.0, %v4010
  %4012 = vmatmul.bf16.gmra.mxu0 %v3932
  %v4013 = vpop.f32.mrf.mxu0
  %v4014 = vadd.f32 0.0, %v4013
  %v4015 = vpop.f32.mrf.mxu0
  %v4016 = vadd.f32 0.0, %v4015
  %4017 = vdwg.mxu0
  %v4018 = vadd.f32 %v3692, %v3944
  %v4019 = vadd.f32 %v3694, %v3946
  %v4020 = vadd.f32 %v3697, %v3949
  %v4021 = vadd.f32 %v3699, %v3951
  %v4022 = vadd.f32 %v3702, %v3954
  %v4023 = vadd.f32 %v3704, %v3956
  %v4024 = vadd.f32 %v3707, %v3959
  %v4025 = vadd.f32 %v3709, %v3961
  %v4026 = vadd.f32 %v3712, %v3964
  %v4027 = vadd.f32 %v3714, %v3966
  %v4028 = vadd.f32 %v3717, %v3969
  %v4029 = vadd.f32 %v3719, %v3971
  %v4030 = vadd.f32 %v3722, %v3974
  %v4031 = vadd.f32 %v3724, %v3976
  %v4032 = vadd.f32 %v3727, %v3979
  %v4033 = vadd.f32 %v3729, %v3981
  %v4034 = vadd.f32 %v3732, %v3984
  %v4035 = vadd.f32 %v3734, %v3986
  %v4036 = vadd.f32 %v3737, %v3989
  %v4037 = vadd.f32 %v3739, %v3991
  %v4038 = vadd.f32 %v3742, %v3994
  %v4039 = vadd.f32 %v3744, %v3996
  %v4040 = vadd.f32 %v3747, %v3999
  %v4041 = vadd.f32 %v3749, %v4001
  %v4042 = vadd.f32 %v3752, %v4004
  %v4043 = vadd.f32 %v3754, %v4006
  %v4044 = vadd.f32 %v3757, %v4009
  %v4045 = vadd.f32 %v3759, %v4011
  %v4046 = vadd.f32 %v3762, %v4014
  %v4047 = vadd.f32 %v3764, %v4016
  %v4048 = vld [vmem:[%s6 + $0x5] ss:$0 sm:$0xff]
  %v4049 = vadd.f32 %v4018, %v4048
  %v4050 = vadd.f32 %v4019, %v4048
  %v4051 = vadd.f32 %v4020, %v4048
  %v4052 = vadd.f32 %v4021, %v4048
  %v4053 = vadd.f32 %v4022, %v4048
  %v4054 = vadd.f32 %v4023, %v4048
  %v4055 = vadd.f32 %v4024, %v4048
  %v4056 = vadd.f32 %v4025, %v4048
  %v4057 = vadd.f32 %v4026, %v4048
  %v4058 = vadd.f32 %v4027, %v4048
  %v4059 = vadd.f32 %v4028, %v4048
  %v4060 = vadd.f32 %v4029, %v4048
  %v4061 = vadd.f32 %v4030, %v4048
  %v4062 = vadd.f32 %v4031, %v4048
  %v4063 = vadd.f32 %v4032, %v4048
  %v4064 = vadd.f32 %v4033, %v4048
  %v4065 = vadd.f32 %v4034, %v4048
  %v4066 = vadd.f32 %v4035, %v4048
  %v4067 = vadd.f32 %v4036, %v4048
  %v4068 = vadd.f32 %v4037, %v4048
  %v4069 = vadd.f32 %v4038, %v4048
  %v4070 = vadd.f32 %v4039, %v4048
  %v4071 = vadd.f32 %v4040, %v4048
  %v4072 = vadd.f32 %v4041, %v4048
  %v4073 = vadd.f32 %v4042, %v4048
  %v4074 = vadd.f32 %v4043, %v4048
  %v4075 = vadd.f32 %v4044, %v4048
  %v4076 = vadd.f32 %v4045, %v4048
  %v4077 = vadd.f32 %v4046, %v4048
  %v4078 = vadd.f32 %v4047, %v4048
  %v4079 = vmax.f32 %v4049, 0.0
  %v4080 = vmax.f32 %v4050, 0.0
  %v4081 = vmax.f32 %v4051, 0.0
  %v4082 = vmax.f32 %v4052, 0.0
  %v4083 = vmax.f32 %v4053, 0.0
  %v4084 = vmax.f32 %v4054, 0.0
  %v4085 = vmax.f32 %v4055, 0.0
  %v4086 = vmax.f32 %v4056, 0.0
  %v4087 = vmax.f32 %v4057, 0.0
  %v4088 = vmax.f32 %v4058, 0.0
  %v4089 = vmax.f32 %v4059, 0.0
  %v4090 = vmax.f32 %v4060, 0.0
  %v4091 = vmax.f32 %v4061, 0.0
  %v4092 = vmax.f32 %v4062, 0.0
  %v4093 = vmax.f32 %v4063, 0.0
  %v4094 = vmax.f32 %v4064, 0.0
  %v4095 = vmax.f32 %v4065, 0.0
  %v4096 = vmax.f32 %v4066, 0.0
  %v4097 = vmax.f32 %v4067, 0.0
  %v4098 = vmax.f32 %v4068, 0.0
  %v4099 = vmax.f32 %v4069, 0.0
  %v4100 = vmax.f32 %v4070, 0.0
  %v4101 = vmax.f32 %v4071, 0.0
  %v4102 = vmax.f32 %v4072, 0.0
  %v4103 = vmax.f32 %v4073, 0.0
  %v4104 = vmax.f32 %v4074, 0.0
  %v4105 = vmax.f32 %v4075, 0.0
  %v4106 = vmax.f32 %v4076, 0.0
  %v4107 = vmax.f32 %v4077, 0.0
  %v4108 = vmax.f32 %v4078, 0.0
  %v4109 = vld [vmem:[%s3 + $0x90] sm:$0xf]
  %v4110 = vld [vmem:[%s3 + $0x94] sm:$0xf]
  %v4111 = vld [vmem:[%s3 + $0x98] sm:$0xf]
  %v4112 = vld [vmem:[%s3 + $0x9c] sm:$0xf]
  %v4113 = vld [vmem:[%s3 + $0xa0] sm:$0xf]
  %v4114 = vld [vmem:[%s3 + $0xa4] sm:$0xf]
  %v4115 = vld [vmem:[%s3 + $0xa8] sm:$0xf]
  %v4116 = vld [vmem:[%s3 + $0xac] sm:$0xf]
  %v4117 = vld [vmem:[%s3 + $0xb0] sm:$0xf]
  %v4118 = vld [vmem:[%s3 + $0xb4] sm:$0xf]
  %v4119 = vld [vmem:[%s3 + $0xb8] sm:$0xf]
  %v4120 = vld [vmem:[%s3 + $0xbc] sm:$0xf]
  %v4121 = vld [vmem:[%s3 + $0xc0] sm:$0xf]
  %v4122 = vld [vmem:[%s3 + $0xc4] sm:$0xf]
  %v4123 = vld [vmem:[%s3 + $0xc8] sm:$0xf]
  %v4124 = vld [vmem:[%s3 + $0xcc] sm:$0xf]
  %v4125 = vld [vmem:[%s3 + $0xd0] sm:$0xf]
  %v4126 = vld [vmem:[%s3 + $0xd4] sm:$0xf]
  %v4127 = vpack.c.bf16 %v4080, %v4079
  %v4128 = vpack.c.bf16 %v4082, %v4081
  %v4129 = vpack.c.bf16 %v4084, %v4083
  %v4130 = vpack.c.bf16 %v4086, %v4085
  %v4131 = vpack.c.bf16 %v4088, %v4087
  %v4132 = vpack.c.bf16 %v4090, %v4089
  %v4133 = vpack.c.bf16 %v4092, %v4091
  %v4134 = vpack.c.bf16 %v4094, %v4093
  %v4135 = vpack.c.bf16 %v4096, %v4095
  %v4136 = vpack.c.bf16 %v4098, %v4097
  %v4137 = vpack.c.bf16 %v4100, %v4099
  %v4138 = vpack.c.bf16 %v4102, %v4101
  %v4139 = vpack.c.bf16 %v4104, %v4103
  %v4140 = vpack.c.bf16 %v4106, %v4105
  %v4141 = vpack.c.bf16 %v4108, %v4107
  %v4142 = vrot.slane %v4079, 7
  %v4143 = vrot.slane %v4080, 7
  %v4144 = vrot.slane %v4081, 7
  %v4145 = vrot.slane %v4082, 7
  %v4146 = vrot.slane %v4083, 7
  %v4147 = vrot.slane %v4084, 7
  %v4148 = vrot.slane %v4085, 7
  %v4149 = vrot.slane %v4086, 7
  %v4150 = vrot.slane %v4087, 7
  %v4151 = vrot.slane %v4088, 7
  %v4152 = vrot.slane %v4089, 7
  %v4153 = vrot.slane %v4090, 7
  %v4154 = vrot.slane %v4091, 7
  %v4155 = vrot.slane %v4092, 7
  %v4156 = vrot.slane %v4093, 7
  %v4157 = vrot.slane %v4094, 7
  %v4158 = vrot.slane %v4095, 7
  %v4159 = vrot.slane %v4096, 7
  %v4160 = vrot.slane %v4097, 7
  %v4161 = vrot.slane %v4098, 7
  %v4162 = vrot.slane %v4099, 7
  %v4163 = vrot.slane %v4100, 7
  %v4164 = vrot.slane %v4101, 7
  %v4165 = vrot.slane %v4102, 7
  %v4166 = vrot.slane %v4103, 7
  %v4167 = vrot.slane %v4104, 7
  %v4168 = vrot.slane %v4105, 7
  %v4169 = vrot.slane %v4106, 7
  %v4170 = vrot.slane %v4107, 7
  %v4171 = vrot.slane %v4108, 7
  %v4172 = vsel %vm1463, %v4170, %v4171
  %v4173 = vsel %vm1463, %v4169, %v4170
  %v4174 = vsel %vm1463, %v4168, %v4169
  %v4175 = vsel %vm1463, %v4167, %v4168
  %v4176 = vsel %vm1463, %v4166, %v4167
  %v4177 = vsel %vm1463, %v4165, %v4166
  %v4178 = vsel %vm1463, %v4164, %v4165
  %v4179 = vsel %vm1463, %v4163, %v4164
  %v4180 = vsel %vm1463, %v4162, %v4163
  %v4181 = vsel %vm1463, %v4161, %v4162
  %v4182 = vsel %vm1463, %v4160, %v4161
  %v4183 = vsel %vm1463, %v4159, %v4160
  %v4184 = vsel %vm1463, %v4158, %v4159
  %v4185 = vsel %vm1463, %v4157, %v4158
  %v4186 = vsel %vm1463, %v4156, %v4157
  %v4187 = vsel %vm1463, %v4155, %v4156
  %v4188 = vsel %vm1463, %v4154, %v4155
  %v4189 = vsel %vm1463, %v4153, %v4154
  %v4190 = vsel %vm1463, %v4152, %v4153
  %v4191 = vsel %vm1463, %v4151, %v4152
  %v4192 = vsel %vm1463, %v4150, %v4151
  %v4193 = vsel %vm1463, %v4149, %v4150
  %v4194 = vsel %vm1463, %v4148, %v4149
  %v4195 = vsel %vm1463, %v4147, %v4148
  %v4196 = vsel %vm1463, %v4146, %v4147
  %v4197 = vsel %vm1463, %v4145, %v4146
  %v4198 = vsel %vm1463, %v4144, %v4145
  %v4199 = vsel %vm1463, %v4143, %v4144
  %v4200 = vsel %vm1463, %v4142, %v4143
  %v4201 = vsel %vm1463, %v4171, %v4142
  %v4202 = vsel %vm1524, 0.0, %v4201
  %v4203 = vsel %vm1525, 0.0, %v4200
  %v4204 = vsel %vm1526, 0.0, %v4199
  %v4205 = vsel %vm1527, 0.0, %v4198
  %v4206 = vsel %vm1528, 0.0, %v4197
  %v4207 = vsel %vm1529, 0.0, %v4196
  %v4208 = vsel %vm1530, 0.0, %v4195
  %v4209 = vsel %vm1531, 0.0, %v4194
  %v4210 = vsel %vm1532, 0.0, %v4193
  %v4211 = vsel %vm1533, 0.0, %v4192
  %v4212 = vsel %vm1534, 0.0, %v4191
  %v4213 = vsel %vm1535, 0.0, %v4190
  %v4214 = vsel %vm1536, 0.0, %v4189
  %v4215 = vsel %vm1537, 0.0, %v4188
  %v4216 = vsel %vm1538, 0.0, %v4187
  %v4217 = vsel %vm1539, 0.0, %v4186
  %v4218 = vsel %vm1540, 0.0, %v4185
  %v4219 = vsel %vm1541, 0.0, %v4184
  %v4220 = vsel %vm1542, 0.0, %v4183
  %v4221 = vsel %vm1543, 0.0, %v4182
  %v4222 = vsel %vm1544, 0.0, %v4181
  %v4223 = vsel %vm1545, 0.0, %v4180
  %v4224 = vsel %vm1546, 0.0, %v4179
  %v4225 = vsel %vm1547, 0.0, %v4178
  %v4226 = vsel %vm1548, 0.0, %v4177
  %v4227 = vsel %vm1549, 0.0, %v4176
  %v4228 = vsel %vm1550, 0.0, %v4175
  %v4229 = vsel %vm1551, 0.0, %v4174
  %v4230 = vsel %vm1552, 0.0, %v4173
  %v4231 = vsel %vm1553, 0.0, %v4172
  %v4232 = vpack.c.bf16 %v4203, %v4202
  %v4233 = vpack.c.bf16 %v4205, %v4204
  %v4234 = vpack.c.bf16 %v4207, %v4206
  %v4235 = vpack.c.bf16 %v4209, %v4208
  %v4236 = vpack.c.bf16 %v4211, %v4210
  %v4237 = vpack.c.bf16 %v4213, %v4212
  %v4238 = vpack.c.bf16 %v4215, %v4214
  %v4239 = vpack.c.bf16 %v4217, %v4216
  %v4240 = vpack.c.bf16 %v4219, %v4218
  %v4241 = vpack.c.bf16 %v4221, %v4220
  %v4242 = vpack.c.bf16 %v4223, %v4222
  %v4243 = vpack.c.bf16 %v4225, %v4224
  %v4244 = vpack.c.bf16 %v4227, %v4226
  %v4245 = vpack.c.bf16 %v4229, %v4228
  %v4246 = vpack.c.bf16 %v4231, %v4230
  %v4253 = vunpack.c.l.b16 %v4109
  %v4254 = vunpack.c.l.b16 %v4110
  %v4255 = vunpack.c.l.b16 %v4111
  %v4256 = vunpack.c.l.b16 %v4112
  %v4257 = vunpack.c.l.b16 %v4113
  %v4258 = vunpack.c.l.b16 %v4114
  %v4259 = vpack.c.b16 %v4254, %v4253
  %v4260 = vpack.c.b16 %v4256, %v4255
  %v4261 = vpack.c.b16 %v4258, %v4257
  %v4266 = vsel %vm3489, %v4232, 0
  %v4269 = vsel %vm3489, %v4233, 0
  %v4272 = vsel %vm3489, %v4234, 0
  %v4275 = vsel %vm3489, %v4235, 0
  %v4278 = vsel %vm3489, %v4236, 0
  %v4281 = vsel %vm3489, %v4237, 0
  %v4284 = vsel %vm3489, %v4238, 0
  %v4287 = vsel %vm3489, %v4239, 0
  %v4290 = vsel %vm3489, %v4240, 0
  %v4293 = vsel %vm3489, %v4241, 0
  %v4296 = vsel %vm3489, %v4242, 0
  %v4299 = vsel %vm3489, %v4243, 0
  %v4302 = vsel %vm3489, %v4244, 0
  %v4305 = vsel %vm3489, %v4245, 0
  %v4308 = vsel %vm3489, %v4246, 0
  %4310 = vmatpush.bf16.msra.mxu0 0
  %4311 = vmatpush.bf16.msra.mxu0 0
  %4312 = vmatpush.bf16.msra.mxu0 0
  %4313 = vmatpush.bf16.msra.mxu0 0
  %4314 = vmatpush.bf16.msra.mxu0 0
  %4315 = vmatpush.bf16.msra.mxu0 %v4261
  %4316 = vmatpush.bf16.msra.mxu0 %v4260
  %4317 = vmatpush.bf16.msra.mxu0 %v4259
  %4318 = vmatmul.bf16.gmra.mxu0 %v4266
  %v4319 = vpop.f32.mrf.mxu0
  %v4320 = vadd.f32 0.0, %v4319
  %v4321 = vpop.f32.mrf.mxu0
  %v4322 = vadd.f32 0.0, %v4321
  %4323 = vmatmul.bf16.gmra.mxu0 %v4269
  %v4324 = vpop.f32.mrf.mxu0
  %v4325 = vadd.f32 0.0, %v4324
  %v4326 = vpop.f32.mrf.mxu0
  %v4327 = vadd.f32 0.0, %v4326
  %4328 = vmatmul.bf16.gmra.mxu0 %v4272
  %v4329 = vpop.f32.mrf.mxu0
  %v4330 = vadd.f32 0.0, %v4329
  %v4331 = vpop.f32.mrf.mxu0
  %v4332 = vadd.f32 0.0, %v4331
  %4333 = vmatmul.bf16.gmra.mxu0 %v4275
  %v4334 = vpop.f32.mrf.mxu0
  %v4335 = vadd.f32 0.0, %v4334
  %v4336 = vpop.f32.mrf.mxu0
  %v4337 = vadd.f32 0.0, %v4336
  %4338 = vmatmul.bf16.gmra.mxu0 %v4278
  %v4339 = vpop.f32.mrf.mxu0
  %v4340 = vadd.f32 0.0, %v4339
  %v4341 = vpop.f32.mrf.mxu0
  %v4342 = vadd.f32 0.0, %v4341
  %4343 = vmatmul.bf16.gmra.mxu0 %v4281
  %v4344 = vpop.f32.mrf.mxu0
  %v4345 = vadd.f32 0.0, %v4344
  %v4346 = vpop.f32.mrf.mxu0
  %v4347 = vadd.f32 0.0, %v4346
  %4348 = vmatmul.bf16.gmra.mxu0 %v4284
  %v4349 = vpop.f32.mrf.mxu0
  %v4350 = vadd.f32 0.0, %v4349
  %v4351 = vpop.f32.mrf.mxu0
  %v4352 = vadd.f32 0.0, %v4351
  %4353 = vmatmul.bf16.gmra.mxu0 %v4287
  %v4354 = vpop.f32.mrf.mxu0
  %v4355 = vadd.f32 0.0, %v4354
  %v4356 = vpop.f32.mrf.mxu0
  %v4357 = vadd.f32 0.0, %v4356
  %4358 = vmatmul.bf16.gmra.mxu0 %v4290
  %v4359 = vpop.f32.mrf.mxu0
  %v4360 = vadd.f32 0.0, %v4359
  %v4361 = vpop.f32.mrf.mxu0
  %v4362 = vadd.f32 0.0, %v4361
  %4363 = vmatmul.bf16.gmra.mxu0 %v4293
  %v4364 = vpop.f32.mrf.mxu0
  %v4365 = vadd.f32 0.0, %v4364
  %v4366 = vpop.f32.mrf.mxu0
  %v4367 = vadd.f32 0.0, %v4366
  %4368 = vmatmul.bf16.gmra.mxu0 %v4296
  %v4369 = vpop.f32.mrf.mxu0
  %v4370 = vadd.f32 0.0, %v4369
  %v4371 = vpop.f32.mrf.mxu0
  %v4372 = vadd.f32 0.0, %v4371
  %4373 = vmatmul.bf16.gmra.mxu0 %v4299
  %v4374 = vpop.f32.mrf.mxu0
  %v4375 = vadd.f32 0.0, %v4374
  %v4376 = vpop.f32.mrf.mxu0
  %v4377 = vadd.f32 0.0, %v4376
  %4378 = vmatmul.bf16.gmra.mxu0 %v4302
  %v4379 = vpop.f32.mrf.mxu0
  %v4380 = vadd.f32 0.0, %v4379
  %v4381 = vpop.f32.mrf.mxu0
  %v4382 = vadd.f32 0.0, %v4381
  %4383 = vmatmul.bf16.gmra.mxu0 %v4305
  %v4384 = vpop.f32.mrf.mxu0
  %v4385 = vadd.f32 0.0, %v4384
  %v4386 = vpop.f32.mrf.mxu0
  %v4387 = vadd.f32 0.0, %v4386
  %4388 = vmatmul.bf16.gmra.mxu0 %v4308
  %v4389 = vpop.f32.mrf.mxu0
  %v4390 = vadd.f32 0.0, %v4389
  %v4391 = vpop.f32.mrf.mxu0
  %v4392 = vadd.f32 0.0, %v4391
  %4393 = vdwg.mxu0
  %v4400 = vunpack.c.l.b16 %v4115
  %v4401 = vunpack.c.l.b16 %v4116
  %v4402 = vunpack.c.l.b16 %v4117
  %v4403 = vunpack.c.l.b16 %v4118
  %v4404 = vunpack.c.l.b16 %v4119
  %v4405 = vunpack.c.l.b16 %v4120
  %v4406 = vpack.c.b16 %v4401, %v4400
  %v4407 = vpack.c.b16 %v4403, %v4402
  %v4408 = vpack.c.b16 %v4405, %v4404
  %v4413 = vsel %vm3489, %v4127, 0
  %v4416 = vsel %vm3489, %v4128, 0
  %v4419 = vsel %vm3489, %v4129, 0
  %v4422 = vsel %vm3489, %v4130, 0
  %v4425 = vsel %vm3489, %v4131, 0
  %v4428 = vsel %vm3489, %v4132, 0
  %v4431 = vsel %vm3489, %v4133, 0
  %v4434 = vsel %vm3489, %v4134, 0
  %v4437 = vsel %vm3489, %v4135, 0
  %v4440 = vsel %vm3489, %v4136, 0
  %v4443 = vsel %vm3489, %v4137, 0
  %v4446 = vsel %vm3489, %v4138, 0
  %v4449 = vsel %vm3489, %v4139, 0
  %v4452 = vsel %vm3489, %v4140, 0
  %v4455 = vsel %vm3489, %v4141, 0
  %4457 = vmatpush.bf16.msra.mxu0 0
  %4458 = vmatpush.bf16.msra.mxu0 0
  %4459 = vmatpush.bf16.msra.mxu0 0
  %4460 = vmatpush.bf16.msra.mxu0 0
  %4461 = vmatpush.bf16.msra.mxu0 0
  %4462 = vmatpush.bf16.msra.mxu0 %v4408
  %4463 = vmatpush.bf16.msra.mxu0 %v4407
  %4464 = vmatpush.bf16.msra.mxu0 %v4406
  %4465 = vmatmul.bf16.gmra.mxu0 %v4413
  %v4466 = vpop.f32.mrf.mxu0
  %v4467 = vadd.f32 %v4320, %v4466
  %v4468 = vpop.f32.mrf.mxu0
  %v4469 = vadd.f32 %v4322, %v4468
  %4470 = vmatmul.bf16.gmra.mxu0 %v4416
  %v4471 = vpop.f32.mrf.mxu0
  %v4472 = vadd.f32 %v4325, %v4471
  %v4473 = vpop.f32.mrf.mxu0
  %v4474 = vadd.f32 %v4327, %v4473
  %4475 = vmatmul.bf16.gmra.mxu0 %v4419
  %v4476 = vpop.f32.mrf.mxu0
  %v4477 = vadd.f32 %v4330, %v4476
  %v4478 = vpop.f32.mrf.mxu0
  %v4479 = vadd.f32 %v4332, %v4478
  %4480 = vmatmul.bf16.gmra.mxu0 %v4422
  %v4481 = vpop.f32.mrf.mxu0
  %v4482 = vadd.f32 %v4335, %v4481
  %v4483 = vpop.f32.mrf.mxu0
  %v4484 = vadd.f32 %v4337, %v4483
  %4485 = vmatmul.bf16.gmra.mxu0 %v4425
  %v4486 = vpop.f32.mrf.mxu0
  %v4487 = vadd.f32 %v4340, %v4486
  %v4488 = vpop.f32.mrf.mxu0
  %v4489 = vadd.f32 %v4342, %v4488
  %4490 = vmatmul.bf16.gmra.mxu0 %v4428
  %v4491 = vpop.f32.mrf.mxu0
  %v4492 = vadd.f32 %v4345, %v4491
  %v4493 = vpop.f32.mrf.mxu0
  %v4494 = vadd.f32 %v4347, %v4493
  %4495 = vmatmul.bf16.gmra.mxu0 %v4431
  %v4496 = vpop.f32.mrf.mxu0
  %v4497 = vadd.f32 %v4350, %v4496
  %v4498 = vpop.f32.mrf.mxu0
  %v4499 = vadd.f32 %v4352, %v4498
  %4500 = vmatmul.bf16.gmra.mxu0 %v4434
  %v4501 = vpop.f32.mrf.mxu0
  %v4502 = vadd.f32 %v4355, %v4501
  %v4503 = vpop.f32.mrf.mxu0
  %v4504 = vadd.f32 %v4357, %v4503
  %4505 = vmatmul.bf16.gmra.mxu0 %v4437
  %v4506 = vpop.f32.mrf.mxu0
  %v4507 = vadd.f32 %v4360, %v4506
  %v4508 = vpop.f32.mrf.mxu0
  %v4509 = vadd.f32 %v4362, %v4508
  %4510 = vmatmul.bf16.gmra.mxu0 %v4440
  %v4511 = vpop.f32.mrf.mxu0
  %v4512 = vadd.f32 %v4365, %v4511
  %v4513 = vpop.f32.mrf.mxu0
  %v4514 = vadd.f32 %v4367, %v4513
  %4515 = vmatmul.bf16.gmra.mxu0 %v4443
  %v4516 = vpop.f32.mrf.mxu0
  %v4517 = vadd.f32 %v4370, %v4516
  %v4518 = vpop.f32.mrf.mxu0
  %v4519 = vadd.f32 %v4372, %v4518
  %4520 = vmatmul.bf16.gmra.mxu0 %v4446
  %v4521 = vpop.f32.mrf.mxu0
  %v4522 = vadd.f32 %v4375, %v4521
  %v4523 = vpop.f32.mrf.mxu0
  %v4524 = vadd.f32 %v4377, %v4523
  %4525 = vmatmul.bf16.gmra.mxu0 %v4449
  %v4526 = vpop.f32.mrf.mxu0
  %v4527 = vadd.f32 %v4380, %v4526
  %v4528 = vpop.f32.mrf.mxu0
  %v4529 = vadd.f32 %v4382, %v4528
  %4530 = vmatmul.bf16.gmra.mxu0 %v4452
  %v4531 = vpop.f32.mrf.mxu0
  %v4532 = vadd.f32 %v4385, %v4531
  %v4533 = vpop.f32.mrf.mxu0
  %v4534 = vadd.f32 %v4387, %v4533
  %4535 = vmatmul.bf16.gmra.mxu0 %v4455
  %v4536 = vpop.f32.mrf.mxu0
  %v4537 = vadd.f32 %v4390, %v4536
  %v4538 = vpop.f32.mrf.mxu0
  %v4539 = vadd.f32 %v4392, %v4538
  %4540 = vdwg.mxu0
  %v4541 = vrot.slane %v4079, 1
  %v4542 = vrot.slane %v4080, 1
  %v4543 = vrot.slane %v4081, 1
  %v4544 = vrot.slane %v4082, 1
  %v4545 = vrot.slane %v4083, 1
  %v4546 = vrot.slane %v4084, 1
  %v4547 = vrot.slane %v4085, 1
  %v4548 = vrot.slane %v4086, 1
  %v4549 = vrot.slane %v4087, 1
  %v4550 = vrot.slane %v4088, 1
  %v4551 = vrot.slane %v4089, 1
  %v4552 = vrot.slane %v4090, 1
  %v4553 = vrot.slane %v4091, 1
  %v4554 = vrot.slane %v4092, 1
  %v4555 = vrot.slane %v4093, 1
  %v4556 = vrot.slane %v4094, 1
  %v4557 = vrot.slane %v4095, 1
  %v4558 = vrot.slane %v4096, 1
  %v4559 = vrot.slane %v4097, 1
  %v4560 = vrot.slane %v4098, 1
  %v4561 = vrot.slane %v4099, 1
  %v4562 = vrot.slane %v4100, 1
  %v4563 = vrot.slane %v4101, 1
  %v4564 = vrot.slane %v4102, 1
  %v4565 = vrot.slane %v4103, 1
  %v4566 = vrot.slane %v4104, 1
  %v4567 = vrot.slane %v4105, 1
  %v4568 = vrot.slane %v4106, 1
  %v4569 = vrot.slane %v4107, 1
  %v4570 = vrot.slane %v4108, 1
  %v4571 = vsel %vm1913, %v4569, %v4570
  %v4572 = vsel %vm1913, %v4568, %v4569
  %v4573 = vsel %vm1913, %v4567, %v4568
  %v4574 = vsel %vm1913, %v4566, %v4567
  %v4575 = vsel %vm1913, %v4565, %v4566
  %v4576 = vsel %vm1913, %v4564, %v4565
  %v4577 = vsel %vm1913, %v4563, %v4564
  %v4578 = vsel %vm1913, %v4562, %v4563
  %v4579 = vsel %vm1913, %v4561, %v4562
  %v4580 = vsel %vm1913, %v4560, %v4561
  %v4581 = vsel %vm1913, %v4559, %v4560
  %v4582 = vsel %vm1913, %v4558, %v4559
  %v4583 = vsel %vm1913, %v4557, %v4558
  %v4584 = vsel %vm1913, %v4556, %v4557
  %v4585 = vsel %vm1913, %v4555, %v4556
  %v4586 = vsel %vm1913, %v4554, %v4555
  %v4587 = vsel %vm1913, %v4553, %v4554
  %v4588 = vsel %vm1913, %v4552, %v4553
  %v4589 = vsel %vm1913, %v4551, %v4552
  %v4590 = vsel %vm1913, %v4550, %v4551
  %v4591 = vsel %vm1913, %v4549, %v4550
  %v4592 = vsel %vm1913, %v4548, %v4549
  %v4593 = vsel %vm1913, %v4547, %v4548
  %v4594 = vsel %vm1913, %v4546, %v4547
  %v4595 = vsel %vm1913, %v4545, %v4546
  %v4596 = vsel %vm1913, %v4544, %v4545
  %v4597 = vsel %vm1913, %v4543, %v4544
  %v4598 = vsel %vm1913, %v4542, %v4543
  %v4599 = vsel %vm1913, %v4541, %v4542
  %v4600 = vsel %vm1913, %v4570, %v4541
  %v4601 = vsel %vm1974, 0.0, %v4599
  %v4602 = vsel %vm1975, 0.0, %v4598
  %v4603 = vsel %vm1976, 0.0, %v4597
  %v4604 = vsel %vm1977, 0.0, %v4596
  %v4605 = vsel %vm1978, 0.0, %v4595
  %v4606 = vsel %vm1979, 0.0, %v4594
  %v4607 = vsel %vm1980, 0.0, %v4593
  %v4608 = vsel %vm1981, 0.0, %v4592
  %v4609 = vsel %vm1982, 0.0, %v4591
  %v4610 = vsel %vm1983, 0.0, %v4590
  %v4611 = vsel %vm1984, 0.0, %v4589
  %v4612 = vsel %vm1985, 0.0, %v4588
  %v4613 = vsel %vm1986, 0.0, %v4587
  %v4614 = vsel %vm1987, 0.0, %v4586
  %v4615 = vsel %vm1988, 0.0, %v4585
  %v4616 = vsel %vm1989, 0.0, %v4584
  %v4617 = vsel %vm1990, 0.0, %v4583
  %v4618 = vsel %vm1991, 0.0, %v4582
  %v4619 = vsel %vm1992, 0.0, %v4581
  %v4620 = vsel %vm1993, 0.0, %v4580
  %v4621 = vsel %vm1994, 0.0, %v4579
  %v4622 = vsel %vm1995, 0.0, %v4578
  %v4623 = vsel %vm1996, 0.0, %v4577
  %v4624 = vsel %vm1997, 0.0, %v4576
  %v4625 = vsel %vm1998, 0.0, %v4575
  %v4626 = vsel %vm1999, 0.0, %v4574
  %v4627 = vsel %vm2000, 0.0, %v4573
  %v4628 = vsel %vm2001, 0.0, %v4572
  %v4629 = vsel %vm2002, 0.0, %v4571
  %v4630 = vsel %vm2003, 0.0, %v4600
  %v4631 = vpack.c.bf16 %v4602, %v4601
  %v4632 = vpack.c.bf16 %v4604, %v4603
  %v4633 = vpack.c.bf16 %v4606, %v4605
  %v4634 = vpack.c.bf16 %v4608, %v4607
  %v4635 = vpack.c.bf16 %v4610, %v4609
  %v4636 = vpack.c.bf16 %v4612, %v4611
  %v4637 = vpack.c.bf16 %v4614, %v4613
  %v4638 = vpack.c.bf16 %v4616, %v4615
  %v4639 = vpack.c.bf16 %v4618, %v4617
  %v4640 = vpack.c.bf16 %v4620, %v4619
  %v4641 = vpack.c.bf16 %v4622, %v4621
  %v4642 = vpack.c.bf16 %v4624, %v4623
  %v4643 = vpack.c.bf16 %v4626, %v4625
  %v4644 = vpack.c.bf16 %v4628, %v4627
  %v4645 = vpack.c.bf16 %v4630, %v4629
  %v4652 = vunpack.c.l.b16 %v4121
  %v4653 = vunpack.c.l.b16 %v4122
  %v4654 = vunpack.c.l.b16 %v4123
  %v4655 = vunpack.c.l.b16 %v4124
  %v4656 = vunpack.c.l.b16 %v4125
  %v4657 = vunpack.c.l.b16 %v4126
  %v4658 = vpack.c.b16 %v4653, %v4652
  %v4659 = vpack.c.b16 %v4655, %v4654
  %v4660 = vpack.c.b16 %v4657, %v4656
  %v4665 = vsel %vm3489, %v4631, 0
  %v4668 = vsel %vm3489, %v4632, 0
  %v4671 = vsel %vm3489, %v4633, 0
  %v4674 = vsel %vm3489, %v4634, 0
  %v4677 = vsel %vm3489, %v4635, 0
  %v4680 = vsel %vm3489, %v4636, 0
  %v4683 = vsel %vm3489, %v4637, 0
  %v4686 = vsel %vm3489, %v4638, 0
  %v4689 = vsel %vm3489, %v4639, 0
  %v4692 = vsel %vm3489, %v4640, 0
  %v4695 = vsel %vm3489, %v4641, 0
  %v4698 = vsel %vm3489, %v4642, 0
  %v4701 = vsel %vm3489, %v4643, 0
  %v4704 = vsel %vm3489, %v4644, 0
  %v4707 = vsel %vm3489, %v4645, 0
  %4709 = vmatpush.bf16.msra.mxu0 0
  %4710 = vmatpush.bf16.msra.mxu0 0
  %4711 = vmatpush.bf16.msra.mxu0 0
  %4712 = vmatpush.bf16.msra.mxu0 0
  %4713 = vmatpush.bf16.msra.mxu0 0
  %4714 = vmatpush.bf16.msra.mxu0 %v4660
  %4715 = vmatpush.bf16.msra.mxu0 %v4659
  %4716 = vmatpush.bf16.msra.mxu0 %v4658
  %4717 = vmatmul.bf16.gmra.mxu0 %v4665
  %v4718 = vpop.f32.mrf.mxu0
  %v4719 = vadd.f32 0.0, %v4718
  %v4720 = vpop.f32.mrf.mxu0
  %v4721 = vadd.f32 0.0, %v4720
  %4722 = vmatmul.bf16.gmra.mxu0 %v4668
  %v4723 = vpop.f32.mrf.mxu0
  %v4724 = vadd.f32 0.0, %v4723
  %v4725 = vpop.f32.mrf.mxu0
  %v4726 = vadd.f32 0.0, %v4725
  %4727 = vmatmul.bf16.gmra.mxu0 %v4671
  %v4728 = vpop.f32.mrf.mxu0
  %v4729 = vadd.f32 0.0, %v4728
  %v4730 = vpop.f32.mrf.mxu0
  %v4731 = vadd.f32 0.0, %v4730
  %4732 = vmatmul.bf16.gmra.mxu0 %v4674
  %v4733 = vpop.f32.mrf.mxu0
  %v4734 = vadd.f32 0.0, %v4733
  %v4735 = vpop.f32.mrf.mxu0
  %v4736 = vadd.f32 0.0, %v4735
  %4737 = vmatmul.bf16.gmra.mxu0 %v4677
  %v4738 = vpop.f32.mrf.mxu0
  %v4739 = vadd.f32 0.0, %v4738
  %v4740 = vpop.f32.mrf.mxu0
  %v4741 = vadd.f32 0.0, %v4740
  %4742 = vmatmul.bf16.gmra.mxu0 %v4680
  %v4743 = vpop.f32.mrf.mxu0
  %v4744 = vadd.f32 0.0, %v4743
  %v4745 = vpop.f32.mrf.mxu0
  %v4746 = vadd.f32 0.0, %v4745
  %4747 = vmatmul.bf16.gmra.mxu0 %v4683
  %v4748 = vpop.f32.mrf.mxu0
  %v4749 = vadd.f32 0.0, %v4748
  %v4750 = vpop.f32.mrf.mxu0
  %v4751 = vadd.f32 0.0, %v4750
  %4752 = vmatmul.bf16.gmra.mxu0 %v4686
  %v4753 = vpop.f32.mrf.mxu0
  %v4754 = vadd.f32 0.0, %v4753
  %v4755 = vpop.f32.mrf.mxu0
  %v4756 = vadd.f32 0.0, %v4755
  %4757 = vmatmul.bf16.gmra.mxu0 %v4689
  %v4758 = vpop.f32.mrf.mxu0
  %v4759 = vadd.f32 0.0, %v4758
  %v4760 = vpop.f32.mrf.mxu0
  %v4761 = vadd.f32 0.0, %v4760
  %4762 = vmatmul.bf16.gmra.mxu0 %v4692
  %v4763 = vpop.f32.mrf.mxu0
  %v4764 = vadd.f32 0.0, %v4763
  %v4765 = vpop.f32.mrf.mxu0
  %v4766 = vadd.f32 0.0, %v4765
  %4767 = vmatmul.bf16.gmra.mxu0 %v4695
  %v4768 = vpop.f32.mrf.mxu0
  %v4769 = vadd.f32 0.0, %v4768
  %v4770 = vpop.f32.mrf.mxu0
  %v4771 = vadd.f32 0.0, %v4770
  %4772 = vmatmul.bf16.gmra.mxu0 %v4698
  %v4773 = vpop.f32.mrf.mxu0
  %v4774 = vadd.f32 0.0, %v4773
  %v4775 = vpop.f32.mrf.mxu0
  %v4776 = vadd.f32 0.0, %v4775
  %4777 = vmatmul.bf16.gmra.mxu0 %v4701
  %v4778 = vpop.f32.mrf.mxu0
  %v4779 = vadd.f32 0.0, %v4778
  %v4780 = vpop.f32.mrf.mxu0
  %v4781 = vadd.f32 0.0, %v4780
  %4782 = vmatmul.bf16.gmra.mxu0 %v4704
  %v4783 = vpop.f32.mrf.mxu0
  %v4784 = vadd.f32 0.0, %v4783
  %v4785 = vpop.f32.mrf.mxu0
  %v4786 = vadd.f32 0.0, %v4785
  %4787 = vmatmul.bf16.gmra.mxu0 %v4707
  %v4788 = vpop.f32.mrf.mxu0
  %v4789 = vadd.f32 0.0, %v4788
  %v4790 = vpop.f32.mrf.mxu0
  %v4791 = vadd.f32 0.0, %v4790
  %4792 = vdwg.mxu0
  %v4793 = vadd.f32 %v4467, %v4719
  %v4794 = vadd.f32 %v4469, %v4721
  %v4795 = vadd.f32 %v4472, %v4724
  %v4796 = vadd.f32 %v4474, %v4726
  %v4797 = vadd.f32 %v4477, %v4729
  %v4798 = vadd.f32 %v4479, %v4731
  %v4799 = vadd.f32 %v4482, %v4734
  %v4800 = vadd.f32 %v4484, %v4736
  %v4801 = vadd.f32 %v4487, %v4739
  %v4802 = vadd.f32 %v4489, %v4741
  %v4803 = vadd.f32 %v4492, %v4744
  %v4804 = vadd.f32 %v4494, %v4746
  %v4805 = vadd.f32 %v4497, %v4749
  %v4806 = vadd.f32 %v4499, %v4751
  %v4807 = vadd.f32 %v4502, %v4754
  %v4808 = vadd.f32 %v4504, %v4756
  %v4809 = vadd.f32 %v4507, %v4759
  %v4810 = vadd.f32 %v4509, %v4761
  %v4811 = vadd.f32 %v4512, %v4764
  %v4812 = vadd.f32 %v4514, %v4766
  %v4813 = vadd.f32 %v4517, %v4769
  %v4814 = vadd.f32 %v4519, %v4771
  %v4815 = vadd.f32 %v4522, %v4774
  %v4816 = vadd.f32 %v4524, %v4776
  %v4817 = vadd.f32 %v4527, %v4779
  %v4818 = vadd.f32 %v4529, %v4781
  %v4819 = vadd.f32 %v4532, %v4784
  %v4820 = vadd.f32 %v4534, %v4786
  %v4821 = vadd.f32 %v4537, %v4789
  %v4822 = vadd.f32 %v4539, %v4791
  %v4823 = vld [vmem:[%s6 + $0x6] ss:$0 sm:$0xff]
  %v4824 = vadd.f32 %v4793, %v4823
  %v4825 = vadd.f32 %v4794, %v4823
  %v4826 = vadd.f32 %v4795, %v4823
  %v4827 = vadd.f32 %v4796, %v4823
  %v4828 = vadd.f32 %v4797, %v4823
  %v4829 = vadd.f32 %v4798, %v4823
  %v4830 = vadd.f32 %v4799, %v4823
  %v4831 = vadd.f32 %v4800, %v4823
  %v4832 = vadd.f32 %v4801, %v4823
  %v4833 = vadd.f32 %v4802, %v4823
  %v4834 = vadd.f32 %v4803, %v4823
  %v4835 = vadd.f32 %v4804, %v4823
  %v4836 = vadd.f32 %v4805, %v4823
  %v4837 = vadd.f32 %v4806, %v4823
  %v4838 = vadd.f32 %v4807, %v4823
  %v4839 = vadd.f32 %v4808, %v4823
  %v4840 = vadd.f32 %v4809, %v4823
  %v4841 = vadd.f32 %v4810, %v4823
  %v4842 = vadd.f32 %v4811, %v4823
  %v4843 = vadd.f32 %v4812, %v4823
  %v4844 = vadd.f32 %v4813, %v4823
  %v4845 = vadd.f32 %v4814, %v4823
  %v4846 = vadd.f32 %v4815, %v4823
  %v4847 = vadd.f32 %v4816, %v4823
  %v4848 = vadd.f32 %v4817, %v4823
  %v4849 = vadd.f32 %v4818, %v4823
  %v4850 = vadd.f32 %v4819, %v4823
  %v4851 = vadd.f32 %v4820, %v4823
  %v4852 = vadd.f32 %v4821, %v4823
  %v4853 = vadd.f32 %v4822, %v4823
  %v4854 = vmax.f32 %v4824, 0.0
  %v4855 = vmax.f32 %v4825, 0.0
  %v4856 = vmax.f32 %v4826, 0.0
  %v4857 = vmax.f32 %v4827, 0.0
  %v4858 = vmax.f32 %v4828, 0.0
  %v4859 = vmax.f32 %v4829, 0.0
  %v4860 = vmax.f32 %v4830, 0.0
  %v4861 = vmax.f32 %v4831, 0.0
  %v4862 = vmax.f32 %v4832, 0.0
  %v4863 = vmax.f32 %v4833, 0.0
  %v4864 = vmax.f32 %v4834, 0.0
  %v4865 = vmax.f32 %v4835, 0.0
  %v4866 = vmax.f32 %v4836, 0.0
  %v4867 = vmax.f32 %v4837, 0.0
  %v4868 = vmax.f32 %v4838, 0.0
  %v4869 = vmax.f32 %v4839, 0.0
  %v4870 = vmax.f32 %v4840, 0.0
  %v4871 = vmax.f32 %v4841, 0.0
  %v4872 = vmax.f32 %v4842, 0.0
  %v4873 = vmax.f32 %v4843, 0.0
  %v4874 = vmax.f32 %v4844, 0.0
  %v4875 = vmax.f32 %v4845, 0.0
  %v4876 = vmax.f32 %v4846, 0.0
  %v4877 = vmax.f32 %v4847, 0.0
  %v4878 = vmax.f32 %v4848, 0.0
  %v4879 = vmax.f32 %v4849, 0.0
  %v4880 = vmax.f32 %v4850, 0.0
  %v4881 = vmax.f32 %v4851, 0.0
  %v4882 = vmax.f32 %v4852, 0.0
  %v4883 = vmax.f32 %v4853, 0.0
  %v4884 = vld [vmem:[%s3 + $0xd8] sm:$0xf]
  %v4885 = vld [vmem:[%s3 + $0xdc] sm:$0xf]
  %v4886 = vld [vmem:[%s3 + $0xe0] sm:$0xf]
  %v4887 = vld [vmem:[%s3 + $0xe4] sm:$0xf]
  %v4888 = vld [vmem:[%s3 + $0xe8] sm:$0xf]
  %v4889 = vld [vmem:[%s3 + $0xec] sm:$0xf]
  %v4890 = vld [vmem:[%s3 + $0xf0] sm:$0xf]
  %v4891 = vld [vmem:[%s3 + $0xf4] sm:$0xf]
  %v4892 = vld [vmem:[%s3 + $0xf8] sm:$0xf]
  %v4893 = vld [vmem:[%s3 + $0xfc] sm:$0xf]
  %v4894 = vld [vmem:[%s3 + $0x100] sm:$0xf]
  %v4895 = vld [vmem:[%s3 + $0x104] sm:$0xf]
  %v4896 = vld [vmem:[%s3 + $0x108] sm:$0xf]
  %v4897 = vld [vmem:[%s3 + $0x10c] sm:$0xf]
  %v4898 = vld [vmem:[%s3 + $0x110] sm:$0xf]
  %v4899 = vld [vmem:[%s3 + $0x114] sm:$0xf]
  %v4900 = vld [vmem:[%s3 + $0x118] sm:$0xf]
  %v4901 = vld [vmem:[%s3 + $0x11c] sm:$0xf]
  %v4902 = vld [vmem:[%s3 + $0x120] sm:$0xf]
  %v4903 = vld [vmem:[%s3 + $0x124] sm:$0xf]
  %v4904 = vld [vmem:[%s3 + $0x128] sm:$0xf]
  %v4905 = vld [vmem:[%s3 + $0x12c] sm:$0xf]
  %v4906 = vld [vmem:[%s3 + $0x130] sm:$0xf]
  %v4907 = vld [vmem:[%s3 + $0x134] sm:$0xf]
  %v4908 = vld [vmem:[%s3 + $0x138] sm:$0xf]
  %v4909 = vld [vmem:[%s3 + $0x13c] sm:$0xf]
  %v4910 = vld [vmem:[%s3 + $0x140] sm:$0xf]
  %v4911 = vld [vmem:[%s3 + $0x144] sm:$0xf]
  %v4912 = vld [vmem:[%s3 + $0x148] sm:$0xf]
  %v4913 = vld [vmem:[%s3 + $0x14c] sm:$0xf]
  %v4914 = vld [vmem:[%s3 + $0x150] sm:$0xf]
  %v4915 = vld [vmem:[%s3 + $0x154] sm:$0xf]
  %v4916 = vld [vmem:[%s3 + $0x158] sm:$0xf]
  %v4917 = vld [vmem:[%s3 + $0x15c] sm:$0xf]
  %v4918 = vld [vmem:[%s3 + $0x160] sm:$0xf]
  %v4919 = vld [vmem:[%s3 + $0x164] sm:$0xf]
  %v4920 = vpack.c.bf16 %v4855, %v4854
  %v4921 = vpack.c.bf16 %v4857, %v4856
  %v4922 = vpack.c.bf16 %v4859, %v4858
  %v4923 = vpack.c.bf16 %v4861, %v4860
  %v4924 = vpack.c.bf16 %v4863, %v4862
  %v4925 = vpack.c.bf16 %v4865, %v4864
  %v4926 = vpack.c.bf16 %v4867, %v4866
  %v4927 = vpack.c.bf16 %v4869, %v4868
  %v4928 = vpack.c.bf16 %v4871, %v4870
  %v4929 = vpack.c.bf16 %v4873, %v4872
  %v4930 = vpack.c.bf16 %v4875, %v4874
  %v4931 = vpack.c.bf16 %v4877, %v4876
  %v4932 = vpack.c.bf16 %v4879, %v4878
  %v4933 = vpack.c.bf16 %v4881, %v4880
  %v4934 = vpack.c.bf16 %v4883, %v4882
  %v4935 = vrot.slane %v4854, 7
  %v4936 = vrot.slane %v4855, 7
  %v4937 = vrot.slane %v4856, 7
  %v4938 = vrot.slane %v4857, 7
  %v4939 = vrot.slane %v4858, 7
  %v4940 = vrot.slane %v4859, 7
  %v4941 = vrot.slane %v4860, 7
  %v4942 = vrot.slane %v4861, 7
  %v4943 = vrot.slane %v4862, 7
  %v4944 = vrot.slane %v4863, 7
  %v4945 = vrot.slane %v4864, 7
  %v4946 = vrot.slane %v4865, 7
  %v4947 = vrot.slane %v4866, 7
  %v4948 = vrot.slane %v4867, 7
  %v4949 = vrot.slane %v4868, 7
  %v4950 = vrot.slane %v4869, 7
  %v4951 = vrot.slane %v4870, 7
  %v4952 = vrot.slane %v4871, 7
  %v4953 = vrot.slane %v4872, 7
  %v4954 = vrot.slane %v4873, 7
  %v4955 = vrot.slane %v4874, 7
  %v4956 = vrot.slane %v4875, 7
  %v4957 = vrot.slane %v4876, 7
  %v4958 = vrot.slane %v4877, 7
  %v4959 = vrot.slane %v4878, 7
  %v4960 = vrot.slane %v4879, 7
  %v4961 = vrot.slane %v4880, 7
  %v4962 = vrot.slane %v4881, 7
  %v4963 = vrot.slane %v4882, 7
  %v4964 = vrot.slane %v4883, 7
  %v4965 = vsel %vm1463, %v4963, %v4964
  %v4966 = vsel %vm1463, %v4962, %v4963
  %v4967 = vsel %vm1463, %v4961, %v4962
  %v4968 = vsel %vm1463, %v4960, %v4961
  %v4969 = vsel %vm1463, %v4959, %v4960
  %v4970 = vsel %vm1463, %v4958, %v4959
  %v4971 = vsel %vm1463, %v4957, %v4958
  %v4972 = vsel %vm1463, %v4956, %v4957
  %v4973 = vsel %vm1463, %v4955, %v4956
  %v4974 = vsel %vm1463, %v4954, %v4955
  %v4975 = vsel %vm1463, %v4953, %v4954
  %v4976 = vsel %vm1463, %v4952, %v4953
  %v4977 = vsel %vm1463, %v4951, %v4952
  %v4978 = vsel %vm1463, %v4950, %v4951
  %v4979 = vsel %vm1463, %v4949, %v4950
  %v4980 = vsel %vm1463, %v4948, %v4949
  %v4981 = vsel %vm1463, %v4947, %v4948
  %v4982 = vsel %vm1463, %v4946, %v4947
  %v4983 = vsel %vm1463, %v4945, %v4946
  %v4984 = vsel %vm1463, %v4944, %v4945
  %v4985 = vsel %vm1463, %v4943, %v4944
  %v4986 = vsel %vm1463, %v4942, %v4943
  %v4987 = vsel %vm1463, %v4941, %v4942
  %v4988 = vsel %vm1463, %v4940, %v4941
  %v4989 = vsel %vm1463, %v4939, %v4940
  %v4990 = vsel %vm1463, %v4938, %v4939
  %v4991 = vsel %vm1463, %v4937, %v4938
  %v4992 = vsel %vm1463, %v4936, %v4937
  %v4993 = vsel %vm1463, %v4935, %v4936
  %v4994 = vsel %vm1463, %v4964, %v4935
  %v4995 = vsel %vm1524, 0.0, %v4994
  %v4996 = vsel %vm1525, 0.0, %v4993
  %v4997 = vsel %vm1526, 0.0, %v4992
  %v4998 = vsel %vm1527, 0.0, %v4991
  %v4999 = vsel %vm1528, 0.0, %v4990
  %v5000 = vsel %vm1529, 0.0, %v4989
  %v5001 = vsel %vm1530, 0.0, %v4988
  %v5002 = vsel %vm1531, 0.0, %v4987
  %v5003 = vsel %vm1532, 0.0, %v4986
  %v5004 = vsel %vm1533, 0.0, %v4985
  %v5005 = vsel %vm1534, 0.0, %v4984
  %v5006 = vsel %vm1535, 0.0, %v4983
  %v5007 = vsel %vm1536, 0.0, %v4982
  %v5008 = vsel %vm1537, 0.0, %v4981
  %v5009 = vsel %vm1538, 0.0, %v4980
  %v5010 = vsel %vm1539, 0.0, %v4979
  %v5011 = vsel %vm1540, 0.0, %v4978
  %v5012 = vsel %vm1541, 0.0, %v4977
  %v5013 = vsel %vm1542, 0.0, %v4976
  %v5014 = vsel %vm1543, 0.0, %v4975
  %v5015 = vsel %vm1544, 0.0, %v4974
  %v5016 = vsel %vm1545, 0.0, %v4973
  %v5017 = vsel %vm1546, 0.0, %v4972
  %v5018 = vsel %vm1547, 0.0, %v4971
  %v5019 = vsel %vm1548, 0.0, %v4970
  %v5020 = vsel %vm1549, 0.0, %v4969
  %v5021 = vsel %vm1550, 0.0, %v4968
  %v5022 = vsel %vm1551, 0.0, %v4967
  %v5023 = vsel %vm1552, 0.0, %v4966
  %v5024 = vsel %vm1553, 0.0, %v4965
  %v5025 = vpack.c.bf16 %v4996, %v4995
  %v5026 = vpack.c.bf16 %v4998, %v4997
  %v5027 = vpack.c.bf16 %v5000, %v4999
  %v5028 = vpack.c.bf16 %v5002, %v5001
  %v5029 = vpack.c.bf16 %v5004, %v5003
  %v5030 = vpack.c.bf16 %v5006, %v5005
  %v5031 = vpack.c.bf16 %v5008, %v5007
  %v5032 = vpack.c.bf16 %v5010, %v5009
  %v5033 = vpack.c.bf16 %v5012, %v5011
  %v5034 = vpack.c.bf16 %v5014, %v5013
  %v5035 = vpack.c.bf16 %v5016, %v5015
  %v5036 = vpack.c.bf16 %v5018, %v5017
  %v5037 = vpack.c.bf16 %v5020, %v5019
  %v5038 = vpack.c.bf16 %v5022, %v5021
  %v5039 = vpack.c.bf16 %v5024, %v5023
  %v5052 = vunpack.c.l.b16 %v4884
  %v5053 = vunpack.c.l.b16 %v4885
  %v5054 = vunpack.c.l.b16 %v4886
  %v5055 = vunpack.c.l.b16 %v4887
  %v5056 = vunpack.c.l.b16 %v4888
  %v5057 = vunpack.c.l.b16 %v4889
  %v5058 = vunpack.c.l.b16 %v4890
  %v5059 = vunpack.c.l.b16 %v4891
  %v5060 = vunpack.c.l.b16 %v4892
  %v5061 = vunpack.c.l.b16 %v4893
  %v5062 = vunpack.c.l.b16 %v4894
  %v5063 = vunpack.c.l.b16 %v4895
  %v5064 = vpack.c.b16 %v5053, %v5052
  %v5065 = vpack.c.b16 %v5055, %v5054
  %v5066 = vpack.c.b16 %v5057, %v5056
  %v5067 = vpack.c.b16 %v5059, %v5058
  %v5068 = vpack.c.b16 %v5061, %v5060
  %v5069 = vpack.c.b16 %v5063, %v5062
  %vm5076 = vcmask 785408
  %v5078 = vsel %vm5076, %v5025, 0
  %v5081 = vsel %vm5076, %v5026, 0
  %v5084 = vsel %vm5076, %v5027, 0
  %v5087 = vsel %vm5076, %v5028, 0
  %v5090 = vsel %vm5076, %v5029, 0
  %v5093 = vsel %vm5076, %v5030, 0
  %v5096 = vsel %vm5076, %v5031, 0
  %v5099 = vsel %vm5076, %v5032, 0
  %v5102 = vsel %vm5076, %v5033, 0
  %v5105 = vsel %vm5076, %v5034, 0
  %v5108 = vsel %vm5076, %v5035, 0
  %v5111 = vsel %vm5076, %v5036, 0
  %v5114 = vsel %vm5076, %v5037, 0
  %v5117 = vsel %vm5076, %v5038, 0
  %v5120 = vsel %vm5076, %v5039, 0
  %5122 = vmatpush.bf16.msra.mxu0 0
  %5123 = vmatpush.bf16.msra.mxu0 0
  %5124 = vmatpush.bf16.msra.mxu0 %v5069
  %5125 = vmatpush.bf16.msra.mxu0 %v5068
  %5126 = vmatpush.bf16.msra.mxu0 %v5067
  %5127 = vmatpush.bf16.msra.mxu0 %v5066
  %5128 = vmatpush.bf16.msra.mxu0 %v5065
  %5129 = vmatpush.bf16.msra.mxu0 %v5064
  %5130 = vmatmul.bf16.gmra.mxu0 %v5078
  %v5131 = vpop.f32.mrf.mxu0
  %v5132 = vadd.f32 0.0, %v5131
  %v5133 = vpop.f32.mrf.mxu0
  %v5134 = vadd.f32 0.0, %v5133
  %5135 = vmatmul.bf16.gmra.mxu0 %v5081
  %v5136 = vpop.f32.mrf.mxu0
  %v5137 = vadd.f32 0.0, %v5136
  %v5138 = vpop.f32.mrf.mxu0
  %v5139 = vadd.f32 0.0, %v5138
  %5140 = vmatmul.bf16.gmra.mxu0 %v5084
  %v5141 = vpop.f32.mrf.mxu0
  %v5142 = vadd.f32 0.0, %v5141
  %v5143 = vpop.f32.mrf.mxu0
  %v5144 = vadd.f32 0.0, %v5143
  %5145 = vmatmul.bf16.gmra.mxu0 %v5087
  %v5146 = vpop.f32.mrf.mxu0
  %v5147 = vadd.f32 0.0, %v5146
  %v5148 = vpop.f32.mrf.mxu0
  %v5149 = vadd.f32 0.0, %v5148
  %5150 = vmatmul.bf16.gmra.mxu0 %v5090
  %v5151 = vpop.f32.mrf.mxu0
  %v5152 = vadd.f32 0.0, %v5151
  %v5153 = vpop.f32.mrf.mxu0
  %v5154 = vadd.f32 0.0, %v5153
  %5155 = vmatmul.bf16.gmra.mxu0 %v5093
  %v5156 = vpop.f32.mrf.mxu0
  %v5157 = vadd.f32 0.0, %v5156
  %v5158 = vpop.f32.mrf.mxu0
  %v5159 = vadd.f32 0.0, %v5158
  %5160 = vmatmul.bf16.gmra.mxu0 %v5096
  %v5161 = vpop.f32.mrf.mxu0
  %v5162 = vadd.f32 0.0, %v5161
  %v5163 = vpop.f32.mrf.mxu0
  %v5164 = vadd.f32 0.0, %v5163
  %5165 = vmatmul.bf16.gmra.mxu0 %v5099
  %v5166 = vpop.f32.mrf.mxu0
  %v5167 = vadd.f32 0.0, %v5166
  %v5168 = vpop.f32.mrf.mxu0
  %v5169 = vadd.f32 0.0, %v5168
  %5170 = vmatmul.bf16.gmra.mxu0 %v5102
  %v5171 = vpop.f32.mrf.mxu0
  %v5172 = vadd.f32 0.0, %v5171
  %v5173 = vpop.f32.mrf.mxu0
  %v5174 = vadd.f32 0.0, %v5173
  %5175 = vmatmul.bf16.gmra.mxu0 %v5105
  %v5176 = vpop.f32.mrf.mxu0
  %v5177 = vadd.f32 0.0, %v5176
  %v5178 = vpop.f32.mrf.mxu0
  %v5179 = vadd.f32 0.0, %v5178
  %5180 = vmatmul.bf16.gmra.mxu0 %v5108
  %v5181 = vpop.f32.mrf.mxu0
  %v5182 = vadd.f32 0.0, %v5181
  %v5183 = vpop.f32.mrf.mxu0
  %v5184 = vadd.f32 0.0, %v5183
  %5185 = vmatmul.bf16.gmra.mxu0 %v5111
  %v5186 = vpop.f32.mrf.mxu0
  %v5187 = vadd.f32 0.0, %v5186
  %v5188 = vpop.f32.mrf.mxu0
  %v5189 = vadd.f32 0.0, %v5188
  %5190 = vmatmul.bf16.gmra.mxu0 %v5114
  %v5191 = vpop.f32.mrf.mxu0
  %v5192 = vadd.f32 0.0, %v5191
  %v5193 = vpop.f32.mrf.mxu0
  %v5194 = vadd.f32 0.0, %v5193
  %5195 = vmatmul.bf16.gmra.mxu0 %v5117
  %v5196 = vpop.f32.mrf.mxu0
  %v5197 = vadd.f32 0.0, %v5196
  %v5198 = vpop.f32.mrf.mxu0
  %v5199 = vadd.f32 0.0, %v5198
  %5200 = vmatmul.bf16.gmra.mxu0 %v5120
  %v5201 = vpop.f32.mrf.mxu0
  %v5202 = vadd.f32 0.0, %v5201
  %v5203 = vpop.f32.mrf.mxu0
  %v5204 = vadd.f32 0.0, %v5203
  %5205 = vdwg.mxu0
  %v5218 = vunpack.c.l.b16 %v4896
  %v5219 = vunpack.c.l.b16 %v4897
  %v5220 = vunpack.c.l.b16 %v4898
  %v5221 = vunpack.c.l.b16 %v4899
  %v5222 = vunpack.c.l.b16 %v4900
  %v5223 = vunpack.c.l.b16 %v4901
  %v5224 = vunpack.c.l.b16 %v4902
  %v5225 = vunpack.c.l.b16 %v4903
  %v5226 = vunpack.c.l.b16 %v4904
  %v5227 = vunpack.c.l.b16 %v4905
  %v5228 = vunpack.c.l.b16 %v4906
  %v5229 = vunpack.c.l.b16 %v4907
  %v5230 = vpack.c.b16 %v5219, %v5218
  %v5231 = vpack.c.b16 %v5221, %v5220
  %v5232 = vpack.c.b16 %v5223, %v5222
  %v5233 = vpack.c.b16 %v5225, %v5224
  %v5234 = vpack.c.b16 %v5227, %v5226
  %v5235 = vpack.c.b16 %v5229, %v5228
  %v5243 = vsel %vm5076, %v4920, 0
  %v5246 = vsel %vm5076, %v4921, 0
  %v5249 = vsel %vm5076, %v4922, 0
  %v5252 = vsel %vm5076, %v4923, 0
  %v5255 = vsel %vm5076, %v4924, 0
  %v5258 = vsel %vm5076, %v4925, 0
  %v5261 = vsel %vm5076, %v4926, 0
  %v5264 = vsel %vm5076, %v4927, 0
  %v5267 = vsel %vm5076, %v4928, 0
  %v5270 = vsel %vm5076, %v4929, 0
  %v5273 = vsel %vm5076, %v4930, 0
  %v5276 = vsel %vm5076, %v4931, 0
  %v5279 = vsel %vm5076, %v4932, 0
  %v5282 = vsel %vm5076, %v4933, 0
  %v5285 = vsel %vm5076, %v4934, 0
  %5287 = vmatpush.bf16.msra.mxu0 0
  %5288 = vmatpush.bf16.msra.mxu0 0
  %5289 = vmatpush.bf16.msra.mxu0 %v5235
  %5290 = vmatpush.bf16.msra.mxu0 %v5234
  %5291 = vmatpush.bf16.msra.mxu0 %v5233
  %5292 = vmatpush.bf16.msra.mxu0 %v5232
  %5293 = vmatpush.bf16.msra.mxu0 %v5231
  %5294 = vmatpush.bf16.msra.mxu0 %v5230
  %5295 = vmatmul.bf16.gmra.mxu0 %v5243
  %v5296 = vpop.f32.mrf.mxu0
  %v5297 = vadd.f32 %v5132, %v5296
  %v5298 = vpop.f32.mrf.mxu0
  %v5299 = vadd.f32 %v5134, %v5298
  %5300 = vmatmul.bf16.gmra.mxu0 %v5246
  %v5301 = vpop.f32.mrf.mxu0
  %v5302 = vadd.f32 %v5137, %v5301
  %v5303 = vpop.f32.mrf.mxu0
  %v5304 = vadd.f32 %v5139, %v5303
  %5305 = vmatmul.bf16.gmra.mxu0 %v5249
  %v5306 = vpop.f32.mrf.mxu0
  %v5307 = vadd.f32 %v5142, %v5306
  %v5308 = vpop.f32.mrf.mxu0
  %v5309 = vadd.f32 %v5144, %v5308
  %5310 = vmatmul.bf16.gmra.mxu0 %v5252
  %v5311 = vpop.f32.mrf.mxu0
  %v5312 = vadd.f32 %v5147, %v5311
  %v5313 = vpop.f32.mrf.mxu0
  %v5314 = vadd.f32 %v5149, %v5313
  %5315 = vmatmul.bf16.gmra.mxu0 %v5255
  %v5316 = vpop.f32.mrf.mxu0
  %v5317 = vadd.f32 %v5152, %v5316
  %v5318 = vpop.f32.mrf.mxu0
  %v5319 = vadd.f32 %v5154, %v5318
  %5320 = vmatmul.bf16.gmra.mxu0 %v5258
  %v5321 = vpop.f32.mrf.mxu0
  %v5322 = vadd.f32 %v5157, %v5321
  %v5323 = vpop.f32.mrf.mxu0
  %v5324 = vadd.f32 %v5159, %v5323
  %5325 = vmatmul.bf16.gmra.mxu0 %v5261
  %v5326 = vpop.f32.mrf.mxu0
  %v5327 = vadd.f32 %v5162, %v5326
  %v5328 = vpop.f32.mrf.mxu0
  %v5329 = vadd.f32 %v5164, %v5328
  %5330 = vmatmul.bf16.gmra.mxu0 %v5264
  %v5331 = vpop.f32.mrf.mxu0
  %v5332 = vadd.f32 %v5167, %v5331
  %v5333 = vpop.f32.mrf.mxu0
  %v5334 = vadd.f32 %v5169, %v5333
  %5335 = vmatmul.bf16.gmra.mxu0 %v5267
  %v5336 = vpop.f32.mrf.mxu0
  %v5337 = vadd.f32 %v5172, %v5336
  %v5338 = vpop.f32.mrf.mxu0
  %v5339 = vadd.f32 %v5174, %v5338
  %5340 = vmatmul.bf16.gmra.mxu0 %v5270
  %v5341 = vpop.f32.mrf.mxu0
  %v5342 = vadd.f32 %v5177, %v5341
  %v5343 = vpop.f32.mrf.mxu0
  %v5344 = vadd.f32 %v5179, %v5343
  %5345 = vmatmul.bf16.gmra.mxu0 %v5273
  %v5346 = vpop.f32.mrf.mxu0
  %v5347 = vadd.f32 %v5182, %v5346
  %v5348 = vpop.f32.mrf.mxu0
  %v5349 = vadd.f32 %v5184, %v5348
  %5350 = vmatmul.bf16.gmra.mxu0 %v5276
  %v5351 = vpop.f32.mrf.mxu0
  %v5352 = vadd.f32 %v5187, %v5351
  %v5353 = vpop.f32.mrf.mxu0
  %v5354 = vadd.f32 %v5189, %v5353
  %5355 = vmatmul.bf16.gmra.mxu0 %v5279
  %v5356 = vpop.f32.mrf.mxu0
  %v5357 = vadd.f32 %v5192, %v5356
  %v5358 = vpop.f32.mrf.mxu0
  %v5359 = vadd.f32 %v5194, %v5358
  %5360 = vmatmul.bf16.gmra.mxu0 %v5282
  %v5361 = vpop.f32.mrf.mxu0
  %v5362 = vadd.f32 %v5197, %v5361
  %v5363 = vpop.f32.mrf.mxu0
  %v5364 = vadd.f32 %v5199, %v5363
  %5365 = vmatmul.bf16.gmra.mxu0 %v5285
  %v5366 = vpop.f32.mrf.mxu0
  %v5367 = vadd.f32 %v5202, %v5366
  %v5368 = vpop.f32.mrf.mxu0
  %v5369 = vadd.f32 %v5204, %v5368
  %5370 = vdwg.mxu0
  %v5371 = vrot.slane %v4854, 1
  %v5372 = vrot.slane %v4855, 1
  %v5373 = vrot.slane %v4856, 1
  %v5374 = vrot.slane %v4857, 1
  %v5375 = vrot.slane %v4858, 1
  %v5376 = vrot.slane %v4859, 1
  %v5377 = vrot.slane %v4860, 1
  %v5378 = vrot.slane %v4861, 1
  %v5379 = vrot.slane %v4862, 1
  %v5380 = vrot.slane %v4863, 1
  %v5381 = vrot.slane %v4864, 1
  %v5382 = vrot.slane %v4865, 1
  %v5383 = vrot.slane %v4866, 1
  %v5384 = vrot.slane %v4867, 1
  %v5385 = vrot.slane %v4868, 1
  %v5386 = vrot.slane %v4869, 1
  %v5387 = vrot.slane %v4870, 1
  %v5388 = vrot.slane %v4871, 1
  %v5389 = vrot.slane %v4872, 1
  %v5390 = vrot.slane %v4873, 1
  %v5391 = vrot.slane %v4874, 1
  %v5392 = vrot.slane %v4875, 1
  %v5393 = vrot.slane %v4876, 1
  %v5394 = vrot.slane %v4877, 1
  %v5395 = vrot.slane %v4878, 1
  %v5396 = vrot.slane %v4879, 1
  %v5397 = vrot.slane %v4880, 1
  %v5398 = vrot.slane %v4881, 1
  %v5399 = vrot.slane %v4882, 1
  %v5400 = vrot.slane %v4883, 1
  %v5401 = vsel %vm1913, %v5399, %v5400
  %v5402 = vsel %vm1913, %v5398, %v5399
  %v5403 = vsel %vm1913, %v5397, %v5398
  %v5404 = vsel %vm1913, %v5396, %v5397
  %v5405 = vsel %vm1913, %v5395, %v5396
  %v5406 = vsel %vm1913, %v5394, %v5395
  %v5407 = vsel %vm1913, %v5393, %v5394
  %v5408 = vsel %vm1913, %v5392, %v5393
  %v5409 = vsel %vm1913, %v5391, %v5392
  %v5410 = vsel %vm1913, %v5390, %v5391
  %v5411 = vsel %vm1913, %v5389, %v5390
  %v5412 = vsel %vm1913, %v5388, %v5389
  %v5413 = vsel %vm1913, %v5387, %v5388
  %v5414 = vsel %vm1913, %v5386, %v5387
  %v5415 = vsel %vm1913, %v5385, %v5386
  %v5416 = vsel %vm1913, %v5384, %v5385
  %v5417 = vsel %vm1913, %v5383, %v5384
  %v5418 = vsel %vm1913, %v5382, %v5383
  %v5419 = vsel %vm1913, %v5381, %v5382
  %v5420 = vsel %vm1913, %v5380, %v5381
  %v5421 = vsel %vm1913, %v5379, %v5380
  %v5422 = vsel %vm1913, %v5378, %v5379
  %v5423 = vsel %vm1913, %v5377, %v5378
  %v5424 = vsel %vm1913, %v5376, %v5377
  %v5425 = vsel %vm1913, %v5375, %v5376
  %v5426 = vsel %vm1913, %v5374, %v5375
  %v5427 = vsel %vm1913, %v5373, %v5374
  %v5428 = vsel %vm1913, %v5372, %v5373
  %v5429 = vsel %vm1913, %v5371, %v5372
  %v5430 = vsel %vm1913, %v5400, %v5371
  %v5431 = vsel %vm1974, 0.0, %v5429
  %v5432 = vsel %vm1975, 0.0, %v5428
  %v5433 = vsel %vm1976, 0.0, %v5427
  %v5434 = vsel %vm1977, 0.0, %v5426
  %v5435 = vsel %vm1978, 0.0, %v5425
  %v5436 = vsel %vm1979, 0.0, %v5424
  %v5437 = vsel %vm1980, 0.0, %v5423
  %v5438 = vsel %vm1981, 0.0, %v5422
  %v5439 = vsel %vm1982, 0.0, %v5421
  %v5440 = vsel %vm1983, 0.0, %v5420
  %v5441 = vsel %vm1984, 0.0, %v5419
  %v5442 = vsel %vm1985, 0.0, %v5418
  %v5443 = vsel %vm1986, 0.0, %v5417
  %v5444 = vsel %vm1987, 0.0, %v5416
  %v5445 = vsel %vm1988, 0.0, %v5415
  %v5446 = vsel %vm1989, 0.0, %v5414
  %v5447 = vsel %vm1990, 0.0, %v5413
  %v5448 = vsel %vm1991, 0.0, %v5412
  %v5449 = vsel %vm1992, 0.0, %v5411
  %v5450 = vsel %vm1993, 0.0, %v5410
  %v5451 = vsel %vm1994, 0.0, %v5409
  %v5452 = vsel %vm1995, 0.0, %v5408
  %v5453 = vsel %vm1996, 0.0, %v5407
  %v5454 = vsel %vm1997, 0.0, %v5406
  %v5455 = vsel %vm1998, 0.0, %v5405
  %v5456 = vsel %vm1999, 0.0, %v5404
  %v5457 = vsel %vm2000, 0.0, %v5403
  %v5458 = vsel %vm2001, 0.0, %v5402
  %v5459 = vsel %vm2002, 0.0, %v5401
  %v5460 = vsel %vm2003, 0.0, %v5430
  %v5461 = vpack.c.bf16 %v5432, %v5431
  %v5462 = vpack.c.bf16 %v5434, %v5433
  %v5463 = vpack.c.bf16 %v5436, %v5435
  %v5464 = vpack.c.bf16 %v5438, %v5437
  %v5465 = vpack.c.bf16 %v5440, %v5439
  %v5466 = vpack.c.bf16 %v5442, %v5441
  %v5467 = vpack.c.bf16 %v5444, %v5443
  %v5468 = vpack.c.bf16 %v5446, %v5445
  %v5469 = vpack.c.bf16 %v5448, %v5447
  %v5470 = vpack.c.bf16 %v5450, %v5449
  %v5471 = vpack.c.bf16 %v5452, %v5451
  %v5472 = vpack.c.bf16 %v5454, %v5453
  %v5473 = vpack.c.bf16 %v5456, %v5455
  %v5474 = vpack.c.bf16 %v5458, %v5457
  %v5475 = vpack.c.bf16 %v5460, %v5459
  %v5488 = vunpack.c.l.b16 %v4908
  %v5489 = vunpack.c.l.b16 %v4909
  %v5490 = vunpack.c.l.b16 %v4910
  %v5491 = vunpack.c.l.b16 %v4911
  %v5492 = vunpack.c.l.b16 %v4912
  %v5493 = vunpack.c.l.b16 %v4913
  %v5494 = vunpack.c.l.b16 %v4914
  %v5495 = vunpack.c.l.b16 %v4915
  %v5496 = vunpack.c.l.b16 %v4916
  %v5497 = vunpack.c.l.b16 %v4917
  %v5498 = vunpack.c.l.b16 %v4918
  %v5499 = vunpack.c.l.b16 %v4919
  %v5500 = vpack.c.b16 %v5489, %v5488
  %v5501 = vpack.c.b16 %v5491, %v5490
  %v5502 = vpack.c.b16 %v5493, %v5492
  %v5503 = vpack.c.b16 %v5495, %v5494
  %v5504 = vpack.c.b16 %v5497, %v5496
  %v5505 = vpack.c.b16 %v5499, %v5498
  %v5513 = vsel %vm5076, %v5461, 0
  %v5516 = vsel %vm5076, %v5462, 0
  %v5519 = vsel %vm5076, %v5463, 0
  %v5522 = vsel %vm5076, %v5464, 0
  %v5525 = vsel %vm5076, %v5465, 0
  %v5528 = vsel %vm5076, %v5466, 0
  %v5531 = vsel %vm5076, %v5467, 0
  %v5534 = vsel %vm5076, %v5468, 0
  %v5537 = vsel %vm5076, %v5469, 0
  %v5540 = vsel %vm5076, %v5470, 0
  %v5543 = vsel %vm5076, %v5471, 0
  %v5546 = vsel %vm5076, %v5472, 0
  %v5549 = vsel %vm5076, %v5473, 0
  %v5552 = vsel %vm5076, %v5474, 0
  %v5555 = vsel %vm5076, %v5475, 0
  %5557 = vmatpush.bf16.msra.mxu0 0
  %5558 = vmatpush.bf16.msra.mxu0 0
  %5559 = vmatpush.bf16.msra.mxu0 %v5505
  %5560 = vmatpush.bf16.msra.mxu0 %v5504
  %5561 = vmatpush.bf16.msra.mxu0 %v5503
  %5562 = vmatpush.bf16.msra.mxu0 %v5502
  %5563 = vmatpush.bf16.msra.mxu0 %v5501
  %5564 = vmatpush.bf16.msra.mxu0 %v5500
  %5565 = vmatmul.bf16.gmra.mxu0 %v5513
  %v5566 = vpop.f32.mrf.mxu0
  %v5567 = vadd.f32 0.0, %v5566
  %v5568 = vpop.f32.mrf.mxu0
  %v5569 = vadd.f32 0.0, %v5568
  %5570 = vmatmul.bf16.gmra.mxu0 %v5516
  %v5571 = vpop.f32.mrf.mxu0
  %v5572 = vadd.f32 0.0, %v5571
  %v5573 = vpop.f32.mrf.mxu0
  %v5574 = vadd.f32 0.0, %v5573
  %5575 = vmatmul.bf16.gmra.mxu0 %v5519
  %v5576 = vpop.f32.mrf.mxu0
  %v5577 = vadd.f32 0.0, %v5576
  %v5578 = vpop.f32.mrf.mxu0
  %v5579 = vadd.f32 0.0, %v5578
  %5580 = vmatmul.bf16.gmra.mxu0 %v5522
  %v5581 = vpop.f32.mrf.mxu0
  %v5582 = vadd.f32 0.0, %v5581
  %v5583 = vpop.f32.mrf.mxu0
  %v5584 = vadd.f32 0.0, %v5583
  %5585 = vmatmul.bf16.gmra.mxu0 %v5525
  %v5586 = vpop.f32.mrf.mxu0
  %v5587 = vadd.f32 0.0, %v5586
  %v5588 = vpop.f32.mrf.mxu0
  %v5589 = vadd.f32 0.0, %v5588
  %5590 = vmatmul.bf16.gmra.mxu0 %v5528
  %v5591 = vpop.f32.mrf.mxu0
  %v5592 = vadd.f32 0.0, %v5591
  %v5593 = vpop.f32.mrf.mxu0
  %v5594 = vadd.f32 0.0, %v5593
  %5595 = vmatmul.bf16.gmra.mxu0 %v5531
  %v5596 = vpop.f32.mrf.mxu0
  %v5597 = vadd.f32 0.0, %v5596
  %v5598 = vpop.f32.mrf.mxu0
  %v5599 = vadd.f32 0.0, %v5598
  %5600 = vmatmul.bf16.gmra.mxu0 %v5534
  %v5601 = vpop.f32.mrf.mxu0
  %v5602 = vadd.f32 0.0, %v5601
  %v5603 = vpop.f32.mrf.mxu0
  %v5604 = vadd.f32 0.0, %v5603
  %5605 = vmatmul.bf16.gmra.mxu0 %v5537
  %v5606 = vpop.f32.mrf.mxu0
  %v5607 = vadd.f32 0.0, %v5606
  %v5608 = vpop.f32.mrf.mxu0
  %v5609 = vadd.f32 0.0, %v5608
  %5610 = vmatmul.bf16.gmra.mxu0 %v5540
  %v5611 = vpop.f32.mrf.mxu0
  %v5612 = vadd.f32 0.0, %v5611
  %v5613 = vpop.f32.mrf.mxu0
  %v5614 = vadd.f32 0.0, %v5613
  %5615 = vmatmul.bf16.gmra.mxu0 %v5543
  %v5616 = vpop.f32.mrf.mxu0
  %v5617 = vadd.f32 0.0, %v5616
  %v5618 = vpop.f32.mrf.mxu0
  %v5619 = vadd.f32 0.0, %v5618
  %5620 = vmatmul.bf16.gmra.mxu0 %v5546
  %v5621 = vpop.f32.mrf.mxu0
  %v5622 = vadd.f32 0.0, %v5621
  %v5623 = vpop.f32.mrf.mxu0
  %v5624 = vadd.f32 0.0, %v5623
  %5625 = vmatmul.bf16.gmra.mxu0 %v5549
  %v5626 = vpop.f32.mrf.mxu0
  %v5627 = vadd.f32 0.0, %v5626
  %v5628 = vpop.f32.mrf.mxu0
  %v5629 = vadd.f32 0.0, %v5628
  %5630 = vmatmul.bf16.gmra.mxu0 %v5552
  %v5631 = vpop.f32.mrf.mxu0
  %v5632 = vadd.f32 0.0, %v5631
  %v5633 = vpop.f32.mrf.mxu0
  %v5634 = vadd.f32 0.0, %v5633
  %5635 = vmatmul.bf16.gmra.mxu0 %v5555
  %v5636 = vpop.f32.mrf.mxu0
  %v5637 = vadd.f32 0.0, %v5636
  %v5638 = vpop.f32.mrf.mxu0
  %v5639 = vadd.f32 0.0, %v5638
  %5640 = vdwg.mxu0
  %v5641 = vadd.f32 %v5297, %v5567
  %v5642 = vadd.f32 %v5299, %v5569
  %v5643 = vadd.f32 %v5302, %v5572
  %v5644 = vadd.f32 %v5304, %v5574
  %v5645 = vadd.f32 %v5307, %v5577
  %v5646 = vadd.f32 %v5309, %v5579
  %v5647 = vadd.f32 %v5312, %v5582
  %v5648 = vadd.f32 %v5314, %v5584
  %v5649 = vadd.f32 %v5317, %v5587
  %v5650 = vadd.f32 %v5319, %v5589
  %v5651 = vadd.f32 %v5322, %v5592
  %v5652 = vadd.f32 %v5324, %v5594
  %v5653 = vadd.f32 %v5327, %v5597
  %v5654 = vadd.f32 %v5329, %v5599
  %v5655 = vadd.f32 %v5332, %v5602
  %v5656 = vadd.f32 %v5334, %v5604
  %v5657 = vadd.f32 %v5337, %v5607
  %v5658 = vadd.f32 %v5339, %v5609
  %v5659 = vadd.f32 %v5342, %v5612
  %v5660 = vadd.f32 %v5344, %v5614
  %v5661 = vadd.f32 %v5347, %v5617
  %v5662 = vadd.f32 %v5349, %v5619
  %v5663 = vadd.f32 %v5352, %v5622
  %v5664 = vadd.f32 %v5354, %v5624
  %v5665 = vadd.f32 %v5357, %v5627
  %v5666 = vadd.f32 %v5359, %v5629
  %v5667 = vadd.f32 %v5362, %v5632
  %v5668 = vadd.f32 %v5364, %v5634
  %v5669 = vadd.f32 %v5367, %v5637
  %v5670 = vadd.f32 %v5369, %v5639
  %v5671 = vld [vmem:[%s6 + $0x7] ss:$0 sm:$0xff]
  %v5672 = vadd.f32 %v5641, %v5671
  %v5673 = vadd.f32 %v5642, %v5671
  %v5674 = vadd.f32 %v5643, %v5671
  %v5675 = vadd.f32 %v5644, %v5671
  %v5676 = vadd.f32 %v5645, %v5671
  %v5677 = vadd.f32 %v5646, %v5671
  %v5678 = vadd.f32 %v5647, %v5671
  %v5679 = vadd.f32 %v5648, %v5671
  %v5680 = vadd.f32 %v5649, %v5671
  %v5681 = vadd.f32 %v5650, %v5671
  %v5682 = vadd.f32 %v5651, %v5671
  %v5683 = vadd.f32 %v5652, %v5671
  %v5684 = vadd.f32 %v5653, %v5671
  %v5685 = vadd.f32 %v5654, %v5671
  %v5686 = vadd.f32 %v5655, %v5671
  %v5687 = vadd.f32 %v5656, %v5671
  %v5688 = vadd.f32 %v5657, %v5671
  %v5689 = vadd.f32 %v5658, %v5671
  %v5690 = vadd.f32 %v5659, %v5671
  %v5691 = vadd.f32 %v5660, %v5671
  %v5692 = vadd.f32 %v5661, %v5671
  %v5693 = vadd.f32 %v5662, %v5671
  %v5694 = vadd.f32 %v5663, %v5671
  %v5695 = vadd.f32 %v5664, %v5671
  %v5696 = vadd.f32 %v5665, %v5671
  %v5697 = vadd.f32 %v5666, %v5671
  %v5698 = vadd.f32 %v5667, %v5671
  %v5699 = vadd.f32 %v5668, %v5671
  %v5700 = vadd.f32 %v5669, %v5671
  %v5701 = vadd.f32 %v5670, %v5671
  %v5702 = vmax.f32 %v5672, 0.0
  %v5703 = vmax.f32 %v5673, 0.0
  %v5704 = vmax.f32 %v5674, 0.0
  %v5705 = vmax.f32 %v5675, 0.0
  %v5706 = vmax.f32 %v5676, 0.0
  %v5707 = vmax.f32 %v5677, 0.0
  %v5708 = vmax.f32 %v5678, 0.0
  %v5709 = vmax.f32 %v5679, 0.0
  %v5710 = vmax.f32 %v5680, 0.0
  %v5711 = vmax.f32 %v5681, 0.0
  %v5712 = vmax.f32 %v5682, 0.0
  %v5713 = vmax.f32 %v5683, 0.0
  %v5714 = vmax.f32 %v5684, 0.0
  %v5715 = vmax.f32 %v5685, 0.0
  %v5716 = vmax.f32 %v5686, 0.0
  %v5717 = vmax.f32 %v5687, 0.0
  %v5718 = vmax.f32 %v5688, 0.0
  %v5719 = vmax.f32 %v5689, 0.0
  %v5720 = vmax.f32 %v5690, 0.0
  %v5721 = vmax.f32 %v5691, 0.0
  %v5722 = vmax.f32 %v5692, 0.0
  %v5723 = vmax.f32 %v5693, 0.0
  %v5724 = vmax.f32 %v5694, 0.0
  %v5725 = vmax.f32 %v5695, 0.0
  %v5726 = vmax.f32 %v5696, 0.0
  %v5727 = vmax.f32 %v5697, 0.0
  %v5728 = vmax.f32 %v5698, 0.0
  %v5729 = vmax.f32 %v5699, 0.0
  %v5730 = vmax.f32 %v5700, 0.0
  %v5731 = vmax.f32 %v5701, 0.0
  %v5732 = vld [vmem:[%s4] sm:$0xff]
  %v5733 = vld [vmem:[%s4 + $0x8] sm:$0xff]
  %v5734 = vld [vmem:[%s4 + $0x10] sm:$0xff]
  %v5735 = vld [vmem:[%s4 + $0x18] sm:$0xff]
  %v5736 = vld [vmem:[%s4 + $0x20] sm:$0xff]
  %v5737 = vld [vmem:[%s4 + $0x28] sm:$0xff]
  %v5738 = vld [vmem:[%s4 + $0x30] sm:$0xff]
  %v5739 = vld [vmem:[%s4 + $0x38] sm:$0xff]
  %v5740 = vld [vmem:[%s4 + $0x40] sm:$0xff]
  %v5741 = vld [vmem:[%s4 + $0x48] sm:$0xff]
  %v5742 = vld [vmem:[%s4 + $0x50] sm:$0xff]
  %v5743 = vld [vmem:[%s4 + $0x58] sm:$0xff]
  %v5744 = vld [vmem:[%s4 + $0x60] sm:$0xff]
  %v5745 = vld [vmem:[%s4 + $0x68] sm:$0xff]
  %v5746 = vld [vmem:[%s4 + $0x70] sm:$0xff]
  %v5747 = vld [vmem:[%s4 + $0x78] sm:$0xff]
  %v5748 = vld [vmem:[%s4 + $0x80] sm:$0xff]
  %v5749 = vld [vmem:[%s4 + $0x88] sm:$0xff]
  %v5750 = vld [vmem:[%s4 + $0x90] sm:$0xff]
  %v5751 = vld [vmem:[%s4 + $0x98] sm:$0xff]
  %v5752 = vld [vmem:[%s4 + $0xa0] sm:$0xff]
  %v5753 = vld [vmem:[%s4 + $0xa8] sm:$0xff]
  %v5754 = vld [vmem:[%s4 + $0xb0] sm:$0xff]
  %v5755 = vld [vmem:[%s4 + $0xb8] sm:$0xff]
  %v5756 = vld [vmem:[%s4 + $0xc0] sm:$0xff]
  %v5757 = vld [vmem:[%s4 + $0xc8] sm:$0xff]
  %v5758 = vld [vmem:[%s4 + $0xd0] sm:$0xff]
  %v5759 = vld [vmem:[%s4 + $0xd8] sm:$0xff]
  %v5760 = vld [vmem:[%s4 + $0xe0] sm:$0xff]
  %v5761 = vld [vmem:[%s4 + $0xe8] sm:$0xff]
  %v5762 = vld [vmem:[%s4 + $0xf0] sm:$0xff]
  %v5763 = vld [vmem:[%s4 + $0xf8] sm:$0xff]
  %v5764 = vld [vmem:[%s4 + $0x100] sm:$0xff]
  %v5765 = vld [vmem:[%s4 + $0x108] sm:$0xff]
  %v5766 = vld [vmem:[%s4 + $0x110] sm:$0xff]
  %v5767 = vld [vmem:[%s4 + $0x118] sm:$0xff]
  %v5768 = vpack.c.bf16 %v5703, %v5702
  %v5769 = vpack.c.bf16 %v5705, %v5704
  %v5770 = vpack.c.bf16 %v5707, %v5706
  %v5771 = vpack.c.bf16 %v5709, %v5708
  %v5772 = vpack.c.bf16 %v5711, %v5710
  %v5773 = vpack.c.bf16 %v5713, %v5712
  %v5774 = vpack.c.bf16 %v5715, %v5714
  %v5775 = vpack.c.bf16 %v5717, %v5716
  %v5776 = vpack.c.bf16 %v5719, %v5718
  %v5777 = vpack.c.bf16 %v5721, %v5720
  %v5778 = vpack.c.bf16 %v5723, %v5722
  %v5779 = vpack.c.bf16 %v5725, %v5724
  %v5780 = vpack.c.bf16 %v5727, %v5726
  %v5781 = vpack.c.bf16 %v5729, %v5728
  %v5782 = vpack.c.bf16 %v5731, %v5730
  %v5783 = vrot.slane %v5702, 7
  %v5784 = vrot.slane %v5703, 7
  %v5785 = vrot.slane %v5704, 7
  %v5786 = vrot.slane %v5705, 7
  %v5787 = vrot.slane %v5706, 7
  %v5788 = vrot.slane %v5707, 7
  %v5789 = vrot.slane %v5708, 7
  %v5790 = vrot.slane %v5709, 7
  %v5791 = vrot.slane %v5710, 7
  %v5792 = vrot.slane %v5711, 7
  %v5793 = vrot.slane %v5712, 7
  %v5794 = vrot.slane %v5713, 7
  %v5795 = vrot.slane %v5714, 7
  %v5796 = vrot.slane %v5715, 7
  %v5797 = vrot.slane %v5716, 7
  %v5798 = vrot.slane %v5717, 7
  %v5799 = vrot.slane %v5718, 7
  %v5800 = vrot.slane %v5719, 7
  %v5801 = vrot.slane %v5720, 7
  %v5802 = vrot.slane %v5721, 7
  %v5803 = vrot.slane %v5722, 7
  %v5804 = vrot.slane %v5723, 7
  %v5805 = vrot.slane %v5724, 7
  %v5806 = vrot.slane %v5725, 7
  %v5807 = vrot.slane %v5726, 7
  %v5808 = vrot.slane %v5727, 7
  %v5809 = vrot.slane %v5728, 7
  %v5810 = vrot.slane %v5729, 7
  %v5811 = vrot.slane %v5730, 7
  %v5812 = vrot.slane %v5731, 7
  %v5813 = vsel %vm1463, %v5811, %v5812
  %v5814 = vsel %vm1463, %v5810, %v5811
  %v5815 = vsel %vm1463, %v5809, %v5810
  %v5816 = vsel %vm1463, %v5808, %v5809
  %v5817 = vsel %vm1463, %v5807, %v5808
  %v5818 = vsel %vm1463, %v5806, %v5807
  %v5819 = vsel %vm1463, %v5805, %v5806
  %v5820 = vsel %vm1463, %v5804, %v5805
  %v5821 = vsel %vm1463, %v5803, %v5804
  %v5822 = vsel %vm1463, %v5802, %v5803
  %v5823 = vsel %vm1463, %v5801, %v5802
  %v5824 = vsel %vm1463, %v5800, %v5801
  %v5825 = vsel %vm1463, %v5799, %v5800
  %v5826 = vsel %vm1463, %v5798, %v5799
  %v5827 = vsel %vm1463, %v5797, %v5798
  %v5828 = vsel %vm1463, %v5796, %v5797
  %v5829 = vsel %vm1463, %v5795, %v5796
  %v5830 = vsel %vm1463, %v5794, %v5795
  %v5831 = vsel %vm1463, %v5793, %v5794
  %v5832 = vsel %vm1463, %v5792, %v5793
  %v5833 = vsel %vm1463, %v5791, %v5792
  %v5834 = vsel %vm1463, %v5790, %v5791
  %v5835 = vsel %vm1463, %v5789, %v5790
  %v5836 = vsel %vm1463, %v5788, %v5789
  %v5837 = vsel %vm1463, %v5787, %v5788
  %v5838 = vsel %vm1463, %v5786, %v5787
  %v5839 = vsel %vm1463, %v5785, %v5786
  %v5840 = vsel %vm1463, %v5784, %v5785
  %v5841 = vsel %vm1463, %v5783, %v5784
  %v5842 = vsel %vm1463, %v5812, %v5783
  %v5843 = vsel %vm1524, 0.0, %v5842
  %v5844 = vsel %vm1525, 0.0, %v5841
  %v5845 = vsel %vm1526, 0.0, %v5840
  %v5846 = vsel %vm1527, 0.0, %v5839
  %v5847 = vsel %vm1528, 0.0, %v5838
  %v5848 = vsel %vm1529, 0.0, %v5837
  %v5849 = vsel %vm1530, 0.0, %v5836
  %v5850 = vsel %vm1531, 0.0, %v5835
  %v5851 = vsel %vm1532, 0.0, %v5834
  %v5852 = vsel %vm1533, 0.0, %v5833
  %v5853 = vsel %vm1534, 0.0, %v5832
  %v5854 = vsel %vm1535, 0.0, %v5831
  %v5855 = vsel %vm1536, 0.0, %v5830
  %v5856 = vsel %vm1537, 0.0, %v5829
  %v5857 = vsel %vm1538, 0.0, %v5828
  %v5858 = vsel %vm1539, 0.0, %v5827
  %v5859 = vsel %vm1540, 0.0, %v5826
  %v5860 = vsel %vm1541, 0.0, %v5825
  %v5861 = vsel %vm1542, 0.0, %v5824
  %v5862 = vsel %vm1543, 0.0, %v5823
  %v5863 = vsel %vm1544, 0.0, %v5822
  %v5864 = vsel %vm1545, 0.0, %v5821
  %v5865 = vsel %vm1546, 0.0, %v5820
  %v5866 = vsel %vm1547, 0.0, %v5819
  %v5867 = vsel %vm1548, 0.0, %v5818
  %v5868 = vsel %vm1549, 0.0, %v5817
  %v5869 = vsel %vm1550, 0.0, %v5816
  %v5870 = vsel %vm1551, 0.0, %v5815
  %v5871 = vsel %vm1552, 0.0, %v5814
  %v5872 = vsel %vm1553, 0.0, %v5813
  %v5873 = vpack.c.bf16 %v5844, %v5843
  %v5874 = vpack.c.bf16 %v5846, %v5845
  %v5875 = vpack.c.bf16 %v5848, %v5847
  %v5876 = vpack.c.bf16 %v5850, %v5849
  %v5877 = vpack.c.bf16 %v5852, %v5851
  %v5878 = vpack.c.bf16 %v5854, %v5853
  %v5879 = vpack.c.bf16 %v5856, %v5855
  %v5880 = vpack.c.bf16 %v5858, %v5857
  %v5881 = vpack.c.bf16 %v5860, %v5859
  %v5882 = vpack.c.bf16 %v5862, %v5861
  %v5883 = vpack.c.bf16 %v5864, %v5863
  %v5884 = vpack.c.bf16 %v5866, %v5865
  %v5885 = vpack.c.bf16 %v5868, %v5867
  %v5886 = vpack.c.bf16 %v5870, %v5869
  %v5887 = vpack.c.bf16 %v5872, %v5871
  %v5900 = vunpack.c.l.b16 %v5732
  %v5901 = vunpack.c.h.b16 %v5732
  %v5902 = vunpack.c.l.b16 %v5733
  %v5903 = vunpack.c.h.b16 %v5733
  %v5904 = vunpack.c.l.b16 %v5734
  %v5905 = vunpack.c.h.b16 %v5734
  %v5906 = vunpack.c.l.b16 %v5735
  %v5907 = vunpack.c.h.b16 %v5735
  %v5908 = vunpack.c.l.b16 %v5736
  %v5909 = vunpack.c.h.b16 %v5736
  %v5910 = vunpack.c.l.b16 %v5737
  %v5911 = vunpack.c.h.b16 %v5737
  %v5912 = vunpack.c.l.b16 %v5738
  %v5913 = vunpack.c.h.b16 %v5738
  %v5914 = vunpack.c.l.b16 %v5739
  %v5915 = vunpack.c.h.b16 %v5739
  %v5916 = vunpack.c.l.b16 %v5740
  %v5917 = vunpack.c.h.b16 %v5740
  %v5918 = vunpack.c.l.b16 %v5741
  %v5919 = vunpack.c.h.b16 %v5741
  %v5920 = vunpack.c.l.b16 %v5742
  %v5921 = vunpack.c.h.b16 %v5742
  %v5922 = vunpack.c.l.b16 %v5743
  %v5923 = vunpack.c.h.b16 %v5743
  %v5924 = vpack.c.b16 %v5902, %v5900
  %v5925 = vpack.c.b16 %v5903, %v5901
  %v5926 = vpack.c.b16 %v5906, %v5904
  %v5927 = vpack.c.b16 %v5907, %v5905
  %v5928 = vpack.c.b16 %v5910, %v5908
  %v5929 = vpack.c.b16 %v5911, %v5909
  %v5930 = vpack.c.b16 %v5914, %v5912
  %v5931 = vpack.c.b16 %v5915, %v5913
  %v5932 = vpack.c.b16 %v5918, %v5916
  %v5933 = vpack.c.b16 %v5919, %v5917
  %v5934 = vpack.c.b16 %v5922, %v5920
  %v5935 = vpack.c.b16 %v5923, %v5921
  %v5949 = vsel %vm5076, %v5873, 0
  %v5952 = vsel %vm5076, %v5874, 0
  %v5955 = vsel %vm5076, %v5875, 0
  %v5958 = vsel %vm5076, %v5876, 0
  %v5961 = vsel %vm5076, %v5877, 0
  %v5964 = vsel %vm5076, %v5878, 0
  %v5967 = vsel %vm5076, %v5879, 0
  %v5970 = vsel %vm5076, %v5880, 0
  %v5973 = vsel %vm5076, %v5881, 0
  %v5976 = vsel %vm5076, %v5882, 0
  %v5979 = vsel %vm5076, %v5883, 0
  %v5982 = vsel %vm5076, %v5884, 0
  %v5985 = vsel %vm5076, %v5885, 0
  %v5988 = vsel %vm5076, %v5886, 0
  %v5991 = vsel %vm5076, %v5887, 0
  %5993 = vmatpush.bf16.msra.mxu0 0
  %5994 = vmatpush.bf16.msra.mxu0 0
  %5995 = vmatpush.bf16.msra.mxu0 %v5934
  %5996 = vmatpush.bf16.msra.mxu0 %v5932
  %5997 = vmatpush.bf16.msra.mxu0 %v5930
  %5998 = vmatpush.bf16.msra.mxu0 %v5928
  %5999 = vmatpush.bf16.msra.mxu0 %v5926
  %6000 = vmatpush.bf16.msra.mxu0 %v5924
  %6001 = vmatmul.bf16.gmra.mxu0 %v5949
  %v6002 = vpop.f32.mrf.mxu0
  %v6003 = vadd.f32 0.0, %v6002
  %v6004 = vpop.f32.mrf.mxu0
  %v6005 = vadd.f32 0.0, %v6004
  %6006 = vmatmul.bf16.gmra.mxu0 %v5952
  %v6007 = vpop.f32.mrf.mxu0
  %v6008 = vadd.f32 0.0, %v6007
  %v6009 = vpop.f32.mrf.mxu0
  %v6010 = vadd.f32 0.0, %v6009
  %6011 = vmatmul.bf16.gmra.mxu0 %v5955
  %v6012 = vpop.f32.mrf.mxu0
  %v6013 = vadd.f32 0.0, %v6012
  %v6014 = vpop.f32.mrf.mxu0
  %v6015 = vadd.f32 0.0, %v6014
  %6016 = vmatmul.bf16.gmra.mxu0 %v5958
  %v6017 = vpop.f32.mrf.mxu0
  %v6018 = vadd.f32 0.0, %v6017
  %v6019 = vpop.f32.mrf.mxu0
  %v6020 = vadd.f32 0.0, %v6019
  %6021 = vmatmul.bf16.gmra.mxu0 %v5961
  %v6022 = vpop.f32.mrf.mxu0
  %v6023 = vadd.f32 0.0, %v6022
  %v6024 = vpop.f32.mrf.mxu0
  %v6025 = vadd.f32 0.0, %v6024
  %6026 = vmatmul.bf16.gmra.mxu0 %v5964
  %v6027 = vpop.f32.mrf.mxu0
  %v6028 = vadd.f32 0.0, %v6027
  %v6029 = vpop.f32.mrf.mxu0
  %v6030 = vadd.f32 0.0, %v6029
  %6031 = vmatmul.bf16.gmra.mxu0 %v5967
  %v6032 = vpop.f32.mrf.mxu0
  %v6033 = vadd.f32 0.0, %v6032
  %v6034 = vpop.f32.mrf.mxu0
  %v6035 = vadd.f32 0.0, %v6034
  %6036 = vmatmul.bf16.gmra.mxu0 %v5970
  %v6037 = vpop.f32.mrf.mxu0
  %v6038 = vadd.f32 0.0, %v6037
  %v6039 = vpop.f32.mrf.mxu0
  %v6040 = vadd.f32 0.0, %v6039
  %6041 = vmatmul.bf16.gmra.mxu0 %v5973
  %v6042 = vpop.f32.mrf.mxu0
  %v6043 = vadd.f32 0.0, %v6042
  %v6044 = vpop.f32.mrf.mxu0
  %v6045 = vadd.f32 0.0, %v6044
  %6046 = vmatmul.bf16.gmra.mxu0 %v5976
  %v6047 = vpop.f32.mrf.mxu0
  %v6048 = vadd.f32 0.0, %v6047
  %v6049 = vpop.f32.mrf.mxu0
  %v6050 = vadd.f32 0.0, %v6049
  %6051 = vmatmul.bf16.gmra.mxu0 %v5979
  %v6052 = vpop.f32.mrf.mxu0
  %v6053 = vadd.f32 0.0, %v6052
  %v6054 = vpop.f32.mrf.mxu0
  %v6055 = vadd.f32 0.0, %v6054
  %6056 = vmatmul.bf16.gmra.mxu0 %v5982
  %v6057 = vpop.f32.mrf.mxu0
  %v6058 = vadd.f32 0.0, %v6057
  %v6059 = vpop.f32.mrf.mxu0
  %v6060 = vadd.f32 0.0, %v6059
  %6061 = vmatmul.bf16.gmra.mxu0 %v5985
  %v6062 = vpop.f32.mrf.mxu0
  %v6063 = vadd.f32 0.0, %v6062
  %v6064 = vpop.f32.mrf.mxu0
  %v6065 = vadd.f32 0.0, %v6064
  %6066 = vmatmul.bf16.gmra.mxu0 %v5988
  %v6067 = vpop.f32.mrf.mxu0
  %v6068 = vadd.f32 0.0, %v6067
  %v6069 = vpop.f32.mrf.mxu0
  %v6070 = vadd.f32 0.0, %v6069
  %6071 = vmatmul.bf16.gmra.mxu0 %v5991
  %v6072 = vpop.f32.mrf.mxu0
  %v6073 = vadd.f32 0.0, %v6072
  %v6074 = vpop.f32.mrf.mxu0
  %v6075 = vadd.f32 0.0, %v6074
  %6076 = vdwg.mxu0
  %6077 = vmatpush.bf16.msra.mxu0 0
  %6078 = vmatpush.bf16.msra.mxu0 0
  %6079 = vmatpush.bf16.msra.mxu0 %v5935
  %6080 = vmatpush.bf16.msra.mxu0 %v5933
  %6081 = vmatpush.bf16.msra.mxu0 %v5931
  %6082 = vmatpush.bf16.msra.mxu0 %v5929
  %6083 = vmatpush.bf16.msra.mxu0 %v5927
  %6084 = vmatpush.bf16.msra.mxu0 %v5925
  %6085 = vmatmul.bf16.gmra.mxu0 %v5949
  %v6086 = vpop.f32.mrf.mxu0
  %v6087 = vadd.f32 0.0, %v6086
  %v6088 = vpop.f32.mrf.mxu0
  %v6089 = vadd.f32 0.0, %v6088
  %6090 = vmatmul.bf16.gmra.mxu0 %v5952
  %v6091 = vpop.f32.mrf.mxu0
  %v6092 = vadd.f32 0.0, %v6091
  %v6093 = vpop.f32.mrf.mxu0
  %v6094 = vadd.f32 0.0, %v6093
  %6095 = vmatmul.bf16.gmra.mxu0 %v5955
  %v6096 = vpop.f32.mrf.mxu0
  %v6097 = vadd.f32 0.0, %v6096
  %v6098 = vpop.f32.mrf.mxu0
  %v6099 = vadd.f32 0.0, %v6098
  %6100 = vmatmul.bf16.gmra.mxu0 %v5958
  %v6101 = vpop.f32.mrf.mxu0
  %v6102 = vadd.f32 0.0, %v6101
  %v6103 = vpop.f32.mrf.mxu0
  %v6104 = vadd.f32 0.0, %v6103
  %6105 = vmatmul.bf16.gmra.mxu0 %v5961
  %v6106 = vpop.f32.mrf.mxu0
  %v6107 = vadd.f32 0.0, %v6106
  %v6108 = vpop.f32.mrf.mxu0
  %v6109 = vadd.f32 0.0, %v6108
  %6110 = vmatmul.bf16.gmra.mxu0 %v5964
  %v6111 = vpop.f32.mrf.mxu0
  %v6112 = vadd.f32 0.0, %v6111
  %v6113 = vpop.f32.mrf.mxu0
  %v6114 = vadd.f32 0.0, %v6113
  %6115 = vmatmul.bf16.gmra.mxu0 %v5967
  %v6116 = vpop.f32.mrf.mxu0
  %v6117 = vadd.f32 0.0, %v6116
  %v6118 = vpop.f32.mrf.mxu0
  %v6119 = vadd.f32 0.0, %v6118
  %6120 = vmatmul.bf16.gmra.mxu0 %v5970
  %v6121 = vpop.f32.mrf.mxu0
  %v6122 = vadd.f32 0.0, %v6121
  %v6123 = vpop.f32.mrf.mxu0
  %v6124 = vadd.f32 0.0, %v6123
  %6125 = vmatmul.bf16.gmra.mxu0 %v5973
  %v6126 = vpop.f32.mrf.mxu0
  %v6127 = vadd.f32 0.0, %v6126
  %v6128 = vpop.f32.mrf.mxu0
  %v6129 = vadd.f32 0.0, %v6128
  %6130 = vmatmul.bf16.gmra.mxu0 %v5976
  %v6131 = vpop.f32.mrf.mxu0
  %v6132 = vadd.f32 0.0, %v6131
  %v6133 = vpop.f32.mrf.mxu0
  %v6134 = vadd.f32 0.0, %v6133
  %6135 = vmatmul.bf16.gmra.mxu0 %v5979
  %v6136 = vpop.f32.mrf.mxu0
  %v6137 = vadd.f32 0.0, %v6136
  %v6138 = vpop.f32.mrf.mxu0
  %v6139 = vadd.f32 0.0, %v6138
  %6140 = vmatmul.bf16.gmra.mxu0 %v5982
  %v6141 = vpop.f32.mrf.mxu0
  %v6142 = vadd.f32 0.0, %v6141
  %v6143 = vpop.f32.mrf.mxu0
  %v6144 = vadd.f32 0.0, %v6143
  %6145 = vmatmul.bf16.gmra.mxu0 %v5985
  %v6146 = vpop.f32.mrf.mxu0
  %v6147 = vadd.f32 0.0, %v6146
  %v6148 = vpop.f32.mrf.mxu0
  %v6149 = vadd.f32 0.0, %v6148
  %6150 = vmatmul.bf16.gmra.mxu0 %v5988
  %v6151 = vpop.f32.mrf.mxu0
  %v6152 = vadd.f32 0.0, %v6151
  %v6153 = vpop.f32.mrf.mxu0
  %v6154 = vadd.f32 0.0, %v6153
  %6155 = vmatmul.bf16.gmra.mxu0 %v5991
  %v6156 = vpop.f32.mrf.mxu0
  %v6157 = vadd.f32 0.0, %v6156
  %v6158 = vpop.f32.mrf.mxu0
  %v6159 = vadd.f32 0.0, %v6158
  %6160 = vdwg.mxu0
  %v6173 = vunpack.c.l.b16 %v5744
  %v6174 = vunpack.c.h.b16 %v5744
  %v6175 = vunpack.c.l.b16 %v5745
  %v6176 = vunpack.c.h.b16 %v5745
  %v6177 = vunpack.c.l.b16 %v5746
  %v6178 = vunpack.c.h.b16 %v5746
  %v6179 = vunpack.c.l.b16 %v5747
  %v6180 = vunpack.c.h.b16 %v5747
  %v6181 = vunpack.c.l.b16 %v5748
  %v6182 = vunpack.c.h.b16 %v5748
  %v6183 = vunpack.c.l.b16 %v5749
  %v6184 = vunpack.c.h.b16 %v5749
  %v6185 = vunpack.c.l.b16 %v5750
  %v6186 = vunpack.c.h.b16 %v5750
  %v6187 = vunpack.c.l.b16 %v5751
  %v6188 = vunpack.c.h.b16 %v5751
  %v6189 = vunpack.c.l.b16 %v5752
  %v6190 = vunpack.c.h.b16 %v5752
  %v6191 = vunpack.c.l.b16 %v5753
  %v6192 = vunpack.c.h.b16 %v5753
  %v6193 = vunpack.c.l.b16 %v5754
  %v6194 = vunpack.c.h.b16 %v5754
  %v6195 = vunpack.c.l.b16 %v5755
  %v6196 = vunpack.c.h.b16 %v5755
  %v6197 = vpack.c.b16 %v6175, %v6173
  %v6198 = vpack.c.b16 %v6176, %v6174
  %v6199 = vpack.c.b16 %v6179, %v6177
  %v6200 = vpack.c.b16 %v6180, %v6178
  %v6201 = vpack.c.b16 %v6183, %v6181
  %v6202 = vpack.c.b16 %v6184, %v6182
  %v6203 = vpack.c.b16 %v6187, %v6185
  %v6204 = vpack.c.b16 %v6188, %v6186
  %v6205 = vpack.c.b16 %v6191, %v6189
  %v6206 = vpack.c.b16 %v6192, %v6190
  %v6207 = vpack.c.b16 %v6195, %v6193
  %v6208 = vpack.c.b16 %v6196, %v6194
  %v6222 = vsel %vm5076, %v5768, 0
  %v6225 = vsel %vm5076, %v5769, 0
  %v6228 = vsel %vm5076, %v5770, 0
  %v6231 = vsel %vm5076, %v5771, 0
  %v6234 = vsel %vm5076, %v5772, 0
  %v6237 = vsel %vm5076, %v5773, 0
  %v6240 = vsel %vm5076, %v5774, 0
  %v6243 = vsel %vm5076, %v5775, 0
  %v6246 = vsel %vm5076, %v5776, 0
  %v6249 = vsel %vm5076, %v5777, 0
  %v6252 = vsel %vm5076, %v5778, 0
  %v6255 = vsel %vm5076, %v5779, 0
  %v6258 = vsel %vm5076, %v5780, 0
  %v6261 = vsel %vm5076, %v5781, 0
  %v6264 = vsel %vm5076, %v5782, 0
  %6266 = vmatpush.bf16.msra.mxu0 0
  %6267 = vmatpush.bf16.msra.mxu0 0
  %6268 = vmatpush.bf16.msra.mxu0 %v6207
  %6269 = vmatpush.bf16.msra.mxu0 %v6205
  %6270 = vmatpush.bf16.msra.mxu0 %v6203
  %6271 = vmatpush.bf16.msra.mxu0 %v6201
  %6272 = vmatpush.bf16.msra.mxu0 %v6199
  %6273 = vmatpush.bf16.msra.mxu0 %v6197
  %6274 = vmatmul.bf16.gmra.mxu0 %v6222
  %v6275 = vpop.f32.mrf.mxu0
  %v6276 = vadd.f32 %v6003, %v6275
  %v6277 = vpop.f32.mrf.mxu0
  %v6278 = vadd.f32 %v6005, %v6277
  %6279 = vmatmul.bf16.gmra.mxu0 %v6225
  %v6280 = vpop.f32.mrf.mxu0
  %v6281 = vadd.f32 %v6008, %v6280
  %v6282 = vpop.f32.mrf.mxu0
  %v6283 = vadd.f32 %v6010, %v6282
  %6284 = vmatmul.bf16.gmra.mxu0 %v6228
  %v6285 = vpop.f32.mrf.mxu0
  %v6286 = vadd.f32 %v6013, %v6285
  %v6287 = vpop.f32.mrf.mxu0
  %v6288 = vadd.f32 %v6015, %v6287
  %6289 = vmatmul.bf16.gmra.mxu0 %v6231
  %v6290 = vpop.f32.mrf.mxu0
  %v6291 = vadd.f32 %v6018, %v6290
  %v6292 = vpop.f32.mrf.mxu0
  %v6293 = vadd.f32 %v6020, %v6292
  %6294 = vmatmul.bf16.gmra.mxu0 %v6234
  %v6295 = vpop.f32.mrf.mxu0
  %v6296 = vadd.f32 %v6023, %v6295
  %v6297 = vpop.f32.mrf.mxu0
  %v6298 = vadd.f32 %v6025, %v6297
  %6299 = vmatmul.bf16.gmra.mxu0 %v6237
  %v6300 = vpop.f32.mrf.mxu0
  %v6301 = vadd.f32 %v6028, %v6300
  %v6302 = vpop.f32.mrf.mxu0
  %v6303 = vadd.f32 %v6030, %v6302
  %6304 = vmatmul.bf16.gmra.mxu0 %v6240
  %v6305 = vpop.f32.mrf.mxu0
  %v6306 = vadd.f32 %v6033, %v6305
  %v6307 = vpop.f32.mrf.mxu0
  %v6308 = vadd.f32 %v6035, %v6307
  %6309 = vmatmul.bf16.gmra.mxu0 %v6243
  %v6310 = vpop.f32.mrf.mxu0
  %v6311 = vadd.f32 %v6038, %v6310
  %v6312 = vpop.f32.mrf.mxu0
  %v6313 = vadd.f32 %v6040, %v6312
  %6314 = vmatmul.bf16.gmra.mxu0 %v6246
  %v6315 = vpop.f32.mrf.mxu0
  %v6316 = vadd.f32 %v6043, %v6315
  %v6317 = vpop.f32.mrf.mxu0
  %v6318 = vadd.f32 %v6045, %v6317
  %6319 = vmatmul.bf16.gmra.mxu0 %v6249
  %v6320 = vpop.f32.mrf.mxu0
  %v6321 = vadd.f32 %v6048, %v6320
  %v6322 = vpop.f32.mrf.mxu0
  %v6323 = vadd.f32 %v6050, %v6322
  %6324 = vmatmul.bf16.gmra.mxu0 %v6252
  %v6325 = vpop.f32.mrf.mxu0
  %v6326 = vadd.f32 %v6053, %v6325
  %v6327 = vpop.f32.mrf.mxu0
  %v6328 = vadd.f32 %v6055, %v6327
  %6329 = vmatmul.bf16.gmra.mxu0 %v6255
  %v6330 = vpop.f32.mrf.mxu0
  %v6331 = vadd.f32 %v6058, %v6330
  %v6332 = vpop.f32.mrf.mxu0
  %v6333 = vadd.f32 %v6060, %v6332
  %6334 = vmatmul.bf16.gmra.mxu0 %v6258
  %v6335 = vpop.f32.mrf.mxu0
  %v6336 = vadd.f32 %v6063, %v6335
  %v6337 = vpop.f32.mrf.mxu0
  %v6338 = vadd.f32 %v6065, %v6337
  %6339 = vmatmul.bf16.gmra.mxu0 %v6261
  %v6340 = vpop.f32.mrf.mxu0
  %v6341 = vadd.f32 %v6068, %v6340
  %v6342 = vpop.f32.mrf.mxu0
  %v6343 = vadd.f32 %v6070, %v6342
  %6344 = vmatmul.bf16.gmra.mxu0 %v6264
  %v6345 = vpop.f32.mrf.mxu0
  %v6346 = vadd.f32 %v6073, %v6345
  %v6347 = vpop.f32.mrf.mxu0
  %v6348 = vadd.f32 %v6075, %v6347
  %6349 = vdwg.mxu0
  %6350 = vmatpush.bf16.msra.mxu0 0
  %6351 = vmatpush.bf16.msra.mxu0 0
  %6352 = vmatpush.bf16.msra.mxu0 %v6208
  %6353 = vmatpush.bf16.msra.mxu0 %v6206
  %6354 = vmatpush.bf16.msra.mxu0 %v6204
  %6355 = vmatpush.bf16.msra.mxu0 %v6202
  %6356 = vmatpush.bf16.msra.mxu0 %v6200
  %6357 = vmatpush.bf16.msra.mxu0 %v6198
  %6358 = vmatmul.bf16.gmra.mxu0 %v6222
  %v6359 = vpop.f32.mrf.mxu0
  %v6360 = vadd.f32 %v6087, %v6359
  %v6361 = vpop.f32.mrf.mxu0
  %v6362 = vadd.f32 %v6089, %v6361
  %6363 = vmatmul.bf16.gmra.mxu0 %v6225
  %v6364 = vpop.f32.mrf.mxu0
  %v6365 = vadd.f32 %v6092, %v6364
  %v6366 = vpop.f32.mrf.mxu0
  %v6367 = vadd.f32 %v6094, %v6366
  %6368 = vmatmul.bf16.gmra.mxu0 %v6228
  %v6369 = vpop.f32.mrf.mxu0
  %v6370 = vadd.f32 %v6097, %v6369
  %v6371 = vpop.f32.mrf.mxu0
  %v6372 = vadd.f32 %v6099, %v6371
  %6373 = vmatmul.bf16.gmra.mxu0 %v6231
  %v6374 = vpop.f32.mrf.mxu0
  %v6375 = vadd.f32 %v6102, %v6374
  %v6376 = vpop.f32.mrf.mxu0
  %v6377 = vadd.f32 %v6104, %v6376
  %6378 = vmatmul.bf16.gmra.mxu0 %v6234
  %v6379 = vpop.f32.mrf.mxu0
  %v6380 = vadd.f32 %v6107, %v6379
  %v6381 = vpop.f32.mrf.mxu0
  %v6382 = vadd.f32 %v6109, %v6381
  %6383 = vmatmul.bf16.gmra.mxu0 %v6237
  %v6384 = vpop.f32.mrf.mxu0
  %v6385 = vadd.f32 %v6112, %v6384
  %v6386 = vpop.f32.mrf.mxu0
  %v6387 = vadd.f32 %v6114, %v6386
  %6388 = vmatmul.bf16.gmra.mxu0 %v6240
  %v6389 = vpop.f32.mrf.mxu0
  %v6390 = vadd.f32 %v6117, %v6389
  %v6391 = vpop.f32.mrf.mxu0
  %v6392 = vadd.f32 %v6119, %v6391
  %6393 = vmatmul.bf16.gmra.mxu0 %v6243
  %v6394 = vpop.f32.mrf.mxu0
  %v6395 = vadd.f32 %v6122, %v6394
  %v6396 = vpop.f32.mrf.mxu0
  %v6397 = vadd.f32 %v6124, %v6396
  %6398 = vmatmul.bf16.gmra.mxu0 %v6246
  %v6399 = vpop.f32.mrf.mxu0
  %v6400 = vadd.f32 %v6127, %v6399
  %v6401 = vpop.f32.mrf.mxu0
  %v6402 = vadd.f32 %v6129, %v6401
  %6403 = vmatmul.bf16.gmra.mxu0 %v6249
  %v6404 = vpop.f32.mrf.mxu0
  %v6405 = vadd.f32 %v6132, %v6404
  %v6406 = vpop.f32.mrf.mxu0
  %v6407 = vadd.f32 %v6134, %v6406
  %6408 = vmatmul.bf16.gmra.mxu0 %v6252
  %v6409 = vpop.f32.mrf.mxu0
  %v6410 = vadd.f32 %v6137, %v6409
  %v6411 = vpop.f32.mrf.mxu0
  %v6412 = vadd.f32 %v6139, %v6411
  %6413 = vmatmul.bf16.gmra.mxu0 %v6255
  %v6414 = vpop.f32.mrf.mxu0
  %v6415 = vadd.f32 %v6142, %v6414
  %v6416 = vpop.f32.mrf.mxu0
  %v6417 = vadd.f32 %v6144, %v6416
  %6418 = vmatmul.bf16.gmra.mxu0 %v6258
  %v6419 = vpop.f32.mrf.mxu0
  %v6420 = vadd.f32 %v6147, %v6419
  %v6421 = vpop.f32.mrf.mxu0
  %v6422 = vadd.f32 %v6149, %v6421
  %6423 = vmatmul.bf16.gmra.mxu0 %v6261
  %v6424 = vpop.f32.mrf.mxu0
  %v6425 = vadd.f32 %v6152, %v6424
  %v6426 = vpop.f32.mrf.mxu0
  %v6427 = vadd.f32 %v6154, %v6426
  %6428 = vmatmul.bf16.gmra.mxu0 %v6264
  %v6429 = vpop.f32.mrf.mxu0
  %v6430 = vadd.f32 %v6157, %v6429
  %v6431 = vpop.f32.mrf.mxu0
  %v6432 = vadd.f32 %v6159, %v6431
  %6433 = vdwg.mxu0
  %v6434 = vrot.slane %v5702, 1
  %v6435 = vrot.slane %v5703, 1
  %v6436 = vrot.slane %v5704, 1
  %v6437 = vrot.slane %v5705, 1
  %v6438 = vrot.slane %v5706, 1
  %v6439 = vrot.slane %v5707, 1
  %v6440 = vrot.slane %v5708, 1
  %v6441 = vrot.slane %v5709, 1
  %v6442 = vrot.slane %v5710, 1
  %v6443 = vrot.slane %v5711, 1
  %v6444 = vrot.slane %v5712, 1
  %v6445 = vrot.slane %v5713, 1
  %v6446 = vrot.slane %v5714, 1
  %v6447 = vrot.slane %v5715, 1
  %v6448 = vrot.slane %v5716, 1
  %v6449 = vrot.slane %v5717, 1
  %v6450 = vrot.slane %v5718, 1
  %v6451 = vrot.slane %v5719, 1
  %v6452 = vrot.slane %v5720, 1
  %v6453 = vrot.slane %v5721, 1
  %v6454 = vrot.slane %v5722, 1
  %v6455 = vrot.slane %v5723, 1
  %v6456 = vrot.slane %v5724, 1
  %v6457 = vrot.slane %v5725, 1
  %v6458 = vrot.slane %v5726, 1
  %v6459 = vrot.slane %v5727, 1
  %v6460 = vrot.slane %v5728, 1
  %v6461 = vrot.slane %v5729, 1
  %v6462 = vrot.slane %v5730, 1
  %v6463 = vrot.slane %v5731, 1
  %v6464 = vsel %vm1913, %v6462, %v6463
  %v6465 = vsel %vm1913, %v6461, %v6462
  %v6466 = vsel %vm1913, %v6460, %v6461
  %v6467 = vsel %vm1913, %v6459, %v6460
  %v6468 = vsel %vm1913, %v6458, %v6459
  %v6469 = vsel %vm1913, %v6457, %v6458
  %v6470 = vsel %vm1913, %v6456, %v6457
  %v6471 = vsel %vm1913, %v6455, %v6456
  %v6472 = vsel %vm1913, %v6454, %v6455
  %v6473 = vsel %vm1913, %v6453, %v6454
  %v6474 = vsel %vm1913, %v6452, %v6453
  %v6475 = vsel %vm1913, %v6451, %v6452
  %v6476 = vsel %vm1913, %v6450, %v6451
  %v6477 = vsel %vm1913, %v6449, %v6450
  %v6478 = vsel %vm1913, %v6448, %v6449
  %v6479 = vsel %vm1913, %v6447, %v6448
  %v6480 = vsel %vm1913, %v6446, %v6447
  %v6481 = vsel %vm1913, %v6445, %v6446
  %v6482 = vsel %vm1913, %v6444, %v6445
  %v6483 = vsel %vm1913, %v6443, %v6444
  %v6484 = vsel %vm1913, %v6442, %v6443
  %v6485 = vsel %vm1913, %v6441, %v6442
  %v6486 = vsel %vm1913, %v6440, %v6441
  %v6487 = vsel %vm1913, %v6439, %v6440
  %v6488 = vsel %vm1913, %v6438, %v6439
  %v6489 = vsel %vm1913, %v6437, %v6438
  %v6490 = vsel %vm1913, %v6436, %v6437
  %v6491 = vsel %vm1913, %v6435, %v6436
  %v6492 = vsel %vm1913, %v6434, %v6435
  %v6493 = vsel %vm1913, %v6463, %v6434
  %v6494 = vsel %vm1974, 0.0, %v6492
  %v6495 = vsel %vm1975, 0.0, %v6491
  %v6496 = vsel %vm1976, 0.0, %v6490
  %v6497 = vsel %vm1977, 0.0, %v6489
  %v6498 = vsel %vm1978, 0.0, %v6488
  %v6499 = vsel %vm1979, 0.0, %v6487
  %v6500 = vsel %vm1980, 0.0, %v6486
  %v6501 = vsel %vm1981, 0.0, %v6485
  %v6502 = vsel %vm1982, 0.0, %v6484
  %v6503 = vsel %vm1983, 0.0, %v6483
  %v6504 = vsel %vm1984, 0.0, %v6482
  %v6505 = vsel %vm1985, 0.0, %v6481
  %v6506 = vsel %vm1986, 0.0, %v6480
  %v6507 = vsel %vm1987, 0.0, %v6479
  %v6508 = vsel %vm1988, 0.0, %v6478
  %v6509 = vsel %vm1989, 0.0, %v6477
  %v6510 = vsel %vm1990, 0.0, %v6476
  %v6511 = vsel %vm1991, 0.0, %v6475
  %v6512 = vsel %vm1992, 0.0, %v6474
  %v6513 = vsel %vm1993, 0.0, %v6473
  %v6514 = vsel %vm1994, 0.0, %v6472
  %v6515 = vsel %vm1995, 0.0, %v6471
  %v6516 = vsel %vm1996, 0.0, %v6470
  %v6517 = vsel %vm1997, 0.0, %v6469
  %v6518 = vsel %vm1998, 0.0, %v6468
  %v6519 = vsel %vm1999, 0.0, %v6467
  %v6520 = vsel %vm2000, 0.0, %v6466
  %v6521 = vsel %vm2001, 0.0, %v6465
  %v6522 = vsel %vm2002, 0.0, %v6464
  %v6523 = vsel %vm2003, 0.0, %v6493
  %v6524 = vpack.c.bf16 %v6495, %v6494
  %v6525 = vpack.c.bf16 %v6497, %v6496
  %v6526 = vpack.c.bf16 %v6499, %v6498
  %v6527 = vpack.c.bf16 %v6501, %v6500
  %v6528 = vpack.c.bf16 %v6503, %v6502
  %v6529 = vpack.c.bf16 %v6505, %v6504
  %v6530 = vpack.c.bf16 %v6507, %v6506
  %v6531 = vpack.c.bf16 %v6509, %v6508
  %v6532 = vpack.c.bf16 %v6511, %v6510
  %v6533 = vpack.c.bf16 %v6513, %v6512
  %v6534 = vpack.c.bf16 %v6515, %v6514
  %v6535 = vpack.c.bf16 %v6517, %v6516
  %v6536 = vpack.c.bf16 %v6519, %v6518
  %v6537 = vpack.c.bf16 %v6521, %v6520
  %v6538 = vpack.c.bf16 %v6523, %v6522
  %v6551 = vunpack.c.l.b16 %v5756
  %v6552 = vunpack.c.h.b16 %v5756
  %v6553 = vunpack.c.l.b16 %v5757
  %v6554 = vunpack.c.h.b16 %v5757
  %v6555 = vunpack.c.l.b16 %v5758
  %v6556 = vunpack.c.h.b16 %v5758
  %v6557 = vunpack.c.l.b16 %v5759
  %v6558 = vunpack.c.h.b16 %v5759
  %v6559 = vunpack.c.l.b16 %v5760
  %v6560 = vunpack.c.h.b16 %v5760
  %v6561 = vunpack.c.l.b16 %v5761
  %v6562 = vunpack.c.h.b16 %v5761
  %v6563 = vunpack.c.l.b16 %v5762
  %v6564 = vunpack.c.h.b16 %v5762
  %v6565 = vunpack.c.l.b16 %v5763
  %v6566 = vunpack.c.h.b16 %v5763
  %v6567 = vunpack.c.l.b16 %v5764
  %v6568 = vunpack.c.h.b16 %v5764
  %v6569 = vunpack.c.l.b16 %v5765
  %v6570 = vunpack.c.h.b16 %v5765
  %v6571 = vunpack.c.l.b16 %v5766
  %v6572 = vunpack.c.h.b16 %v5766
  %v6573 = vunpack.c.l.b16 %v5767
  %v6574 = vunpack.c.h.b16 %v5767
  %v6575 = vpack.c.b16 %v6553, %v6551
  %v6576 = vpack.c.b16 %v6554, %v6552
  %v6577 = vpack.c.b16 %v6557, %v6555
  %v6578 = vpack.c.b16 %v6558, %v6556
  %v6579 = vpack.c.b16 %v6561, %v6559
  %v6580 = vpack.c.b16 %v6562, %v6560
  %v6581 = vpack.c.b16 %v6565, %v6563
  %v6582 = vpack.c.b16 %v6566, %v6564
  %v6583 = vpack.c.b16 %v6569, %v6567
  %v6584 = vpack.c.b16 %v6570, %v6568
  %v6585 = vpack.c.b16 %v6573, %v6571
  %v6586 = vpack.c.b16 %v6574, %v6572
  %v6600 = vsel %vm5076, %v6524, 0
  %v6603 = vsel %vm5076, %v6525, 0
  %v6606 = vsel %vm5076, %v6526, 0
  %v6609 = vsel %vm5076, %v6527, 0
  %v6612 = vsel %vm5076, %v6528, 0
  %v6615 = vsel %vm5076, %v6529, 0
  %v6618 = vsel %vm5076, %v6530, 0
  %v6621 = vsel %vm5076, %v6531, 0
  %v6624 = vsel %vm5076, %v6532, 0
  %v6627 = vsel %vm5076, %v6533, 0
  %v6630 = vsel %vm5076, %v6534, 0
  %v6633 = vsel %vm5076, %v6535, 0
  %v6636 = vsel %vm5076, %v6536, 0
  %v6639 = vsel %vm5076, %v6537, 0
  %v6642 = vsel %vm5076, %v6538, 0
  %6644 = vmatpush.bf16.msra.mxu0 0
  %6645 = vmatpush.bf16.msra.mxu0 0
  %6646 = vmatpush.bf16.msra.mxu0 %v6585
  %6647 = vmatpush.bf16.msra.mxu0 %v6583
  %6648 = vmatpush.bf16.msra.mxu0 %v6581
  %6649 = vmatpush.bf16.msra.mxu0 %v6579
  %6650 = vmatpush.bf16.msra.mxu0 %v6577
  %6651 = vmatpush.bf16.msra.mxu0 %v6575
  %6652 = vmatmul.bf16.gmra.mxu0 %v6600
  %v6653 = vpop.f32.mrf.mxu0
  %v6654 = vadd.f32 0.0, %v6653
  %v6655 = vpop.f32.mrf.mxu0
  %v6656 = vadd.f32 0.0, %v6655
  %6657 = vmatmul.bf16.gmra.mxu0 %v6603
  %v6658 = vpop.f32.mrf.mxu0
  %v6659 = vadd.f32 0.0, %v6658
  %v6660 = vpop.f32.mrf.mxu0
  %v6661 = vadd.f32 0.0, %v6660
  %6662 = vmatmul.bf16.gmra.mxu0 %v6606
  %v6663 = vpop.f32.mrf.mxu0
  %v6664 = vadd.f32 0.0, %v6663
  %v6665 = vpop.f32.mrf.mxu0
  %v6666 = vadd.f32 0.0, %v6665
  %6667 = vmatmul.bf16.gmra.mxu0 %v6609
  %v6668 = vpop.f32.mrf.mxu0
  %v6669 = vadd.f32 0.0, %v6668
  %v6670 = vpop.f32.mrf.mxu0
  %v6671 = vadd.f32 0.0, %v6670
  %6672 = vmatmul.bf16.gmra.mxu0 %v6612
  %v6673 = vpop.f32.mrf.mxu0
  %v6674 = vadd.f32 0.0, %v6673
  %v6675 = vpop.f32.mrf.mxu0
  %v6676 = vadd.f32 0.0, %v6675
  %6677 = vmatmul.bf16.gmra.mxu0 %v6615
  %v6678 = vpop.f32.mrf.mxu0
  %v6679 = vadd.f32 0.0, %v6678
  %v6680 = vpop.f32.mrf.mxu0
  %v6681 = vadd.f32 0.0, %v6680
  %6682 = vmatmul.bf16.gmra.mxu0 %v6618
  %v6683 = vpop.f32.mrf.mxu0
  %v6684 = vadd.f32 0.0, %v6683
  %v6685 = vpop.f32.mrf.mxu0
  %v6686 = vadd.f32 0.0, %v6685
  %6687 = vmatmul.bf16.gmra.mxu0 %v6621
  %v6688 = vpop.f32.mrf.mxu0
  %v6689 = vadd.f32 0.0, %v6688
  %v6690 = vpop.f32.mrf.mxu0
  %v6691 = vadd.f32 0.0, %v6690
  %6692 = vmatmul.bf16.gmra.mxu0 %v6624
  %v6693 = vpop.f32.mrf.mxu0
  %v6694 = vadd.f32 0.0, %v6693
  %v6695 = vpop.f32.mrf.mxu0
  %v6696 = vadd.f32 0.0, %v6695
  %6697 = vmatmul.bf16.gmra.mxu0 %v6627
  %v6698 = vpop.f32.mrf.mxu0
  %v6699 = vadd.f32 0.0, %v6698
  %v6700 = vpop.f32.mrf.mxu0
  %v6701 = vadd.f32 0.0, %v6700
  %6702 = vmatmul.bf16.gmra.mxu0 %v6630
  %v6703 = vpop.f32.mrf.mxu0
  %v6704 = vadd.f32 0.0, %v6703
  %v6705 = vpop.f32.mrf.mxu0
  %v6706 = vadd.f32 0.0, %v6705
  %6707 = vmatmul.bf16.gmra.mxu0 %v6633
  %v6708 = vpop.f32.mrf.mxu0
  %v6709 = vadd.f32 0.0, %v6708
  %v6710 = vpop.f32.mrf.mxu0
  %v6711 = vadd.f32 0.0, %v6710
  %6712 = vmatmul.bf16.gmra.mxu0 %v6636
  %v6713 = vpop.f32.mrf.mxu0
  %v6714 = vadd.f32 0.0, %v6713
  %v6715 = vpop.f32.mrf.mxu0
  %v6716 = vadd.f32 0.0, %v6715
  %6717 = vmatmul.bf16.gmra.mxu0 %v6639
  %v6718 = vpop.f32.mrf.mxu0
  %v6719 = vadd.f32 0.0, %v6718
  %v6720 = vpop.f32.mrf.mxu0
  %v6721 = vadd.f32 0.0, %v6720
  %6722 = vmatmul.bf16.gmra.mxu0 %v6642
  %v6723 = vpop.f32.mrf.mxu0
  %v6724 = vadd.f32 0.0, %v6723
  %v6725 = vpop.f32.mrf.mxu0
  %v6726 = vadd.f32 0.0, %v6725
  %6727 = vdwg.mxu0
  %6728 = vmatpush.bf16.msra.mxu0 0
  %6729 = vmatpush.bf16.msra.mxu0 0
  %6730 = vmatpush.bf16.msra.mxu0 %v6586
  %6731 = vmatpush.bf16.msra.mxu0 %v6584
  %6732 = vmatpush.bf16.msra.mxu0 %v6582
  %6733 = vmatpush.bf16.msra.mxu0 %v6580
  %6734 = vmatpush.bf16.msra.mxu0 %v6578
  %6735 = vmatpush.bf16.msra.mxu0 %v6576
  %6736 = vmatmul.bf16.gmra.mxu0 %v6600
  %v6737 = vpop.f32.mrf.mxu0
  %v6738 = vadd.f32 0.0, %v6737
  %v6739 = vpop.f32.mrf.mxu0
  %v6740 = vadd.f32 0.0, %v6739
  %6741 = vmatmul.bf16.gmra.mxu0 %v6603
  %v6742 = vpop.f32.mrf.mxu0
  %v6743 = vadd.f32 0.0, %v6742
  %v6744 = vpop.f32.mrf.mxu0
  %v6745 = vadd.f32 0.0, %v6744
  %6746 = vmatmul.bf16.gmra.mxu0 %v6606
  %v6747 = vpop.f32.mrf.mxu0
  %v6748 = vadd.f32 0.0, %v6747
  %v6749 = vpop.f32.mrf.mxu0
  %v6750 = vadd.f32 0.0, %v6749
  %6751 = vmatmul.bf16.gmra.mxu0 %v6609
  %v6752 = vpop.f32.mrf.mxu0
  %v6753 = vadd.f32 0.0, %v6752
  %v6754 = vpop.f32.mrf.mxu0
  %v6755 = vadd.f32 0.0, %v6754
  %6756 = vmatmul.bf16.gmra.mxu0 %v6612
  %v6757 = vpop.f32.mrf.mxu0
  %v6758 = vadd.f32 0.0, %v6757
  %v6759 = vpop.f32.mrf.mxu0
  %v6760 = vadd.f32 0.0, %v6759
  %6761 = vmatmul.bf16.gmra.mxu0 %v6615
  %v6762 = vpop.f32.mrf.mxu0
  %v6763 = vadd.f32 0.0, %v6762
  %v6764 = vpop.f32.mrf.mxu0
  %v6765 = vadd.f32 0.0, %v6764
  %6766 = vmatmul.bf16.gmra.mxu0 %v6618
  %v6767 = vpop.f32.mrf.mxu0
  %v6768 = vadd.f32 0.0, %v6767
  %v6769 = vpop.f32.mrf.mxu0
  %v6770 = vadd.f32 0.0, %v6769
  %6771 = vmatmul.bf16.gmra.mxu0 %v6621
  %v6772 = vpop.f32.mrf.mxu0
  %v6773 = vadd.f32 0.0, %v6772
  %v6774 = vpop.f32.mrf.mxu0
  %v6775 = vadd.f32 0.0, %v6774
  %6776 = vmatmul.bf16.gmra.mxu0 %v6624
  %v6777 = vpop.f32.mrf.mxu0
  %v6778 = vadd.f32 0.0, %v6777
  %v6779 = vpop.f32.mrf.mxu0
  %v6780 = vadd.f32 0.0, %v6779
  %6781 = vmatmul.bf16.gmra.mxu0 %v6627
  %v6782 = vpop.f32.mrf.mxu0
  %v6783 = vadd.f32 0.0, %v6782
  %v6784 = vpop.f32.mrf.mxu0
  %v6785 = vadd.f32 0.0, %v6784
  %6786 = vmatmul.bf16.gmra.mxu0 %v6630
  %v6787 = vpop.f32.mrf.mxu0
  %v6788 = vadd.f32 0.0, %v6787
  %v6789 = vpop.f32.mrf.mxu0
  %v6790 = vadd.f32 0.0, %v6789
  %6791 = vmatmul.bf16.gmra.mxu0 %v6633
  %v6792 = vpop.f32.mrf.mxu0
  %v6793 = vadd.f32 0.0, %v6792
  %v6794 = vpop.f32.mrf.mxu0
  %v6795 = vadd.f32 0.0, %v6794
  %6796 = vmatmul.bf16.gmra.mxu0 %v6636
  %v6797 = vpop.f32.mrf.mxu0
  %v6798 = vadd.f32 0.0, %v6797
  %v6799 = vpop.f32.mrf.mxu0
  %v6800 = vadd.f32 0.0, %v6799
  %6801 = vmatmul.bf16.gmra.mxu0 %v6639
  %v6802 = vpop.f32.mrf.mxu0
  %v6803 = vadd.f32 0.0, %v6802
  %v6804 = vpop.f32.mrf.mxu0
  %v6805 = vadd.f32 0.0, %v6804
  %6806 = vmatmul.bf16.gmra.mxu0 %v6642
  %v6807 = vpop.f32.mrf.mxu0
  %v6808 = vadd.f32 0.0, %v6807
  %v6809 = vpop.f32.mrf.mxu0
  %v6810 = vadd.f32 0.0, %v6809
  %6811 = vdwg.mxu0
  %v6812 = vadd.f32 %v6276, %v6654
  %v6813 = vadd.f32 %v6360, %v6738
  %v6814 = vadd.f32 %v6278, %v6656
  %v6815 = vadd.f32 %v6362, %v6740
  %v6816 = vadd.f32 %v6281, %v6659
  %v6817 = vadd.f32 %v6365, %v6743
  %v6818 = vadd.f32 %v6283, %v6661
  %v6819 = vadd.f32 %v6367, %v6745
  %v6820 = vadd.f32 %v6286, %v6664
  %v6821 = vadd.f32 %v6370, %v6748
  %v6822 = vadd.f32 %v6288, %v6666
  %v6823 = vadd.f32 %v6372, %v6750
  %v6824 = vadd.f32 %v6291, %v6669
  %v6825 = vadd.f32 %v6375, %v6753
  %v6826 = vadd.f32 %v6293, %v6671
  %v6827 = vadd.f32 %v6377, %v6755
  %v6828 = vadd.f32 %v6296, %v6674
  %v6829 = vadd.f32 %v6380, %v6758
  %v6830 = vadd.f32 %v6298, %v6676
  %v6831 = vadd.f32 %v6382, %v6760
  %v6832 = vadd.f32 %v6301, %v6679
  %v6833 = vadd.f32 %v6385, %v6763
  %v6834 = vadd.f32 %v6303, %v6681
  %v6835 = vadd.f32 %v6387, %v6765
  %v6836 = vadd.f32 %v6306, %v6684
  %v6837 = vadd.f32 %v6390, %v6768
  %v6838 = vadd.f32 %v6308, %v6686
  %v6839 = vadd.f32 %v6392, %v6770
  %v6840 = vadd.f32 %v6311, %v6689
  %v6841 = vadd.f32 %v6395, %v6773
  %v6842 = vadd.f32 %v6313, %v6691
  %v6843 = vadd.f32 %v6397, %v6775
  %v6844 = vadd.f32 %v6316, %v6694
  %v6845 = vadd.f32 %v6400, %v6778
  %v6846 = vadd.f32 %v6318, %v6696
  %v6847 = vadd.f32 %v6402, %v6780
  %v6848 = vadd.f32 %v6321, %v6699
  %v6849 = vadd.f32 %v6405, %v6783
  %v6850 = vadd.f32 %v6323, %v6701
  %v6851 = vadd.f32 %v6407, %v6785
  %v6852 = vadd.f32 %v6326, %v6704
  %v6853 = vadd.f32 %v6410, %v6788
  %v6854 = vadd.f32 %v6328, %v6706
  %v6855 = vadd.f32 %v6412, %v6790
  %v6856 = vadd.f32 %v6331, %v6709
  %v6857 = vadd.f32 %v6415, %v6793
  %v6858 = vadd.f32 %v6333, %v6711
  %v6859 = vadd.f32 %v6417, %v6795
  %v6860 = vadd.f32 %v6336, %v6714
  %v6861 = vadd.f32 %v6420, %v6798
  %v6862 = vadd.f32 %v6338, %v6716
  %v6863 = vadd.f32 %v6422, %v6800
  %v6864 = vadd.f32 %v6341, %v6719
  %v6865 = vadd.f32 %v6425, %v6803
  %v6866 = vadd.f32 %v6343, %v6721
  %v6867 = vadd.f32 %v6427, %v6805
  %v6868 = vadd.f32 %v6346, %v6724
  %v6869 = vadd.f32 %v6430, %v6808
  %v6870 = vadd.f32 %v6348, %v6726
  %v6871 = vadd.f32 %v6432, %v6810
  %s6872 = scalar_lea.vmem %s6, 16
  %v6873 = vld [vmem:[%s6872] ss:$8 sm:$0x3]
  %v6875 = vperm.slane %v6873, 0
  %v6876 = vperm.slane %v6873, 1
  %v6879 = vadd.f32 %v6812, %v6875
  %v6880 = vadd.f32 %v6813, %v6876
  %v6881 = vadd.f32 %v6814, %v6875
  %v6882 = vadd.f32 %v6815, %v6876
  %v6883 = vadd.f32 %v6816, %v6875
  %v6884 = vadd.f32 %v6817, %v6876
  %v6885 = vadd.f32 %v6818, %v6875
  %v6886 = vadd.f32 %v6819, %v6876
  %v6887 = vadd.f32 %v6820, %v6875
  %v6888 = vadd.f32 %v6821, %v6876
  %v6889 = vadd.f32 %v6822, %v6875
  %v6890 = vadd.f32 %v6823, %v6876
  %v6891 = vadd.f32 %v6824, %v6875
  %v6892 = vadd.f32 %v6825, %v6876
  %v6893 = vadd.f32 %v6826, %v6875
  %v6894 = vadd.f32 %v6827, %v6876
  %v6895 = vadd.f32 %v6828, %v6875
  %v6896 = vadd.f32 %v6829, %v6876
  %v6897 = vadd.f32 %v6830, %v6875
  %v6898 = vadd.f32 %v6831, %v6876
  %v6899 = vadd.f32 %v6832, %v6875
  %v6900 = vadd.f32 %v6833, %v6876
  %v6901 = vadd.f32 %v6834, %v6875
  %v6902 = vadd.f32 %v6835, %v6876
  %v6903 = vadd.f32 %v6836, %v6875
  %v6904 = vadd.f32 %v6837, %v6876
  %v6905 = vadd.f32 %v6838, %v6875
  %v6906 = vadd.f32 %v6839, %v6876
  %v6907 = vadd.f32 %v6840, %v6875
  %v6908 = vadd.f32 %v6841, %v6876
  %v6909 = vadd.f32 %v6842, %v6875
  %v6910 = vadd.f32 %v6843, %v6876
  %v6911 = vadd.f32 %v6844, %v6875
  %v6912 = vadd.f32 %v6845, %v6876
  %v6913 = vadd.f32 %v6846, %v6875
  %v6914 = vadd.f32 %v6847, %v6876
  %v6915 = vadd.f32 %v6848, %v6875
  %v6916 = vadd.f32 %v6849, %v6876
  %v6917 = vadd.f32 %v6850, %v6875
  %v6918 = vadd.f32 %v6851, %v6876
  %v6919 = vadd.f32 %v6852, %v6875
  %v6920 = vadd.f32 %v6853, %v6876
  %v6921 = vadd.f32 %v6854, %v6875
  %v6922 = vadd.f32 %v6855, %v6876
  %v6923 = vadd.f32 %v6856, %v6875
  %v6924 = vadd.f32 %v6857, %v6876
  %v6925 = vadd.f32 %v6858, %v6875
  %v6926 = vadd.f32 %v6859, %v6876
  %v6927 = vadd.f32 %v6860, %v6875
  %v6928 = vadd.f32 %v6861, %v6876
  %v6929 = vadd.f32 %v6862, %v6875
  %v6930 = vadd.f32 %v6863, %v6876
  %v6931 = vadd.f32 %v6864, %v6875
  %v6932 = vadd.f32 %v6865, %v6876
  %v6933 = vadd.f32 %v6866, %v6875
  %v6934 = vadd.f32 %v6867, %v6876
  %v6935 = vadd.f32 %v6868, %v6875
  %v6936 = vadd.f32 %v6869, %v6876
  %v6937 = vadd.f32 %v6870, %v6875
  %v6938 = vadd.f32 %v6871, %v6876
  %v6939 = vmax.f32 %v6879, 0.0
  %v6940 = vmax.f32 %v6880, 0.0
  %v6941 = vmax.f32 %v6881, 0.0
  %v6942 = vmax.f32 %v6882, 0.0
  %v6943 = vmax.f32 %v6883, 0.0
  %v6944 = vmax.f32 %v6884, 0.0
  %v6945 = vmax.f32 %v6885, 0.0
  %v6946 = vmax.f32 %v6886, 0.0
  %v6947 = vmax.f32 %v6887, 0.0
  %v6948 = vmax.f32 %v6888, 0.0
  %v6949 = vmax.f32 %v6889, 0.0
  %v6950 = vmax.f32 %v6890, 0.0
  %v6951 = vmax.f32 %v6891, 0.0
  %v6952 = vmax.f32 %v6892, 0.0
  %v6953 = vmax.f32 %v6893, 0.0
  %v6954 = vmax.f32 %v6894, 0.0
  %v6955 = vmax.f32 %v6895, 0.0
  %v6956 = vmax.f32 %v6896, 0.0
  %v6957 = vmax.f32 %v6897, 0.0
  %v6958 = vmax.f32 %v6898, 0.0
  %v6959 = vmax.f32 %v6899, 0.0
  %v6960 = vmax.f32 %v6900, 0.0
  %v6961 = vmax.f32 %v6901, 0.0
  %v6962 = vmax.f32 %v6902, 0.0
  %v6963 = vmax.f32 %v6903, 0.0
  %v6964 = vmax.f32 %v6904, 0.0
  %v6965 = vmax.f32 %v6905, 0.0
  %v6966 = vmax.f32 %v6906, 0.0
  %v6967 = vmax.f32 %v6907, 0.0
  %v6968 = vmax.f32 %v6908, 0.0
  %v6969 = vmax.f32 %v6909, 0.0
  %v6970 = vmax.f32 %v6910, 0.0
  %v6971 = vmax.f32 %v6911, 0.0
  %v6972 = vmax.f32 %v6912, 0.0
  %v6973 = vmax.f32 %v6913, 0.0
  %v6974 = vmax.f32 %v6914, 0.0
  %v6975 = vmax.f32 %v6915, 0.0
  %v6976 = vmax.f32 %v6916, 0.0
  %v6977 = vmax.f32 %v6917, 0.0
  %v6978 = vmax.f32 %v6918, 0.0
  %v6979 = vmax.f32 %v6919, 0.0
  %v6980 = vmax.f32 %v6920, 0.0
  %v6981 = vmax.f32 %v6921, 0.0
  %v6982 = vmax.f32 %v6922, 0.0
  %v6983 = vmax.f32 %v6923, 0.0
  %v6984 = vmax.f32 %v6924, 0.0
  %v6985 = vmax.f32 %v6925, 0.0
  %v6986 = vmax.f32 %v6926, 0.0
  %v6987 = vmax.f32 %v6927, 0.0
  %v6988 = vmax.f32 %v6928, 0.0
  %v6989 = vmax.f32 %v6929, 0.0
  %v6990 = vmax.f32 %v6930, 0.0
  %v6991 = vmax.f32 %v6931, 0.0
  %v6992 = vmax.f32 %v6932, 0.0
  %v6993 = vmax.f32 %v6933, 0.0
  %v6994 = vmax.f32 %v6934, 0.0
  %v6995 = vmax.f32 %v6935, 0.0
  %v6996 = vmax.f32 %v6936, 0.0
  %v6997 = vmax.f32 %v6937, 0.0
  %v6998 = vmax.f32 %v6938, 0.0
  %v6999 = vld [vmem:[%s4 + $0x120] sm:$0xff]
  %v7000 = vld [vmem:[%s4 + $0x128] sm:$0xff]
  %v7001 = vld [vmem:[%s4 + $0x130] sm:$0xff]
  %v7002 = vld [vmem:[%s4 + $0x138] sm:$0xff]
  %v7003 = vld [vmem:[%s4 + $0x140] sm:$0xff]
  %v7004 = vld [vmem:[%s4 + $0x148] sm:$0xff]
  %v7005 = vld [vmem:[%s4 + $0x150] sm:$0xff]
  %v7006 = vld [vmem:[%s4 + $0x158] sm:$0xff]
  %v7007 = vld [vmem:[%s4 + $0x160] sm:$0xff]
  %v7008 = vld [vmem:[%s4 + $0x168] sm:$0xff]
  %v7009 = vld [vmem:[%s4 + $0x170] sm:$0xff]
  %v7010 = vld [vmem:[%s4 + $0x178] sm:$0xff]
  %v7011 = vld [vmem:[%s4 + $0x180] sm:$0xff]
  %v7012 = vld [vmem:[%s4 + $0x188] sm:$0xff]
  %v7013 = vld [vmem:[%s4 + $0x190] sm:$0xff]
  %v7014 = vld [vmem:[%s4 + $0x198] sm:$0xff]
  %v7015 = vld [vmem:[%s4 + $0x1a0] sm:$0xff]
  %v7016 = vld [vmem:[%s4 + $0x1a8] sm:$0xff]
  %v7017 = vld [vmem:[%s4 + $0x1b0] sm:$0xff]
  %v7018 = vld [vmem:[%s4 + $0x1b8] sm:$0xff]
  %v7019 = vld [vmem:[%s4 + $0x1c0] sm:$0xff]
  %v7020 = vld [vmem:[%s4 + $0x1c8] sm:$0xff]
  %v7021 = vld [vmem:[%s4 + $0x1d0] sm:$0xff]
  %v7022 = vld [vmem:[%s4 + $0x1d8] sm:$0xff]
  %v7023 = vld [vmem:[%s4 + $0x1e0] sm:$0xff]
  %v7024 = vld [vmem:[%s4 + $0x1e8] sm:$0xff]
  %v7025 = vld [vmem:[%s4 + $0x1f0] sm:$0xff]
  %v7026 = vld [vmem:[%s4 + $0x1f8] sm:$0xff]
  %v7027 = vld [vmem:[%s4 + $0x200] sm:$0xff]
  %v7028 = vld [vmem:[%s4 + $0x208] sm:$0xff]
  %v7029 = vld [vmem:[%s4 + $0x210] sm:$0xff]
  %v7030 = vld [vmem:[%s4 + $0x218] sm:$0xff]
  %v7031 = vld [vmem:[%s4 + $0x220] sm:$0xff]
  %v7032 = vld [vmem:[%s4 + $0x228] sm:$0xff]
  %v7033 = vld [vmem:[%s4 + $0x230] sm:$0xff]
  %v7034 = vld [vmem:[%s4 + $0x238] sm:$0xff]
  %v7035 = vld [vmem:[%s4 + $0x240] sm:$0xff]
  %v7036 = vld [vmem:[%s4 + $0x248] sm:$0xff]
  %v7037 = vld [vmem:[%s4 + $0x250] sm:$0xff]
  %v7038 = vld [vmem:[%s4 + $0x258] sm:$0xff]
  %v7039 = vld [vmem:[%s4 + $0x260] sm:$0xff]
  %v7040 = vld [vmem:[%s4 + $0x268] sm:$0xff]
  %v7041 = vld [vmem:[%s4 + $0x270] sm:$0xff]
  %v7042 = vld [vmem:[%s4 + $0x278] sm:$0xff]
  %v7043 = vld [vmem:[%s4 + $0x280] sm:$0xff]
  %v7044 = vld [vmem:[%s4 + $0x288] sm:$0xff]
  %v7045 = vld [vmem:[%s4 + $0x290] sm:$0xff]
  %v7046 = vld [vmem:[%s4 + $0x298] sm:$0xff]
  %v7047 = vld [vmem:[%s4 + $0x2a0] sm:$0xff]
  %v7048 = vld [vmem:[%s4 + $0x2a8] sm:$0xff]
  %v7049 = vld [vmem:[%s4 + $0x2b0] sm:$0xff]
  %v7050 = vld [vmem:[%s4 + $0x2b8] sm:$0xff]
  %v7051 = vld [vmem:[%s4 + $0x2c0] sm:$0xff]
  %v7052 = vld [vmem:[%s4 + $0x2c8] sm:$0xff]
  %v7053 = vld [vmem:[%s4 + $0x2d0] sm:$0xff]
  %v7054 = vld [vmem:[%s4 + $0x2d8] sm:$0xff]
  %v7055 = vld [vmem:[%s4 + $0x2e0] sm:$0xff]
  %v7056 = vld [vmem:[%s4 + $0x2e8] sm:$0xff]
  %v7057 = vld [vmem:[%s4 + $0x2f0] sm:$0xff]
  %v7058 = vld [vmem:[%s4 + $0x2f8] sm:$0xff]
  %v7059 = vld [vmem:[%s4 + $0x300] sm:$0xff]
  %v7060 = vld [vmem:[%s4 + $0x308] sm:$0xff]
  %v7061 = vld [vmem:[%s4 + $0x310] sm:$0xff]
  %v7062 = vld [vmem:[%s4 + $0x318] sm:$0xff]
  %v7063 = vld [vmem:[%s4 + $0x320] sm:$0xff]
  %v7064 = vld [vmem:[%s4 + $0x328] sm:$0xff]
  %v7065 = vld [vmem:[%s4 + $0x330] sm:$0xff]
  %v7066 = vld [vmem:[%s4 + $0x338] sm:$0xff]
  %v7067 = vld [vmem:[%s4 + $0x340] sm:$0xff]
  %v7068 = vld [vmem:[%s4 + $0x348] sm:$0xff]
  %v7069 = vld [vmem:[%s4 + $0x350] sm:$0xff]
  %v7070 = vld [vmem:[%s4 + $0x358] sm:$0xff]
  %v7071 = vpack.c.bf16 %v6941, %v6939
  %v7072 = vpack.c.bf16 %v6942, %v6940
  %v7073 = vpack.c.bf16 %v6945, %v6943
  %v7074 = vpack.c.bf16 %v6946, %v6944
  %v7075 = vpack.c.bf16 %v6949, %v6947
  %v7076 = vpack.c.bf16 %v6950, %v6948
  %v7077 = vpack.c.bf16 %v6953, %v6951
  %v7078 = vpack.c.bf16 %v6954, %v6952
  %v7079 = vpack.c.bf16 %v6957, %v6955
  %v7080 = vpack.c.bf16 %v6958, %v6956
  %v7081 = vpack.c.bf16 %v6961, %v6959
  %v7082 = vpack.c.bf16 %v6962, %v6960
  %v7083 = vpack.c.bf16 %v6965, %v6963
  %v7084 = vpack.c.bf16 %v6966, %v6964
  %v7085 = vpack.c.bf16 %v6969, %v6967
  %v7086 = vpack.c.bf16 %v6970, %v6968
  %v7087 = vpack.c.bf16 %v6973, %v6971
  %v7088 = vpack.c.bf16 %v6974, %v6972
  %v7089 = vpack.c.bf16 %v6977, %v6975
  %v7090 = vpack.c.bf16 %v6978, %v6976
  %v7091 = vpack.c.bf16 %v6981, %v6979
  %v7092 = vpack.c.bf16 %v6982, %v6980
  %v7093 = vpack.c.bf16 %v6985, %v6983
  %v7094 = vpack.c.bf16 %v6986, %v6984
  %v7095 = vpack.c.bf16 %v6989, %v6987
  %v7096 = vpack.c.bf16 %v6990, %v6988
  %v7097 = vpack.c.bf16 %v6993, %v6991
  %v7098 = vpack.c.bf16 %v6994, %v6992
  %v7099 = vpack.c.bf16 %v6997, %v6995
  %v7100 = vpack.c.bf16 %v6998, %v6996
  %v7101 = vrot.slane %v6939, 7
  %v7102 = vrot.slane %v6940, 7
  %v7103 = vrot.slane %v6941, 7
  %v7104 = vrot.slane %v6942, 7
  %v7105 = vrot.slane %v6943, 7
  %v7106 = vrot.slane %v6944, 7
  %v7107 = vrot.slane %v6945, 7
  %v7108 = vrot.slane %v6946, 7
  %v7109 = vrot.slane %v6947, 7
  %v7110 = vrot.slane %v6948, 7
  %v7111 = vrot.slane %v6949, 7
  %v7112 = vrot.slane %v6950, 7
  %v7113 = vrot.slane %v6951, 7
  %v7114 = vrot.slane %v6952, 7
  %v7115 = vrot.slane %v6953, 7
  %v7116 = vrot.slane %v6954, 7
  %v7117 = vrot.slane %v6955, 7
  %v7118 = vrot.slane %v6956, 7
  %v7119 = vrot.slane %v6957, 7
  %v7120 = vrot.slane %v6958, 7
  %v7121 = vrot.slane %v6959, 7
  %v7122 = vrot.slane %v6960, 7
  %v7123 = vrot.slane %v6961, 7
  %v7124 = vrot.slane %v6962, 7
  %v7125 = vrot.slane %v6963, 7
  %v7126 = vrot.slane %v6964, 7
  %v7127 = vrot.slane %v6965, 7
  %v7128 = vrot.slane %v6966, 7
  %v7129 = vrot.slane %v6967, 7
  %v7130 = vrot.slane %v6968, 7
  %v7131 = vrot.slane %v6969, 7
  %v7132 = vrot.slane %v6970, 7
  %v7133 = vrot.slane %v6971, 7
  %v7134 = vrot.slane %v6972, 7
  %v7135 = vrot.slane %v6973, 7
  %v7136 = vrot.slane %v6974, 7
  %v7137 = vrot.slane %v6975, 7
  %v7138 = vrot.slane %v6976, 7
  %v7139 = vrot.slane %v6977, 7
  %v7140 = vrot.slane %v6978, 7
  %v7141 = vrot.slane %v6979, 7
  %v7142 = vrot.slane %v6980, 7
  %v7143 = vrot.slane %v6981, 7
  %v7144 = vrot.slane %v6982, 7
  %v7145 = vrot.slane %v6983, 7
  %v7146 = vrot.slane %v6984, 7
  %v7147 = vrot.slane %v6985, 7
  %v7148 = vrot.slane %v6986, 7
  %v7149 = vrot.slane %v6987, 7
  %v7150 = vrot.slane %v6988, 7
  %v7151 = vrot.slane %v6989, 7
  %v7152 = vrot.slane %v6990, 7
  %v7153 = vrot.slane %v6991, 7
  %v7154 = vrot.slane %v6992, 7
  %v7155 = vrot.slane %v6993, 7
  %v7156 = vrot.slane %v6994, 7
  %v7157 = vrot.slane %v6995, 7
  %v7158 = vrot.slane %v6996, 7
  %v7159 = vrot.slane %v6997, 7
  %v7160 = vrot.slane %v6998, 7
  %v7161 = vsel %vm1463, %v7157, %v7159
  %v7162 = vsel %vm1463, %v7158, %v7160
  %v7163 = vsel %vm1463, %v7155, %v7157
  %v7164 = vsel %vm1463, %v7156, %v7158
  %v7165 = vsel %vm1463, %v7153, %v7155
  %v7166 = vsel %vm1463, %v7154, %v7156
  %v7167 = vsel %vm1463, %v7151, %v7153
  %v7168 = vsel %vm1463, %v7152, %v7154
  %v7169 = vsel %vm1463, %v7149, %v7151
  %v7170 = vsel %vm1463, %v7150, %v7152
  %v7171 = vsel %vm1463, %v7147, %v7149
  %v7172 = vsel %vm1463, %v7148, %v7150
  %v7173 = vsel %vm1463, %v7145, %v7147
  %v7174 = vsel %vm1463, %v7146, %v7148
  %v7175 = vsel %vm1463, %v7143, %v7145
  %v7176 = vsel %vm1463, %v7144, %v7146
  %v7177 = vsel %vm1463, %v7141, %v7143
  %v7178 = vsel %vm1463, %v7142, %v7144
  %v7179 = vsel %vm1463, %v7139, %v7141
  %v7180 = vsel %vm1463, %v7140, %v7142
  %v7181 = vsel %vm1463, %v7137, %v7139
  %v7182 = vsel %vm1463, %v7138, %v7140
  %v7183 = vsel %vm1463, %v7135, %v7137
  %v7184 = vsel %vm1463, %v7136, %v7138
  %v7185 = vsel %vm1463, %v7133, %v7135
  %v7186 = vsel %vm1463, %v7134, %v7136
  %v7187 = vsel %vm1463, %v7131, %v7133
  %v7188 = vsel %vm1463, %v7132, %v7134
  %v7189 = vsel %vm1463, %v7129, %v7131
  %v7190 = vsel %vm1463, %v7130, %v7132
  %v7191 = vsel %vm1463, %v7127, %v7129
  %v7192 = vsel %vm1463, %v7128, %v7130
  %v7193 = vsel %vm1463, %v7125, %v7127
  %v7194 = vsel %vm1463, %v7126, %v7128
  %v7195 = vsel %vm1463, %v7123, %v7125
  %v7196 = vsel %vm1463, %v7124, %v7126
  %v7197 = vsel %vm1463, %v7121, %v7123
  %v7198 = vsel %vm1463, %v7122, %v7124
  %v7199 = vsel %vm1463, %v7119, %v7121
  %v7200 = vsel %vm1463, %v7120, %v7122
  %v7201 = vsel %vm1463, %v7117, %v7119
  %v7202 = vsel %vm1463, %v7118, %v7120
  %v7203 = vsel %vm1463, %v7115, %v7117
  %v7204 = vsel %vm1463, %v7116, %v7118
  %v7205 = vsel %vm1463, %v7113, %v7115
  %v7206 = vsel %vm1463, %v7114, %v7116
  %v7207 = vsel %vm1463, %v7111, %v7113
  %v7208 = vsel %vm1463, %v7112, %v7114
  %v7209 = vsel %vm1463, %v7109, %v7111
  %v7210 = vsel %vm1463, %v7110, %v7112
  %v7211 = vsel %vm1463, %v7107, %v7109
  %v7212 = vsel %vm1463, %v7108, %v7110
  %v7213 = vsel %vm1463, %v7105, %v7107
  %v7214 = vsel %vm1463, %v7106, %v7108
  %v7215 = vsel %vm1463, %v7103, %v7105
  %v7216 = vsel %vm1463, %v7104, %v7106
  %v7217 = vsel %vm1463, %v7101, %v7103
  %v7218 = vsel %vm1463, %v7102, %v7104
  %v7219 = vsel %vm1463, %v7159, %v7101
  %v7220 = vsel %vm1463, %v7160, %v7102
  %v7221 = vsel %vm1524, 0.0, %v7219
  %v7222 = vsel %vm1524, 0.0, %v7220
  %v7223 = vsel %vm1525, 0.0, %v7217
  %v7224 = vsel %vm1525, 0.0, %v7218
  %v7225 = vsel %vm1526, 0.0, %v7215
  %v7226 = vsel %vm1526, 0.0, %v7216
  %v7227 = vsel %vm1527, 0.0, %v7213
  %v7228 = vsel %vm1527, 0.0, %v7214
  %v7229 = vsel %vm1528, 0.0, %v7211
  %v7230 = vsel %vm1528, 0.0, %v7212
  %v7231 = vsel %vm1529, 0.0, %v7209
  %v7232 = vsel %vm1529, 0.0, %v7210
  %v7233 = vsel %vm1530, 0.0, %v7207
  %v7234 = vsel %vm1530, 0.0, %v7208
  %v7235 = vsel %vm1531, 0.0, %v7205
  %v7236 = vsel %vm1531, 0.0, %v7206
  %v7237 = vsel %vm1532, 0.0, %v7203
  %v7238 = vsel %vm1532, 0.0, %v7204
  %v7239 = vsel %vm1533, 0.0, %v7201
  %v7240 = vsel %vm1533, 0.0, %v7202
  %v7241 = vsel %vm1534, 0.0, %v7199
  %v7242 = vsel %vm1534, 0.0, %v7200
  %v7243 = vsel %vm1535, 0.0, %v7197
  %v7244 = vsel %vm1535, 0.0, %v7198
  %v7245 = vsel %vm1536, 0.0, %v7195
  %v7246 = vsel %vm1536, 0.0, %v7196
  %v7247 = vsel %vm1537, 0.0, %v7193
  %v7248 = vsel %vm1537, 0.0, %v7194
  %v7249 = vsel %vm1538, 0.0, %v7191
  %v7250 = vsel %vm1538, 0.0, %v7192
  %v7251 = vsel %vm1539, 0.0, %v7189
  %v7252 = vsel %vm1539, 0.0, %v7190
  %v7253 = vsel %vm1540, 0.0, %v7187
  %v7254 = vsel %vm1540, 0.0, %v7188
  %v7255 = vsel %vm1541, 0.0, %v7185
  %v7256 = vsel %vm1541, 0.0, %v7186
  %v7257 = vsel %vm1542, 0.0, %v7183
  %v7258 = vsel %vm1542, 0.0, %v7184
  %v7259 = vsel %vm1543, 0.0, %v7181
  %v7260 = vsel %vm1543, 0.0, %v7182
  %v7261 = vsel %vm1544, 0.0, %v7179
  %v7262 = vsel %vm1544, 0.0, %v7180
  %v7263 = vsel %vm1545, 0.0, %v7177
  %v7264 = vsel %vm1545, 0.0, %v7178
  %v7265 = vsel %vm1546, 0.0, %v7175
  %v7266 = vsel %vm1546, 0.0, %v7176
  %v7267 = vsel %vm1547, 0.0, %v7173
  %v7268 = vsel %vm1547, 0.0, %v7174
  %v7269 = vsel %vm1548, 0.0, %v7171
  %v7270 = vsel %vm1548, 0.0, %v7172
  %v7271 = vsel %vm1549, 0.0, %v7169
  %v7272 = vsel %vm1549, 0.0, %v7170
  %v7273 = vsel %vm1550, 0.0, %v7167
  %v7274 = vsel %vm1550, 0.0, %v7168
  %v7275 = vsel %vm1551, 0.0, %v7165
  %v7276 = vsel %vm1551, 0.0, %v7166
  %v7277 = vsel %vm1552, 0.0, %v7163
  %v7278 = vsel %vm1552, 0.0, %v7164
  %v7279 = vsel %vm1553, 0.0, %v7161
  %v7280 = vsel %vm1553, 0.0, %v7162
  %v7281 = vpack.c.bf16 %v7223, %v7221
  %v7282 = vpack.c.bf16 %v7224, %v7222
  %v7283 = vpack.c.bf16 %v7227, %v7225
  %v7284 = vpack.c.bf16 %v7228, %v7226
  %v7285 = vpack.c.bf16 %v7231, %v7229
  %v7286 = vpack.c.bf16 %v7232, %v7230
  %v7287 = vpack.c.bf16 %v7235, %v7233
  %v7288 = vpack.c.bf16 %v7236, %v7234
  %v7289 = vpack.c.bf16 %v7239, %v7237
  %v7290 = vpack.c.bf16 %v7240, %v7238
  %v7291 = vpack.c.bf16 %v7243, %v7241
  %v7292 = vpack.c.bf16 %v7244, %v7242
  %v7293 = vpack.c.bf16 %v7247, %v7245
  %v7294 = vpack.c.bf16 %v7248, %v7246
  %v7295 = vpack.c.bf16 %v7251, %v7249
  %v7296 = vpack.c.bf16 %v7252, %v7250
  %v7297 = vpack.c.bf16 %v7255, %v7253
  %v7298 = vpack.c.bf16 %v7256, %v7254
  %v7299 = vpack.c.bf16 %v7259, %v7257
  %v7300 = vpack.c.bf16 %v7260, %v7258
  %v7301 = vpack.c.bf16 %v7263, %v7261
  %v7302 = vpack.c.bf16 %v7264, %v7262
  %v7303 = vpack.c.bf16 %v7267, %v7265
  %v7304 = vpack.c.bf16 %v7268, %v7266
  %v7305 = vpack.c.bf16 %v7271, %v7269
  %v7306 = vpack.c.bf16 %v7272, %v7270
  %v7307 = vpack.c.bf16 %v7275, %v7273
  %v7308 = vpack.c.bf16 %v7276, %v7274
  %v7309 = vpack.c.bf16 %v7279, %v7277
  %v7310 = vpack.c.bf16 %v7280, %v7278
  %v7335 = vunpack.c.l.b16 %v6999
  %v7336 = vunpack.c.h.b16 %v6999
  %v7337 = vunpack.c.l.b16 %v7000
  %v7338 = vunpack.c.h.b16 %v7000
  %v7339 = vunpack.c.l.b16 %v7001
  %v7340 = vunpack.c.h.b16 %v7001
  %v7341 = vunpack.c.l.b16 %v7002
  %v7342 = vunpack.c.h.b16 %v7002
  %v7343 = vunpack.c.l.b16 %v7003
  %v7344 = vunpack.c.h.b16 %v7003
  %v7345 = vunpack.c.l.b16 %v7004
  %v7346 = vunpack.c.h.b16 %v7004
  %v7347 = vunpack.c.l.b16 %v7005
  %v7348 = vunpack.c.h.b16 %v7005
  %v7349 = vunpack.c.l.b16 %v7006
  %v7350 = vunpack.c.h.b16 %v7006
  %v7351 = vunpack.c.l.b16 %v7007
  %v7352 = vunpack.c.h.b16 %v7007
  %v7353 = vunpack.c.l.b16 %v7008
  %v7354 = vunpack.c.h.b16 %v7008
  %v7355 = vunpack.c.l.b16 %v7009
  %v7356 = vunpack.c.h.b16 %v7009
  %v7357 = vunpack.c.l.b16 %v7010
  %v7358 = vunpack.c.h.b16 %v7010
  %v7359 = vunpack.c.l.b16 %v7011
  %v7360 = vunpack.c.h.b16 %v7011
  %v7361 = vunpack.c.l.b16 %v7012
  %v7362 = vunpack.c.h.b16 %v7012
  %v7363 = vunpack.c.l.b16 %v7013
  %v7364 = vunpack.c.h.b16 %v7013
  %v7365 = vunpack.c.l.b16 %v7014
  %v7366 = vunpack.c.h.b16 %v7014
  %v7367 = vunpack.c.l.b16 %v7015
  %v7368 = vunpack.c.h.b16 %v7015
  %v7369 = vunpack.c.l.b16 %v7016
  %v7370 = vunpack.c.h.b16 %v7016
  %v7371 = vunpack.c.l.b16 %v7017
  %v7372 = vunpack.c.h.b16 %v7017
  %v7373 = vunpack.c.l.b16 %v7018
  %v7374 = vunpack.c.h.b16 %v7018
  %v7375 = vunpack.c.l.b16 %v7019
  %v7376 = vunpack.c.h.b16 %v7019
  %v7377 = vunpack.c.l.b16 %v7020
  %v7378 = vunpack.c.h.b16 %v7020
  %v7379 = vunpack.c.l.b16 %v7021
  %v7380 = vunpack.c.h.b16 %v7021
  %v7381 = vunpack.c.l.b16 %v7022
  %v7382 = vunpack.c.h.b16 %v7022
  %v7383 = vpack.c.b16 %v7337, %v7335
  %v7384 = vpack.c.b16 %v7338, %v7336
  %v7385 = vpack.c.b16 %v7341, %v7339
  %v7386 = vpack.c.b16 %v7342, %v7340
  %v7387 = vpack.c.b16 %v7345, %v7343
  %v7388 = vpack.c.b16 %v7346, %v7344
  %v7389 = vpack.c.b16 %v7349, %v7347
  %v7390 = vpack.c.b16 %v7350, %v7348
  %v7391 = vpack.c.b16 %v7353, %v7351
  %v7392 = vpack.c.b16 %v7354, %v7352
  %v7393 = vpack.c.b16 %v7357, %v7355
  %v7394 = vpack.c.b16 %v7358, %v7356
  %v7395 = vpack.c.b16 %v7361, %v7359
  %v7396 = vpack.c.b16 %v7362, %v7360
  %v7397 = vpack.c.b16 %v7365, %v7363
  %v7398 = vpack.c.b16 %v7366, %v7364
  %v7399 = vpack.c.b16 %v7369, %v7367
  %v7400 = vpack.c.b16 %v7370, %v7368
  %v7401 = vpack.c.b16 %v7373, %v7371
  %v7402 = vpack.c.b16 %v7374, %v7372
  %v7403 = vpack.c.b16 %v7377, %v7375
  %v7404 = vpack.c.b16 %v7378, %v7376
  %v7405 = vpack.c.b16 %v7381, %v7379
  %v7406 = vpack.c.b16 %v7382, %v7380
  %vm7431 = vcmask 523264
  %v7433 = vsel %vm7431, %v7282, 0
  %v7436 = vsel %vm7431, %v7284, 0
  %v7439 = vsel %vm7431, %v7286, 0
  %v7442 = vsel %vm7431, %v7288, 0
  %v7445 = vsel %vm7431, %v7290, 0
  %v7448 = vsel %vm7431, %v7292, 0
  %v7451 = vsel %vm7431, %v7294, 0
  %v7454 = vsel %vm7431, %v7296, 0
  %v7457 = vsel %vm7431, %v7298, 0
  %v7460 = vsel %vm7431, %v7300, 0
  %v7463 = vsel %vm7431, %v7302, 0
  %v7466 = vsel %vm7431, %v7304, 0
  %v7469 = vsel %vm7431, %v7306, 0
  %v7472 = vsel %vm7431, %v7308, 0
  %v7475 = vsel %vm7431, %v7310, 0
  %7477 = vmatpush.bf16.msra.mxu0 %v7397
  %7478 = vmatpush.bf16.msra.mxu0 %v7395
  %7479 = vmatpush.bf16.msra.mxu0 %v7393
  %7480 = vmatpush.bf16.msra.mxu0 %v7391
  %7481 = vmatpush.bf16.msra.mxu0 %v7389
  %7482 = vmatpush.bf16.msra.mxu0 %v7387
  %7483 = vmatpush.bf16.msra.mxu0 %v7385
  %7484 = vmatpush.bf16.msra.mxu0 %v7383
  %7485 = vmatmul.bf16.gmra.mxu0 %v7281
  %v7486 = vpop.f32.mrf.mxu0
  %v7487 = vadd.f32 0.0, %v7486
  %v7488 = vpop.f32.mrf.mxu0
  %v7489 = vadd.f32 0.0, %v7488
  %7490 = vmatmul.bf16.gmra.mxu0 %v7283
  %v7491 = vpop.f32.mrf.mxu0
  %v7492 = vadd.f32 0.0, %v7491
  %v7493 = vpop.f32.mrf.mxu0
  %v7494 = vadd.f32 0.0, %v7493
  %7495 = vmatmul.bf16.gmra.mxu0 %v7285
  %v7496 = vpop.f32.mrf.mxu0
  %v7497 = vadd.f32 0.0, %v7496
  %v7498 = vpop.f32.mrf.mxu0
  %v7499 = vadd.f32 0.0, %v7498
  %7500 = vmatmul.bf16.gmra.mxu0 %v7287
  %v7501 = vpop.f32.mrf.mxu0
  %v7502 = vadd.f32 0.0, %v7501
  %v7503 = vpop.f32.mrf.mxu0
  %v7504 = vadd.f32 0.0, %v7503
  %7505 = vmatmul.bf16.gmra.mxu0 %v7289
  %v7506 = vpop.f32.mrf.mxu0
  %v7507 = vadd.f32 0.0, %v7506
  %v7508 = vpop.f32.mrf.mxu0
  %v7509 = vadd.f32 0.0, %v7508
  %7510 = vmatmul.bf16.gmra.mxu0 %v7291
  %v7511 = vpop.f32.mrf.mxu0
  %v7512 = vadd.f32 0.0, %v7511
  %v7513 = vpop.f32.mrf.mxu0
  %v7514 = vadd.f32 0.0, %v7513
  %7515 = vmatmul.bf16.gmra.mxu0 %v7293
  %v7516 = vpop.f32.mrf.mxu0
  %v7517 = vadd.f32 0.0, %v7516
  %v7518 = vpop.f32.mrf.mxu0
  %v7519 = vadd.f32 0.0, %v7518
  %7520 = vmatmul.bf16.gmra.mxu0 %v7295
  %v7521 = vpop.f32.mrf.mxu0
  %v7522 = vadd.f32 0.0, %v7521
  %v7523 = vpop.f32.mrf.mxu0
  %v7524 = vadd.f32 0.0, %v7523
  %7525 = vmatmul.bf16.gmra.mxu0 %v7297
  %v7526 = vpop.f32.mrf.mxu0
  %v7527 = vadd.f32 0.0, %v7526
  %v7528 = vpop.f32.mrf.mxu0
  %v7529 = vadd.f32 0.0, %v7528
  %7530 = vmatmul.bf16.gmra.mxu0 %v7299
  %v7531 = vpop.f32.mrf.mxu0
  %v7532 = vadd.f32 0.0, %v7531
  %v7533 = vpop.f32.mrf.mxu0
  %v7534 = vadd.f32 0.0, %v7533
  %7535 = vmatmul.bf16.gmra.mxu0 %v7301
  %v7536 = vpop.f32.mrf.mxu0
  %v7537 = vadd.f32 0.0, %v7536
  %v7538 = vpop.f32.mrf.mxu0
  %v7539 = vadd.f32 0.0, %v7538
  %7540 = vmatmul.bf16.gmra.mxu0 %v7303
  %v7541 = vpop.f32.mrf.mxu0
  %v7542 = vadd.f32 0.0, %v7541
  %v7543 = vpop.f32.mrf.mxu0
  %v7544 = vadd.f32 0.0, %v7543
  %7545 = vmatmul.bf16.gmra.mxu0 %v7305
  %v7546 = vpop.f32.mrf.mxu0
  %v7547 = vadd.f32 0.0, %v7546
  %v7548 = vpop.f32.mrf.mxu0
  %v7549 = vadd.f32 0.0, %v7548
  %7550 = vmatmul.bf16.gmra.mxu0 %v7307
  %v7551 = vpop.f32.mrf.mxu0
  %v7552 = vadd.f32 0.0, %v7551
  %v7553 = vpop.f32.mrf.mxu0
  %v7554 = vadd.f32 0.0, %v7553
  %7555 = vmatmul.bf16.gmra.mxu0 %v7309
  %v7556 = vpop.f32.mrf.mxu0
  %v7557 = vadd.f32 0.0, %v7556
  %v7558 = vpop.f32.mrf.mxu0
  %v7559 = vadd.f32 0.0, %v7558
  %7560 = vdwg.mxu0
  %7561 = vmatpush.bf16.msra.mxu0 0
  %7562 = vmatpush.bf16.msra.mxu0 0
  %7563 = vmatpush.bf16.msra.mxu0 0
  %7564 = vmatpush.bf16.msra.mxu0 0
  %7565 = vmatpush.bf16.msra.mxu0 %v7405
  %7566 = vmatpush.bf16.msra.mxu0 %v7403
  %7567 = vmatpush.bf16.msra.mxu0 %v7401
  %7568 = vmatpush.bf16.msra.mxu0 %v7399
  %7569 = vmatmul.bf16.gmra.mxu0 %v7433
  %v7570 = vpop.f32.mrf.mxu0
  %v7571 = vadd.f32 %v7487, %v7570
  %v7572 = vpop.f32.mrf.mxu0
  %v7573 = vadd.f32 %v7489, %v7572
  %7574 = vmatmul.bf16.gmra.mxu0 %v7436
  %v7575 = vpop.f32.mrf.mxu0
  %v7576 = vadd.f32 %v7492, %v7575
  %v7577 = vpop.f32.mrf.mxu0
  %v7578 = vadd.f32 %v7494, %v7577
  %7579 = vmatmul.bf16.gmra.mxu0 %v7439
  %v7580 = vpop.f32.mrf.mxu0
  %v7581 = vadd.f32 %v7497, %v7580
  %v7582 = vpop.f32.mrf.mxu0
  %v7583 = vadd.f32 %v7499, %v7582
  %7584 = vmatmul.bf16.gmra.mxu0 %v7442
  %v7585 = vpop.f32.mrf.mxu0
  %v7586 = vadd.f32 %v7502, %v7585
  %v7587 = vpop.f32.mrf.mxu0
  %v7588 = vadd.f32 %v7504, %v7587
  %7589 = vmatmul.bf16.gmra.mxu0 %v7445
  %v7590 = vpop.f32.mrf.mxu0
  %v7591 = vadd.f32 %v7507, %v7590
  %v7592 = vpop.f32.mrf.mxu0
  %v7593 = vadd.f32 %v7509, %v7592
  %7594 = vmatmul.bf16.gmra.mxu0 %v7448
  %v7595 = vpop.f32.mrf.mxu0
  %v7596 = vadd.f32 %v7512, %v7595
  %v7597 = vpop.f32.mrf.mxu0
  %v7598 = vadd.f32 %v7514, %v7597
  %7599 = vmatmul.bf16.gmra.mxu0 %v7451
  %v7600 = vpop.f32.mrf.mxu0
  %v7601 = vadd.f32 %v7517, %v7600
  %v7602 = vpop.f32.mrf.mxu0
  %v7603 = vadd.f32 %v7519, %v7602
  %7604 = vmatmul.bf16.gmra.mxu0 %v7454
  %v7605 = vpop.f32.mrf.mxu0
  %v7606 = vadd.f32 %v7522, %v7605
  %v7607 = vpop.f32.mrf.mxu0
  %v7608 = vadd.f32 %v7524, %v7607
  %7609 = vmatmul.bf16.gmra.mxu0 %v7457
  %v7610 = vpop.f32.mrf.mxu0
  %v7611 = vadd.f32 %v7527, %v7610
  %v7612 = vpop.f32.mrf.mxu0
  %v7613 = vadd.f32 %v7529, %v7612
  %7614 = vmatmul.bf16.gmra.mxu0 %v7460
  %v7615 = vpop.f32.mrf.mxu0
  %v7616 = vadd.f32 %v7532, %v7615
  %v7617 = vpop.f32.mrf.mxu0
  %v7618 = vadd.f32 %v7534, %v7617
  %7619 = vmatmul.bf16.gmra.mxu0 %v7463
  %v7620 = vpop.f32.mrf.mxu0
  %v7621 = vadd.f32 %v7537, %v7620
  %v7622 = vpop.f32.mrf.mxu0
  %v7623 = vadd.f32 %v7539, %v7622
  %7624 = vmatmul.bf16.gmra.mxu0 %v7466
  %v7625 = vpop.f32.mrf.mxu0
  %v7626 = vadd.f32 %v7542, %v7625
  %v7627 = vpop.f32.mrf.mxu0
  %v7628 = vadd.f32 %v7544, %v7627
  %7629 = vmatmul.bf16.gmra.mxu0 %v7469
  %v7630 = vpop.f32.mrf.mxu0
  %v7631 = vadd.f32 %v7547, %v7630
  %v7632 = vpop.f32.mrf.mxu0
  %v7633 = vadd.f32 %v7549, %v7632
  %7634 = vmatmul.bf16.gmra.mxu0 %v7472
  %v7635 = vpop.f32.mrf.mxu0
  %v7636 = vadd.f32 %v7552, %v7635
  %v7637 = vpop.f32.mrf.mxu0
  %v7638 = vadd.f32 %v7554, %v7637
  %7639 = vmatmul.bf16.gmra.mxu0 %v7475
  %v7640 = vpop.f32.mrf.mxu0
  %v7641 = vadd.f32 %v7557, %v7640
  %v7642 = vpop.f32.mrf.mxu0
  %v7643 = vadd.f32 %v7559, %v7642
  %7644 = vdwg.mxu0
  %7645 = vmatpush.bf16.msra.mxu0 %v7398
  %7646 = vmatpush.bf16.msra.mxu0 %v7396
  %7647 = vmatpush.bf16.msra.mxu0 %v7394
  %7648 = vmatpush.bf16.msra.mxu0 %v7392
  %7649 = vmatpush.bf16.msra.mxu0 %v7390
  %7650 = vmatpush.bf16.msra.mxu0 %v7388
  %7651 = vmatpush.bf16.msra.mxu0 %v7386
  %7652 = vmatpush.bf16.msra.mxu0 %v7384
  %7653 = vmatmul.bf16.gmra.mxu0 %v7281
  %v7654 = vpop.f32.mrf.mxu0
  %v7655 = vadd.f32 0.0, %v7654
  %v7656 = vpop.f32.mrf.mxu0
  %v7657 = vadd.f32 0.0, %v7656
  %7658 = vmatmul.bf16.gmra.mxu0 %v7283
  %v7659 = vpop.f32.mrf.mxu0
  %v7660 = vadd.f32 0.0, %v7659
  %v7661 = vpop.f32.mrf.mxu0
  %v7662 = vadd.f32 0.0, %v7661
  %7663 = vmatmul.bf16.gmra.mxu0 %v7285
  %v7664 = vpop.f32.mrf.mxu0
  %v7665 = vadd.f32 0.0, %v7664
  %v7666 = vpop.f32.mrf.mxu0
  %v7667 = vadd.f32 0.0, %v7666
  %7668 = vmatmul.bf16.gmra.mxu0 %v7287
  %v7669 = vpop.f32.mrf.mxu0
  %v7670 = vadd.f32 0.0, %v7669
  %v7671 = vpop.f32.mrf.mxu0
  %v7672 = vadd.f32 0.0, %v7671
  %7673 = vmatmul.bf16.gmra.mxu0 %v7289
  %v7674 = vpop.f32.mrf.mxu0
  %v7675 = vadd.f32 0.0, %v7674
  %v7676 = vpop.f32.mrf.mxu0
  %v7677 = vadd.f32 0.0, %v7676
  %7678 = vmatmul.bf16.gmra.mxu0 %v7291
  %v7679 = vpop.f32.mrf.mxu0
  %v7680 = vadd.f32 0.0, %v7679
  %v7681 = vpop.f32.mrf.mxu0
  %v7682 = vadd.f32 0.0, %v7681
  %7683 = vmatmul.bf16.gmra.mxu0 %v7293
  %v7684 = vpop.f32.mrf.mxu0
  %v7685 = vadd.f32 0.0, %v7684
  %v7686 = vpop.f32.mrf.mxu0
  %v7687 = vadd.f32 0.0, %v7686
  %7688 = vmatmul.bf16.gmra.mxu0 %v7295
  %v7689 = vpop.f32.mrf.mxu0
  %v7690 = vadd.f32 0.0, %v7689
  %v7691 = vpop.f32.mrf.mxu0
  %v7692 = vadd.f32 0.0, %v7691
  %7693 = vmatmul.bf16.gmra.mxu0 %v7297
  %v7694 = vpop.f32.mrf.mxu0
  %v7695 = vadd.f32 0.0, %v7694
  %v7696 = vpop.f32.mrf.mxu0
  %v7697 = vadd.f32 0.0, %v7696
  %7698 = vmatmul.bf16.gmra.mxu0 %v7299
  %v7699 = vpop.f32.mrf.mxu0
  %v7700 = vadd.f32 0.0, %v7699
  %v7701 = vpop.f32.mrf.mxu0
  %v7702 = vadd.f32 0.0, %v7701
  %7703 = vmatmul.bf16.gmra.mxu0 %v7301
  %v7704 = vpop.f32.mrf.mxu0
  %v7705 = vadd.f32 0.0, %v7704
  %v7706 = vpop.f32.mrf.mxu0
  %v7707 = vadd.f32 0.0, %v7706
  %7708 = vmatmul.bf16.gmra.mxu0 %v7303
  %v7709 = vpop.f32.mrf.mxu0
  %v7710 = vadd.f32 0.0, %v7709
  %v7711 = vpop.f32.mrf.mxu0
  %v7712 = vadd.f32 0.0, %v7711
  %7713 = vmatmul.bf16.gmra.mxu0 %v7305
  %v7714 = vpop.f32.mrf.mxu0
  %v7715 = vadd.f32 0.0, %v7714
  %v7716 = vpop.f32.mrf.mxu0
  %v7717 = vadd.f32 0.0, %v7716
  %7718 = vmatmul.bf16.gmra.mxu0 %v7307
  %v7719 = vpop.f32.mrf.mxu0
  %v7720 = vadd.f32 0.0, %v7719
  %v7721 = vpop.f32.mrf.mxu0
  %v7722 = vadd.f32 0.0, %v7721
  %7723 = vmatmul.bf16.gmra.mxu0 %v7309
  %v7724 = vpop.f32.mrf.mxu0
  %v7725 = vadd.f32 0.0, %v7724
  %v7726 = vpop.f32.mrf.mxu0
  %v7727 = vadd.f32 0.0, %v7726
  %7728 = vdwg.mxu0
  %7729 = vmatpush.bf16.msra.mxu0 0
  %7730 = vmatpush.bf16.msra.mxu0 0
  %7731 = vmatpush.bf16.msra.mxu0 0
  %7732 = vmatpush.bf16.msra.mxu0 0
  %7733 = vmatpush.bf16.msra.mxu0 %v7406
  %7734 = vmatpush.bf16.msra.mxu0 %v7404
  %7735 = vmatpush.bf16.msra.mxu0 %v7402
  %7736 = vmatpush.bf16.msra.mxu0 %v7400
  %7737 = vmatmul.bf16.gmra.mxu0 %v7433
  %v7738 = vpop.f32.mrf.mxu0
  %v7739 = vadd.f32 %v7655, %v7738
  %v7740 = vpop.f32.mrf.mxu0
  %v7741 = vadd.f32 %v7657, %v7740
  %7742 = vmatmul.bf16.gmra.mxu0 %v7436
  %v7743 = vpop.f32.mrf.mxu0
  %v7744 = vadd.f32 %v7660, %v7743
  %v7745 = vpop.f32.mrf.mxu0
  %v7746 = vadd.f32 %v7662, %v7745
  %7747 = vmatmul.bf16.gmra.mxu0 %v7439
  %v7748 = vpop.f32.mrf.mxu0
  %v7749 = vadd.f32 %v7665, %v7748
  %v7750 = vpop.f32.mrf.mxu0
  %v7751 = vadd.f32 %v7667, %v7750
  %7752 = vmatmul.bf16.gmra.mxu0 %v7442
  %v7753 = vpop.f32.mrf.mxu0
  %v7754 = vadd.f32 %v7670, %v7753
  %v7755 = vpop.f32.mrf.mxu0
  %v7756 = vadd.f32 %v7672, %v7755
  %7757 = vmatmul.bf16.gmra.mxu0 %v7445
  %v7758 = vpop.f32.mrf.mxu0
  %v7759 = vadd.f32 %v7675, %v7758
  %v7760 = vpop.f32.mrf.mxu0
  %v7761 = vadd.f32 %v7677, %v7760
  %7762 = vmatmul.bf16.gmra.mxu0 %v7448
  %v7763 = vpop.f32.mrf.mxu0
  %v7764 = vadd.f32 %v7680, %v7763
  %v7765 = vpop.f32.mrf.mxu0
  %v7766 = vadd.f32 %v7682, %v7765
  %7767 = vmatmul.bf16.gmra.mxu0 %v7451
  %v7768 = vpop.f32.mrf.mxu0
  %v7769 = vadd.f32 %v7685, %v7768
  %v7770 = vpop.f32.mrf.mxu0
  %v7771 = vadd.f32 %v7687, %v7770
  %7772 = vmatmul.bf16.gmra.mxu0 %v7454
  %v7773 = vpop.f32.mrf.mxu0
  %v7774 = vadd.f32 %v7690, %v7773
  %v7775 = vpop.f32.mrf.mxu0
  %v7776 = vadd.f32 %v7692, %v7775
  %7777 = vmatmul.bf16.gmra.mxu0 %v7457
  %v7778 = vpop.f32.mrf.mxu0
  %v7779 = vadd.f32 %v7695, %v7778
  %v7780 = vpop.f32.mrf.mxu0
  %v7781 = vadd.f32 %v7697, %v7780
  %7782 = vmatmul.bf16.gmra.mxu0 %v7460
  %v7783 = vpop.f32.mrf.mxu0
  %v7784 = vadd.f32 %v7700, %v7783
  %v7785 = vpop.f32.mrf.mxu0
  %v7786 = vadd.f32 %v7702, %v7785
  %7787 = vmatmul.bf16.gmra.mxu0 %v7463
  %v7788 = vpop.f32.mrf.mxu0
  %v7789 = vadd.f32 %v7705, %v7788
  %v7790 = vpop.f32.mrf.mxu0
  %v7791 = vadd.f32 %v7707, %v7790
  %7792 = vmatmul.bf16.gmra.mxu0 %v7466
  %v7793 = vpop.f32.mrf.mxu0
  %v7794 = vadd.f32 %v7710, %v7793
  %v7795 = vpop.f32.mrf.mxu0
  %v7796 = vadd.f32 %v7712, %v7795
  %7797 = vmatmul.bf16.gmra.mxu0 %v7469
  %v7798 = vpop.f32.mrf.mxu0
  %v7799 = vadd.f32 %v7715, %v7798
  %v7800 = vpop.f32.mrf.mxu0
  %v7801 = vadd.f32 %v7717, %v7800
  %7802 = vmatmul.bf16.gmra.mxu0 %v7472
  %v7803 = vpop.f32.mrf.mxu0
  %v7804 = vadd.f32 %v7720, %v7803
  %v7805 = vpop.f32.mrf.mxu0
  %v7806 = vadd.f32 %v7722, %v7805
  %7807 = vmatmul.bf16.gmra.mxu0 %v7475
  %v7808 = vpop.f32.mrf.mxu0
  %v7809 = vadd.f32 %v7725, %v7808
  %v7810 = vpop.f32.mrf.mxu0
  %v7811 = vadd.f32 %v7727, %v7810
  %7812 = vdwg.mxu0
  %v7837 = vunpack.c.l.b16 %v7023
  %v7838 = vunpack.c.h.b16 %v7023
  %v7839 = vunpack.c.l.b16 %v7024
  %v7840 = vunpack.c.h.b16 %v7024
  %v7841 = vunpack.c.l.b16 %v7025
  %v7842 = vunpack.c.h.b16 %v7025
  %v7843 = vunpack.c.l.b16 %v7026
  %v7844 = vunpack.c.h.b16 %v7026
  %v7845 = vunpack.c.l.b16 %v7027
  %v7846 = vunpack.c.h.b16 %v7027
  %v7847 = vunpack.c.l.b16 %v7028
  %v7848 = vunpack.c.h.b16 %v7028
  %v7849 = vunpack.c.l.b16 %v7029
  %v7850 = vunpack.c.h.b16 %v7029
  %v7851 = vunpack.c.l.b16 %v7030
  %v7852 = vunpack.c.h.b16 %v7030
  %v7853 = vunpack.c.l.b16 %v7031
  %v7854 = vunpack.c.h.b16 %v7031
  %v7855 = vunpack.c.l.b16 %v7032
  %v7856 = vunpack.c.h.b16 %v7032
  %v7857 = vunpack.c.l.b16 %v7033
  %v7858 = vunpack.c.h.b16 %v7033
  %v7859 = vunpack.c.l.b16 %v7034
  %v7860 = vunpack.c.h.b16 %v7034
  %v7861 = vunpack.c.l.b16 %v7035
  %v7862 = vunpack.c.h.b16 %v7035
  %v7863 = vunpack.c.l.b16 %v7036
  %v7864 = vunpack.c.h.b16 %v7036
  %v7865 = vunpack.c.l.b16 %v7037
  %v7866 = vunpack.c.h.b16 %v7037
  %v7867 = vunpack.c.l.b16 %v7038
  %v7868 = vunpack.c.h.b16 %v7038
  %v7869 = vunpack.c.l.b16 %v7039
  %v7870 = vunpack.c.h.b16 %v7039
  %v7871 = vunpack.c.l.b16 %v7040
  %v7872 = vunpack.c.h.b16 %v7040
  %v7873 = vunpack.c.l.b16 %v7041
  %v7874 = vunpack.c.h.b16 %v7041
  %v7875 = vunpack.c.l.b16 %v7042
  %v7876 = vunpack.c.h.b16 %v7042
  %v7877 = vunpack.c.l.b16 %v7043
  %v7878 = vunpack.c.h.b16 %v7043
  %v7879 = vunpack.c.l.b16 %v7044
  %v7880 = vunpack.c.h.b16 %v7044
  %v7881 = vunpack.c.l.b16 %v7045
  %v7882 = vunpack.c.h.b16 %v7045
  %v7883 = vunpack.c.l.b16 %v7046
  %v7884 = vunpack.c.h.b16 %v7046
  %v7885 = vpack.c.b16 %v7839, %v7837
  %v7886 = vpack.c.b16 %v7840, %v7838
  %v7887 = vpack.c.b16 %v7843, %v7841
  %v7888 = vpack.c.b16 %v7844, %v7842
  %v7889 = vpack.c.b16 %v7847, %v7845
  %v7890 = vpack.c.b16 %v7848, %v7846
  %v7891 = vpack.c.b16 %v7851, %v7849
  %v7892 = vpack.c.b16 %v7852, %v7850
  %v7893 = vpack.c.b16 %v7855, %v7853
  %v7894 = vpack.c.b16 %v7856, %v7854
  %v7895 = vpack.c.b16 %v7859, %v7857
  %v7896 = vpack.c.b16 %v7860, %v7858
  %v7897 = vpack.c.b16 %v7863, %v7861
  %v7898 = vpack.c.b16 %v7864, %v7862
  %v7899 = vpack.c.b16 %v7867, %v7865
  %v7900 = vpack.c.b16 %v7868, %v7866
  %v7901 = vpack.c.b16 %v7871, %v7869
  %v7902 = vpack.c.b16 %v7872, %v7870
  %v7903 = vpack.c.b16 %v7875, %v7873
  %v7904 = vpack.c.b16 %v7876, %v7874
  %v7905 = vpack.c.b16 %v7879, %v7877
  %v7906 = vpack.c.b16 %v7880, %v7878
  %v7907 = vpack.c.b16 %v7883, %v7881
  %v7908 = vpack.c.b16 %v7884, %v7882
  %v7934 = vsel %vm7431, %v7072, 0
  %v7937 = vsel %vm7431, %v7074, 0
  %v7940 = vsel %vm7431, %v7076, 0
  %v7943 = vsel %vm7431, %v7078, 0
  %v7946 = vsel %vm7431, %v7080, 0
  %v7949 = vsel %vm7431, %v7082, 0
  %v7952 = vsel %vm7431, %v7084, 0
  %v7955 = vsel %vm7431, %v7086, 0
  %v7958 = vsel %vm7431, %v7088, 0
  %v7961 = vsel %vm7431, %v7090, 0
  %v7964 = vsel %vm7431, %v7092, 0
  %v7967 = vsel %vm7431, %v7094, 0
  %v7970 = vsel %vm7431, %v7096, 0
  %v7973 = vsel %vm7431, %v7098, 0
  %v7976 = vsel %vm7431, %v7100, 0
  %7978 = vmatpush.bf16.msra.mxu0 %v7899
  %7979 = vmatpush.bf16.msra.mxu0 %v7897
  %7980 = vmatpush.bf16.msra.mxu0 %v7895
  %7981 = vmatpush.bf16.msra.mxu0 %v7893
  %7982 = vmatpush.bf16.msra.mxu0 %v7891
  %7983 = vmatpush.bf16.msra.mxu0 %v7889
  %7984 = vmatpush.bf16.msra.mxu0 %v7887
  %7985 = vmatpush.bf16.msra.mxu0 %v7885
  %7986 = vmatmul.bf16.gmra.mxu0 %v7071
  %v7987 = vpop.f32.mrf.mxu0
  %v7988 = vadd.f32 %v7571, %v7987
  %v7989 = vpop.f32.mrf.mxu0
  %v7990 = vadd.f32 %v7573, %v7989
  %7991 = vmatmul.bf16.gmra.mxu0 %v7073
  %v7992 = vpop.f32.mrf.mxu0
  %v7993 = vadd.f32 %v7576, %v7992
  %v7994 = vpop.f32.mrf.mxu0
  %v7995 = vadd.f32 %v7578, %v7994
  %7996 = vmatmul.bf16.gmra.mxu0 %v7075
  %v7997 = vpop.f32.mrf.mxu0
  %v7998 = vadd.f32 %v7581, %v7997
  %v7999 = vpop.f32.mrf.mxu0
  %v8000 = vadd.f32 %v7583, %v7999
  %8001 = vmatmul.bf16.gmra.mxu0 %v7077
  %v8002 = vpop.f32.mrf.mxu0
  %v8003 = vadd.f32 %v7586, %v8002
  %v8004 = vpop.f32.mrf.mxu0
  %v8005 = vadd.f32 %v7588, %v8004
  %8006 = vmatmul.bf16.gmra.mxu0 %v7079
  %v8007 = vpop.f32.mrf.mxu0
  %v8008 = vadd.f32 %v7591, %v8007
  %v8009 = vpop.f32.mrf.mxu0
  %v8010 = vadd.f32 %v7593, %v8009
  %8011 = vmatmul.bf16.gmra.mxu0 %v7081
  %v8012 = vpop.f32.mrf.mxu0
  %v8013 = vadd.f32 %v7596, %v8012
  %v8014 = vpop.f32.mrf.mxu0
  %v8015 = vadd.f32 %v7598, %v8014
  %8016 = vmatmul.bf16.gmra.mxu0 %v7083
  %v8017 = vpop.f32.mrf.mxu0
  %v8018 = vadd.f32 %v7601, %v8017
  %v8019 = vpop.f32.mrf.mxu0
  %v8020 = vadd.f32 %v7603, %v8019
  %8021 = vmatmul.bf16.gmra.mxu0 %v7085
  %v8022 = vpop.f32.mrf.mxu0
  %v8023 = vadd.f32 %v7606, %v8022
  %v8024 = vpop.f32.mrf.mxu0
  %v8025 = vadd.f32 %v7608, %v8024
  %8026 = vmatmul.bf16.gmra.mxu0 %v7087
  %v8027 = vpop.f32.mrf.mxu0
  %v8028 = vadd.f32 %v7611, %v8027
  %v8029 = vpop.f32.mrf.mxu0
  %v8030 = vadd.f32 %v7613, %v8029
  %8031 = vmatmul.bf16.gmra.mxu0 %v7089
  %v8032 = vpop.f32.mrf.mxu0
  %v8033 = vadd.f32 %v7616, %v8032
  %v8034 = vpop.f32.mrf.mxu0
  %v8035 = vadd.f32 %v7618, %v8034
  %8036 = vmatmul.bf16.gmra.mxu0 %v7091
  %v8037 = vpop.f32.mrf.mxu0
  %v8038 = vadd.f32 %v7621, %v8037
  %v8039 = vpop.f32.mrf.mxu0
  %v8040 = vadd.f32 %v7623, %v8039
  %8041 = vmatmul.bf16.gmra.mxu0 %v7093
  %v8042 = vpop.f32.mrf.mxu0
  %v8043 = vadd.f32 %v7626, %v8042
  %v8044 = vpop.f32.mrf.mxu0
  %v8045 = vadd.f32 %v7628, %v8044
  %8046 = vmatmul.bf16.gmra.mxu0 %v7095
  %v8047 = vpop.f32.mrf.mxu0
  %v8048 = vadd.f32 %v7631, %v8047
  %v8049 = vpop.f32.mrf.mxu0
  %v8050 = vadd.f32 %v7633, %v8049
  %8051 = vmatmul.bf16.gmra.mxu0 %v7097
  %v8052 = vpop.f32.mrf.mxu0
  %v8053 = vadd.f32 %v7636, %v8052
  %v8054 = vpop.f32.mrf.mxu0
  %v8055 = vadd.f32 %v7638, %v8054
  %8056 = vmatmul.bf16.gmra.mxu0 %v7099
  %v8057 = vpop.f32.mrf.mxu0
  %v8058 = vadd.f32 %v7641, %v8057
  %v8059 = vpop.f32.mrf.mxu0
  %v8060 = vadd.f32 %v7643, %v8059
  %8061 = vdwg.mxu0
  %8062 = vmatpush.bf16.msra.mxu0 0
  %8063 = vmatpush.bf16.msra.mxu0 0
  %8064 = vmatpush.bf16.msra.mxu0 0
  %8065 = vmatpush.bf16.msra.mxu0 0
  %8066 = vmatpush.bf16.msra.mxu0 %v7907
  %8067 = vmatpush.bf16.msra.mxu0 %v7905
  %8068 = vmatpush.bf16.msra.mxu0 %v7903
  %8069 = vmatpush.bf16.msra.mxu0 %v7901
  %8070 = vmatmul.bf16.gmra.mxu0 %v7934
  %v8071 = vpop.f32.mrf.mxu0
  %v8072 = vadd.f32 %v7988, %v8071
  %v8073 = vpop.f32.mrf.mxu0
  %v8074 = vadd.f32 %v7990, %v8073
  %8075 = vmatmul.bf16.gmra.mxu0 %v7937
  %v8076 = vpop.f32.mrf.mxu0
  %v8077 = vadd.f32 %v7993, %v8076
  %v8078 = vpop.f32.mrf.mxu0
  %v8079 = vadd.f32 %v7995, %v8078
  %8080 = vmatmul.bf16.gmra.mxu0 %v7940
  %v8081 = vpop.f32.mrf.mxu0
  %v8082 = vadd.f32 %v7998, %v8081
  %v8083 = vpop.f32.mrf.mxu0
  %v8084 = vadd.f32 %v8000, %v8083
  %8085 = vmatmul.bf16.gmra.mxu0 %v7943
  %v8086 = vpop.f32.mrf.mxu0
  %v8087 = vadd.f32 %v8003, %v8086
  %v8088 = vpop.f32.mrf.mxu0
  %v8089 = vadd.f32 %v8005, %v8088
  %8090 = vmatmul.bf16.gmra.mxu0 %v7946
  %v8091 = vpop.f32.mrf.mxu0
  %v8092 = vadd.f32 %v8008, %v8091
  %v8093 = vpop.f32.mrf.mxu0
  %v8094 = vadd.f32 %v8010, %v8093
  %8095 = vmatmul.bf16.gmra.mxu0 %v7949
  %v8096 = vpop.f32.mrf.mxu0
  %v8097 = vadd.f32 %v8013, %v8096
  %v8098 = vpop.f32.mrf.mxu0
  %v8099 = vadd.f32 %v8015, %v8098
  %8100 = vmatmul.bf16.gmra.mxu0 %v7952
  %v8101 = vpop.f32.mrf.mxu0
  %v8102 = vadd.f32 %v8018, %v8101
  %v8103 = vpop.f32.mrf.mxu0
  %v8104 = vadd.f32 %v8020, %v8103
  %8105 = vmatmul.bf16.gmra.mxu0 %v7955
  %v8106 = vpop.f32.mrf.mxu0
  %v8107 = vadd.f32 %v8023, %v8106
  %v8108 = vpop.f32.mrf.mxu0
  %v8109 = vadd.f32 %v8025, %v8108
  %8110 = vmatmul.bf16.gmra.mxu0 %v7958
  %v8111 = vpop.f32.mrf.mxu0
  %v8112 = vadd.f32 %v8028, %v8111
  %v8113 = vpop.f32.mrf.mxu0
  %v8114 = vadd.f32 %v8030, %v8113
  %8115 = vmatmul.bf16.gmra.mxu0 %v7961
  %v8116 = vpop.f32.mrf.mxu0
  %v8117 = vadd.f32 %v8033, %v8116
  %v8118 = vpop.f32.mrf.mxu0
  %v8119 = vadd.f32 %v8035, %v8118
  %8120 = vmatmul.bf16.gmra.mxu0 %v7964
  %v8121 = vpop.f32.mrf.mxu0
  %v8122 = vadd.f32 %v8038, %v8121
  %v8123 = vpop.f32.mrf.mxu0
  %v8124 = vadd.f32 %v8040, %v8123
  %8125 = vmatmul.bf16.gmra.mxu0 %v7967
  %v8126 = vpop.f32.mrf.mxu0
  %v8127 = vadd.f32 %v8043, %v8126
  %v8128 = vpop.f32.mrf.mxu0
  %v8129 = vadd.f32 %v8045, %v8128
  %8130 = vmatmul.bf16.gmra.mxu0 %v7970
  %v8131 = vpop.f32.mrf.mxu0
  %v8132 = vadd.f32 %v8048, %v8131
  %v8133 = vpop.f32.mrf.mxu0
  %v8134 = vadd.f32 %v8050, %v8133
  %8135 = vmatmul.bf16.gmra.mxu0 %v7973
  %v8136 = vpop.f32.mrf.mxu0
  %v8137 = vadd.f32 %v8053, %v8136
  %v8138 = vpop.f32.mrf.mxu0
  %v8139 = vadd.f32 %v8055, %v8138
  %8140 = vmatmul.bf16.gmra.mxu0 %v7976
  %v8141 = vpop.f32.mrf.mxu0
  %v8142 = vadd.f32 %v8058, %v8141
  %v8143 = vpop.f32.mrf.mxu0
  %v8144 = vadd.f32 %v8060, %v8143
  %8145 = vdwg.mxu0
  %8146 = vmatpush.bf16.msra.mxu0 %v7900
  %8147 = vmatpush.bf16.msra.mxu0 %v7898
  %8148 = vmatpush.bf16.msra.mxu0 %v7896
  %8149 = vmatpush.bf16.msra.mxu0 %v7894
  %8150 = vmatpush.bf16.msra.mxu0 %v7892
  %8151 = vmatpush.bf16.msra.mxu0 %v7890
  %8152 = vmatpush.bf16.msra.mxu0 %v7888
  %8153 = vmatpush.bf16.msra.mxu0 %v7886
  %8154 = vmatmul.bf16.gmra.mxu0 %v7071
  %v8155 = vpop.f32.mrf.mxu0
  %v8156 = vadd.f32 %v7739, %v8155
  %v8157 = vpop.f32.mrf.mxu0
  %v8158 = vadd.f32 %v7741, %v8157
  %8159 = vmatmul.bf16.gmra.mxu0 %v7073
  %v8160 = vpop.f32.mrf.mxu0
  %v8161 = vadd.f32 %v7744, %v8160
  %v8162 = vpop.f32.mrf.mxu0
  %v8163 = vadd.f32 %v7746, %v8162
  %8164 = vmatmul.bf16.gmra.mxu0 %v7075
  %v8165 = vpop.f32.mrf.mxu0
  %v8166 = vadd.f32 %v7749, %v8165
  %v8167 = vpop.f32.mrf.mxu0
  %v8168 = vadd.f32 %v7751, %v8167
  %8169 = vmatmul.bf16.gmra.mxu0 %v7077
  %v8170 = vpop.f32.mrf.mxu0
  %v8171 = vadd.f32 %v7754, %v8170
  %v8172 = vpop.f32.mrf.mxu0
  %v8173 = vadd.f32 %v7756, %v8172
  %8174 = vmatmul.bf16.gmra.mxu0 %v7079
  %v8175 = vpop.f32.mrf.mxu0
  %v8176 = vadd.f32 %v7759, %v8175
  %v8177 = vpop.f32.mrf.mxu0
  %v8178 = vadd.f32 %v7761, %v8177
  %8179 = vmatmul.bf16.gmra.mxu0 %v7081
  %v8180 = vpop.f32.mrf.mxu0
  %v8181 = vadd.f32 %v7764, %v8180
  %v8182 = vpop.f32.mrf.mxu0
  %v8183 = vadd.f32 %v7766, %v8182
  %8184 = vmatmul.bf16.gmra.mxu0 %v7083
  %v8185 = vpop.f32.mrf.mxu0
  %v8186 = vadd.f32 %v7769, %v8185
  %v8187 = vpop.f32.mrf.mxu0
  %v8188 = vadd.f32 %v7771, %v8187
  %8189 = vmatmul.bf16.gmra.mxu0 %v7085
  %v8190 = vpop.f32.mrf.mxu0
  %v8191 = vadd.f32 %v7774, %v8190
  %v8192 = vpop.f32.mrf.mxu0
  %v8193 = vadd.f32 %v7776, %v8192
  %8194 = vmatmul.bf16.gmra.mxu0 %v7087
  %v8195 = vpop.f32.mrf.mxu0
  %v8196 = vadd.f32 %v7779, %v8195
  %v8197 = vpop.f32.mrf.mxu0
  %v8198 = vadd.f32 %v7781, %v8197
  %8199 = vmatmul.bf16.gmra.mxu0 %v7089
  %v8200 = vpop.f32.mrf.mxu0
  %v8201 = vadd.f32 %v7784, %v8200
  %v8202 = vpop.f32.mrf.mxu0
  %v8203 = vadd.f32 %v7786, %v8202
  %8204 = vmatmul.bf16.gmra.mxu0 %v7091
  %v8205 = vpop.f32.mrf.mxu0
  %v8206 = vadd.f32 %v7789, %v8205
  %v8207 = vpop.f32.mrf.mxu0
  %v8208 = vadd.f32 %v7791, %v8207
  %8209 = vmatmul.bf16.gmra.mxu0 %v7093
  %v8210 = vpop.f32.mrf.mxu0
  %v8211 = vadd.f32 %v7794, %v8210
  %v8212 = vpop.f32.mrf.mxu0
  %v8213 = vadd.f32 %v7796, %v8212
  %8214 = vmatmul.bf16.gmra.mxu0 %v7095
  %v8215 = vpop.f32.mrf.mxu0
  %v8216 = vadd.f32 %v7799, %v8215
  %v8217 = vpop.f32.mrf.mxu0
  %v8218 = vadd.f32 %v7801, %v8217
  %8219 = vmatmul.bf16.gmra.mxu0 %v7097
  %v8220 = vpop.f32.mrf.mxu0
  %v8221 = vadd.f32 %v7804, %v8220
  %v8222 = vpop.f32.mrf.mxu0
  %v8223 = vadd.f32 %v7806, %v8222
  %8224 = vmatmul.bf16.gmra.mxu0 %v7099
  %v8225 = vpop.f32.mrf.mxu0
  %v8226 = vadd.f32 %v7809, %v8225
  %v8227 = vpop.f32.mrf.mxu0
  %v8228 = vadd.f32 %v7811, %v8227
  %8229 = vdwg.mxu0
  %8230 = vmatpush.bf16.msra.mxu0 0
  %8231 = vmatpush.bf16.msra.mxu0 0
  %8232 = vmatpush.bf16.msra.mxu0 0
  %8233 = vmatpush.bf16.msra.mxu0 0
  %8234 = vmatpush.bf16.msra.mxu0 %v7908
  %8235 = vmatpush.bf16.msra.mxu0 %v7906
  %8236 = vmatpush.bf16.msra.mxu0 %v7904
  %8237 = vmatpush.bf16.msra.mxu0 %v7902
  %8238 = vmatmul.bf16.gmra.mxu0 %v7934
  %v8239 = vpop.f32.mrf.mxu0
  %v8240 = vadd.f32 %v8156, %v8239
  %v8241 = vpop.f32.mrf.mxu0
  %v8242 = vadd.f32 %v8158, %v8241
  %8243 = vmatmul.bf16.gmra.mxu0 %v7937
  %v8244 = vpop.f32.mrf.mxu0
  %v8245 = vadd.f32 %v8161, %v8244
  %v8246 = vpop.f32.mrf.mxu0
  %v8247 = vadd.f32 %v8163, %v8246
  %8248 = vmatmul.bf16.gmra.mxu0 %v7940
  %v8249 = vpop.f32.mrf.mxu0
  %v8250 = vadd.f32 %v8166, %v8249
  %v8251 = vpop.f32.mrf.mxu0
  %v8252 = vadd.f32 %v8168, %v8251
  %8253 = vmatmul.bf16.gmra.mxu0 %v7943
  %v8254 = vpop.f32.mrf.mxu0
  %v8255 = vadd.f32 %v8171, %v8254
  %v8256 = vpop.f32.mrf.mxu0
  %v8257 = vadd.f32 %v8173, %v8256
  %8258 = vmatmul.bf16.gmra.mxu0 %v7946
  %v8259 = vpop.f32.mrf.mxu0
  %v8260 = vadd.f32 %v8176, %v8259
  %v8261 = vpop.f32.mrf.mxu0
  %v8262 = vadd.f32 %v8178, %v8261
  %8263 = vmatmul.bf16.gmra.mxu0 %v7949
  %v8264 = vpop.f32.mrf.mxu0
  %v8265 = vadd.f32 %v8181, %v8264
  %v8266 = vpop.f32.mrf.mxu0
  %v8267 = vadd.f32 %v8183, %v8266
  %8268 = vmatmul.bf16.gmra.mxu0 %v7952
  %v8269 = vpop.f32.mrf.mxu0
  %v8270 = vadd.f32 %v8186, %v8269
  %v8271 = vpop.f32.mrf.mxu0
  %v8272 = vadd.f32 %v8188, %v8271
  %8273 = vmatmul.bf16.gmra.mxu0 %v7955
  %v8274 = vpop.f32.mrf.mxu0
  %v8275 = vadd.f32 %v8191, %v8274
  %v8276 = vpop.f32.mrf.mxu0
  %v8277 = vadd.f32 %v8193, %v8276
  %8278 = vmatmul.bf16.gmra.mxu0 %v7958
  %v8279 = vpop.f32.mrf.mxu0
  %v8280 = vadd.f32 %v8196, %v8279
  %v8281 = vpop.f32.mrf.mxu0
  %v8282 = vadd.f32 %v8198, %v8281
  %8283 = vmatmul.bf16.gmra.mxu0 %v7961
  %v8284 = vpop.f32.mrf.mxu0
  %v8285 = vadd.f32 %v8201, %v8284
  %v8286 = vpop.f32.mrf.mxu0
  %v8287 = vadd.f32 %v8203, %v8286
  %8288 = vmatmul.bf16.gmra.mxu0 %v7964
  %v8289 = vpop.f32.mrf.mxu0
  %v8290 = vadd.f32 %v8206, %v8289
  %v8291 = vpop.f32.mrf.mxu0
  %v8292 = vadd.f32 %v8208, %v8291
  %8293 = vmatmul.bf16.gmra.mxu0 %v7967
  %v8294 = vpop.f32.mrf.mxu0
  %v8295 = vadd.f32 %v8211, %v8294
  %v8296 = vpop.f32.mrf.mxu0
  %v8297 = vadd.f32 %v8213, %v8296
  %8298 = vmatmul.bf16.gmra.mxu0 %v7970
  %v8299 = vpop.f32.mrf.mxu0
  %v8300 = vadd.f32 %v8216, %v8299
  %v8301 = vpop.f32.mrf.mxu0
  %v8302 = vadd.f32 %v8218, %v8301
  %8303 = vmatmul.bf16.gmra.mxu0 %v7973
  %v8304 = vpop.f32.mrf.mxu0
  %v8305 = vadd.f32 %v8221, %v8304
  %v8306 = vpop.f32.mrf.mxu0
  %v8307 = vadd.f32 %v8223, %v8306
  %8308 = vmatmul.bf16.gmra.mxu0 %v7976
  %v8309 = vpop.f32.mrf.mxu0
  %v8310 = vadd.f32 %v8226, %v8309
  %v8311 = vpop.f32.mrf.mxu0
  %v8312 = vadd.f32 %v8228, %v8311
  %8313 = vdwg.mxu0
  %v8314 = vrot.slane %v6939, 1
  %v8315 = vrot.slane %v6940, 1
  %v8316 = vrot.slane %v6941, 1
  %v8317 = vrot.slane %v6942, 1
  %v8318 = vrot.slane %v6943, 1
  %v8319 = vrot.slane %v6944, 1
  %v8320 = vrot.slane %v6945, 1
  %v8321 = vrot.slane %v6946, 1
  %v8322 = vrot.slane %v6947, 1
  %v8323 = vrot.slane %v6948, 1
  %v8324 = vrot.slane %v6949, 1
  %v8325 = vrot.slane %v6950, 1
  %v8326 = vrot.slane %v6951, 1
  %v8327 = vrot.slane %v6952, 1
  %v8328 = vrot.slane %v6953, 1
  %v8329 = vrot.slane %v6954, 1
  %v8330 = vrot.slane %v6955, 1
  %v8331 = vrot.slane %v6956, 1
  %v8332 = vrot.slane %v6957, 1
  %v8333 = vrot.slane %v6958, 1
  %v8334 = vrot.slane %v6959, 1
  %v8335 = vrot.slane %v6960, 1
  %v8336 = vrot.slane %v6961, 1
  %v8337 = vrot.slane %v6962, 1
  %v8338 = vrot.slane %v6963, 1
  %v8339 = vrot.slane %v6964, 1
  %v8340 = vrot.slane %v6965, 1
  %v8341 = vrot.slane %v6966, 1
  %v8342 = vrot.slane %v6967, 1
  %v8343 = vrot.slane %v6968, 1
  %v8344 = vrot.slane %v6969, 1
  %v8345 = vrot.slane %v6970, 1
  %v8346 = vrot.slane %v6971, 1
  %v8347 = vrot.slane %v6972, 1
  %v8348 = vrot.slane %v6973, 1
  %v8349 = vrot.slane %v6974, 1
  %v8350 = vrot.slane %v6975, 1
  %v8351 = vrot.slane %v6976, 1
  %v8352 = vrot.slane %v6977, 1
  %v8353 = vrot.slane %v6978, 1
  %v8354 = vrot.slane %v6979, 1
  %v8355 = vrot.slane %v6980, 1
  %v8356 = vrot.slane %v6981, 1
  %v8357 = vrot.slane %v6982, 1
  %v8358 = vrot.slane %v6983, 1
  %v8359 = vrot.slane %v6984, 1
  %v8360 = vrot.slane %v6985, 1
  %v8361 = vrot.slane %v6986, 1
  %v8362 = vrot.slane %v6987, 1
  %v8363 = vrot.slane %v6988, 1
  %v8364 = vrot.slane %v6989, 1
  %v8365 = vrot.slane %v6990, 1
  %v8366 = vrot.slane %v6991, 1
  %v8367 = vrot.slane %v6992, 1
  %v8368 = vrot.slane %v6993, 1
  %v8369 = vrot.slane %v6994, 1
  %v8370 = vrot.slane %v6995, 1
  %v8371 = vrot.slane %v6996, 1
  %v8372 = vrot.slane %v6997, 1
  %v8373 = vrot.slane %v6998, 1
  %v8374 = vsel %vm1913, %v8370, %v8372
  %v8375 = vsel %vm1913, %v8371, %v8373
  %v8376 = vsel %vm1913, %v8368, %v8370
  %v8377 = vsel %vm1913, %v8369, %v8371
  %v8378 = vsel %vm1913, %v8366, %v8368
  %v8379 = vsel %vm1913, %v8367, %v8369
  %v8380 = vsel %vm1913, %v8364, %v8366
  %v8381 = vsel %vm1913, %v8365, %v8367
  %v8382 = vsel %vm1913, %v8362, %v8364
  %v8383 = vsel %vm1913, %v8363, %v8365
  %v8384 = vsel %vm1913, %v8360, %v8362
  %v8385 = vsel %vm1913, %v8361, %v8363
  %v8386 = vsel %vm1913, %v8358, %v8360
  %v8387 = vsel %vm1913, %v8359, %v8361
  %v8388 = vsel %vm1913, %v8356, %v8358
  %v8389 = vsel %vm1913, %v8357, %v8359
  %v8390 = vsel %vm1913, %v8354, %v8356
  %v8391 = vsel %vm1913, %v8355, %v8357
  %v8392 = vsel %vm1913, %v8352, %v8354
  %v8393 = vsel %vm1913, %v8353, %v8355
  %v8394 = vsel %vm1913, %v8350, %v8352
  %v8395 = vsel %vm1913, %v8351, %v8353
  %v8396 = vsel %vm1913, %v8348, %v8350
  %v8397 = vsel %vm1913, %v8349, %v8351
  %v8398 = vsel %vm1913, %v8346, %v8348
  %v8399 = vsel %vm1913, %v8347, %v8349
  %v8400 = vsel %vm1913, %v8344, %v8346
  %v8401 = vsel %vm1913, %v8345, %v8347
  %v8402 = vsel %vm1913, %v8342, %v8344
  %v8403 = vsel %vm1913, %v8343, %v8345
  %v8404 = vsel %vm1913, %v8340, %v8342
  %v8405 = vsel %vm1913, %v8341, %v8343
  %v8406 = vsel %vm1913, %v8338, %v8340
  %v8407 = vsel %vm1913, %v8339, %v8341
  %v8408 = vsel %vm1913, %v8336, %v8338
  %v8409 = vsel %vm1913, %v8337, %v8339
  %v8410 = vsel %vm1913, %v8334, %v8336
  %v8411 = vsel %vm1913, %v8335, %v8337
  %v8412 = vsel %vm1913, %v8332, %v8334
  %v8413 = vsel %vm1913, %v8333, %v8335
  %v8414 = vsel %vm1913, %v8330, %v8332
  %v8415 = vsel %vm1913, %v8331, %v8333
  %v8416 = vsel %vm1913, %v8328, %v8330
  %v8417 = vsel %vm1913, %v8329, %v8331
  %v8418 = vsel %vm1913, %v8326, %v8328
  %v8419 = vsel %vm1913, %v8327, %v8329
  %v8420 = vsel %vm1913, %v8324, %v8326
  %v8421 = vsel %vm1913, %v8325, %v8327
  %v8422 = vsel %vm1913, %v8322, %v8324
  %v8423 = vsel %vm1913, %v8323, %v8325
  %v8424 = vsel %vm1913, %v8320, %v8322
  %v8425 = vsel %vm1913, %v8321, %v8323
  %v8426 = vsel %vm1913, %v8318, %v8320
  %v8427 = vsel %vm1913, %v8319, %v8321
  %v8428 = vsel %vm1913, %v8316, %v8318
  %v8429 = vsel %vm1913, %v8317, %v8319
  %v8430 = vsel %vm1913, %v8314, %v8316
  %v8431 = vsel %vm1913, %v8315, %v8317
  %v8432 = vsel %vm1913, %v8372, %v8314
  %v8433 = vsel %vm1913, %v8373, %v8315
  %v8434 = vsel %vm1974, 0.0, %v8430
  %v8435 = vsel %vm1974, 0.0, %v8431
  %v8436 = vsel %vm1975, 0.0, %v8428
  %v8437 = vsel %vm1975, 0.0, %v8429
  %v8438 = vsel %vm1976, 0.0, %v8426
  %v8439 = vsel %vm1976, 0.0, %v8427
  %v8440 = vsel %vm1977, 0.0, %v8424
  %v8441 = vsel %vm1977, 0.0, %v8425
  %v8442 = vsel %vm1978, 0.0, %v8422
  %v8443 = vsel %vm1978, 0.0, %v8423
  %v8444 = vsel %vm1979, 0.0, %v8420
  %v8445 = vsel %vm1979, 0.0, %v8421
  %v8446 = vsel %vm1980, 0.0, %v8418
  %v8447 = vsel %vm1980, 0.0, %v8419
  %v8448 = vsel %vm1981, 0.0, %v8416
  %v8449 = vsel %vm1981, 0.0, %v8417
  %v8450 = vsel %vm1982, 0.0, %v8414
  %v8451 = vsel %vm1982, 0.0, %v8415
  %v8452 = vsel %vm1983, 0.0, %v8412
  %v8453 = vsel %vm1983, 0.0, %v8413
  %v8454 = vsel %vm1984, 0.0, %v8410
  %v8455 = vsel %vm1984, 0.0, %v8411
  %v8456 = vsel %vm1985, 0.0, %v8408
  %v8457 = vsel %vm1985, 0.0, %v8409
  %v8458 = vsel %vm1986, 0.0, %v8406
  %v8459 = vsel %vm1986, 0.0, %v8407
  %v8460 = vsel %vm1987, 0.0, %v8404
  %v8461 = vsel %vm1987, 0.0, %v8405
  %v8462 = vsel %vm1988, 0.0, %v8402
  %v8463 = vsel %vm1988, 0.0, %v8403
  %v8464 = vsel %vm1989, 0.0, %v8400
  %v8465 = vsel %vm1989, 0.0, %v8401
  %v8466 = vsel %vm1990, 0.0, %v8398
  %v8467 = vsel %vm1990, 0.0, %v8399
  %v8468 = vsel %vm1991, 0.0, %v8396
  %v8469 = vsel %vm1991, 0.0, %v8397
  %v8470 = vsel %vm1992, 0.0, %v8394
  %v8471 = vsel %vm1992, 0.0, %v8395
  %v8472 = vsel %vm1993, 0.0, %v8392
  %v8473 = vsel %vm1993, 0.0, %v8393
  %v8474 = vsel %vm1994, 0.0, %v8390
  %v8475 = vsel %vm1994, 0.0, %v8391
  %v8476 = vsel %vm1995, 0.0, %v8388
  %v8477 = vsel %vm1995, 0.0, %v8389
  %v8478 = vsel %vm1996, 0.0, %v8386
  %v8479 = vsel %vm1996, 0.0, %v8387
  %v8480 = vsel %vm1997, 0.0, %v8384
  %v8481 = vsel %vm1997, 0.0, %v8385
  %v8482 = vsel %vm1998, 0.0, %v8382
  %v8483 = vsel %vm1998, 0.0, %v8383
  %v8484 = vsel %vm1999, 0.0, %v8380
  %v8485 = vsel %vm1999, 0.0, %v8381
  %v8486 = vsel %vm2000, 0.0, %v8378
  %v8487 = vsel %vm2000, 0.0, %v8379
  %v8488 = vsel %vm2001, 0.0, %v8376
  %v8489 = vsel %vm2001, 0.0, %v8377
  %v8490 = vsel %vm2002, 0.0, %v8374
  %v8491 = vsel %vm2002, 0.0, %v8375
  %v8492 = vsel %vm2003, 0.0, %v8432
  %v8493 = vsel %vm2003, 0.0, %v8433
  %v8494 = vpack.c.bf16 %v8436, %v8434
  %v8495 = vpack.c.bf16 %v8437, %v8435
  %v8496 = vpack.c.bf16 %v8440, %v8438
  %v8497 = vpack.c.bf16 %v8441, %v8439
  %v8498 = vpack.c.bf16 %v8444, %v8442
  %v8499 = vpack.c.bf16 %v8445, %v8443
  %v8500 = vpack.c.bf16 %v8448, %v8446
  %v8501 = vpack.c.bf16 %v8449, %v8447
  %v8502 = vpack.c.bf16 %v8452, %v8450
  %v8503 = vpack.c.bf16 %v8453, %v8451
  %v8504 = vpack.c.bf16 %v8456, %v8454
  %v8505 = vpack.c.bf16 %v8457, %v8455
  %v8506 = vpack.c.bf16 %v8460, %v8458
  %v8507 = vpack.c.bf16 %v8461, %v8459
  %v8508 = vpack.c.bf16 %v8464, %v8462
  %v8509 = vpack.c.bf16 %v8465, %v8463
  %v8510 = vpack.c.bf16 %v8468, %v8466
  %v8511 = vpack.c.bf16 %v8469, %v8467
  %v8512 = vpack.c.bf16 %v8472, %v8470
  %v8513 = vpack.c.bf16 %v8473, %v8471
  %v8514 = vpack.c.bf16 %v8476, %v8474
  %v8515 = vpack.c.bf16 %v8477, %v8475
  %v8516 = vpack.c.bf16 %v8480, %v8478
  %v8517 = vpack.c.bf16 %v8481, %v8479
  %v8518 = vpack.c.bf16 %v8484, %v8482
  %v8519 = vpack.c.bf16 %v8485, %v8483
  %v8520 = vpack.c.bf16 %v8488, %v8486
  %v8521 = vpack.c.bf16 %v8489, %v8487
  %v8522 = vpack.c.bf16 %v8492, %v8490
  %v8523 = vpack.c.bf16 %v8493, %v8491
  %v8548 = vunpack.c.l.b16 %v7047
  %v8549 = vunpack.c.h.b16 %v7047
  %v8550 = vunpack.c.l.b16 %v7048
  %v8551 = vunpack.c.h.b16 %v7048
  %v8552 = vunpack.c.l.b16 %v7049
  %v8553 = vunpack.c.h.b16 %v7049
  %v8554 = vunpack.c.l.b16 %v7050
  %v8555 = vunpack.c.h.b16 %v7050
  %v8556 = vunpack.c.l.b16 %v7051
  %v8557 = vunpack.c.h.b16 %v7051
  %v8558 = vunpack.c.l.b16 %v7052
  %v8559 = vunpack.c.h.b16 %v7052
  %v8560 = vunpack.c.l.b16 %v7053
  %v8561 = vunpack.c.h.b16 %v7053
  %v8562 = vunpack.c.l.b16 %v7054
  %v8563 = vunpack.c.h.b16 %v7054
  %v8564 = vunpack.c.l.b16 %v7055
  %v8565 = vunpack.c.h.b16 %v7055
  %v8566 = vunpack.c.l.b16 %v7056
  %v8567 = vunpack.c.h.b16 %v7056
  %v8568 = vunpack.c.l.b16 %v7057
  %v8569 = vunpack.c.h.b16 %v7057
  %v8570 = vunpack.c.l.b16 %v7058
  %v8571 = vunpack.c.h.b16 %v7058
  %v8572 = vunpack.c.l.b16 %v7059
  %v8573 = vunpack.c.h.b16 %v7059
  %v8574 = vunpack.c.l.b16 %v7060
  %v8575 = vunpack.c.h.b16 %v7060
  %v8576 = vunpack.c.l.b16 %v7061
  %v8577 = vunpack.c.h.b16 %v7061
  %v8578 = vunpack.c.l.b16 %v7062
  %v8579 = vunpack.c.h.b16 %v7062
  %v8580 = vunpack.c.l.b16 %v7063
  %v8581 = vunpack.c.h.b16 %v7063
  %v8582 = vunpack.c.l.b16 %v7064
  %v8583 = vunpack.c.h.b16 %v7064
  %v8584 = vunpack.c.l.b16 %v7065
  %v8585 = vunpack.c.h.b16 %v7065
  %v8586 = vunpack.c.l.b16 %v7066
  %v8587 = vunpack.c.h.b16 %v7066
  %v8588 = vunpack.c.l.b16 %v7067
  %v8589 = vunpack.c.h.b16 %v7067
  %v8590 = vunpack.c.l.b16 %v7068
  %v8591 = vunpack.c.h.b16 %v7068
  %v8592 = vunpack.c.l.b16 %v7069
  %v8593 = vunpack.c.h.b16 %v7069
  %v8594 = vunpack.c.l.b16 %v7070
  %v8595 = vunpack.c.h.b16 %v7070
  %v8596 = vpack.c.b16 %v8550, %v8548
  %v8597 = vpack.c.b16 %v8551, %v8549
  %v8598 = vpack.c.b16 %v8554, %v8552
  %v8599 = vpack.c.b16 %v8555, %v8553
  %v8600 = vpack.c.b16 %v8558, %v8556
  %v8601 = vpack.c.b16 %v8559, %v8557
  %v8602 = vpack.c.b16 %v8562, %v8560
  %v8603 = vpack.c.b16 %v8563, %v8561
  %v8604 = vpack.c.b16 %v8566, %v8564
  %v8605 = vpack.c.b16 %v8567, %v8565
  %v8606 = vpack.c.b16 %v8570, %v8568
  %v8607 = vpack.c.b16 %v8571, %v8569
  %v8608 = vpack.c.b16 %v8574, %v8572
  %v8609 = vpack.c.b16 %v8575, %v8573
  %v8610 = vpack.c.b16 %v8578, %v8576
  %v8611 = vpack.c.b16 %v8579, %v8577
  %v8612 = vpack.c.b16 %v8582, %v8580
  %v8613 = vpack.c.b16 %v8583, %v8581
  %v8614 = vpack.c.b16 %v8586, %v8584
  %v8615 = vpack.c.b16 %v8587, %v8585
  %v8616 = vpack.c.b16 %v8590, %v8588
  %v8617 = vpack.c.b16 %v8591, %v8589
  %v8618 = vpack.c.b16 %v8594, %v8592
  %v8619 = vpack.c.b16 %v8595, %v8593
  %v8645 = vsel %vm7431, %v8495, 0
  %v8648 = vsel %vm7431, %v8497, 0
  %v8651 = vsel %vm7431, %v8499, 0
  %v8654 = vsel %vm7431, %v8501, 0
  %v8657 = vsel %vm7431, %v8503, 0
  %v8660 = vsel %vm7431, %v8505, 0
  %v8663 = vsel %vm7431, %v8507, 0
  %v8666 = vsel %vm7431, %v8509, 0
  %v8669 = vsel %vm7431, %v8511, 0
  %v8672 = vsel %vm7431, %v8513, 0
  %v8675 = vsel %vm7431, %v8515, 0
  %v8678 = vsel %vm7431, %v8517, 0
  %v8681 = vsel %vm7431, %v8519, 0
  %v8684 = vsel %vm7431, %v8521, 0
  %v8687 = vsel %vm7431, %v8523, 0
  %8689 = vmatpush.bf16.msra.mxu0 %v8610
  %8690 = vmatpush.bf16.msra.mxu0 %v8608
  %8691 = vmatpush.bf16.msra.mxu0 %v8606
  %8692 = vmatpush.bf16.msra.mxu0 %v8604
  %8693 = vmatpush.bf16.msra.mxu0 %v8602
  %8694 = vmatpush.bf16.msra.mxu0 %v8600
  %8695 = vmatpush.bf16.msra.mxu0 %v8598
  %8696 = vmatpush.bf16.msra.mxu0 %v8596
  %8697 = vmatmul.bf16.gmra.mxu0 %v8494
  %v8698 = vpop.f32.mrf.mxu0
  %v8699 = vadd.f32 0.0, %v8698
  %v8700 = vpop.f32.mrf.mxu0
  %v8701 = vadd.f32 0.0, %v8700
  %8702 = vmatmul.bf16.gmra.mxu0 %v8496
  %v8703 = vpop.f32.mrf.mxu0
  %v8704 = vadd.f32 0.0, %v8703
  %v8705 = vpop.f32.mrf.mxu0
  %v8706 = vadd.f32 0.0, %v8705
  %8707 = vmatmul.bf16.gmra.mxu0 %v8498
  %v8708 = vpop.f32.mrf.mxu0
  %v8709 = vadd.f32 0.0, %v8708
  %v8710 = vpop.f32.mrf.mxu0
  %v8711 = vadd.f32 0.0, %v8710
  %8712 = vmatmul.bf16.gmra.mxu0 %v8500
  %v8713 = vpop.f32.mrf.mxu0
  %v8714 = vadd.f32 0.0, %v8713
  %v8715 = vpop.f32.mrf.mxu0
  %v8716 = vadd.f32 0.0, %v8715
  %8717 = vmatmul.bf16.gmra.mxu0 %v8502
  %v8718 = vpop.f32.mrf.mxu0
  %v8719 = vadd.f32 0.0, %v8718
  %v8720 = vpop.f32.mrf.mxu0
  %v8721 = vadd.f32 0.0, %v8720
  %8722 = vmatmul.bf16.gmra.mxu0 %v8504
  %v8723 = vpop.f32.mrf.mxu0
  %v8724 = vadd.f32 0.0, %v8723
  %v8725 = vpop.f32.mrf.mxu0
  %v8726 = vadd.f32 0.0, %v8725
  %8727 = vmatmul.bf16.gmra.mxu0 %v8506
  %v8728 = vpop.f32.mrf.mxu0
  %v8729 = vadd.f32 0.0, %v8728
  %v8730 = vpop.f32.mrf.mxu0
  %v8731 = vadd.f32 0.0, %v8730
  %8732 = vmatmul.bf16.gmra.mxu0 %v8508
  %v8733 = vpop.f32.mrf.mxu0
  %v8734 = vadd.f32 0.0, %v8733
  %v8735 = vpop.f32.mrf.mxu0
  %v8736 = vadd.f32 0.0, %v8735
  %8737 = vmatmul.bf16.gmra.mxu0 %v8510
  %v8738 = vpop.f32.mrf.mxu0
  %v8739 = vadd.f32 0.0, %v8738
  %v8740 = vpop.f32.mrf.mxu0
  %v8741 = vadd.f32 0.0, %v8740
  %8742 = vmatmul.bf16.gmra.mxu0 %v8512
  %v8743 = vpop.f32.mrf.mxu0
  %v8744 = vadd.f32 0.0, %v8743
  %v8745 = vpop.f32.mrf.mxu0
  %v8746 = vadd.f32 0.0, %v8745
  %8747 = vmatmul.bf16.gmra.mxu0 %v8514
  %v8748 = vpop.f32.mrf.mxu0
  %v8749 = vadd.f32 0.0, %v8748
  %v8750 = vpop.f32.mrf.mxu0
  %v8751 = vadd.f32 0.0, %v8750
  %8752 = vmatmul.bf16.gmra.mxu0 %v8516
  %v8753 = vpop.f32.mrf.mxu0
  %v8754 = vadd.f32 0.0, %v8753
  %v8755 = vpop.f32.mrf.mxu0
  %v8756 = vadd.f32 0.0, %v8755
  %8757 = vmatmul.bf16.gmra.mxu0 %v8518
  %v8758 = vpop.f32.mrf.mxu0
  %v8759 = vadd.f32 0.0, %v8758
  %v8760 = vpop.f32.mrf.mxu0
  %v8761 = vadd.f32 0.0, %v8760
  %8762 = vmatmul.bf16.gmra.mxu0 %v8520
  %v8763 = vpop.f32.mrf.mxu0
  %v8764 = vadd.f32 0.0, %v8763
  %v8765 = vpop.f32.mrf.mxu0
  %v8766 = vadd.f32 0.0, %v8765
  %8767 = vmatmul.bf16.gmra.mxu0 %v8522
  %v8768 = vpop.f32.mrf.mxu0
  %v8769 = vadd.f32 0.0, %v8768
  %v8770 = vpop.f32.mrf.mxu0
  %v8771 = vadd.f32 0.0, %v8770
  %8772 = vdwg.mxu0
  %8773 = vmatpush.bf16.msra.mxu0 0
  %8774 = vmatpush.bf16.msra.mxu0 0
  %8775 = vmatpush.bf16.msra.mxu0 0
  %8776 = vmatpush.bf16.msra.mxu0 0
  %8777 = vmatpush.bf16.msra.mxu0 %v8618
  %8778 = vmatpush.bf16.msra.mxu0 %v8616
  %8779 = vmatpush.bf16.msra.mxu0 %v8614
  %8780 = vmatpush.bf16.msra.mxu0 %v8612
  %8781 = vmatmul.bf16.gmra.mxu0 %v8645
  %v8782 = vpop.f32.mrf.mxu0
  %v8783 = vadd.f32 %v8699, %v8782
  %v8784 = vpop.f32.mrf.mxu0
  %v8785 = vadd.f32 %v8701, %v8784
  %8786 = vmatmul.bf16.gmra.mxu0 %v8648
  %v8787 = vpop.f32.mrf.mxu0
  %v8788 = vadd.f32 %v8704, %v8787
  %v8789 = vpop.f32.mrf.mxu0
  %v8790 = vadd.f32 %v8706, %v8789
  %8791 = vmatmul.bf16.gmra.mxu0 %v8651
  %v8792 = vpop.f32.mrf.mxu0
  %v8793 = vadd.f32 %v8709, %v8792
  %v8794 = vpop.f32.mrf.mxu0
  %v8795 = vadd.f32 %v8711, %v8794
  %8796 = vmatmul.bf16.gmra.mxu0 %v8654
  %v8797 = vpop.f32.mrf.mxu0
  %v8798 = vadd.f32 %v8714, %v8797
  %v8799 = vpop.f32.mrf.mxu0
  %v8800 = vadd.f32 %v8716, %v8799
  %8801 = vmatmul.bf16.gmra.mxu0 %v8657
  %v8802 = vpop.f32.mrf.mxu0
  %v8803 = vadd.f32 %v8719, %v8802
  %v8804 = vpop.f32.mrf.mxu0
  %v8805 = vadd.f32 %v8721, %v8804
  %8806 = vmatmul.bf16.gmra.mxu0 %v8660
  %v8807 = vpop.f32.mrf.mxu0
  %v8808 = vadd.f32 %v8724, %v8807
  %v8809 = vpop.f32.mrf.mxu0
  %v8810 = vadd.f32 %v8726, %v8809
  %8811 = vmatmul.bf16.gmra.mxu0 %v8663
  %v8812 = vpop.f32.mrf.mxu0
  %v8813 = vadd.f32 %v8729, %v8812
  %v8814 = vpop.f32.mrf.mxu0
  %v8815 = vadd.f32 %v8731, %v8814
  %8816 = vmatmul.bf16.gmra.mxu0 %v8666
  %v8817 = vpop.f32.mrf.mxu0
  %v8818 = vadd.f32 %v8734, %v8817
  %v8819 = vpop.f32.mrf.mxu0
  %v8820 = vadd.f32 %v8736, %v8819
  %8821 = vmatmul.bf16.gmra.mxu0 %v8669
  %v8822 = vpop.f32.mrf.mxu0
  %v8823 = vadd.f32 %v8739, %v8822
  %v8824 = vpop.f32.mrf.mxu0
  %v8825 = vadd.f32 %v8741, %v8824
  %8826 = vmatmul.bf16.gmra.mxu0 %v8672
  %v8827 = vpop.f32.mrf.mxu0
  %v8828 = vadd.f32 %v8744, %v8827
  %v8829 = vpop.f32.mrf.mxu0
  %v8830 = vadd.f32 %v8746, %v8829
  %8831 = vmatmul.bf16.gmra.mxu0 %v8675
  %v8832 = vpop.f32.mrf.mxu0
  %v8833 = vadd.f32 %v8749, %v8832
  %v8834 = vpop.f32.mrf.mxu0
  %v8835 = vadd.f32 %v8751, %v8834
  %8836 = vmatmul.bf16.gmra.mxu0 %v8678
  %v8837 = vpop.f32.mrf.mxu0
  %v8838 = vadd.f32 %v8754, %v8837
  %v8839 = vpop.f32.mrf.mxu0
  %v8840 = vadd.f32 %v8756, %v8839
  %8841 = vmatmul.bf16.gmra.mxu0 %v8681
  %v8842 = vpop.f32.mrf.mxu0
  %v8843 = vadd.f32 %v8759, %v8842
  %v8844 = vpop.f32.mrf.mxu0
  %v8845 = vadd.f32 %v8761, %v8844
  %8846 = vmatmul.bf16.gmra.mxu0 %v8684
  %v8847 = vpop.f32.mrf.mxu0
  %v8848 = vadd.f32 %v8764, %v8847
  %v8849 = vpop.f32.mrf.mxu0
  %v8850 = vadd.f32 %v8766, %v8849
  %8851 = vmatmul.bf16.gmra.mxu0 %v8687
  %v8852 = vpop.f32.mrf.mxu0
  %v8853 = vadd.f32 %v8769, %v8852
  %v8854 = vpop.f32.mrf.mxu0
  %v8855 = vadd.f32 %v8771, %v8854
  %8856 = vdwg.mxu0
  %8857 = vmatpush.bf16.msra.mxu0 %v8611
  %8858 = vmatpush.bf16.msra.mxu0 %v8609
  %8859 = vmatpush.bf16.msra.mxu0 %v8607
  %8860 = vmatpush.bf16.msra.mxu0 %v8605
  %8861 = vmatpush.bf16.msra.mxu0 %v8603
  %8862 = vmatpush.bf16.msra.mxu0 %v8601
  %8863 = vmatpush.bf16.msra.mxu0 %v8599
  %8864 = vmatpush.bf16.msra.mxu0 %v8597
  %8865 = vmatmul.bf16.gmra.mxu0 %v8494
  %v8866 = vpop.f32.mrf.mxu0
  %v8867 = vadd.f32 0.0, %v8866
  %v8868 = vpop.f32.mrf.mxu0
  %v8869 = vadd.f32 0.0, %v8868
  %8870 = vmatmul.bf16.gmra.mxu0 %v8496
  %v8871 = vpop.f32.mrf.mxu0
  %v8872 = vadd.f32 0.0, %v8871
  %v8873 = vpop.f32.mrf.mxu0
  %v8874 = vadd.f32 0.0, %v8873
  %8875 = vmatmul.bf16.gmra.mxu0 %v8498
  %v8876 = vpop.f32.mrf.mxu0
  %v8877 = vadd.f32 0.0, %v8876
  %v8878 = vpop.f32.mrf.mxu0
  %v8879 = vadd.f32 0.0, %v8878
  %8880 = vmatmul.bf16.gmra.mxu0 %v8500
  %v8881 = vpop.f32.mrf.mxu0
  %v8882 = vadd.f32 0.0, %v8881
  %v8883 = vpop.f32.mrf.mxu0
  %v8884 = vadd.f32 0.0, %v8883
  %8885 = vmatmul.bf16.gmra.mxu0 %v8502
  %v8886 = vpop.f32.mrf.mxu0
  %v8887 = vadd.f32 0.0, %v8886
  %v8888 = vpop.f32.mrf.mxu0
  %v8889 = vadd.f32 0.0, %v8888
  %8890 = vmatmul.bf16.gmra.mxu0 %v8504
  %v8891 = vpop.f32.mrf.mxu0
  %v8892 = vadd.f32 0.0, %v8891
  %v8893 = vpop.f32.mrf.mxu0
  %v8894 = vadd.f32 0.0, %v8893
  %8895 = vmatmul.bf16.gmra.mxu0 %v8506
  %v8896 = vpop.f32.mrf.mxu0
  %v8897 = vadd.f32 0.0, %v8896
  %v8898 = vpop.f32.mrf.mxu0
  %v8899 = vadd.f32 0.0, %v8898
  %8900 = vmatmul.bf16.gmra.mxu0 %v8508
  %v8901 = vpop.f32.mrf.mxu0
  %v8902 = vadd.f32 0.0, %v8901
  %v8903 = vpop.f32.mrf.mxu0
  %v8904 = vadd.f32 0.0, %v8903
  %8905 = vmatmul.bf16.gmra.mxu0 %v8510
  %v8906 = vpop.f32.mrf.mxu0
  %v8907 = vadd.f32 0.0, %v8906
  %v8908 = vpop.f32.mrf.mxu0
  %v8909 = vadd.f32 0.0, %v8908
  %8910 = vmatmul.bf16.gmra.mxu0 %v8512
  %v8911 = vpop.f32.mrf.mxu0
  %v8912 = vadd.f32 0.0, %v8911
  %v8913 = vpop.f32.mrf.mxu0
  %v8914 = vadd.f32 0.0, %v8913
  %8915 = vmatmul.bf16.gmra.mxu0 %v8514
  %v8916 = vpop.f32.mrf.mxu0
  %v8917 = vadd.f32 0.0, %v8916
  %v8918 = vpop.f32.mrf.mxu0
  %v8919 = vadd.f32 0.0, %v8918
  %8920 = vmatmul.bf16.gmra.mxu0 %v8516
  %v8921 = vpop.f32.mrf.mxu0
  %v8922 = vadd.f32 0.0, %v8921
  %v8923 = vpop.f32.mrf.mxu0
  %v8924 = vadd.f32 0.0, %v8923
  %8925 = vmatmul.bf16.gmra.mxu0 %v8518
  %v8926 = vpop.f32.mrf.mxu0
  %v8927 = vadd.f32 0.0, %v8926
  %v8928 = vpop.f32.mrf.mxu0
  %v8929 = vadd.f32 0.0, %v8928
  %8930 = vmatmul.bf16.gmra.mxu0 %v8520
  %v8931 = vpop.f32.mrf.mxu0
  %v8932 = vadd.f32 0.0, %v8931
  %v8933 = vpop.f32.mrf.mxu0
  %v8934 = vadd.f32 0.0, %v8933
  %8935 = vmatmul.bf16.gmra.mxu0 %v8522
  %v8936 = vpop.f32.mrf.mxu0
  %v8937 = vadd.f32 0.0, %v8936
  %v8938 = vpop.f32.mrf.mxu0
  %v8939 = vadd.f32 0.0, %v8938
  %8940 = vdwg.mxu0
  %8941 = vmatpush.bf16.msra.mxu0 0
  %8942 = vmatpush.bf16.msra.mxu0 0
  %8943 = vmatpush.bf16.msra.mxu0 0
  %8944 = vmatpush.bf16.msra.mxu0 0
  %8945 = vmatpush.bf16.msra.mxu0 %v8619
  %8946 = vmatpush.bf16.msra.mxu0 %v8617
  %8947 = vmatpush.bf16.msra.mxu0 %v8615
  %8948 = vmatpush.bf16.msra.mxu0 %v8613
  %8949 = vmatmul.bf16.gmra.mxu0 %v8645
  %v8950 = vpop.f32.mrf.mxu0
  %v8951 = vadd.f32 %v8867, %v8950
  %v8952 = vpop.f32.mrf.mxu0
  %v8953 = vadd.f32 %v8869, %v8952
  %8954 = vmatmul.bf16.gmra.mxu0 %v8648
  %v8955 = vpop.f32.mrf.mxu0
  %v8956 = vadd.f32 %v8872, %v8955
  %v8957 = vpop.f32.mrf.mxu0
  %v8958 = vadd.f32 %v8874, %v8957
  %8959 = vmatmul.bf16.gmra.mxu0 %v8651
  %v8960 = vpop.f32.mrf.mxu0
  %v8961 = vadd.f32 %v8877, %v8960
  %v8962 = vpop.f32.mrf.mxu0
  %v8963 = vadd.f32 %v8879, %v8962
  %8964 = vmatmul.bf16.gmra.mxu0 %v8654
  %v8965 = vpop.f32.mrf.mxu0
  %v8966 = vadd.f32 %v8882, %v8965
  %v8967 = vpop.f32.mrf.mxu0
  %v8968 = vadd.f32 %v8884, %v8967
  %8969 = vmatmul.bf16.gmra.mxu0 %v8657
  %v8970 = vpop.f32.mrf.mxu0
  %v8971 = vadd.f32 %v8887, %v8970
  %v8972 = vpop.f32.mrf.mxu0
  %v8973 = vadd.f32 %v8889, %v8972
  %8974 = vmatmul.bf16.gmra.mxu0 %v8660
  %v8975 = vpop.f32.mrf.mxu0
  %v8976 = vadd.f32 %v8892, %v8975
  %v8977 = vpop.f32.mrf.mxu0
  %v8978 = vadd.f32 %v8894, %v8977
  %8979 = vmatmul.bf16.gmra.mxu0 %v8663
  %v8980 = vpop.f32.mrf.mxu0
  %v8981 = vadd.f32 %v8897, %v8980
  %v8982 = vpop.f32.mrf.mxu0
  %v8983 = vadd.f32 %v8899, %v8982
  %8984 = vmatmul.bf16.gmra.mxu0 %v8666
  %v8985 = vpop.f32.mrf.mxu0
  %v8986 = vadd.f32 %v8902, %v8985
  %v8987 = vpop.f32.mrf.mxu0
  %v8988 = vadd.f32 %v8904, %v8987
  %8989 = vmatmul.bf16.gmra.mxu0 %v8669
  %v8990 = vpop.f32.mrf.mxu0
  %v8991 = vadd.f32 %v8907, %v8990
  %v8992 = vpop.f32.mrf.mxu0
  %v8993 = vadd.f32 %v8909, %v8992
  %8994 = vmatmul.bf16.gmra.mxu0 %v8672
  %v8995 = vpop.f32.mrf.mxu0
  %v8996 = vadd.f32 %v8912, %v8995
  %v8997 = vpop.f32.mrf.mxu0
  %v8998 = vadd.f32 %v8914, %v8997
  %8999 = vmatmul.bf16.gmra.mxu0 %v8675
  %v9000 = vpop.f32.mrf.mxu0
  %v9001 = vadd.f32 %v8917, %v9000
  %v9002 = vpop.f32.mrf.mxu0
  %v9003 = vadd.f32 %v8919, %v9002
  %9004 = vmatmul.bf16.gmra.mxu0 %v8678
  %v9005 = vpop.f32.mrf.mxu0
  %v9006 = vadd.f32 %v8922, %v9005
  %v9007 = vpop.f32.mrf.mxu0
  %v9008 = vadd.f32 %v8924, %v9007
  %9009 = vmatmul.bf16.gmra.mxu0 %v8681
  %v9010 = vpop.f32.mrf.mxu0
  %v9011 = vadd.f32 %v8927, %v9010
  %v9012 = vpop.f32.mrf.mxu0
  %v9013 = vadd.f32 %v8929, %v9012
  %9014 = vmatmul.bf16.gmra.mxu0 %v8684
  %v9015 = vpop.f32.mrf.mxu0
  %v9016 = vadd.f32 %v8932, %v9015
  %v9017 = vpop.f32.mrf.mxu0
  %v9018 = vadd.f32 %v8934, %v9017
  %9019 = vmatmul.bf16.gmra.mxu0 %v8687
  %v9020 = vpop.f32.mrf.mxu0
  %v9021 = vadd.f32 %v8937, %v9020
  %v9022 = vpop.f32.mrf.mxu0
  %v9023 = vadd.f32 %v8939, %v9022
  %9024 = vdwg.mxu0
  %v9025 = vadd.f32 %v8072, %v8783
  %v9026 = vadd.f32 %v8240, %v8951
  %v9027 = vadd.f32 %v8074, %v8785
  %v9028 = vadd.f32 %v8242, %v8953
  %v9029 = vadd.f32 %v8077, %v8788
  %v9030 = vadd.f32 %v8245, %v8956
  %v9031 = vadd.f32 %v8079, %v8790
  %v9032 = vadd.f32 %v8247, %v8958
  %v9033 = vadd.f32 %v8082, %v8793
  %v9034 = vadd.f32 %v8250, %v8961
  %v9035 = vadd.f32 %v8084, %v8795
  %v9036 = vadd.f32 %v8252, %v8963
  %v9037 = vadd.f32 %v8087, %v8798
  %v9038 = vadd.f32 %v8255, %v8966
  %v9039 = vadd.f32 %v8089, %v8800
  %v9040 = vadd.f32 %v8257, %v8968
  %v9041 = vadd.f32 %v8092, %v8803
  %v9042 = vadd.f32 %v8260, %v8971
  %v9043 = vadd.f32 %v8094, %v8805
  %v9044 = vadd.f32 %v8262, %v8973
  %v9045 = vadd.f32 %v8097, %v8808
  %v9046 = vadd.f32 %v8265, %v8976
  %v9047 = vadd.f32 %v8099, %v8810
  %v9048 = vadd.f32 %v8267, %v8978
  %v9049 = vadd.f32 %v8102, %v8813
  %v9050 = vadd.f32 %v8270, %v8981
  %v9051 = vadd.f32 %v8104, %v8815
  %v9052 = vadd.f32 %v8272, %v8983
  %v9053 = vadd.f32 %v8107, %v8818
  %v9054 = vadd.f32 %v8275, %v8986
  %v9055 = vadd.f32 %v8109, %v8820
  %v9056 = vadd.f32 %v8277, %v8988
  %v9057 = vadd.f32 %v8112, %v8823
  %v9058 = vadd.f32 %v8280, %v8991
  %v9059 = vadd.f32 %v8114, %v8825
  %v9060 = vadd.f32 %v8282, %v8993
  %v9061 = vadd.f32 %v8117, %v8828
  %v9062 = vadd.f32 %v8285, %v8996
  %v9063 = vadd.f32 %v8119, %v8830
  %v9064 = vadd.f32 %v8287, %v8998
  %v9065 = vadd.f32 %v8122, %v8833
  %v9066 = vadd.f32 %v8290, %v9001
  %v9067 = vadd.f32 %v8124, %v8835
  %v9068 = vadd.f32 %v8292, %v9003
  %v9069 = vadd.f32 %v8127, %v8838
  %v9070 = vadd.f32 %v8295, %v9006
  %v9071 = vadd.f32 %v8129, %v8840
  %v9072 = vadd.f32 %v8297, %v9008
  %v9073 = vadd.f32 %v8132, %v8843
  %v9074 = vadd.f32 %v8300, %v9011
  %v9075 = vadd.f32 %v8134, %v8845
  %v9076 = vadd.f32 %v8302, %v9013
  %v9077 = vadd.f32 %v8137, %v8848
  %v9078 = vadd.f32 %v8305, %v9016
  %v9079 = vadd.f32 %v8139, %v8850
  %v9080 = vadd.f32 %v8307, %v9018
  %v9081 = vadd.f32 %v8142, %v8853
  %v9082 = vadd.f32 %v8310, %v9021
  %v9083 = vadd.f32 %v8144, %v8855
  %v9084 = vadd.f32 %v8312, %v9023
  %s9085 = scalar_lea.vmem %s6, 17
  %v9086 = vld [vmem:[%s9085] ss:$8 sm:$0x3]
  %v9088 = vperm.slane %v9086, 0
  %v9089 = vperm.slane %v9086, 1
  %v9092 = vadd.f32 %v9025, %v9088
  %v9093 = vadd.f32 %v9026, %v9089
  %v9094 = vadd.f32 %v9027, %v9088
  %v9095 = vadd.f32 %v9028, %v9089
  %v9096 = vadd.f32 %v9029, %v9088
  %v9097 = vadd.f32 %v9030, %v9089
  %v9098 = vadd.f32 %v9031, %v9088
  %v9099 = vadd.f32 %v9032, %v9089
  %v9100 = vadd.f32 %v9033, %v9088
  %v9101 = vadd.f32 %v9034, %v9089
  %v9102 = vadd.f32 %v9035, %v9088
  %v9103 = vadd.f32 %v9036, %v9089
  %v9104 = vadd.f32 %v9037, %v9088
  %v9105 = vadd.f32 %v9038, %v9089
  %v9106 = vadd.f32 %v9039, %v9088
  %v9107 = vadd.f32 %v9040, %v9089
  %v9108 = vadd.f32 %v9041, %v9088
  %v9109 = vadd.f32 %v9042, %v9089
  %v9110 = vadd.f32 %v9043, %v9088
  %v9111 = vadd.f32 %v9044, %v9089
  %v9112 = vadd.f32 %v9045, %v9088
  %v9113 = vadd.f32 %v9046, %v9089
  %v9114 = vadd.f32 %v9047, %v9088
  %v9115 = vadd.f32 %v9048, %v9089
  %v9116 = vadd.f32 %v9049, %v9088
  %v9117 = vadd.f32 %v9050, %v9089
  %v9118 = vadd.f32 %v9051, %v9088
  %v9119 = vadd.f32 %v9052, %v9089
  %v9120 = vadd.f32 %v9053, %v9088
  %v9121 = vadd.f32 %v9054, %v9089
  %v9122 = vadd.f32 %v9055, %v9088
  %v9123 = vadd.f32 %v9056, %v9089
  %v9124 = vadd.f32 %v9057, %v9088
  %v9125 = vadd.f32 %v9058, %v9089
  %v9126 = vadd.f32 %v9059, %v9088
  %v9127 = vadd.f32 %v9060, %v9089
  %v9128 = vadd.f32 %v9061, %v9088
  %v9129 = vadd.f32 %v9062, %v9089
  %v9130 = vadd.f32 %v9063, %v9088
  %v9131 = vadd.f32 %v9064, %v9089
  %v9132 = vadd.f32 %v9065, %v9088
  %v9133 = vadd.f32 %v9066, %v9089
  %v9134 = vadd.f32 %v9067, %v9088
  %v9135 = vadd.f32 %v9068, %v9089
  %v9136 = vadd.f32 %v9069, %v9088
  %v9137 = vadd.f32 %v9070, %v9089
  %v9138 = vadd.f32 %v9071, %v9088
  %v9139 = vadd.f32 %v9072, %v9089
  %v9140 = vadd.f32 %v9073, %v9088
  %v9141 = vadd.f32 %v9074, %v9089
  %v9142 = vadd.f32 %v9075, %v9088
  %v9143 = vadd.f32 %v9076, %v9089
  %v9144 = vadd.f32 %v9077, %v9088
  %v9145 = vadd.f32 %v9078, %v9089
  %v9146 = vadd.f32 %v9079, %v9088
  %v9147 = vadd.f32 %v9080, %v9089
  %v9148 = vadd.f32 %v9081, %v9088
  %v9149 = vadd.f32 %v9082, %v9089
  %v9150 = vadd.f32 %v9083, %v9088
  %v9151 = vadd.f32 %v9084, %v9089
  %v9152 = vmax.f32 %v9092, 0.0
  %v9153 = vmax.f32 %v9093, 0.0
  %v9154 = vmax.f32 %v9094, 0.0
  %v9155 = vmax.f32 %v9095, 0.0
  %v9156 = vmax.f32 %v9096, 0.0
  %v9157 = vmax.f32 %v9097, 0.0
  %v9158 = vmax.f32 %v9098, 0.0
  %v9159 = vmax.f32 %v9099, 0.0
  %v9160 = vmax.f32 %v9100, 0.0
  %v9161 = vmax.f32 %v9101, 0.0
  %v9162 = vmax.f32 %v9102, 0.0
  %v9163 = vmax.f32 %v9103, 0.0
  %v9164 = vmax.f32 %v9104, 0.0
  %v9165 = vmax.f32 %v9105, 0.0
  %v9166 = vmax.f32 %v9106, 0.0
  %v9167 = vmax.f32 %v9107, 0.0
  %v9168 = vmax.f32 %v9108, 0.0
  %v9169 = vmax.f32 %v9109, 0.0
  %v9170 = vmax.f32 %v9110, 0.0
  %v9171 = vmax.f32 %v9111, 0.0
  %v9172 = vmax.f32 %v9112, 0.0
  %v9173 = vmax.f32 %v9113, 0.0
  %v9174 = vmax.f32 %v9114, 0.0
  %v9175 = vmax.f32 %v9115, 0.0
  %v9176 = vmax.f32 %v9116, 0.0
  %v9177 = vmax.f32 %v9117, 0.0
  %v9178 = vmax.f32 %v9118, 0.0
  %v9179 = vmax.f32 %v9119, 0.0
  %v9180 = vmax.f32 %v9120, 0.0
  %v9181 = vmax.f32 %v9121, 0.0
  %v9182 = vmax.f32 %v9122, 0.0
  %v9183 = vmax.f32 %v9123, 0.0
  %v9184 = vmax.f32 %v9124, 0.0
  %v9185 = vmax.f32 %v9125, 0.0
  %v9186 = vmax.f32 %v9126, 0.0
  %v9187 = vmax.f32 %v9127, 0.0
  %v9188 = vmax.f32 %v9128, 0.0
  %v9189 = vmax.f32 %v9129, 0.0
  %v9190 = vmax.f32 %v9130, 0.0
  %v9191 = vmax.f32 %v9131, 0.0
  %v9192 = vmax.f32 %v9132, 0.0
  %v9193 = vmax.f32 %v9133, 0.0
  %v9194 = vmax.f32 %v9134, 0.0
  %v9195 = vmax.f32 %v9135, 0.0
  %v9196 = vmax.f32 %v9136, 0.0
  %v9197 = vmax.f32 %v9137, 0.0
  %v9198 = vmax.f32 %v9138, 0.0
  %v9199 = vmax.f32 %v9139, 0.0
  %v9200 = vmax.f32 %v9140, 0.0
  %v9201 = vmax.f32 %v9141, 0.0
  %v9202 = vmax.f32 %v9142, 0.0
  %v9203 = vmax.f32 %v9143, 0.0
  %v9204 = vmax.f32 %v9144, 0.0
  %v9205 = vmax.f32 %v9145, 0.0
  %v9206 = vmax.f32 %v9146, 0.0
  %v9207 = vmax.f32 %v9147, 0.0
  %v9208 = vmax.f32 %v9148, 0.0
  %v9209 = vmax.f32 %v9149, 0.0
  %v9210 = vmax.f32 %v9150, 0.0
  %v9211 = vmax.f32 %v9151, 0.0
  %v9212 = vlaneseq
  %v9213 = vand.u32 %v9212, 127
  %v9214 = vadd.s32 %v9213, 128
  %v9215 = vmul.u32 %v28, 60
  %vm9216 = vcmp.ge.s32.totalorder %v9213, %v9215
  %vm9217 = vcmp.ge.s32.totalorder %v9214, %v9215
  %v9218 = vadd.s32 %v9215, 60
  %vm9219 = vcmp.lt.s32.totalorder %v9213, %v9218
  %vm9220 = vcmp.lt.s32.totalorder %v9214, %v9218
  %vm9221 = vmand %vm9216, %vm9219
  %vm9222 = vmand %vm9217, %vm9220
  %v9223 = vsel %vm9221, 0.016666668, 0.0
  %v9224 = vsel %vm9222, 0.016666668, 0.0
  %vm9225 = vcmask 916480
  %v9227 = vsel %vm9225, %v9224, 0
  %9229 = vmatpush.msra.mxu0 %v9182
  %9230 = vmatpush.msra.mxu0 %v9180
  %9231 = vmatpush.msra.mxu0 %v9178
  %9232 = vmatpush.msra.mxu0 %v9176
  %9233 = vmatpush.msra.mxu0 %v9174
  %9234 = vmatpush.msra.mxu0 %v9172
  %9235 = vmatpush.msra.mxu0 %v9170
  %9236 = vmatpush.msra.mxu0 %v9168
  %9237 = vmatpush.msra.mxu0 %v9166
  %9238 = vmatpush.msra.mxu0 %v9164
  %9239 = vmatpush.msra.mxu0 %v9162
  %9240 = vmatpush.msra.mxu0 %v9160
  %9241 = vmatpush.msra.mxu0 %v9158
  %9242 = vmatpush.msra.mxu0 %v9156
  %9243 = vmatpush.msra.mxu0 %v9154
  %9244 = vmatpush.msra.mxu0 %v9152
  %9245 = vmatmul.f32.gmra.mxu0 %v9223
  %v9246 = vpop.f32.mrf.mxu0
  %v9247 = vadd.f32 0.0, %v9246
  %9248 = vdwg.mxu0
  %9249 = vmatpush.msra.mxu0 0.0
  %9250 = vmatpush.msra.mxu0 0.0
  %9251 = vmatpush.msra.mxu0 %v9210
  %9252 = vmatpush.msra.mxu0 %v9208
  %9253 = vmatpush.msra.mxu0 %v9206
  %9254 = vmatpush.msra.mxu0 %v9204
  %9255 = vmatpush.msra.mxu0 %v9202
  %9256 = vmatpush.msra.mxu0 %v9200
  %9257 = vmatpush.msra.mxu0 %v9198
  %9258 = vmatpush.msra.mxu0 %v9196
  %9259 = vmatpush.msra.mxu0 %v9194
  %9260 = vmatpush.msra.mxu0 %v9192
  %9261 = vmatpush.msra.mxu0 %v9190
  %9262 = vmatpush.msra.mxu0 %v9188
  %9263 = vmatpush.msra.mxu0 %v9186
  %9264 = vmatpush.msra.mxu0 %v9184
  %9265 = vmatmul.f32.gmra.mxu0 %v9227
  %v9266 = vpop.f32.mrf.mxu0
  %v9267 = vadd.f32 %v9247, %v9266
  %9268 = vdwg.mxu0
  %9269 = vmatpush.msra.mxu0 %v9183
  %9270 = vmatpush.msra.mxu0 %v9181
  %9271 = vmatpush.msra.mxu0 %v9179
  %9272 = vmatpush.msra.mxu0 %v9177
  %9273 = vmatpush.msra.mxu0 %v9175
  %9274 = vmatpush.msra.mxu0 %v9173
  %9275 = vmatpush.msra.mxu0 %v9171
  %9276 = vmatpush.msra.mxu0 %v9169
  %9277 = vmatpush.msra.mxu0 %v9167
  %9278 = vmatpush.msra.mxu0 %v9165
  %9279 = vmatpush.msra.mxu0 %v9163
  %9280 = vmatpush.msra.mxu0 %v9161
  %9281 = vmatpush.msra.mxu0 %v9159
  %9282 = vmatpush.msra.mxu0 %v9157
  %9283 = vmatpush.msra.mxu0 %v9155
  %9284 = vmatpush.msra.mxu0 %v9153
  %9285 = vmatmul.f32.gmra.mxu0 %v9223
  %v9286 = vpop.f32.mrf.mxu0
  %v9287 = vadd.f32 0.0, %v9286
  %9288 = vdwg.mxu0
  %9289 = vmatpush.msra.mxu0 0.0
  %9290 = vmatpush.msra.mxu0 0.0
  %9291 = vmatpush.msra.mxu0 %v9211
  %9292 = vmatpush.msra.mxu0 %v9209
  %9293 = vmatpush.msra.mxu0 %v9207
  %9294 = vmatpush.msra.mxu0 %v9205
  %9295 = vmatpush.msra.mxu0 %v9203
  %9296 = vmatpush.msra.mxu0 %v9201
  %9297 = vmatpush.msra.mxu0 %v9199
  %9298 = vmatpush.msra.mxu0 %v9197
  %9299 = vmatpush.msra.mxu0 %v9195
  %9300 = vmatpush.msra.mxu0 %v9193
  %9301 = vmatpush.msra.mxu0 %v9191
  %9302 = vmatpush.msra.mxu0 %v9189
  %9303 = vmatpush.msra.mxu0 %v9187
  %9304 = vmatpush.msra.mxu0 %v9185
  %9305 = vmatmul.f32.gmra.mxu0 %v9227
  %v9306 = vpop.f32.mrf.mxu0
  %v9307 = vadd.f32 %v9287, %v9306
  %9308 = vdwg.mxu0
  %v9309 = vpack.c.bf16 %v9267, %v9267
  %v9310 = vpack.c.bf16 %v9307, %v9307
  %v9311 = vld [vmem:[%s5] sm:$0xf]
  %v9312 = vld [vmem:[%s5 + $0x4] sm:$0xf]
  %v9313 = vld [vmem:[%s5 + $0x8] sm:$0xf]
  %v9314 = vld [vmem:[%s5 + $0xc] sm:$0xf]
  %v9315 = vld [vmem:[%s5 + $0x10] sm:$0xf]
  %v9316 = vld [vmem:[%s5 + $0x14] sm:$0xf]
  %v9317 = vld [vmem:[%s5 + $0x18] sm:$0xf]
  %v9318 = vld [vmem:[%s5 + $0x1c] sm:$0xf]
  %v9319 = vld [vmem:[%s5 + $0x20] sm:$0xf]
  %v9320 = vld [vmem:[%s5 + $0x24] sm:$0xf]
  %v9321 = vld [vmem:[%s5 + $0x28] sm:$0xf]
  %v9322 = vld [vmem:[%s5 + $0x2c] sm:$0xf]
  %v9323 = vld [vmem:[%s5 + $0x30] sm:$0xf]
  %v9324 = vld [vmem:[%s5 + $0x34] sm:$0xf]
  %v9325 = vld [vmem:[%s5 + $0x38] sm:$0xf]
  %v9326 = vld [vmem:[%s5 + $0x3c] sm:$0xf]
  %v9327 = vld [vmem:[%s5 + $0x40] sm:$0xf]
  %v9328 = vld [vmem:[%s5 + $0x44] sm:$0xf]
  %v9329 = vld [vmem:[%s5 + $0x48] sm:$0xf]
  %v9330 = vld [vmem:[%s5 + $0x4c] sm:$0xf]
  %v9331 = vld [vmem:[%s5 + $0x50] sm:$0xf]
  %v9332 = vld [vmem:[%s5 + $0x54] sm:$0xf]
  %v9333 = vld [vmem:[%s5 + $0x58] sm:$0xf]
  %v9334 = vld [vmem:[%s5 + $0x5c] sm:$0xf]
  %v9335 = vld [vmem:[%s1] sm:$0x3]
  %v9336 = vld [vmem:[%s5 + $0x60] sm:$0xf]
  %v9337 = vld [vmem:[%s5 + $0x64] sm:$0xf]
  %v9340 = vunpack.c.l.b16 %v9336
  %v9341 = vunpack.c.l.b16 %v9337
  %v9342 = vpack.c.b16 %v9341, %v9340
  %vm9344 = vcmask 130048
  %v9346 = vsel %vm9344, %v9335, 0
  %9348 = vmatpush.bf16.msra.mxu0 0
  %9349 = vmatpush.bf16.msra.mxu0 0
  %9350 = vmatpush.bf16.msra.mxu0 0
  %9351 = vmatpush.bf16.msra.mxu0 0
  %9352 = vmatpush.bf16.msra.mxu0 0
  %9353 = vmatpush.bf16.msra.mxu0 0
  %9354 = vmatpush.bf16.msra.mxu0 0
  %9355 = vmatpush.bf16.msra.mxu0 %v9342
  %9356 = vmatmul.bf16.gmra.mxu0 %v9346
  %v9357 = vpop.f32.mrf.mxu0
  %v9358 = vadd.f32 0.0, %v9357
  %v9359 = vpop.f32.mrf.mxu0
  %9360 = vdwg.mxu0
  %v9385 = vunpack.c.l.b16 %v9311
  %v9386 = vunpack.c.l.b16 %v9312
  %v9387 = vunpack.c.l.b16 %v9313
  %v9388 = vunpack.c.l.b16 %v9314
  %v9389 = vunpack.c.l.b16 %v9315
  %v9390 = vunpack.c.l.b16 %v9316
  %v9391 = vunpack.c.l.b16 %v9317
  %v9392 = vunpack.c.l.b16 %v9318
  %v9393 = vunpack.c.l.b16 %v9319
  %v9394 = vunpack.c.l.b16 %v9320
  %v9395 = vunpack.c.l.b16 %v9321
  %v9396 = vunpack.c.l.b16 %v9322
  %v9397 = vunpack.c.l.b16 %v9323
  %v9398 = vunpack.c.l.b16 %v9324
  %v9399 = vunpack.c.l.b16 %v9325
  %v9400 = vunpack.c.l.b16 %v9326
  %v9401 = vunpack.c.l.b16 %v9327
  %v9402 = vunpack.c.l.b16 %v9328
  %v9403 = vunpack.c.l.b16 %v9329
  %v9404 = vunpack.c.l.b16 %v9330
  %v9405 = vunpack.c.l.b16 %v9331
  %v9406 = vunpack.c.l.b16 %v9332
  %v9407 = vunpack.c.l.b16 %v9333
  %v9408 = vunpack.c.l.b16 %v9334
  %v9409 = vpack.c.b16 %v9386, %v9385
  %v9410 = vpack.c.b16 %v9388, %v9387
  %v9411 = vpack.c.b16 %v9390, %v9389
  %v9412 = vpack.c.b16 %v9392, %v9391
  %v9413 = vpack.c.b16 %v9394, %v9393
  %v9414 = vpack.c.b16 %v9396, %v9395
  %v9415 = vpack.c.b16 %v9398, %v9397
  %v9416 = vpack.c.b16 %v9400, %v9399
  %v9417 = vpack.c.b16 %v9402, %v9401
  %v9418 = vpack.c.b16 %v9404, %v9403
  %v9419 = vpack.c.b16 %v9406, %v9405
  %v9420 = vpack.c.b16 %v9408, %v9407
  %v9434 = vsel %vm7431, %v9310, 0
  %9436 = vmatpush.bf16.msra.mxu0 %v9416
  %9437 = vmatpush.bf16.msra.mxu0 %v9415
  %9438 = vmatpush.bf16.msra.mxu0 %v9414
  %9439 = vmatpush.bf16.msra.mxu0 %v9413
  %9440 = vmatpush.bf16.msra.mxu0 %v9412
  %9441 = vmatpush.bf16.msra.mxu0 %v9411
  %9442 = vmatpush.bf16.msra.mxu0 %v9410
  %9443 = vmatpush.bf16.msra.mxu0 %v9409
  %9444 = vmatmul.bf16.gmra.mxu0 %v9309
  %v9445 = vpop.f32.mrf.mxu0
  %v9446 = vadd.f32 %v9358, %v9445
  %v9447 = vpop.f32.mrf.mxu0
  %9448 = vdwg.mxu0
  %9449 = vmatpush.bf16.msra.mxu0 0
  %9450 = vmatpush.bf16.msra.mxu0 0
  %9451 = vmatpush.bf16.msra.mxu0 0
  %9452 = vmatpush.bf16.msra.mxu0 0
  %9453 = vmatpush.bf16.msra.mxu0 %v9420
  %9454 = vmatpush.bf16.msra.mxu0 %v9419
  %9455 = vmatpush.bf16.msra.mxu0 %v9418
  %9456 = vmatpush.bf16.msra.mxu0 %v9417
  %9457 = vmatmul.bf16.gmra.mxu0 %v9434
  %v9458 = vpop.f32.mrf.mxu0
  %v9459 = vadd.f32 %v9446, %v9458
  %v9460 = vpop.f32.mrf.mxu0
  %9461 = vdwg.mxu0
  %v9462 = vld [vmem:[%s6 + $0x12] ss:$0 sm:$0xff]
  %v9463 = vadd.f32 %v9459, %v9462
  %v9464 = vmax.f32 %v9463, 0.0
  %v9465 = vpack.c.bf16 %v9464, %v9464
  %v9466 = vld [vmem:[%s5 + $0x68] sm:$0xf]
  %v9467 = vld [vmem:[%s5 + $0x6c] sm:$0xf]
  %v9468 = vld [vmem:[%s5 + $0x70] sm:$0xf]
  %v9469 = vld [vmem:[%s5 + $0x74] sm:$0xf]
  %v9470 = vld [vmem:[%s5 + $0x78] sm:$0xf]
  %v9471 = vld [vmem:[%s5 + $0x7c] sm:$0xf]
  %v9472 = vld [vmem:[%s5 + $0x80] sm:$0xf]
  %v9473 = vld [vmem:[%s5 + $0x84] sm:$0xf]
  %v9474 = vld [vmem:[%s6 + $0x13] ss:$0 sm:$0xff]
  %v9483 = vunpack.c.l.b16 %v9466
  %v9484 = vunpack.c.l.b16 %v9467
  %v9485 = vunpack.c.l.b16 %v9468
  %v9486 = vunpack.c.l.b16 %v9469
  %v9487 = vunpack.c.l.b16 %v9470
  %v9488 = vunpack.c.l.b16 %v9471
  %v9489 = vunpack.c.l.b16 %v9472
  %v9490 = vunpack.c.l.b16 %v9473
  %v9491 = vpack.c.b16 %v9484, %v9483
  %v9492 = vpack.c.b16 %v9486, %v9485
  %v9493 = vpack.c.b16 %v9488, %v9487
  %v9494 = vpack.c.b16 %v9490, %v9489
  %v9500 = vsel %vm7431, %v9465, 0
  %9502 = vmatpush.bf16.msra.mxu0 0
  %9503 = vmatpush.bf16.msra.mxu0 0
  %9504 = vmatpush.bf16.msra.mxu0 0
  %9505 = vmatpush.bf16.msra.mxu0 0
  %9506 = vmatpush.bf16.msra.mxu0 %v9494
  %9507 = vmatpush.bf16.msra.mxu0 %v9493
  %9508 = vmatpush.bf16.msra.mxu0 %v9492
  %9509 = vmatpush.bf16.msra.mxu0 %v9491
  %9510 = vmatmul.bf16.gmra.mxu0 %v9500
  %v9511 = vpop.f32.mrf.mxu0
  %v9512 = vadd.f32 %v9474, %v9511
  %v9513 = vpop.f32.mrf.mxu0
  %9514 = vdwg.mxu0
  %v9515 = vmax.f32 %v9512, 0.0
  %v9516 = vpack.c.bf16 %v9515, %v9515
  %v9517 = vld [vmem:[%s5 + $0x88] sm:$0xf]
  %v9518 = vld [vmem:[%s5 + $0x8c] sm:$0xf]
  %v9519 = vld [vmem:[%s5 + $0x90] sm:$0xf]
  %v9520 = vld [vmem:[%s5 + $0x94] sm:$0xf]
  %v9521 = vld [vmem:[%s5 + $0x98] sm:$0xf]
  %v9522 = vld [vmem:[%s5 + $0x9c] sm:$0xf]
  %v9523 = vld [vmem:[%s5 + $0xa0] sm:$0xf]
  %v9524 = vld [vmem:[%s5 + $0xa4] sm:$0xf]
  %v9525 = vld [vmem:[%s6 + $0x14] ss:$0 sm:$0xff]
  %v9534 = vunpack.c.l.b16 %v9517
  %v9535 = vunpack.c.l.b16 %v9518
  %v9536 = vunpack.c.l.b16 %v9519
  %v9537 = vunpack.c.l.b16 %v9520
  %v9538 = vunpack.c.l.b16 %v9521
  %v9539 = vunpack.c.l.b16 %v9522
  %v9540 = vunpack.c.l.b16 %v9523
  %v9541 = vunpack.c.l.b16 %v9524
  %v9542 = vpack.c.b16 %v9535, %v9534
  %v9543 = vpack.c.b16 %v9537, %v9536
  %v9544 = vpack.c.b16 %v9539, %v9538
  %v9545 = vpack.c.b16 %v9541, %v9540
  %v9551 = vsel %vm7431, %v9516, 0
  %9553 = vmatpush.bf16.msra.mxu0 0
  %9554 = vmatpush.bf16.msra.mxu0 0
  %9555 = vmatpush.bf16.msra.mxu0 0
  %9556 = vmatpush.bf16.msra.mxu0 0
  %9557 = vmatpush.bf16.msra.mxu0 %v9545
  %9558 = vmatpush.bf16.msra.mxu0 %v9544
  %9559 = vmatpush.bf16.msra.mxu0 %v9543
  %9560 = vmatpush.bf16.msra.mxu0 %v9542
  %9561 = vmatmul.bf16.gmra.mxu0 %v9551
  %v9562 = vpop.f32.mrf.mxu0
  %v9563 = vadd.f32 %v9525, %v9562
  %v9564 = vpop.f32.mrf.mxu0
  %9565 = vdwg.mxu0
  %v9566 = vxor.u32 %v9563, 2147483648
  %v9567 = vmul.f32 %v9566, 1.442695
  %v9568 = vpow.pop %v9567
  %v9569 = vadd.f32 %v9568, 1.0
  %v9570 = vrcp.pop %v9569
  %v9571 = vmul.f32 %v9569, %v9570
  %v9572 = vsub.f32 1.0, %v9571
  %v9573 = vmul.f32 %v9570, %v9572
  %v9574 = vadd.f32 %v9570, %v9573
  %vm9575 = vweird.f32 %v9569
  %vm9576 = vweird.f32 %v9570
  %vm9577 = vmor %vm9575, %vm9576
  %v9578 = vsel %vm9577, %v9570, %v9574
  %v9579 = vand.u32 2147483647, %v9569
  %vm9580 = vcmp.eq.f32.partialorder %v9579, 8.507059e+37
  %v9581 = vand.u32 %v9569, 2147483648
  %v9582 = vor.u32 1.1754944e-38, %v9581
  %v9583 = vsel %vm9580, %v9582, %v9578
  %v9584 = vmul.f32 1.0, %v9583
  %vm9585 = vcmask 3072
  %9586 = vst.msk [vmem:[%s7] sm:$0xf] %vm9585, %v9584
  // Predicated region
  $region30: #{tpu_custom_call.1} parent=0 // pred_check
    _
  $region31: #{tpu_custom_call.1} parent=0 // pred_check_branch
    %9588 = sbr.rel (0) target = $region33
  $region32: #{tpu_custom_call.1} parent=0 // pred_region
    _
  $region33: #{tpu_custom_call.1} parent=0 // pred_fallthru
    _
  // Predicated region
  $region34: #{tpu_custom_call.1} parent=0 // pred_check
    _
  $region35: #{tpu_custom_call.1} parent=0 // pred_check_branch
    %9590 = sbr.rel (0) target = $region37
  $region36: #{tpu_custom_call.1} parent=0 // pred_region
    _
  $region37: #{tpu_custom_call.1} parent=0 // pred_fallthru
    _

</llo_original>
